<compile_context>
chip_gen: v5e
topology: v5e:2x2
jax: 0.10.0
libtpu: 0.0.40
codegen_flags: <defaults>
</compile_context>

<pallas_src>
import functools

import jax
import jax.numpy as jnp
from jax.experimental import pallas as pl
from jax.experimental.pallas import tpu as pltpu


def stnkd_kernel(
    x_ref,                 # (BB, TN, k) f32 — one (batch-block, point-tile)
    w1_ref, b1_ref,        # conv1 (BN folded): k -> 64
    w2_ref, b2_ref,        # conv2 (BN folded): 64 -> 128
    w3_ref, b3_ref,        # conv3 (BN folded): 128 -> 1024
    wf1_ref, bf1_ref,      # fc1 (BN folded): 1024 -> 512
    wf2_ref, bf2_ref,      # fc2 (BN folded): 512 -> 256
    wf3_ref, bf3_ref,      # fc3: 256 -> k*k
    iden_ref,              # (1, k*k) flattened eye(k), f32
    out_ref,               # (BB, k*k) f32
    g_ref,                 # VMEM scratch (BB, 1024) f32 running max
):
    n = pl.program_id(1)
    BB, TN, k = x_ref.shape

    @pl.when(n == 0)
    def _():
        g_ref[...] = jnp.full_like(g_ref, -jnp.inf)

    def mm(h, w_ref):
        # bf16 MXU matmul with f32 accumulation.
        return jnp.dot(h.astype(jnp.bfloat16), w_ref[...],
                       preferred_element_type=jnp.float32)

    # Conv stage on (BB*TN, k): 1x1 Conv1d == matmul over channels (+bias+ReLU).
    x = x_ref[...].reshape(BB * TN, k)                       # f32
    h = jnp.maximum(mm(x, w1_ref) + b1_ref[...], 0.0)        # (BB*TN, 64)
    h = jnp.maximum(mm(h, w2_ref) + b2_ref[...], 0.0)        # (BB*TN, 128)
    h = jnp.maximum(mm(h, w3_ref) + b3_ref[...], 0.0)        # (BB*TN, 1024)

    # torch.max(x, 2)[0]: running max over the point axis, streamed per tile.
    tile_max = jnp.max(h.reshape(BB, TN, 1024), axis=1)      # (BB, 1024)
    g_ref[...] = jnp.maximum(g_ref[...], tile_max)

    # FC tail + identity add, only once the whole point axis has been seen.
    @pl.when(n == pl.num_programs(1) - 1)
    def _():
        g = g_ref[...]                                       # (BB, 1024)
        f = jnp.maximum(mm(g, wf1_ref) + bf1_ref[...], 0.0)  # (BB, 512)
        f = jnp.maximum(mm(f, wf2_ref) + bf2_ref[...], 0.0)  # (BB, 256)
        f = mm(f, wf3_ref) + bf3_ref[...]                    # (BB, k*k)
        out_ref[...] = f + iden_ref[...]


def stnkd_forward(x_bkn, folded_params, *, k, block_b=8, block_n=128):
    """x_bkn: (B, k, N) f32 (PyTorch Conv1d layout). Returns (B, k, k)."""
    B, kk, N = x_bkn.shape
    assert kk == k
    assert B % block_b == 0, "B must be a multiple of block_b"
    assert N % block_n == 0, "N must be a multiple of block_n"

    x = jnp.transpose(x_bkn, (0, 2, 1))                      # (B, N, k)

    (w1, b1, w2, b2, w3, b3, wf1, bf1, wf2, bf2, wf3, bf3) = folded_params
    iden = jnp.eye(k, dtype=jnp.float32).reshape(1, k * k)

    param_list = [w1, b1, w2, b2, w3, b3, wf1, bf1, wf2, bf2, wf3, bf3, iden]

    def full_spec(arr):
        # Grid-invariant parameter: whole (small) array resident in VMEM;
        # constant block index -> the DMA is not re-issued across grid steps.
        return pl.BlockSpec(arr.shape, lambda b, n: (0,) * arr.ndim)

    in_specs = [pl.BlockSpec((block_b, block_n, k), lambda b, n: (b, n, 0))]
    in_specs += [full_spec(p) for p in param_list]

    out = pl.pallas_call(
        stnkd_kernel,
        out_shape=jax.ShapeDtypeStruct((B, k * k), jnp.float32),
        grid=(B // block_b, N // block_n),
        in_specs=in_specs,
        out_specs=pl.BlockSpec((block_b, k * k), lambda b, n: (b, 0)),
        scratch_shapes=[pltpu.VMEM((block_b, 1024), jnp.float32)],
        compiler_params=pltpu.CompilerParams(
            dimension_semantics=("parallel", "arbitrary"),
        ),
    )(x, *param_list)

    return out.reshape(B, k, k)


def make_folded_params(key, k):
    """Deterministic synthetic STNkd(k) parameters with BN pre-folded.

    Weights are stored bf16 (MXU operands); folded biases stay f32.
    """
    dims = [(k, 64), (64, 128), (128, 1024), (1024, 512), (512, 256), (256, k * k)]
    eps = 1e-5
    keys = jax.random.split(key, 6 * len(dims))
    folded = []
    ki = 0
    for li, (cin, cout) in enumerate(dims):
        kw, kb, kg, kbe, kmu, kva = keys[ki:ki + 6]
        ki += 6
        w = jax.random.normal(kw, (cin, cout), jnp.float32) * 0.05
        b = jax.random.normal(kb, (1, cout), jnp.float32) * 0.05
        if li < 5:  # bn1..bn5 (fc3 has no BN)
            gamma = 1.0 + 0.1 * jax.random.normal(kg, (1, cout), jnp.float32)
            beta = 0.05 * jax.random.normal(kbe, (1, cout), jnp.float32)
            mean = 0.02 * jax.random.normal(kmu, (1, cout), jnp.float32)
            var = 1.0 + 0.1 * jnp.abs(jax.random.normal(kva, (1, cout), jnp.float32))
            scale = gamma / jnp.sqrt(var + eps)
            shift = beta - mean * scale
            w = w * scale            # fold BN scale into weight columns
            b = b * scale + shift    # fold BN shift into bias
        folded += [w.astype(jnp.bfloat16), b.astype(jnp.float32)]
    return tuple(folded)


def stnkd_reference(x_bkn, folded_params, *, k):
    """Pure-JAX reference using the same bf16-matmul / f32-accumulate math."""
    (w1, b1, w2, b2, w3, b3, wf1, bf1, wf2, bf2, wf3, bf3) = folded_params
    x = jnp.transpose(x_bkn, (0, 2, 1))                      # (B, N, k)

    def mm(h, w):
        return jnp.dot(h.astype(jnp.bfloat16), w,
                       preferred_element_type=jnp.float32)

    h = jnp.maximum(mm(x, w1) + b1, 0.0)
    h = jnp.maximum(mm(h, w2) + b2, 0.0)
    h = jnp.maximum(mm(h, w3) + b3, 0.0)
    g = jnp.max(h, axis=1)                                   # (B, 1024)
    f = jnp.maximum(mm(g, wf1) + bf1, 0.0)
    f = jnp.maximum(mm(f, wf2) + bf2, 0.0)
    f = mm(f, wf3) + bf3
    f = f + jnp.eye(k, dtype=jnp.float32).reshape(1, k * k)
    return f.reshape(-1, k, k)


if __name__ == "__main__":
    # Small demo shapes: 16 batch elements (2 batch-blocks of 8 -> both v7x
    # TCs busy), transform size k=16, 256 points tiled in two 128-point tiles.
    B, K, N = 16, 16, 256
    BB, TN = 8, 128

    key = jax.random.PRNGKey(0)
    kx, kp = jax.random.split(key)
    x = jax.random.normal(kx, (B, K, N), jnp.float32)        # PyTorch (B, k, N)
    params = make_folded_params(kp, K)

    fwd = jax.jit(functools.partial(stnkd_forward, k=K, block_b=BB, block_n=TN))
    out = fwd(x, params)
    jax.block_until_ready(out)

    ref = stnkd_reference(x, params, k=K)
    assert out.shape == (B, K, K)
    assert jnp.allclose(out, ref, atol=1e-2, rtol=1e-2), "mismatch vs reference"
    print("KERNEL_OK")
</pallas_src>

<mosaic_0001>
module attributes {stable_mosaic.version = 11 : i64} {
  func.func @stnkd_kernel(%arg0: i32, %arg1: i32, %arg2: memref<8x128x16xf32, #tpu.memory_space<vmem>>, %arg3: memref<16x64xbf16, #tpu.memory_space<vmem>>, %arg4: memref<1x64xf32, #tpu.memory_space<vmem>>, %arg5: memref<64x128xbf16, #tpu.memory_space<vmem>>, %arg6: memref<1x128xf32, #tpu.memory_space<vmem>>, %arg7: memref<128x1024xbf16, #tpu.memory_space<vmem>>, %arg8: memref<1x1024xf32, #tpu.memory_space<vmem>>, %arg9: memref<1024x512xbf16, #tpu.memory_space<vmem>>, %arg10: memref<1x512xf32, #tpu.memory_space<vmem>>, %arg11: memref<512x256xbf16, #tpu.memory_space<vmem>>, %arg12: memref<1x256xf32, #tpu.memory_space<vmem>>, %arg13: memref<256x256xbf16, #tpu.memory_space<vmem>>, %arg14: memref<1x256xf32, #tpu.memory_space<vmem>>, %arg15: memref<1x256xf32, #tpu.memory_space<vmem>>, %arg16: memref<8x256xf32, #tpu.memory_space<vmem>>, %arg17: memref<8x1024xf32, #tpu.memory_space<vmem>>) attributes {dimension_semantics = [#tpu.dimension_semantics<parallel>, #tpu.dimension_semantics<arbitrary>], iteration_bounds = array<i64: 2, 2>, scalar_prefetch = 0 : i64, scratch_operands = 1 : i64, tpu.core_type = #tpu.core_type<tc>, window_params = [{transform_indices = @transform_0, window_bounds = array<i64: 8, 128, 16>}, {pipeline_mode = #tpu.pipeline_mode<synchronous>, transform_indices = @transform_1, window_bounds = array<i64: 16, 64>}, {pipeline_mode = #tpu.pipeline_mode<synchronous>, transform_indices = @transform_2, window_bounds = array<i64: 1, 64>}, {pipeline_mode = #tpu.pipeline_mode<synchronous>, transform_indices = @transform_3, window_bounds = array<i64: 64, 128>}, {pipeline_mode = #tpu.pipeline_mode<synchronous>, transform_indices = @transform_4, window_bounds = array<i64: 1, 128>}, {pipeline_mode = #tpu.pipeline_mode<synchronous>, transform_indices = @transform_5, window_bounds = array<i64: 128, 1024>}, {pipeline_mode = #tpu.pipeline_mode<synchronous>, transform_indices = @transform_6, window_bounds = array<i64: 1, 1024>}, {pipeline_mode = #tpu.pipeline_mode<synchronous>, transform_indices = @transform_7, window_bounds = array<i64: 1024, 512>}, {pipeline_mode = #tpu.pipeline_mode<synchronous>, transform_indices = @transform_8, window_bounds = array<i64: 1, 512>}, {pipeline_mode = #tpu.pipeline_mode<synchronous>, transform_indices = @transform_9, window_bounds = array<i64: 512, 256>}, {pipeline_mode = #tpu.pipeline_mode<synchronous>, transform_indices = @transform_10, window_bounds = array<i64: 1, 256>}, {pipeline_mode = #tpu.pipeline_mode<synchronous>, transform_indices = @transform_11, window_bounds = array<i64: 256, 256>}, {pipeline_mode = #tpu.pipeline_mode<synchronous>, transform_indices = @transform_12, window_bounds = array<i64: 1, 256>}, {pipeline_mode = #tpu.pipeline_mode<synchronous>, transform_indices = @transform_13, window_bounds = array<i64: 1, 256>}, {transform_indices = @transform_14, window_bounds = array<i64: 8, 256>}]} {
    %c0_i32 = arith.constant 0 : i32
    %0 = arith.cmpi eq, %arg1, %c0_i32 : i32
    %1 = arith.extui %0 : i1 to i32
    %c0_i32_0 = arith.constant 0 : i32
    %2 = arith.cmpi ne, %1, %c0_i32_0 : i32
    scf.if %2 {
      %cst_26 = arith.constant 0xFF800000 : f32
      %37 = vector.broadcast %cst_26 : f32 to vector<8x1024xf32>
      %c0_27 = arith.constant 0 : index
      %c0_28 = arith.constant 0 : index
      %38 = vector.load %arg17[%c0_27, %c0_28] : memref<8x1024xf32, #tpu.memory_space<vmem>>, vector<8x1024xf32>
      tpu.vector_store %arg17[%c0_27, %c0_28], %37 {strides = array<i32>} : memref<8x1024xf32, #tpu.memory_space<vmem>>, vector<8x1024xf32>,
    } else {
    }
    %c0 = arith.constant 0 : index
    %c0_1 = arith.constant 0 : index
    %c0_2 = arith.constant 0 : index
    %3 = vector.load %arg2[%c0, %c0_1, %c0_2] : memref<8x128x16xf32, #tpu.memory_space<vmem>>, vector<8x128x16xf32>
    %4 = vector.shape_cast %3 : vector<8x128x16xf32> to vector<1024x16xf32>
    %5 = arith.truncf %4 : vector<1024x16xf32> to vector<1024x16xbf16>
    %c0_3 = arith.constant 0 : index
    %c0_4 = arith.constant 0 : index
    %6 = vector.load %arg3[%c0_3, %c0_4] : memref<16x64xbf16, #tpu.memory_space<vmem>>, vector<16x64xbf16>
    %cst = arith.constant dense<0.000000e+00> : vector<1024x64xf32>
    %7 = tpu.matmul %5, %6, %cst {dimension_numbers = #tpu.dot_dimension_numbers<[1], [0], [0], [1], [0, 0, 1, 1], [], []>} : vector<1024x16xbf16>, vector<16x64xbf16>, vector<1024x64xf32> -> vector<1024x64xf32>
    %c0_5 = arith.constant 0 : index
    %c0_6 = arith.constant 0 : index
    %8 = vector.load %arg4[%c0_5, %c0_6] : memref<1x64xf32, #tpu.memory_space<vmem>>, vector<1x64xf32>
    %9 = vector.broadcast %8 : vector<1x64xf32> to vector<1024x64xf32>
    %10 = arith.addf %7, %9 : vector<1024x64xf32>
    %cst_7 = arith.constant 0.000000e+00 : f32
    %11 = vector.broadcast %cst_7 : f32 to vector<1024x64xf32>
    %12 = arith.maximumf %10, %11 : vector<1024x64xf32>
    %13 = arith.truncf %12 : vector<1024x64xf32> to vector<1024x64xbf16>
    %c0_8 = arith.constant 0 : index
    %c0_9 = arith.constant 0 : index
    %14 = vector.load %arg5[%c0_8, %c0_9] : memref<64x128xbf16, #tpu.memory_space<vmem>>, vector<64x128xbf16>
    %cst_10 = arith.constant dense<0.000000e+00> : vector<1024x128xf32>
    %15 = tpu.matmul %13, %14, %cst_10 {dimension_numbers = #tpu.dot_dimension_numbers<[1], [0], [0], [1], [0, 0, 1, 1], [], []>} : vector<1024x64xbf16>, vector<64x128xbf16>, vector<1024x128xf32> -> vector<1024x128xf32>
    %c0_11 = arith.constant 0 : index
    %c0_12 = arith.constant 0 : index
    %16 = vector.load %arg6[%c0_11, %c0_12] : memref<1x128xf32, #tpu.memory_space<vmem>>, vector<1x128xf32>
    %17 = vector.broadcast %16 : vector<1x128xf32> to vector<1024x128xf32>
    %18 = arith.addf %15, %17 : vector<1024x128xf32>
    %cst_13 = arith.constant 0.000000e+00 : f32
    %19 = vector.broadcast %cst_13 : f32 to vector<1024x128xf32>
    %20 = arith.maximumf %18, %19 : vector<1024x128xf32>
    %21 = arith.truncf %20 : vector<1024x128xf32> to vector<1024x128xbf16>
    %c0_14 = arith.constant 0 : index
    %c0_15 = arith.constant 0 : index
    %22 = vector.load %arg7[%c0_14, %c0_15] : memref<128x1024xbf16, #tpu.memory_space<vmem>>, vector<128x1024xbf16>
    %cst_16 = arith.constant dense<0.000000e+00> : vector<1024x1024xf32>
    %23 = tpu.matmul %21, %22, %cst_16 {dimension_numbers = #tpu.dot_dimension_numbers<[1], [0], [0], [1], [0, 0, 1, 1], [], []>} : vector<1024x128xbf16>, vector<128x1024xbf16>, vector<1024x1024xf32> -> vector<1024x1024xf32>
    %c0_17 = arith.constant 0 : index
    %c0_18 = arith.constant 0 : index
    %24 = vector.load %arg8[%c0_17, %c0_18] : memref<1x1024xf32, #tpu.memory_space<vmem>>, vector<1x1024xf32>
    %25 = vector.broadcast %24 : vector<1x1024xf32> to vector<1024x1024xf32>
    %26 = arith.addf %23, %25 : vector<1024x1024xf32>
    %cst_19 = arith.constant 0.000000e+00 : f32
    %27 = vector.broadcast %cst_19 : f32 to vector<1024x1024xf32>
    %28 = arith.maximumf %26, %27 : vector<1024x1024xf32>
    %29 = vector.shape_cast %28 : vector<1024x1024xf32> to vector<8x128x1024xf32>
    %cst_20 = arith.constant dense<0xFF800000> : vector<8x1024xf32>
    %30 = vector.multi_reduction <maximumf>, %29, %cst_20 [1] : vector<8x128x1024xf32> to vector<8x1024xf32>
    %c0_21 = arith.constant 0 : index
    %c0_22 = arith.constant 0 : index
    %31 = vector.load %arg17[%c0_21, %c0_22] : memref<8x1024xf32, #tpu.memory_space<vmem>>, vector<8x1024xf32>
    %32 = arith.maximumf %31, %30 : vector<8x1024xf32>
    %c0_23 = arith.constant 0 : index
    %c0_24 = arith.constant 0 : index
    %33 = vector.load %arg17[%c0_23, %c0_24] : memref<8x1024xf32, #tpu.memory_space<vmem>>, vector<8x1024xf32>
    tpu.vector_store %arg17[%c0_23, %c0_24], %32 {strides = array<i32>} : memref<8x1024xf32, #tpu.memory_space<vmem>>, vector<8x1024xf32>,
    %c1_i32 = arith.constant 1 : i32
    %34 = arith.cmpi eq, %arg1, %c1_i32 : i32
    %35 = arith.extui %34 : i1 to i32
    %c0_i32_25 = arith.constant 0 : i32
    %36 = arith.cmpi ne, %35, %c0_i32_25 : i32
    scf.if %36 {
      %c0_26 = arith.constant 0 : index
      %c0_27 = arith.constant 0 : index
      %37 = vector.load %arg17[%c0_26, %c0_27] : memref<8x1024xf32, #tpu.memory_space<vmem>>, vector<8x1024xf32>
      %38 = arith.truncf %37 : vector<8x1024xf32> to vector<8x1024xbf16>
      %c0_28 = arith.constant 0 : index
      %c0_29 = arith.constant 0 : index
      %39 = vector.load %arg9[%c0_28, %c0_29] : memref<1024x512xbf16, #tpu.memory_space<vmem>>, vector<1024x512xbf16>
      %cst_30 = arith.constant dense<0.000000e+00> : vector<8x512xf32>
      %40 = tpu.matmul %38, %39, %cst_30 {dimension_numbers = #tpu.dot_dimension_numbers<[1], [0], [0], [1], [0, 0, 1, 1], [], []>} : vector<8x1024xbf16>, vector<1024x512xbf16>, vector<8x512xf32> -> vector<8x512xf32>
      %c0_31 = arith.constant 0 : index
      %c0_32 = arith.constant 0 : index
      %41 = vector.load %arg10[%c0_31, %c0_32] : memref<1x512xf32, #tpu.memory_space<vmem>>, vector<1x512xf32>
      %42 = vector.broadcast %41 : vector<1x512xf32> to vector<8x512xf32>
      %43 = arith.addf %40, %42 : vector<8x512xf32>
      %cst_33 = arith.constant 0.000000e+00 : f32
      %44 = vector.broadcast %cst_33 : f32 to vector<8x512xf32>
      %45 = arith.maximumf %43, %44 : vector<8x512xf32>
      %46 = arith.truncf %45 : vector<8x512xf32> to vector<8x512xbf16>
      %c0_34 = arith.constant 0 : index
      %c0_35 = arith.constant 0 : index
      %47 = vector.load %arg11[%c0_34, %c0_35] : memref<512x256xbf16, #tpu.memory_space<vmem>>, vector<512x256xbf16>
      %cst_36 = arith.constant dense<0.000000e+00> : vector<8x256xf32>
      %48 = tpu.matmul %46, %47, %cst_36 {dimension_numbers = #tpu.dot_dimension_numbers<[1], [0], [0], [1], [0, 0, 1, 1], [], []>} : vector<8x512xbf16>, vector<512x256xbf16>, vector<8x256xf32> -> vector<8x256xf32>
      %c0_37 = arith.constant 0 : index
      %c0_38 = arith.constant 0 : index
      %49 = vector.load %arg12[%c0_37, %c0_38] : memref<1x256xf32, #tpu.memory_space<vmem>>, vector<1x256xf32>
      %50 = vector.broadcast %49 : vector<1x256xf32> to vector<8x256xf32>
      %51 = arith.addf %48, %50 : vector<8x256xf32>
      %cst_39 = arith.constant 0.000000e+00 : f32
      %52 = vector.broadcast %cst_39 : f32 to vector<8x256xf32>
      %53 = arith.maximumf %51, %52 : vector<8x256xf32>
      %54 = arith.truncf %53 : vector<8x256xf32> to vector<8x256xbf16>
      %c0_40 = arith.constant 0 : index
      %c0_41 = arith.constant 0 : index
      %55 = vector.load %arg13[%c0_40, %c0_41] : memref<256x256xbf16, #tpu.memory_space<vmem>>, vector<256x256xbf16>
      %cst_42 = arith.constant dense<0.000000e+00> : vector<8x256xf32>
      %56 = tpu.matmul %54, %55, %cst_42 {dimension_numbers = #tpu.dot_dimension_numbers<[1], [0], [0], [1], [0, 0, 1, 1], [], []>} : vector<8x256xbf16>, vector<256x256xbf16>, vector<8x256xf32> -> vector<8x256xf32>
      %c0_43 = arith.constant 0 : index
      %c0_44 = arith.constant 0 : index
      %57 = vector.load %arg14[%c0_43, %c0_44] : memref<1x256xf32, #tpu.memory_space<vmem>>, vector<1x256xf32>
      %58 = vector.broadcast %57 : vector<1x256xf32> to vector<8x256xf32>
      %59 = arith.addf %56, %58 : vector<8x256xf32>
      %c0_45 = arith.constant 0 : index
      %c0_46 = arith.constant 0 : index
      %60 = vector.load %arg15[%c0_45, %c0_46] : memref<1x256xf32, #tpu.memory_space<vmem>>, vector<1x256xf32>
      %61 = vector.broadcast %60 : vector<1x256xf32> to vector<8x256xf32>
      %62 = arith.addf %59, %61 : vector<8x256xf32>
      %c0_47 = arith.constant 0 : index
      %c0_48 = arith.constant 0 : index
      %63 = vector.load %arg16[%c0_47, %c0_48] : memref<8x256xf32, #tpu.memory_space<vmem>>, vector<8x256xf32>
      tpu.vector_store %arg16[%c0_47, %c0_48], %62 {strides = array<i32>} : memref<8x256xf32, #tpu.memory_space<vmem>>, vector<8x256xf32>,
    } else {
    }
    return
  }
  func.func @transform_0(%arg0: i32, %arg1: i32) -> (i32, i32, i32) {
    %c0_i32 = arith.constant 0 : i32
    %c0_i32_0 = arith.constant 0 : i32
    return %arg0, %arg1, %c0_i32 : i32, i32, i32
  }
  func.func @transform_1(%arg0: i32, %arg1: i32) -> (i32, i32) {
    %c0_i32 = arith.constant 0 : i32
    %c0_i32_0 = arith.constant 0 : i32
    %c0_i32_1 = arith.constant 0 : i32
    return %c0_i32, %c0_i32_0 : i32, i32
  }
  func.func @transform_2(%arg0: i32, %arg1: i32) -> (i32, i32) {
    %c0_i32 = arith.constant 0 : i32
    %c0_i32_0 = arith.constant 0 : i32
    %c0_i32_1 = arith.constant 0 : i32
    return %c0_i32, %c0_i32_0 : i32, i32
  }
  func.func @transform_3(%arg0: i32, %arg1: i32) -> (i32, i32) {
    %c0_i32 = arith.constant 0 : i32
    %c0_i32_0 = arith.constant 0 : i32
    %c0_i32_1 = arith.constant 0 : i32
    return %c0_i32, %c0_i32_0 : i32, i32
  }
  func.func @transform_4(%arg0: i32, %arg1: i32) -> (i32, i32) {
    %c0_i32 = arith.constant 0 : i32
    %c0_i32_0 = arith.constant 0 : i32
    %c0_i32_1 = arith.constant 0 : i32
    return %c0_i32, %c0_i32_0 : i32, i32
  }
  func.func @transform_5(%arg0: i32, %arg1: i32) -> (i32, i32) {
    %c0_i32 = arith.constant 0 : i32
    %c0_i32_0 = arith.constant 0 : i32
    %c0_i32_1 = arith.constant 0 : i32
    return %c0_i32, %c0_i32_0 : i32, i32
  }
  func.func @transform_6(%arg0: i32, %arg1: i32) -> (i32, i32) {
    %c0_i32 = arith.constant 0 : i32
    %c0_i32_0 = arith.constant 0 : i32
    %c0_i32_1 = arith.constant 0 : i32
    return %c0_i32, %c0_i32_0 : i32, i32
  }
  func.func @transform_7(%arg0: i32, %arg1: i32) -> (i32, i32) {
    %c0_i32 = arith.constant 0 : i32
    %c0_i32_0 = arith.constant 0 : i32
    %c0_i32_1 = arith.constant 0 : i32
    return %c0_i32, %c0_i32_0 : i32, i32
  }
  func.func @transform_8(%arg0: i32, %arg1: i32) -> (i32, i32) {
    %c0_i32 = arith.constant 0 : i32
    %c0_i32_0 = arith.constant 0 : i32
    %c0_i32_1 = arith.constant 0 : i32
    return %c0_i32, %c0_i32_0 : i32, i32
  }
  func.func @transform_9(%arg0: i32, %arg1: i32) -> (i32, i32) {
    %c0_i32 = arith.constant 0 : i32
    %c0_i32_0 = arith.constant 0 : i32
    %c0_i32_1 = arith.constant 0 : i32
    return %c0_i32, %c0_i32_0 : i32, i32
  }
  func.func @transform_10(%arg0: i32, %arg1: i32) -> (i32, i32) {
    %c0_i32 = arith.constant 0 : i32
    %c0_i32_0 = arith.constant 0 : i32
    %c0_i32_1 = arith.constant 0 : i32
    return %c0_i32, %c0_i32_0 : i32, i32
  }
  func.func @transform_11(%arg0: i32, %arg1: i32) -> (i32, i32) {
    %c0_i32 = arith.constant 0 : i32
    %c0_i32_0 = arith.constant 0 : i32
    %c0_i32_1 = arith.constant 0 : i32
    return %c0_i32, %c0_i32_0 : i32, i32
  }
  func.func @transform_12(%arg0: i32, %arg1: i32) -> (i32, i32) {
    %c0_i32 = arith.constant 0 : i32
    %c0_i32_0 = arith.constant 0 : i32
    %c0_i32_1 = arith.constant 0 : i32
    return %c0_i32, %c0_i32_0 : i32, i32
  }
  func.func @transform_13(%arg0: i32, %arg1: i32) -> (i32, i32) {
    %c0_i32 = arith.constant 0 : i32
    %c0_i32_0 = arith.constant 0 : i32
    %c0_i32_1 = arith.constant 0 : i32
    return %c0_i32, %c0_i32_0 : i32, i32
  }
  func.func @transform_14(%arg0: i32, %arg1: i32) -> (i32, i32) {
    %c0_i32 = arith.constant 0 : i32
    %c0_i32_0 = arith.constant 0 : i32
    return %arg0, %c0_i32 : i32, i32
  }
}

</mosaic_0001>

<llo_original>
// kernel: stnkd_forward.1
$region0: #{stnkd_forward.1}
  #allocation0 [shape = 'u32[]', space=smem, size = 0x4, offset = 0x4, fixed_abs, tag = 'smem constant byte address 0x4 - core index']
  #allocation1 [shape = 'u32[72,128]{1,0:T(1,128)}', space=vmem, size = 0x9000, scoped, tag = 'internal scratch']
  #allocation2 [shape = 'f32[8,1024]{1,0:T(8,128)}', space=vmem, size = 0x8000, scoped, tag = 'scratch operand']
  %s0 = inlined_call_operand.vmem [shape: f32[16,256,16], index: 0, kind: input, shape index: {}]
  %s1 = inlined_call_operand.vmem [shape: bf16[16,64], index: 1, kind: input, shape index: {}]
  %s2 = inlined_call_operand.vmem [shape: f32[1,64], index: 2, kind: input, shape index: {}]
  %s3 = inlined_call_operand.vmem [shape: bf16[64,128], index: 3, kind: input, shape index: {}]
  %s4 = inlined_call_operand.vmem [shape: f32[1,128], index: 4, kind: input, shape index: {}]
  %s5 = inlined_call_operand.vmem [shape: bf16[128,1024], index: 5, kind: input, shape index: {}]
  %s6 = inlined_call_operand.vmem [shape: f32[1,1024], index: 6, kind: input, shape index: {}]
  %s7 = inlined_call_operand.vmem [shape: bf16[1024,512], index: 7, kind: input, shape index: {}]
  %s8 = inlined_call_operand.vmem [shape: f32[1,512], index: 8, kind: input, shape index: {}]
  %s9 = inlined_call_operand.vmem [shape: bf16[512,256], index: 9, kind: input, shape index: {}]
  %s10 = inlined_call_operand.vmem [shape: f32[1,256], index: 10, kind: input, shape index: {}]
  %s11 = inlined_call_operand.vmem [shape: bf16[256,256], index: 11, kind: input, shape index: {}]
  %s12 = inlined_call_operand.vmem [shape: f32[1,256], index: 12, kind: input, shape index: {}]
  %s13 = inlined_call_operand.vmem [shape: f32[1,256], index: 13, kind: input, shape index: {}]
  %s14 = inlined_call_operand.vmem [shape: f32[16,256], index: 14, kind: output, shape index: {}]
  %s15 = sld [smem:[#allocation0]]
  $region135: #{stnkd_forward.1} parent=0
    _
  %s17 = ssub.s32 1, %s15
  %s18 = scalar_select 0, %s17, %s15
  $region1: #{stnkd_forward.1} parent=0
    #allocation3 [shape = 'u8[1048576]{0}', space=vmem, size = 0x100000, scoped, tag = 'input window, operand 0']
    loop: start=0, step=1, limit=6
    $region2: #{stnkd_forward.1} parent=1 // loop_pre_header
      _
    $region3: #{stnkd_forward.1} parent=1 // loop_header
      %s20 = sphi 0, %s24
      %p21 = scmp.ge.s32.totalorder %s20, 6
      %s27 = sphi 0, %s39
      %s28 = sphi 0, %s35
      %s29 = sphi 0, %s27
      %s30 = sphi 0, %s28
      %s31 = sphi 0, %s29
      %s32 = sphi 0, %s30
      %s44 = sphi 0, %s46
      %s47 = sphi 0, %s44
      %s48 = sphi 0, %s47
      %s64 = sphi 0, %s48
      %s68 = sphi 0, %s68
      %s70 = sphi 0, %s68
      %s71 = sphi 0, %s70
      %s85 = sphi 0, %s71
      %s89 = sphi 0, %s89
      %s91 = sphi 0, %s89
      %s92 = sphi 0, %s91
      %s106 = sphi 0, %s92
      %s110 = sphi 0, %s110
      %s112 = sphi 0, %s110
      %s113 = sphi 0, %s112
      %s127 = sphi 0, %s113
      %s131 = sphi 0, %s131
      %s133 = sphi 0, %s131
      %s134 = sphi 0, %s133
      %s148 = sphi 0, %s134
      %s152 = sphi 0, %s152
      %s154 = sphi 0, %s152
      %s155 = sphi 0, %s154
      %s169 = sphi 0, %s155
      %s173 = sphi 0, %s173
      %s175 = sphi 0, %s173
      %s176 = sphi 0, %s175
      %s190 = sphi 0, %s176
      %s194 = sphi 0, %s194
      %s196 = sphi 0, %s194
      %s197 = sphi 0, %s196
      %s211 = sphi 0, %s197
      %s215 = sphi 0, %s215
      %s217 = sphi 0, %s215
      %s218 = sphi 0, %s217
      %s232 = sphi 0, %s218
      %s236 = sphi 0, %s236
      %s238 = sphi 0, %s236
      %s239 = sphi 0, %s238
      %s253 = sphi 0, %s239
      %s257 = sphi 0, %s257
      %s259 = sphi 0, %s257
      %s260 = sphi 0, %s259
      %s274 = sphi 0, %s260
      %s278 = sphi 0, %s278
      %s280 = sphi 0, %s278
      %s281 = sphi 0, %s280
      %s295 = sphi 0, %s281
      %s299 = sphi 0, %s299
      %s301 = sphi 0, %s299
      %s302 = sphi 0, %s301
      %s316 = sphi 0, %s302
      %s320 = sphi 0, %s320
      %s322 = sphi 0, %s320
      %s323 = sphi 0, %s322
      %s337 = sphi 0, %s323
      %s343 = sphi 0, %s345
      %s346 = sphi 0, %s343
      %s347 = sphi 0, %s346
      %s363 = sphi 0, %s347
    $region4: #{stnkd_forward.1} parent=1 // loop_header_branch
      %23 = sbr.rel (%p21) target = $region8
    $region5: #{stnkd_forward.1} parent=1 // loop_body
      %s25 = ssub.s32 %s20, 1
      %s26 = ssub.s32 %s20, 2
      %s33 = sadd.s32 1, %s28
      %p34 = scmp.ge.s32.totalorder %s33, 2
      %s35 = scalar_select %p34, 0, %s33
      %s36 = sadd.s32 1, %s27
      %s37 = scalar_select %p34, %s36, %s27
      %p38 = scmp.ge.s32.totalorder %s37, 2
      %s39 = scalar_select %p38, 0, %s37
      %s40 = ssub.s32 %s27, %s39
      %s41 = ssub.s32 %s28, %s35
      %s42 = sor.u32 %s40, %s41
      %p43 = scmp.eq.s32.totalorder %s42, 0
      %s45 = sadd.s32 %s44, 1
      %s46 = scalar_select %p43, %s44, %s45
      %p49 = pneg %p43
      %p50 = scmp.eq.s32.totalorder %s20, 3
      %p51 = por %p49, %p50
      %p52 = scmp.ne.s32.totalorder %s44, %s47
      %p53 = scmp.eq.s32.totalorder %s20, 0
      %p54 = por %p52, %p53
      %p55 = scmp.ne.s32.totalorder %s44, %s47
      %p56 = scmp.eq.s32.totalorder %s25, 3
      %p57 = por %p55, %p56
      %p58 = scmp.ne.s32.totalorder %s47, %s48
      %p59 = scmp.eq.s32.totalorder %s25, 0
      %p60 = por %p58, %p59
      %p61 = scmp.ne.s32.totalorder %s47, %s48
      %p62 = scmp.eq.s32.totalorder %s26, 3
      %p63 = por %p61, %p62
      %p65 = scmp.ne.s32.totalorder %s48, %s64
      %p66 = scmp.eq.s32.totalorder %s26, 0
      %p67 = por %p65, %p66
      %s69 = sadd.s32 %s68, 1
      %p72 = scmp.eq.s32.totalorder %s20, 3
      %p73 = scmp.ne.s32.totalorder %s68, %s70
      %p74 = scmp.eq.s32.totalorder %s20, 0
      %p75 = por %p73, %p74
      %p76 = scmp.ne.s32.totalorder %s68, %s70
      %p77 = scmp.eq.s32.totalorder %s25, 3
      %p78 = por %p76, %p77
      %p79 = scmp.ne.s32.totalorder %s70, %s71
      %p80 = scmp.eq.s32.totalorder %s25, 0
      %p81 = por %p79, %p80
      %p82 = scmp.ne.s32.totalorder %s70, %s71
      %p83 = scmp.eq.s32.totalorder %s26, 3
      %p84 = por %p82, %p83
      %p86 = scmp.ne.s32.totalorder %s71, %s85
      %p87 = scmp.eq.s32.totalorder %s26, 0
      %p88 = por %p86, %p87
      %s90 = sadd.s32 %s89, 1
      %p93 = scmp.eq.s32.totalorder %s20, 3
      %p94 = scmp.ne.s32.totalorder %s89, %s91
      %p95 = scmp.eq.s32.totalorder %s20, 0
      %p96 = por %p94, %p95
      %p97 = scmp.ne.s32.totalorder %s89, %s91
      %p98 = scmp.eq.s32.totalorder %s25, 3
      %p99 = por %p97, %p98
      %p100 = scmp.ne.s32.totalorder %s91, %s92
      %p101 = scmp.eq.s32.totalorder %s25, 0
      %p102 = por %p100, %p101
      %p103 = scmp.ne.s32.totalorder %s91, %s92
      %p104 = scmp.eq.s32.totalorder %s26, 3
      %p105 = por %p103, %p104
      %p107 = scmp.ne.s32.totalorder %s92, %s106
      %p108 = scmp.eq.s32.totalorder %s26, 0
      %p109 = por %p107, %p108
      %s111 = sadd.s32 %s110, 1
      %p114 = scmp.eq.s32.totalorder %s20, 3
      %p115 = scmp.ne.s32.totalorder %s110, %s112
      %p116 = scmp.eq.s32.totalorder %s20, 0
      %p117 = por %p115, %p116
      %p118 = scmp.ne.s32.totalorder %s110, %s112
      %p119 = scmp.eq.s32.totalorder %s25, 3
      %p120 = por %p118, %p119
      %p121 = scmp.ne.s32.totalorder %s112, %s113
      %p122 = scmp.eq.s32.totalorder %s25, 0
      %p123 = por %p121, %p122
      %p124 = scmp.ne.s32.totalorder %s112, %s113
      %p125 = scmp.eq.s32.totalorder %s26, 3
      %p126 = por %p124, %p125
      %p128 = scmp.ne.s32.totalorder %s113, %s127
      %p129 = scmp.eq.s32.totalorder %s26, 0
      %p130 = por %p128, %p129
      %s132 = sadd.s32 %s131, 1
      %p135 = scmp.eq.s32.totalorder %s20, 3
      %p136 = scmp.ne.s32.totalorder %s131, %s133
      %p137 = scmp.eq.s32.totalorder %s20, 0
      %p138 = por %p136, %p137
      %p139 = scmp.ne.s32.totalorder %s131, %s133
      %p140 = scmp.eq.s32.totalorder %s25, 3
      %p141 = por %p139, %p140
      %p142 = scmp.ne.s32.totalorder %s133, %s134
      %p143 = scmp.eq.s32.totalorder %s25, 0
      %p144 = por %p142, %p143
      %p145 = scmp.ne.s32.totalorder %s133, %s134
      %p146 = scmp.eq.s32.totalorder %s26, 3
      %p147 = por %p145, %p146
      %p149 = scmp.ne.s32.totalorder %s134, %s148
      %p150 = scmp.eq.s32.totalorder %s26, 0
      %p151 = por %p149, %p150
      %s153 = sadd.s32 %s152, 1
      %p156 = scmp.eq.s32.totalorder %s20, 3
      %p157 = scmp.ne.s32.totalorder %s152, %s154
      %p158 = scmp.eq.s32.totalorder %s20, 0
      %p159 = por %p157, %p158
      %p160 = scmp.ne.s32.totalorder %s152, %s154
      %p161 = scmp.eq.s32.totalorder %s25, 3
      %p162 = por %p160, %p161
      %p163 = scmp.ne.s32.totalorder %s154, %s155
      %p164 = scmp.eq.s32.totalorder %s25, 0
      %p165 = por %p163, %p164
      %p166 = scmp.ne.s32.totalorder %s154, %s155
      %p167 = scmp.eq.s32.totalorder %s26, 3
      %p168 = por %p166, %p167
      %p170 = scmp.ne.s32.totalorder %s155, %s169
      %p171 = scmp.eq.s32.totalorder %s26, 0
      %p172 = por %p170, %p171
      %s174 = sadd.s32 %s173, 1
      %p177 = scmp.eq.s32.totalorder %s20, 3
      %p178 = scmp.ne.s32.totalorder %s173, %s175
      %p179 = scmp.eq.s32.totalorder %s20, 0
      %p180 = por %p178, %p179
      %p181 = scmp.ne.s32.totalorder %s173, %s175
      %p182 = scmp.eq.s32.totalorder %s25, 3
      %p183 = por %p181, %p182
      %p184 = scmp.ne.s32.totalorder %s175, %s176
      %p185 = scmp.eq.s32.totalorder %s25, 0
      %p186 = por %p184, %p185
      %p187 = scmp.ne.s32.totalorder %s175, %s176
      %p188 = scmp.eq.s32.totalorder %s26, 3
      %p189 = por %p187, %p188
      %p191 = scmp.ne.s32.totalorder %s176, %s190
      %p192 = scmp.eq.s32.totalorder %s26, 0
      %p193 = por %p191, %p192
      %s195 = sadd.s32 %s194, 1
      %p198 = scmp.eq.s32.totalorder %s20, 3
      %p199 = scmp.ne.s32.totalorder %s194, %s196
      %p200 = scmp.eq.s32.totalorder %s20, 0
      %p201 = por %p199, %p200
      %p202 = scmp.ne.s32.totalorder %s194, %s196
      %p203 = scmp.eq.s32.totalorder %s25, 3
      %p204 = por %p202, %p203
      %p205 = scmp.ne.s32.totalorder %s196, %s197
      %p206 = scmp.eq.s32.totalorder %s25, 0
      %p207 = por %p205, %p206
      %p208 = scmp.ne.s32.totalorder %s196, %s197
      %p209 = scmp.eq.s32.totalorder %s26, 3
      %p210 = por %p208, %p209
      %p212 = scmp.ne.s32.totalorder %s197, %s211
      %p213 = scmp.eq.s32.totalorder %s26, 0
      %p214 = por %p212, %p213
      %s216 = sadd.s32 %s215, 1
      %p219 = scmp.eq.s32.totalorder %s20, 3
      %p220 = scmp.ne.s32.totalorder %s215, %s217
      %p221 = scmp.eq.s32.totalorder %s20, 0
      %p222 = por %p220, %p221
      %p223 = scmp.ne.s32.totalorder %s215, %s217
      %p224 = scmp.eq.s32.totalorder %s25, 3
      %p225 = por %p223, %p224
      %p226 = scmp.ne.s32.totalorder %s217, %s218
      %p227 = scmp.eq.s32.totalorder %s25, 0
      %p228 = por %p226, %p227
      %p229 = scmp.ne.s32.totalorder %s217, %s218
      %p230 = scmp.eq.s32.totalorder %s26, 3
      %p231 = por %p229, %p230
      %p233 = scmp.ne.s32.totalorder %s218, %s232
      %p234 = scmp.eq.s32.totalorder %s26, 0
      %p235 = por %p233, %p234
      %s237 = sadd.s32 %s236, 1
      %p240 = scmp.eq.s32.totalorder %s20, 3
      %p241 = scmp.ne.s32.totalorder %s236, %s238
      %p242 = scmp.eq.s32.totalorder %s20, 0
      %p243 = por %p241, %p242
      %p244 = scmp.ne.s32.totalorder %s236, %s238
      %p245 = scmp.eq.s32.totalorder %s25, 3
      %p246 = por %p244, %p245
      %p247 = scmp.ne.s32.totalorder %s238, %s239
      %p248 = scmp.eq.s32.totalorder %s25, 0
      %p249 = por %p247, %p248
      %p250 = scmp.ne.s32.totalorder %s238, %s239
      %p251 = scmp.eq.s32.totalorder %s26, 3
      %p252 = por %p250, %p251
      %p254 = scmp.ne.s32.totalorder %s239, %s253
      %p255 = scmp.eq.s32.totalorder %s26, 0
      %p256 = por %p254, %p255
      %s258 = sadd.s32 %s257, 1
      %p261 = scmp.eq.s32.totalorder %s20, 3
      %p262 = scmp.ne.s32.totalorder %s257, %s259
      %p263 = scmp.eq.s32.totalorder %s20, 0
      %p264 = por %p262, %p263
      %p265 = scmp.ne.s32.totalorder %s257, %s259
      %p266 = scmp.eq.s32.totalorder %s25, 3
      %p267 = por %p265, %p266
      %p268 = scmp.ne.s32.totalorder %s259, %s260
      %p269 = scmp.eq.s32.totalorder %s25, 0
      %p270 = por %p268, %p269
      %p271 = scmp.ne.s32.totalorder %s259, %s260
      %p272 = scmp.eq.s32.totalorder %s26, 3
      %p273 = por %p271, %p272
      %p275 = scmp.ne.s32.totalorder %s260, %s274
      %p276 = scmp.eq.s32.totalorder %s26, 0
      %p277 = por %p275, %p276
      %s279 = sadd.s32 %s278, 1
      %p282 = scmp.eq.s32.totalorder %s20, 3
      %p283 = scmp.ne.s32.totalorder %s278, %s280
      %p284 = scmp.eq.s32.totalorder %s20, 0
      %p285 = por %p283, %p284
      %p286 = scmp.ne.s32.totalorder %s278, %s280
      %p287 = scmp.eq.s32.totalorder %s25, 3
      %p288 = por %p286, %p287
      %p289 = scmp.ne.s32.totalorder %s280, %s281
      %p290 = scmp.eq.s32.totalorder %s25, 0
      %p291 = por %p289, %p290
      %p292 = scmp.ne.s32.totalorder %s280, %s281
      %p293 = scmp.eq.s32.totalorder %s26, 3
      %p294 = por %p292, %p293
      %p296 = scmp.ne.s32.totalorder %s281, %s295
      %p297 = scmp.eq.s32.totalorder %s26, 0
      %p298 = por %p296, %p297
      %s300 = sadd.s32 %s299, 1
      %p303 = scmp.eq.s32.totalorder %s20, 3
      %p304 = scmp.ne.s32.totalorder %s299, %s301
      %p305 = scmp.eq.s32.totalorder %s20, 0
      %p306 = por %p304, %p305
      %p307 = scmp.ne.s32.totalorder %s299, %s301
      %p308 = scmp.eq.s32.totalorder %s25, 3
      %p309 = por %p307, %p308
      %p310 = scmp.ne.s32.totalorder %s301, %s302
      %p311 = scmp.eq.s32.totalorder %s25, 0
      %p312 = por %p310, %p311
      %p313 = scmp.ne.s32.totalorder %s301, %s302
      %p314 = scmp.eq.s32.totalorder %s26, 3
      %p315 = por %p313, %p314
      %p317 = scmp.ne.s32.totalorder %s302, %s316
      %p318 = scmp.eq.s32.totalorder %s26, 0
      %p319 = por %p317, %p318
      %s321 = sadd.s32 %s320, 1
      %p324 = scmp.eq.s32.totalorder %s20, 3
      %p325 = scmp.ne.s32.totalorder %s320, %s322
      %p326 = scmp.eq.s32.totalorder %s20, 0
      %p327 = por %p325, %p326
      %p328 = scmp.ne.s32.totalorder %s320, %s322
      %p329 = scmp.eq.s32.totalorder %s25, 3
      %p330 = por %p328, %p329
      %p331 = scmp.ne.s32.totalorder %s322, %s323
      %p332 = scmp.eq.s32.totalorder %s25, 0
      %p333 = por %p331, %p332
      %p334 = scmp.ne.s32.totalorder %s322, %s323
      %p335 = scmp.eq.s32.totalorder %s26, 3
      %p336 = por %p334, %p335
      %p338 = scmp.ne.s32.totalorder %s323, %s337
      %p339 = scmp.eq.s32.totalorder %s26, 0
      %p340 = por %p338, %p339
      %s341 = ssub.s32 %s27, %s39
      %p342 = scmp.eq.s32.totalorder %s341, 0
      %s344 = sadd.s32 %s343, 1
      %s345 = scalar_select %p342, %s343, %s344
      %p348 = pneg %p342
      %p349 = scmp.eq.s32.totalorder %s20, 3
      %p350 = por %p348, %p349
      %p351 = scmp.ne.s32.totalorder %s343, %s346
      %p352 = scmp.eq.s32.totalorder %s20, 0
      %p353 = por %p351, %p352
      %p354 = scmp.ne.s32.totalorder %s343, %s346
      %p355 = scmp.eq.s32.totalorder %s25, 3
      %p356 = por %p354, %p355
      %p357 = scmp.ne.s32.totalorder %s346, %s347
      %p358 = scmp.eq.s32.totalorder %s25, 0
      %p359 = por %p357, %p358
      %p360 = scmp.ne.s32.totalorder %s346, %s347
      %p361 = scmp.eq.s32.totalorder %s26, 3
      %p362 = por %p360, %p361
      %p364 = scmp.ne.s32.totalorder %s347, %s363
      %p365 = scmp.eq.s32.totalorder %s26, 0
      %p366 = por %p364, %p365
      %p367 = scmp.le.s32.totalorder 1, %s20
      %p368 = scmp.lt.s32.totalorder %s20, 5
      %p369 = pnand %p367, %p368
      %p370 = pneg %p369
      // Predicated region
      $region9: #{stnkd_forward.1} parent=5 // pred_check
        _
      $region10: #{stnkd_forward.1} parent=5 // pred_check_branch
        %372 = sbr.rel (%p369) target = $region12
      $region11: #{stnkd_forward.1} parent=5 // pred_region
        %s373 = ssub.s32 %s20, 1
        // Predicated region
        $region13: #{stnkd_forward.1} parent=11 // pred_check
          %p374 = pneg %p81
        $region14: #{stnkd_forward.1} parent=11 // pred_check_branch
          %376 = sbr.rel (%p374) target = $region16
        $region15: #{stnkd_forward.1} parent=11 // pred_region
          _
        $region16: #{stnkd_forward.1} parent=11 // pred_fallthru
          _
        // Predicated region
        $region17: #{stnkd_forward.1} parent=11 // pred_check
          %p377 = pneg %p102
        $region18: #{stnkd_forward.1} parent=11 // pred_check_branch
          %379 = sbr.rel (%p377) target = $region20
        $region19: #{stnkd_forward.1} parent=11 // pred_region
          _
        $region20: #{stnkd_forward.1} parent=11 // pred_fallthru
          _
        // Predicated region
        $region21: #{stnkd_forward.1} parent=11 // pred_check
          %p380 = pneg %p123
        $region22: #{stnkd_forward.1} parent=11 // pred_check_branch
          %382 = sbr.rel (%p380) target = $region24
        $region23: #{stnkd_forward.1} parent=11 // pred_region
          _
        $region24: #{stnkd_forward.1} parent=11 // pred_fallthru
          _
        // Predicated region
        $region25: #{stnkd_forward.1} parent=11 // pred_check
          %p383 = pneg %p144
        $region26: #{stnkd_forward.1} parent=11 // pred_check_branch
          %385 = sbr.rel (%p383) target = $region28
        $region27: #{stnkd_forward.1} parent=11 // pred_region
          _
        $region28: #{stnkd_forward.1} parent=11 // pred_fallthru
          _
        // Predicated region
        $region29: #{stnkd_forward.1} parent=11 // pred_check
          %p386 = pneg %p165
        $region30: #{stnkd_forward.1} parent=11 // pred_check_branch
          %388 = sbr.rel (%p386) target = $region32
        $region31: #{stnkd_forward.1} parent=11 // pred_region
          _
        $region32: #{stnkd_forward.1} parent=11 // pred_fallthru
          _
        // Predicated region
        $region33: #{stnkd_forward.1} parent=11 // pred_check
          %p389 = pneg %p186
        $region34: #{stnkd_forward.1} parent=11 // pred_check_branch
          %391 = sbr.rel (%p389) target = $region36
        $region35: #{stnkd_forward.1} parent=11 // pred_region
          _
        $region36: #{stnkd_forward.1} parent=11 // pred_fallthru
          _
        // Predicated region
        $region37: #{stnkd_forward.1} parent=11 // pred_check
          %p392 = pneg %p207
        $region38: #{stnkd_forward.1} parent=11 // pred_check_branch
          %394 = sbr.rel (%p392) target = $region40
        $region39: #{stnkd_forward.1} parent=11 // pred_region
          _
        $region40: #{stnkd_forward.1} parent=11 // pred_fallthru
          _
        // Predicated region
        $region41: #{stnkd_forward.1} parent=11 // pred_check
          %p395 = pneg %p228
        $region42: #{stnkd_forward.1} parent=11 // pred_check_branch
          %397 = sbr.rel (%p395) target = $region44
        $region43: #{stnkd_forward.1} parent=11 // pred_region
          _
        $region44: #{stnkd_forward.1} parent=11 // pred_fallthru
          _
        // Predicated region
        $region45: #{stnkd_forward.1} parent=11 // pred_check
          %p398 = pneg %p249
        $region46: #{stnkd_forward.1} parent=11 // pred_check_branch
          %400 = sbr.rel (%p398) target = $region48
        $region47: #{stnkd_forward.1} parent=11 // pred_region
          _
        $region48: #{stnkd_forward.1} parent=11 // pred_fallthru
          _
        // Predicated region
        $region49: #{stnkd_forward.1} parent=11 // pred_check
          %p401 = pneg %p270
        $region50: #{stnkd_forward.1} parent=11 // pred_check_branch
          %403 = sbr.rel (%p401) target = $region52
        $region51: #{stnkd_forward.1} parent=11 // pred_region
          _
        $region52: #{stnkd_forward.1} parent=11 // pred_fallthru
          _
        // Predicated region
        $region53: #{stnkd_forward.1} parent=11 // pred_check
          %p404 = pneg %p291
        $region54: #{stnkd_forward.1} parent=11 // pred_check_branch
          %406 = sbr.rel (%p404) target = $region56
        $region55: #{stnkd_forward.1} parent=11 // pred_region
          _
        $region56: #{stnkd_forward.1} parent=11 // pred_fallthru
          _
        // Predicated region
        $region57: #{stnkd_forward.1} parent=11 // pred_check
          %p407 = pneg %p312
        $region58: #{stnkd_forward.1} parent=11 // pred_check_branch
          %409 = sbr.rel (%p407) target = $region60
        $region59: #{stnkd_forward.1} parent=11 // pred_region
          _
        $region60: #{stnkd_forward.1} parent=11 // pred_fallthru
          _
        // Predicated region
        $region61: #{stnkd_forward.1} parent=11 // pred_check
          %p410 = pneg %p333
        $region62: #{stnkd_forward.1} parent=11 // pred_check_branch
          %412 = sbr.rel (%p410) target = $region64
        $region63: #{stnkd_forward.1} parent=11 // pred_region
          _
        $region64: #{stnkd_forward.1} parent=11 // pred_fallthru
          _
      $region12: #{stnkd_forward.1} parent=5 // pred_fallthru
        _
      %p413 = scmp.lt.s32.totalorder %s20, 4
      // Predicated region
      $region65: #{stnkd_forward.1} parent=5 // pred_check
        %p414 = pneg %p413
      $region66: #{stnkd_forward.1} parent=5 // pred_check_branch
        %416 = sbr.rel (%p414) target = $region68
      $region67: #{stnkd_forward.1} parent=5 // pred_region
        // Predicated region
        $region69: #{stnkd_forward.1} parent=67 // pred_check
          %p417 = pneg %p54
        $region70: #{stnkd_forward.1} parent=67 // pred_check_branch
          %419 = sbr.rel (%p417) target = $region72
        $region71: #{stnkd_forward.1} parent=67 // pred_region
          %s420 = sand.u32 %s44, 1
          %s421 = sand.u32 %s44, 1
          %s422 = smul.addr %s421, 1024
          %s423 = scalar_lea.vmem [#allocation3], %s422
          %s424 = smul.u32 8, %s27
          %s425 = smul.u32 16, %s28
          %s426 = smul.addr %s424, 32
          %s427 = sadd.s32 %s425, %s426
          %s428 = smul.addr %s427, 8
          %s429 = scalar_lea.vmem %s0, %s428
          // Predicated region
          $region73: #{stnkd_forward.1} parent=71 // pred_check
            _
          $region74: #{stnkd_forward.1} parent=71 // pred_check_branch
            %431 = sbr.rel (0) target = $region76
          $region75: #{stnkd_forward.1} parent=71 // pred_region
            // Predicated region
            $region77: #{stnkd_forward.1} parent=75 // pred_check
              _
            $region78: #{stnkd_forward.1} parent=75 // pred_check_branch
              %433 = sbr.rel (0) target = $region80
            $region79: #{stnkd_forward.1} parent=75 // pred_region
              // Predicated region
              $region92: #{stnkd_forward.1} parent=79 // pred_check
                _
              $region93: #{stnkd_forward.1} parent=79 // pred_check_branch
                %703 = sbr.rel (0) target = $region95
              $region94: #{stnkd_forward.1} parent=79 // pred_region
                loop: start=0, step=1, limit=1
                $region96: #{stnkd_forward.1} parent=94 // loop_pre_header
                  _
                $region97: #{stnkd_forward.1} parent=94 // loop_header
                  %s705 = sphi 0, %s709
                  %p706 = scmp.ge.s32.totalorder %s705, 1
                  %s710 = sphi %s429, %s429
                  %s711 = sphi %s423, %s423
                $region98: #{stnkd_forward.1} parent=94 // loop_header_branch
                  %708 = sbr.rel (%p706) target = $region102
                $region99: #{stnkd_forward.1} parent=94 // loop_body
                  %v712 = vld [vmem:[%s710] sm:$0xff]
                  %713 = vst [vmem:[%s711] sm:$0xff] %v712
                  %v714 = vld [vmem:[%s710 + $0x8] sm:$0xff]
                  %715 = vst [vmem:[%s711 + $0x8] sm:$0xff] %v714
                  %v716 = vld [vmem:[%s710 + $0x10] sm:$0xff]
                  %717 = vst [vmem:[%s711 + $0x10] sm:$0xff] %v716
                  %v718 = vld [vmem:[%s710 + $0x18] sm:$0xff]
                  %719 = vst [vmem:[%s711 + $0x18] sm:$0xff] %v718
                  %v720 = vld [vmem:[%s710 + $0x20] sm:$0xff]
                  %721 = vst [vmem:[%s711 + $0x20] sm:$0xff] %v720
                  %v722 = vld [vmem:[%s710 + $0x28] sm:$0xff]
                  %723 = vst [vmem:[%s711 + $0x28] sm:$0xff] %v722
                  %v724 = vld [vmem:[%s710 + $0x30] sm:$0xff]
                  %725 = vst [vmem:[%s711 + $0x30] sm:$0xff] %v724
                  %v726 = vld [vmem:[%s710 + $0x38] sm:$0xff]
                  %727 = vst [vmem:[%s711 + $0x38] sm:$0xff] %v726
                  %v728 = vld [vmem:[%s710 + $0x40] sm:$0xff]
                  %729 = vst [vmem:[%s711 + $0x40] sm:$0xff] %v728
                  %v730 = vld [vmem:[%s710 + $0x48] sm:$0xff]
                  %731 = vst [vmem:[%s711 + $0x48] sm:$0xff] %v730
                  %v732 = vld [vmem:[%s710 + $0x50] sm:$0xff]
                  %733 = vst [vmem:[%s711 + $0x50] sm:$0xff] %v732
                  %v734 = vld [vmem:[%s710 + $0x58] sm:$0xff]
                  %735 = vst [vmem:[%s711 + $0x58] sm:$0xff] %v734
                  %v736 = vld [vmem:[%s710 + $0x60] sm:$0xff]
                  %737 = vst [vmem:[%s711 + $0x60] sm:$0xff] %v736
                  %v738 = vld [vmem:[%s710 + $0x68] sm:$0xff]
                  %739 = vst [vmem:[%s711 + $0x68] sm:$0xff] %v738
                  %v740 = vld [vmem:[%s710 + $0x70] sm:$0xff]
                  %741 = vst [vmem:[%s711 + $0x70] sm:$0xff] %v740
                  %v742 = vld [vmem:[%s710 + $0x78] sm:$0xff]
                  %743 = vst [vmem:[%s711 + $0x78] sm:$0xff] %v742
                  %v744 = vld [vmem:[%s710 + $0x100] sm:$0xff]
                  %745 = vst [vmem:[%s711 + $0x80] sm:$0xff] %v744
                  %v746 = vld [vmem:[%s710 + $0x108] sm:$0xff]
                  %747 = vst [vmem:[%s711 + $0x88] sm:$0xff] %v746
                  %v748 = vld [vmem:[%s710 + $0x110] sm:$0xff]
                  %749 = vst [vmem:[%s711 + $0x90] sm:$0xff] %v748
                  %v750 = vld [vmem:[%s710 + $0x118] sm:$0xff]
                  %751 = vst [vmem:[%s711 + $0x98] sm:$0xff] %v750
                  %v752 = vld [vmem:[%s710 + $0x120] sm:$0xff]
                  %753 = vst [vmem:[%s711 + $0xa0] sm:$0xff] %v752
                  %v754 = vld [vmem:[%s710 + $0x128] sm:$0xff]
                  %755 = vst [vmem:[%s711 + $0xa8] sm:$0xff] %v754
                  %v756 = vld [vmem:[%s710 + $0x130] sm:$0xff]
                  %757 = vst [vmem:[%s711 + $0xb0] sm:$0xff] %v756
                  %v758 = vld [vmem:[%s710 + $0x138] sm:$0xff]
                  %759 = vst [vmem:[%s711 + $0xb8] sm:$0xff] %v758
                  %v760 = vld [vmem:[%s710 + $0x140] sm:$0xff]
                  %761 = vst [vmem:[%s711 + $0xc0] sm:$0xff] %v760
                  %v762 = vld [vmem:[%s710 + $0x148] sm:$0xff]
                  %763 = vst [vmem:[%s711 + $0xc8] sm:$0xff] %v762
                  %v764 = vld [vmem:[%s710 + $0x150] sm:$0xff]
                  %765 = vst [vmem:[%s711 + $0xd0] sm:$0xff] %v764
                  %v766 = vld [vmem:[%s710 + $0x158] sm:$0xff]
                  %767 = vst [vmem:[%s711 + $0xd8] sm:$0xff] %v766
                  %v768 = vld [vmem:[%s710 + $0x160] sm:$0xff]
                  %769 = vst [vmem:[%s711 + $0xe0] sm:$0xff] %v768
                  %v770 = vld [vmem:[%s710 + $0x168] sm:$0xff]
                  %771 = vst [vmem:[%s711 + $0xe8] sm:$0xff] %v770
                  %v772 = vld [vmem:[%s710 + $0x170] sm:$0xff]
                  %773 = vst [vmem:[%s711 + $0xf0] sm:$0xff] %v772
                  %v774 = vld [vmem:[%s710 + $0x178] sm:$0xff]
                  %775 = vst [vmem:[%s711 + $0xf8] sm:$0xff] %v774
                  %v776 = vld [vmem:[%s710 + $0x200] sm:$0xff]
                  %777 = vst [vmem:[%s711 + $0x100] sm:$0xff] %v776
                  %v778 = vld [vmem:[%s710 + $0x208] sm:$0xff]
                  %779 = vst [vmem:[%s711 + $0x108] sm:$0xff] %v778
                  %v780 = vld [vmem:[%s710 + $0x210] sm:$0xff]
                  %781 = vst [vmem:[%s711 + $0x110] sm:$0xff] %v780
                  %v782 = vld [vmem:[%s710 + $0x218] sm:$0xff]
                  %783 = vst [vmem:[%s711 + $0x118] sm:$0xff] %v782
                  %v784 = vld [vmem:[%s710 + $0x220] sm:$0xff]
                  %785 = vst [vmem:[%s711 + $0x120] sm:$0xff] %v784
                  %v786 = vld [vmem:[%s710 + $0x228] sm:$0xff]
                  %787 = vst [vmem:[%s711 + $0x128] sm:$0xff] %v786
                  %v788 = vld [vmem:[%s710 + $0x230] sm:$0xff]
                  %789 = vst [vmem:[%s711 + $0x130] sm:$0xff] %v788
                  %v790 = vld [vmem:[%s710 + $0x238] sm:$0xff]
                  %791 = vst [vmem:[%s711 + $0x138] sm:$0xff] %v790
                  %v792 = vld [vmem:[%s710 + $0x240] sm:$0xff]
                  %793 = vst [vmem:[%s711 + $0x140] sm:$0xff] %v792
                  %v794 = vld [vmem:[%s710 + $0x248] sm:$0xff]
                  %795 = vst [vmem:[%s711 + $0x148] sm:$0xff] %v794
                  %v796 = vld [vmem:[%s710 + $0x250] sm:$0xff]
                  %797 = vst [vmem:[%s711 + $0x150] sm:$0xff] %v796
                  %v798 = vld [vmem:[%s710 + $0x258] sm:$0xff]
                  %799 = vst [vmem:[%s711 + $0x158] sm:$0xff] %v798
                  %v800 = vld [vmem:[%s710 + $0x260] sm:$0xff]
                  %801 = vst [vmem:[%s711 + $0x160] sm:$0xff] %v800
                  %v802 = vld [vmem:[%s710 + $0x268] sm:$0xff]
                  %803 = vst [vmem:[%s711 + $0x168] sm:$0xff] %v802
                  %v804 = vld [vmem:[%s710 + $0x270] sm:$0xff]
                  %805 = vst [vmem:[%s711 + $0x170] sm:$0xff] %v804
                  %v806 = vld [vmem:[%s710 + $0x278] sm:$0xff]
                  %807 = vst [vmem:[%s711 + $0x178] sm:$0xff] %v806
                  %v808 = vld [vmem:[%s710 + $0x300] sm:$0xff]
                  %809 = vst [vmem:[%s711 + $0x180] sm:$0xff] %v808
                  %v810 = vld [vmem:[%s710 + $0x308] sm:$0xff]
                  %811 = vst [vmem:[%s711 + $0x188] sm:$0xff] %v810
                  %v812 = vld [vmem:[%s710 + $0x310] sm:$0xff]
                  %813 = vst [vmem:[%s711 + $0x190] sm:$0xff] %v812
                  %v814 = vld [vmem:[%s710 + $0x318] sm:$0xff]
                  %815 = vst [vmem:[%s711 + $0x198] sm:$0xff] %v814
                  %v816 = vld [vmem:[%s710 + $0x320] sm:$0xff]
                  %817 = vst [vmem:[%s711 + $0x1a0] sm:$0xff] %v816
                  %v818 = vld [vmem:[%s710 + $0x328] sm:$0xff]
                  %819 = vst [vmem:[%s711 + $0x1a8] sm:$0xff] %v818
                  %v820 = vld [vmem:[%s710 + $0x330] sm:$0xff]
                  %821 = vst [vmem:[%s711 + $0x1b0] sm:$0xff] %v820
                  %v822 = vld [vmem:[%s710 + $0x338] sm:$0xff]
                  %823 = vst [vmem:[%s711 + $0x1b8] sm:$0xff] %v822
                  %v824 = vld [vmem:[%s710 + $0x340] sm:$0xff]
                  %825 = vst [vmem:[%s711 + $0x1c0] sm:$0xff] %v824
                  %v826 = vld [vmem:[%s710 + $0x348] sm:$0xff]
                  %827 = vst [vmem:[%s711 + $0x1c8] sm:$0xff] %v826
                  %v828 = vld [vmem:[%s710 + $0x350] sm:$0xff]
                  %829 = vst [vmem:[%s711 + $0x1d0] sm:$0xff] %v828
                  %v830 = vld [vmem:[%s710 + $0x358] sm:$0xff]
                  %831 = vst [vmem:[%s711 + $0x1d8] sm:$0xff] %v830
                  %v832 = vld [vmem:[%s710 + $0x360] sm:$0xff]
                  %833 = vst [vmem:[%s711 + $0x1e0] sm:$0xff] %v832
                  %v834 = vld [vmem:[%s710 + $0x368] sm:$0xff]
                  %835 = vst [vmem:[%s711 + $0x1e8] sm:$0xff] %v834
                  %v836 = vld [vmem:[%s710 + $0x370] sm:$0xff]
                  %837 = vst [vmem:[%s711 + $0x1f0] sm:$0xff] %v836
                  %v838 = vld [vmem:[%s710 + $0x378] sm:$0xff]
                  %839 = vst [vmem:[%s711 + $0x1f8] sm:$0xff] %v838
                  %v840 = vld [vmem:[%s710 + $0x400] sm:$0xff]
                  %841 = vst [vmem:[%s711 + $0x200] sm:$0xff] %v840
                  %v842 = vld [vmem:[%s710 + $0x408] sm:$0xff]
                  %843 = vst [vmem:[%s711 + $0x208] sm:$0xff] %v842
                  %v844 = vld [vmem:[%s710 + $0x410] sm:$0xff]
                  %845 = vst [vmem:[%s711 + $0x210] sm:$0xff] %v844
                  %v846 = vld [vmem:[%s710 + $0x418] sm:$0xff]
                  %847 = vst [vmem:[%s711 + $0x218] sm:$0xff] %v846
                  %v848 = vld [vmem:[%s710 + $0x420] sm:$0xff]
                  %849 = vst [vmem:[%s711 + $0x220] sm:$0xff] %v848
                  %v850 = vld [vmem:[%s710 + $0x428] sm:$0xff]
                  %851 = vst [vmem:[%s711 + $0x228] sm:$0xff] %v850
                  %v852 = vld [vmem:[%s710 + $0x430] sm:$0xff]
                  %853 = vst [vmem:[%s711 + $0x230] sm:$0xff] %v852
                  %v854 = vld [vmem:[%s710 + $0x438] sm:$0xff]
                  %855 = vst [vmem:[%s711 + $0x238] sm:$0xff] %v854
                  %v856 = vld [vmem:[%s710 + $0x440] sm:$0xff]
                  %857 = vst [vmem:[%s711 + $0x240] sm:$0xff] %v856
                  %v858 = vld [vmem:[%s710 + $0x448] sm:$0xff]
                  %859 = vst [vmem:[%s711 + $0x248] sm:$0xff] %v858
                  %v860 = vld [vmem:[%s710 + $0x450] sm:$0xff]
                  %861 = vst [vmem:[%s711 + $0x250] sm:$0xff] %v860
                  %v862 = vld [vmem:[%s710 + $0x458] sm:$0xff]
                  %863 = vst [vmem:[%s711 + $0x258] sm:$0xff] %v862
                  %v864 = vld [vmem:[%s710 + $0x460] sm:$0xff]
                  %865 = vst [vmem:[%s711 + $0x260] sm:$0xff] %v864
                  %v866 = vld [vmem:[%s710 + $0x468] sm:$0xff]
                  %867 = vst [vmem:[%s711 + $0x268] sm:$0xff] %v866
                  %v868 = vld [vmem:[%s710 + $0x470] sm:$0xff]
                  %869 = vst [vmem:[%s711 + $0x270] sm:$0xff] %v868
                  %v870 = vld [vmem:[%s710 + $0x478] sm:$0xff]
                  %871 = vst [vmem:[%s711 + $0x278] sm:$0xff] %v870
                  %v872 = vld [vmem:[%s710 + $0x500] sm:$0xff]
                  %873 = vst [vmem:[%s711 + $0x280] sm:$0xff] %v872
                  %v874 = vld [vmem:[%s710 + $0x508] sm:$0xff]
                  %875 = vst [vmem:[%s711 + $0x288] sm:$0xff] %v874
                  %v876 = vld [vmem:[%s710 + $0x510] sm:$0xff]
                  %877 = vst [vmem:[%s711 + $0x290] sm:$0xff] %v876
                  %v878 = vld [vmem:[%s710 + $0x518] sm:$0xff]
                  %879 = vst [vmem:[%s711 + $0x298] sm:$0xff] %v878
                  %v880 = vld [vmem:[%s710 + $0x520] sm:$0xff]
                  %881 = vst [vmem:[%s711 + $0x2a0] sm:$0xff] %v880
                  %v882 = vld [vmem:[%s710 + $0x528] sm:$0xff]
                  %883 = vst [vmem:[%s711 + $0x2a8] sm:$0xff] %v882
                  %v884 = vld [vmem:[%s710 + $0x530] sm:$0xff]
                  %885 = vst [vmem:[%s711 + $0x2b0] sm:$0xff] %v884
                  %v886 = vld [vmem:[%s710 + $0x538] sm:$0xff]
                  %887 = vst [vmem:[%s711 + $0x2b8] sm:$0xff] %v886
                  %v888 = vld [vmem:[%s710 + $0x540] sm:$0xff]
                  %889 = vst [vmem:[%s711 + $0x2c0] sm:$0xff] %v888
                  %v890 = vld [vmem:[%s710 + $0x548] sm:$0xff]
                  %891 = vst [vmem:[%s711 + $0x2c8] sm:$0xff] %v890
                  %v892 = vld [vmem:[%s710 + $0x550] sm:$0xff]
                  %893 = vst [vmem:[%s711 + $0x2d0] sm:$0xff] %v892
                  %v894 = vld [vmem:[%s710 + $0x558] sm:$0xff]
                  %895 = vst [vmem:[%s711 + $0x2d8] sm:$0xff] %v894
                  %v896 = vld [vmem:[%s710 + $0x560] sm:$0xff]
                  %897 = vst [vmem:[%s711 + $0x2e0] sm:$0xff] %v896
                  %v898 = vld [vmem:[%s710 + $0x568] sm:$0xff]
                  %899 = vst [vmem:[%s711 + $0x2e8] sm:$0xff] %v898
                  %v900 = vld [vmem:[%s710 + $0x570] sm:$0xff]
                  %901 = vst [vmem:[%s711 + $0x2f0] sm:$0xff] %v900
                  %v902 = vld [vmem:[%s710 + $0x578] sm:$0xff]
                  %903 = vst [vmem:[%s711 + $0x2f8] sm:$0xff] %v902
                  %v904 = vld [vmem:[%s710 + $0x600] sm:$0xff]
                  %905 = vst [vmem:[%s711 + $0x300] sm:$0xff] %v904
                  %v906 = vld [vmem:[%s710 + $0x608] sm:$0xff]
                  %907 = vst [vmem:[%s711 + $0x308] sm:$0xff] %v906
                  %v908 = vld [vmem:[%s710 + $0x610] sm:$0xff]
                  %909 = vst [vmem:[%s711 + $0x310] sm:$0xff] %v908
                  %v910 = vld [vmem:[%s710 + $0x618] sm:$0xff]
                  %911 = vst [vmem:[%s711 + $0x318] sm:$0xff] %v910
                  %v912 = vld [vmem:[%s710 + $0x620] sm:$0xff]
                  %913 = vst [vmem:[%s711 + $0x320] sm:$0xff] %v912
                  %v914 = vld [vmem:[%s710 + $0x628] sm:$0xff]
                  %915 = vst [vmem:[%s711 + $0x328] sm:$0xff] %v914
                  %v916 = vld [vmem:[%s710 + $0x630] sm:$0xff]
                  %917 = vst [vmem:[%s711 + $0x330] sm:$0xff] %v916
                  %v918 = vld [vmem:[%s710 + $0x638] sm:$0xff]
                  %919 = vst [vmem:[%s711 + $0x338] sm:$0xff] %v918
                  %v920 = vld [vmem:[%s710 + $0x640] sm:$0xff]
                  %921 = vst [vmem:[%s711 + $0x340] sm:$0xff] %v920
                  %v922 = vld [vmem:[%s710 + $0x648] sm:$0xff]
                  %923 = vst [vmem:[%s711 + $0x348] sm:$0xff] %v922
                  %v924 = vld [vmem:[%s710 + $0x650] sm:$0xff]
                  %925 = vst [vmem:[%s711 + $0x350] sm:$0xff] %v924
                  %v926 = vld [vmem:[%s710 + $0x658] sm:$0xff]
                  %927 = vst [vmem:[%s711 + $0x358] sm:$0xff] %v926
                  %v928 = vld [vmem:[%s710 + $0x660] sm:$0xff]
                  %929 = vst [vmem:[%s711 + $0x360] sm:$0xff] %v928
                  %v930 = vld [vmem:[%s710 + $0x668] sm:$0xff]
                  %931 = vst [vmem:[%s711 + $0x368] sm:$0xff] %v930
                  %v932 = vld [vmem:[%s710 + $0x670] sm:$0xff]
                  %933 = vst [vmem:[%s711 + $0x370] sm:$0xff] %v932
                  %v934 = vld [vmem:[%s710 + $0x678] sm:$0xff]
                  %935 = vst [vmem:[%s711 + $0x378] sm:$0xff] %v934
                  %v936 = vld [vmem:[%s710 + $0x700] sm:$0xff]
                  %937 = vst [vmem:[%s711 + $0x380] sm:$0xff] %v936
                  %v938 = vld [vmem:[%s710 + $0x708] sm:$0xff]
                  %939 = vst [vmem:[%s711 + $0x388] sm:$0xff] %v938
                  %v940 = vld [vmem:[%s710 + $0x710] sm:$0xff]
                  %941 = vst [vmem:[%s711 + $0x390] sm:$0xff] %v940
                  %v942 = vld [vmem:[%s710 + $0x718] sm:$0xff]
                  %943 = vst [vmem:[%s711 + $0x398] sm:$0xff] %v942
                  %v944 = vld [vmem:[%s710 + $0x720] sm:$0xff]
                  %945 = vst [vmem:[%s711 + $0x3a0] sm:$0xff] %v944
                  %v946 = vld [vmem:[%s710 + $0x728] sm:$0xff]
                  %947 = vst [vmem:[%s711 + $0x3a8] sm:$0xff] %v946
                  %v948 = vld [vmem:[%s710 + $0x730] sm:$0xff]
                  %949 = vst [vmem:[%s711 + $0x3b0] sm:$0xff] %v948
                  %v950 = vld [vmem:[%s710 + $0x738] sm:$0xff]
                  %951 = vst [vmem:[%s711 + $0x3b8] sm:$0xff] %v950
                  %v952 = vld [vmem:[%s710 + $0x740] sm:$0xff]
                  %953 = vst [vmem:[%s711 + $0x3c0] sm:$0xff] %v952
                  %v954 = vld [vmem:[%s710 + $0x748] sm:$0xff]
                  %955 = vst [vmem:[%s711 + $0x3c8] sm:$0xff] %v954
                  %v956 = vld [vmem:[%s710 + $0x750] sm:$0xff]
                  %957 = vst [vmem:[%s711 + $0x3d0] sm:$0xff] %v956
                  %v958 = vld [vmem:[%s710 + $0x758] sm:$0xff]
                  %959 = vst [vmem:[%s711 + $0x3d8] sm:$0xff] %v958
                  %v960 = vld [vmem:[%s710 + $0x760] sm:$0xff]
                  %961 = vst [vmem:[%s711 + $0x3e0] sm:$0xff] %v960
                  %v962 = vld [vmem:[%s710 + $0x768] sm:$0xff]
                  %963 = vst [vmem:[%s711 + $0x3e8] sm:$0xff] %v962
                  %v964 = vld [vmem:[%s710 + $0x770] sm:$0xff]
                  %965 = vst [vmem:[%s711 + $0x3f0] sm:$0xff] %v964
                  %v966 = vld [vmem:[%s710 + $0x778] sm:$0xff]
                  %967 = vst [vmem:[%s711 + $0x3f8] sm:$0xff] %v966
                $region100: #{stnkd_forward.1} parent=94 // loop_footer
                  %s709 = sadd.s32 1, %s705
                $region101: #{stnkd_forward.1} parent=94 // loop_footer_branch
                  %704 = sbr.rel target = $region97
                $region102: #{stnkd_forward.1} parent=94 // loop_exit
                  _
              $region95: #{stnkd_forward.1} parent=79 // pred_fallthru
                _
              // Predicated region
              $region103: #{stnkd_forward.1} parent=79 // pred_check
                _
              $region104: #{stnkd_forward.1} parent=79 // pred_check_branch
                %969 = sbr.rel target = $region106
              $region105: #{stnkd_forward.1} parent=79 // pred_region
                _
              $region106: #{stnkd_forward.1} parent=79 // pred_fallthru
                _
            $region80: #{stnkd_forward.1} parent=75 // pred_fallthru
              _
            // Predicated region
            $region81: #{stnkd_forward.1} parent=75 // pred_check
              _
            $region82: #{stnkd_forward.1} parent=75 // pred_check_branch
              %435 = sbr.rel target = $region84
            $region83: #{stnkd_forward.1} parent=75 // pred_region
              %s437 = ssub.s32 256, 1
              loop: start=0, step=1, limit=1
              $region85: #{stnkd_forward.1} parent=83 // loop_pre_header
                _
              $region86: #{stnkd_forward.1} parent=83 // loop_header
                %s439 = sphi 0, %s443
                %p440 = scmp.ge.s32.totalorder %s439, 1
                %s444 = sphi %s429, %s429
                %s445 = sphi %s423, %s423
              $region87: #{stnkd_forward.1} parent=83 // loop_header_branch
                %442 = sbr.rel (%p440) target = $region91
              $region88: #{stnkd_forward.1} parent=83 // loop_body
                %v446 = vld [vmem:[%s444] sm:%s437]
                %447 = vst [vmem:[%s445] sm:%s437] %v446
                %v448 = vld [vmem:[%s444 + $0x8] sm:%s437]
                %449 = vst [vmem:[%s445 + $0x8] sm:%s437] %v448
                %v450 = vld [vmem:[%s444 + $0x10] sm:%s437]
                %451 = vst [vmem:[%s445 + $0x10] sm:%s437] %v450
                %v452 = vld [vmem:[%s444 + $0x18] sm:%s437]
                %453 = vst [vmem:[%s445 + $0x18] sm:%s437] %v452
                %v454 = vld [vmem:[%s444 + $0x20] sm:%s437]
                %455 = vst [vmem:[%s445 + $0x20] sm:%s437] %v454
                %v456 = vld [vmem:[%s444 + $0x28] sm:%s437]
                %457 = vst [vmem:[%s445 + $0x28] sm:%s437] %v456
                %v458 = vld [vmem:[%s444 + $0x30] sm:%s437]
                %459 = vst [vmem:[%s445 + $0x30] sm:%s437] %v458
                %v460 = vld [vmem:[%s444 + $0x38] sm:%s437]
                %461 = vst [vmem:[%s445 + $0x38] sm:%s437] %v460
                %v462 = vld [vmem:[%s444 + $0x40] sm:%s437]
                %463 = vst [vmem:[%s445 + $0x40] sm:%s437] %v462
                %v464 = vld [vmem:[%s444 + $0x48] sm:%s437]
                %465 = vst [vmem:[%s445 + $0x48] sm:%s437] %v464
                %v466 = vld [vmem:[%s444 + $0x50] sm:%s437]
                %467 = vst [vmem:[%s445 + $0x50] sm:%s437] %v466
                %v468 = vld [vmem:[%s444 + $0x58] sm:%s437]
                %469 = vst [vmem:[%s445 + $0x58] sm:%s437] %v468
                %v470 = vld [vmem:[%s444 + $0x60] sm:%s437]
                %471 = vst [vmem:[%s445 + $0x60] sm:%s437] %v470
                %v472 = vld [vmem:[%s444 + $0x68] sm:%s437]
                %473 = vst [vmem:[%s445 + $0x68] sm:%s437] %v472
                %v474 = vld [vmem:[%s444 + $0x70] sm:%s437]
                %475 = vst [vmem:[%s445 + $0x70] sm:%s437] %v474
                %v476 = vld [vmem:[%s444 + $0x78] sm:%s437]
                %477 = vst [vmem:[%s445 + $0x78] sm:%s437] %v476
                %v478 = vld [vmem:[%s444 + $0x100] sm:%s437]
                %479 = vst [vmem:[%s445 + $0x80] sm:%s437] %v478
                %v480 = vld [vmem:[%s444 + $0x108] sm:%s437]
                %481 = vst [vmem:[%s445 + $0x88] sm:%s437] %v480
                %v482 = vld [vmem:[%s444 + $0x110] sm:%s437]
                %483 = vst [vmem:[%s445 + $0x90] sm:%s437] %v482
                %v484 = vld [vmem:[%s444 + $0x118] sm:%s437]
                %485 = vst [vmem:[%s445 + $0x98] sm:%s437] %v484
                %v486 = vld [vmem:[%s444 + $0x120] sm:%s437]
                %487 = vst [vmem:[%s445 + $0xa0] sm:%s437] %v486
                %v488 = vld [vmem:[%s444 + $0x128] sm:%s437]
                %489 = vst [vmem:[%s445 + $0xa8] sm:%s437] %v488
                %v490 = vld [vmem:[%s444 + $0x130] sm:%s437]
                %491 = vst [vmem:[%s445 + $0xb0] sm:%s437] %v490
                %v492 = vld [vmem:[%s444 + $0x138] sm:%s437]
                %493 = vst [vmem:[%s445 + $0xb8] sm:%s437] %v492
                %v494 = vld [vmem:[%s444 + $0x140] sm:%s437]
                %495 = vst [vmem:[%s445 + $0xc0] sm:%s437] %v494
                %v496 = vld [vmem:[%s444 + $0x148] sm:%s437]
                %497 = vst [vmem:[%s445 + $0xc8] sm:%s437] %v496
                %v498 = vld [vmem:[%s444 + $0x150] sm:%s437]
                %499 = vst [vmem:[%s445 + $0xd0] sm:%s437] %v498
                %v500 = vld [vmem:[%s444 + $0x158] sm:%s437]
                %501 = vst [vmem:[%s445 + $0xd8] sm:%s437] %v500
                %v502 = vld [vmem:[%s444 + $0x160] sm:%s437]
                %503 = vst [vmem:[%s445 + $0xe0] sm:%s437] %v502
                %v504 = vld [vmem:[%s444 + $0x168] sm:%s437]
                %505 = vst [vmem:[%s445 + $0xe8] sm:%s437] %v504
                %v506 = vld [vmem:[%s444 + $0x170] sm:%s437]
                %507 = vst [vmem:[%s445 + $0xf0] sm:%s437] %v506
                %v508 = vld [vmem:[%s444 + $0x178] sm:%s437]
                %509 = vst [vmem:[%s445 + $0xf8] sm:%s437] %v508
                %v510 = vld [vmem:[%s444 + $0x200] sm:%s437]
                %511 = vst [vmem:[%s445 + $0x100] sm:%s437] %v510
                %v512 = vld [vmem:[%s444 + $0x208] sm:%s437]
                %513 = vst [vmem:[%s445 + $0x108] sm:%s437] %v512
                %v514 = vld [vmem:[%s444 + $0x210] sm:%s437]
                %515 = vst [vmem:[%s445 + $0x110] sm:%s437] %v514
                %v516 = vld [vmem:[%s444 + $0x218] sm:%s437]
                %517 = vst [vmem:[%s445 + $0x118] sm:%s437] %v516
                %v518 = vld [vmem:[%s444 + $0x220] sm:%s437]
                %519 = vst [vmem:[%s445 + $0x120] sm:%s437] %v518
                %v520 = vld [vmem:[%s444 + $0x228] sm:%s437]
                %521 = vst [vmem:[%s445 + $0x128] sm:%s437] %v520
                %v522 = vld [vmem:[%s444 + $0x230] sm:%s437]
                %523 = vst [vmem:[%s445 + $0x130] sm:%s437] %v522
                %v524 = vld [vmem:[%s444 + $0x238] sm:%s437]
                %525 = vst [vmem:[%s445 + $0x138] sm:%s437] %v524
                %v526 = vld [vmem:[%s444 + $0x240] sm:%s437]
                %527 = vst [vmem:[%s445 + $0x140] sm:%s437] %v526
                %v528 = vld [vmem:[%s444 + $0x248] sm:%s437]
                %529 = vst [vmem:[%s445 + $0x148] sm:%s437] %v528
                %v530 = vld [vmem:[%s444 + $0x250] sm:%s437]
                %531 = vst [vmem:[%s445 + $0x150] sm:%s437] %v530
                %v532 = vld [vmem:[%s444 + $0x258] sm:%s437]
                %533 = vst [vmem:[%s445 + $0x158] sm:%s437] %v532
                %v534 = vld [vmem:[%s444 + $0x260] sm:%s437]
                %535 = vst [vmem:[%s445 + $0x160] sm:%s437] %v534
                %v536 = vld [vmem:[%s444 + $0x268] sm:%s437]
                %537 = vst [vmem:[%s445 + $0x168] sm:%s437] %v536
                %v538 = vld [vmem:[%s444 + $0x270] sm:%s437]
                %539 = vst [vmem:[%s445 + $0x170] sm:%s437] %v538
                %v540 = vld [vmem:[%s444 + $0x278] sm:%s437]
                %541 = vst [vmem:[%s445 + $0x178] sm:%s437] %v540
                %v542 = vld [vmem:[%s444 + $0x300] sm:%s437]
                %543 = vst [vmem:[%s445 + $0x180] sm:%s437] %v542
                %v544 = vld [vmem:[%s444 + $0x308] sm:%s437]
                %545 = vst [vmem:[%s445 + $0x188] sm:%s437] %v544
                %v546 = vld [vmem:[%s444 + $0x310] sm:%s437]
                %547 = vst [vmem:[%s445 + $0x190] sm:%s437] %v546
                %v548 = vld [vmem:[%s444 + $0x318] sm:%s437]
                %549 = vst [vmem:[%s445 + $0x198] sm:%s437] %v548
                %v550 = vld [vmem:[%s444 + $0x320] sm:%s437]
                %551 = vst [vmem:[%s445 + $0x1a0] sm:%s437] %v550
                %v552 = vld [vmem:[%s444 + $0x328] sm:%s437]
                %553 = vst [vmem:[%s445 + $0x1a8] sm:%s437] %v552
                %v554 = vld [vmem:[%s444 + $0x330] sm:%s437]
                %555 = vst [vmem:[%s445 + $0x1b0] sm:%s437] %v554
                %v556 = vld [vmem:[%s444 + $0x338] sm:%s437]
                %557 = vst [vmem:[%s445 + $0x1b8] sm:%s437] %v556
                %v558 = vld [vmem:[%s444 + $0x340] sm:%s437]
                %559 = vst [vmem:[%s445 + $0x1c0] sm:%s437] %v558
                %v560 = vld [vmem:[%s444 + $0x348] sm:%s437]
                %561 = vst [vmem:[%s445 + $0x1c8] sm:%s437] %v560
                %v562 = vld [vmem:[%s444 + $0x350] sm:%s437]
                %563 = vst [vmem:[%s445 + $0x1d0] sm:%s437] %v562
                %v564 = vld [vmem:[%s444 + $0x358] sm:%s437]
                %565 = vst [vmem:[%s445 + $0x1d8] sm:%s437] %v564
                %v566 = vld [vmem:[%s444 + $0x360] sm:%s437]
                %567 = vst [vmem:[%s445 + $0x1e0] sm:%s437] %v566
                %v568 = vld [vmem:[%s444 + $0x368] sm:%s437]
                %569 = vst [vmem:[%s445 + $0x1e8] sm:%s437] %v568
                %v570 = vld [vmem:[%s444 + $0x370] sm:%s437]
                %571 = vst [vmem:[%s445 + $0x1f0] sm:%s437] %v570
                %v572 = vld [vmem:[%s444 + $0x378] sm:%s437]
                %573 = vst [vmem:[%s445 + $0x1f8] sm:%s437] %v572
                %v574 = vld [vmem:[%s444 + $0x400] sm:%s437]
                %575 = vst [vmem:[%s445 + $0x200] sm:%s437] %v574
                %v576 = vld [vmem:[%s444 + $0x408] sm:%s437]
                %577 = vst [vmem:[%s445 + $0x208] sm:%s437] %v576
                %v578 = vld [vmem:[%s444 + $0x410] sm:%s437]
                %579 = vst [vmem:[%s445 + $0x210] sm:%s437] %v578
                %v580 = vld [vmem:[%s444 + $0x418] sm:%s437]
                %581 = vst [vmem:[%s445 + $0x218] sm:%s437] %v580
                %v582 = vld [vmem:[%s444 + $0x420] sm:%s437]
                %583 = vst [vmem:[%s445 + $0x220] sm:%s437] %v582
                %v584 = vld [vmem:[%s444 + $0x428] sm:%s437]
                %585 = vst [vmem:[%s445 + $0x228] sm:%s437] %v584
                %v586 = vld [vmem:[%s444 + $0x430] sm:%s437]
                %587 = vst [vmem:[%s445 + $0x230] sm:%s437] %v586
                %v588 = vld [vmem:[%s444 + $0x438] sm:%s437]
                %589 = vst [vmem:[%s445 + $0x238] sm:%s437] %v588
                %v590 = vld [vmem:[%s444 + $0x440] sm:%s437]
                %591 = vst [vmem:[%s445 + $0x240] sm:%s437] %v590
                %v592 = vld [vmem:[%s444 + $0x448] sm:%s437]
                %593 = vst [vmem:[%s445 + $0x248] sm:%s437] %v592
                %v594 = vld [vmem:[%s444 + $0x450] sm:%s437]
                %595 = vst [vmem:[%s445 + $0x250] sm:%s437] %v594
                %v596 = vld [vmem:[%s444 + $0x458] sm:%s437]
                %597 = vst [vmem:[%s445 + $0x258] sm:%s437] %v596
                %v598 = vld [vmem:[%s444 + $0x460] sm:%s437]
                %599 = vst [vmem:[%s445 + $0x260] sm:%s437] %v598
                %v600 = vld [vmem:[%s444 + $0x468] sm:%s437]
                %601 = vst [vmem:[%s445 + $0x268] sm:%s437] %v600
                %v602 = vld [vmem:[%s444 + $0x470] sm:%s437]
                %603 = vst [vmem:[%s445 + $0x270] sm:%s437] %v602
                %v604 = vld [vmem:[%s444 + $0x478] sm:%s437]
                %605 = vst [vmem:[%s445 + $0x278] sm:%s437] %v604
                %v606 = vld [vmem:[%s444 + $0x500] sm:%s437]
                %607 = vst [vmem:[%s445 + $0x280] sm:%s437] %v606
                %v608 = vld [vmem:[%s444 + $0x508] sm:%s437]
                %609 = vst [vmem:[%s445 + $0x288] sm:%s437] %v608
                %v610 = vld [vmem:[%s444 + $0x510] sm:%s437]
                %611 = vst [vmem:[%s445 + $0x290] sm:%s437] %v610
                %v612 = vld [vmem:[%s444 + $0x518] sm:%s437]
                %613 = vst [vmem:[%s445 + $0x298] sm:%s437] %v612
                %v614 = vld [vmem:[%s444 + $0x520] sm:%s437]
                %615 = vst [vmem:[%s445 + $0x2a0] sm:%s437] %v614
                %v616 = vld [vmem:[%s444 + $0x528] sm:%s437]
                %617 = vst [vmem:[%s445 + $0x2a8] sm:%s437] %v616
                %v618 = vld [vmem:[%s444 + $0x530] sm:%s437]
                %619 = vst [vmem:[%s445 + $0x2b0] sm:%s437] %v618
                %v620 = vld [vmem:[%s444 + $0x538] sm:%s437]
                %621 = vst [vmem:[%s445 + $0x2b8] sm:%s437] %v620
                %v622 = vld [vmem:[%s444 + $0x540] sm:%s437]
                %623 = vst [vmem:[%s445 + $0x2c0] sm:%s437] %v622
                %v624 = vld [vmem:[%s444 + $0x548] sm:%s437]
                %625 = vst [vmem:[%s445 + $0x2c8] sm:%s437] %v624
                %v626 = vld [vmem:[%s444 + $0x550] sm:%s437]
                %627 = vst [vmem:[%s445 + $0x2d0] sm:%s437] %v626
                %v628 = vld [vmem:[%s444 + $0x558] sm:%s437]
                %629 = vst [vmem:[%s445 + $0x2d8] sm:%s437] %v628
                %v630 = vld [vmem:[%s444 + $0x560] sm:%s437]
                %631 = vst [vmem:[%s445 + $0x2e0] sm:%s437] %v630
                %v632 = vld [vmem:[%s444 + $0x568] sm:%s437]
                %633 = vst [vmem:[%s445 + $0x2e8] sm:%s437] %v632
                %v634 = vld [vmem:[%s444 + $0x570] sm:%s437]
                %635 = vst [vmem:[%s445 + $0x2f0] sm:%s437] %v634
                %v636 = vld [vmem:[%s444 + $0x578] sm:%s437]
                %637 = vst [vmem:[%s445 + $0x2f8] sm:%s437] %v636
                %v638 = vld [vmem:[%s444 + $0x600] sm:%s437]
                %639 = vst [vmem:[%s445 + $0x300] sm:%s437] %v638
                %v640 = vld [vmem:[%s444 + $0x608] sm:%s437]
                %641 = vst [vmem:[%s445 + $0x308] sm:%s437] %v640
                %v642 = vld [vmem:[%s444 + $0x610] sm:%s437]
                %643 = vst [vmem:[%s445 + $0x310] sm:%s437] %v642
                %v644 = vld [vmem:[%s444 + $0x618] sm:%s437]
                %645 = vst [vmem:[%s445 + $0x318] sm:%s437] %v644
                %v646 = vld [vmem:[%s444 + $0x620] sm:%s437]
                %647 = vst [vmem:[%s445 + $0x320] sm:%s437] %v646
                %v648 = vld [vmem:[%s444 + $0x628] sm:%s437]
                %649 = vst [vmem:[%s445 + $0x328] sm:%s437] %v648
                %v650 = vld [vmem:[%s444 + $0x630] sm:%s437]
                %651 = vst [vmem:[%s445 + $0x330] sm:%s437] %v650
                %v652 = vld [vmem:[%s444 + $0x638] sm:%s437]
                %653 = vst [vmem:[%s445 + $0x338] sm:%s437] %v652
                %v654 = vld [vmem:[%s444 + $0x640] sm:%s437]
                %655 = vst [vmem:[%s445 + $0x340] sm:%s437] %v654
                %v656 = vld [vmem:[%s444 + $0x648] sm:%s437]
                %657 = vst [vmem:[%s445 + $0x348] sm:%s437] %v656
                %v658 = vld [vmem:[%s444 + $0x650] sm:%s437]
                %659 = vst [vmem:[%s445 + $0x350] sm:%s437] %v658
                %v660 = vld [vmem:[%s444 + $0x658] sm:%s437]
                %661 = vst [vmem:[%s445 + $0x358] sm:%s437] %v660
                %v662 = vld [vmem:[%s444 + $0x660] sm:%s437]
                %663 = vst [vmem:[%s445 + $0x360] sm:%s437] %v662
                %v664 = vld [vmem:[%s444 + $0x668] sm:%s437]
                %665 = vst [vmem:[%s445 + $0x368] sm:%s437] %v664
                %v666 = vld [vmem:[%s444 + $0x670] sm:%s437]
                %667 = vst [vmem:[%s445 + $0x370] sm:%s437] %v666
                %v668 = vld [vmem:[%s444 + $0x678] sm:%s437]
                %669 = vst [vmem:[%s445 + $0x378] sm:%s437] %v668
                %v670 = vld [vmem:[%s444 + $0x700] sm:%s437]
                %671 = vst [vmem:[%s445 + $0x380] sm:%s437] %v670
                %v672 = vld [vmem:[%s444 + $0x708] sm:%s437]
                %673 = vst [vmem:[%s445 + $0x388] sm:%s437] %v672
                %v674 = vld [vmem:[%s444 + $0x710] sm:%s437]
                %675 = vst [vmem:[%s445 + $0x390] sm:%s437] %v674
                %v676 = vld [vmem:[%s444 + $0x718] sm:%s437]
                %677 = vst [vmem:[%s445 + $0x398] sm:%s437] %v676
                %v678 = vld [vmem:[%s444 + $0x720] sm:%s437]
                %679 = vst [vmem:[%s445 + $0x3a0] sm:%s437] %v678
                %v680 = vld [vmem:[%s444 + $0x728] sm:%s437]
                %681 = vst [vmem:[%s445 + $0x3a8] sm:%s437] %v680
                %v682 = vld [vmem:[%s444 + $0x730] sm:%s437]
                %683 = vst [vmem:[%s445 + $0x3b0] sm:%s437] %v682
                %v684 = vld [vmem:[%s444 + $0x738] sm:%s437]
                %685 = vst [vmem:[%s445 + $0x3b8] sm:%s437] %v684
                %v686 = vld [vmem:[%s444 + $0x740] sm:%s437]
                %687 = vst [vmem:[%s445 + $0x3c0] sm:%s437] %v686
                %v688 = vld [vmem:[%s444 + $0x748] sm:%s437]
                %689 = vst [vmem:[%s445 + $0x3c8] sm:%s437] %v688
                %v690 = vld [vmem:[%s444 + $0x750] sm:%s437]
                %691 = vst [vmem:[%s445 + $0x3d0] sm:%s437] %v690
                %v692 = vld [vmem:[%s444 + $0x758] sm:%s437]
                %693 = vst [vmem:[%s445 + $0x3d8] sm:%s437] %v692
                %v694 = vld [vmem:[%s444 + $0x760] sm:%s437]
                %695 = vst [vmem:[%s445 + $0x3e0] sm:%s437] %v694
                %v696 = vld [vmem:[%s444 + $0x768] sm:%s437]
                %697 = vst [vmem:[%s445 + $0x3e8] sm:%s437] %v696
                %v698 = vld [vmem:[%s444 + $0x770] sm:%s437]
                %699 = vst [vmem:[%s445 + $0x3f0] sm:%s437] %v698
                %v700 = vld [vmem:[%s444 + $0x778] sm:%s437]
                %701 = vst [vmem:[%s445 + $0x3f8] sm:%s437] %v700
              $region89: #{stnkd_forward.1} parent=83 // loop_footer
                %s443 = sadd.s32 1, %s439
              $region90: #{stnkd_forward.1} parent=83 // loop_footer_branch
                %438 = sbr.rel target = $region86
              $region91: #{stnkd_forward.1} parent=83 // loop_exit
                _
            $region84: #{stnkd_forward.1} parent=75 // pred_fallthru
              _
          $region76: #{stnkd_forward.1} parent=71 // pred_fallthru
            _
          %970 = vnop
        $region72: #{stnkd_forward.1} parent=67 // pred_fallthru
          _
      $region68: #{stnkd_forward.1} parent=5 // pred_fallthru
        _
      %p971 = scmp.le.s32.totalorder 1, %s20
      %p972 = scmp.lt.s32.totalorder %s20, 5
      %p973 = pnand %p971, %p972
      %p974 = pneg %p973
      // Predicated region
      $region107: #{stnkd_forward.1} parent=5 // pred_check
        _
      $region108: #{stnkd_forward.1} parent=5 // pred_check_branch
        %976 = sbr.rel (%p973) target = $region110
      $region109: #{stnkd_forward.1} parent=5 // pred_region
        %s977 = ssub.s32 %s20, 1
        %s978 = sand.u32 %s47, 1
        %s979 = sand.u32 %s47, 1
        %s980 = smul.addr %s979, 1024
        %s981 = scalar_lea.vmem [#allocation3], %s980
        // Predicated region
        $region111: #{stnkd_forward.1} parent=109 // pred_check
          %p982 = pneg %p60
        $region112: #{stnkd_forward.1} parent=109 // pred_check_branch
          %984 = sbr.rel (%p982) target = $region114
        $region113: #{stnkd_forward.1} parent=109 // pred_region
          _
        $region114: #{stnkd_forward.1} parent=109 // pred_fallthru
          _
        %s985 = sand.u32 %s47, 1
        %s986 = sand.u32 %s47, 1
        %s987 = smul.addr %s986, 1024
        %s988 = scalar_lea.vmem [#allocation3], %s987
        %p989 = pneg %p60
        %p990 = pneg %p57
        %p991 = pneg %p81
        %p992 = pneg %p78
        %p993 = pneg %p102
        %p994 = pneg %p99
        %p995 = pneg %p123
        %p996 = pneg %p120
        %p997 = pneg %p144
        %p998 = pneg %p141
        %p999 = pneg %p165
        %p1000 = pneg %p162
        %p1001 = pneg %p186
        %p1002 = pneg %p183
        %p1003 = pneg %p207
        %p1004 = pneg %p204
        %p1005 = pneg %p228
        %p1006 = pneg %p225
        %p1007 = pneg %p249
        %p1008 = pneg %p246
        %p1009 = pneg %p270
        %p1010 = pneg %p267
        %p1011 = pneg %p291
        %p1012 = pneg %p288
        %p1013 = pneg %p312
        %p1014 = pneg %p309
        %p1015 = pneg %p333
        %p1016 = pneg %p330
        %p1017 = pneg %p359
        %p1018 = pneg %p356
        %p1019 = scmp.lt.s32.totalorder %s29, 1
        %s1020 = scalar_select %p1019, %s29, 1
        %s1021 = smul.addr %s1020, 2
        %s1022 = smul.addr %s1021, 8
        %s1023 = scalar_lea.vmem %s14, %s1022
        %s1024 = smul.u32 8, %s29
        %s1025 = smul.u32 16, %s30
        %p1026 = scmp.lt.s32.totalorder %s29, 1
        %s1027 = scalar_select %p1026, %s29, 1
        %s1028 = smul.addr %s1027, 2
        %s1029 = smul.addr %s1028, 8
        %s1030 = scalar_lea.vmem %s14, %s1029
        %p1032 = scmp.eq.s32.totalorder %s30, 0
        // Predicated region
        $region115: #{stnkd_forward.1} parent=109 // pred_check
          %p1033 = pneg %p1032
        $region116: #{stnkd_forward.1} parent=109 // pred_check_branch
          %1035 = sbr.rel (%p1033) target = $region118
        $region117: #{stnkd_forward.1} parent=109 // pred_region
          %1036 = vst [vmem:[#allocation2] sm:$0xff] -inf
          %1037 = vst [vmem:[#allocation2 + $0x8] sm:$0xff] -inf
          %1038 = vst [vmem:[#allocation2 + $0x10] sm:$0xff] -inf
          %1039 = vst [vmem:[#allocation2 + $0x18] sm:$0xff] -inf
          %1040 = vst [vmem:[#allocation2 + $0x20] sm:$0xff] -inf
          %1041 = vst [vmem:[#allocation2 + $0x28] sm:$0xff] -inf
          %1042 = vst [vmem:[#allocation2 + $0x30] sm:$0xff] -inf
          %1043 = vst [vmem:[#allocation2 + $0x38] sm:$0xff] -inf
        $region118: #{stnkd_forward.1} parent=109 // pred_fallthru
          _
        %v1044 = vld [vmem:[%s981] sm:$0xff]
        %v1045 = vld [vmem:[%s981 + $0x8] sm:$0xff]
        %v1046 = vld [vmem:[%s981 + $0x10] sm:$0xff]
        %v1047 = vld [vmem:[%s981 + $0x18] sm:$0xff]
        %v1048 = vld [vmem:[%s981 + $0x20] sm:$0xff]
        %v1049 = vld [vmem:[%s981 + $0x28] sm:$0xff]
        %v1050 = vld [vmem:[%s981 + $0x30] sm:$0xff]
        %v1051 = vld [vmem:[%s981 + $0x38] sm:$0xff]
        %v1052 = vld [vmem:[%s981 + $0x40] sm:$0xff]
        %v1053 = vld [vmem:[%s981 + $0x48] sm:$0xff]
        %v1054 = vld [vmem:[%s981 + $0x50] sm:$0xff]
        %v1055 = vld [vmem:[%s981 + $0x58] sm:$0xff]
        %v1056 = vld [vmem:[%s981 + $0x60] sm:$0xff]
        %v1057 = vld [vmem:[%s981 + $0x68] sm:$0xff]
        %v1058 = vld [vmem:[%s981 + $0x70] sm:$0xff]
        %v1059 = vld [vmem:[%s981 + $0x78] sm:$0xff]
        %v1060 = vld [vmem:[%s981 + $0x80] sm:$0xff]
        %v1061 = vld [vmem:[%s981 + $0x88] sm:$0xff]
        %v1062 = vld [vmem:[%s981 + $0x90] sm:$0xff]
        %v1063 = vld [vmem:[%s981 + $0x98] sm:$0xff]
        %v1064 = vld [vmem:[%s981 + $0xa0] sm:$0xff]
        %v1065 = vld [vmem:[%s981 + $0xa8] sm:$0xff]
        %v1066 = vld [vmem:[%s981 + $0xb0] sm:$0xff]
        %v1067 = vld [vmem:[%s981 + $0xb8] sm:$0xff]
        %v1068 = vld [vmem:[%s981 + $0xc0] sm:$0xff]
        %v1069 = vld [vmem:[%s981 + $0xc8] sm:$0xff]
        %v1070 = vld [vmem:[%s981 + $0xd0] sm:$0xff]
        %v1071 = vld [vmem:[%s981 + $0xd8] sm:$0xff]
        %v1072 = vld [vmem:[%s981 + $0xe0] sm:$0xff]
        %v1073 = vld [vmem:[%s981 + $0xe8] sm:$0xff]
        %v1074 = vld [vmem:[%s981 + $0xf0] sm:$0xff]
        %v1075 = vld [vmem:[%s981 + $0xf8] sm:$0xff]
        %v1076 = vld [vmem:[%s981 + $0x100] sm:$0xff]
        %v1077 = vld [vmem:[%s981 + $0x108] sm:$0xff]
        %v1078 = vld [vmem:[%s981 + $0x110] sm:$0xff]
        %v1079 = vld [vmem:[%s981 + $0x118] sm:$0xff]
        %v1080 = vld [vmem:[%s981 + $0x120] sm:$0xff]
        %v1081 = vld [vmem:[%s981 + $0x128] sm:$0xff]
        %v1082 = vld [vmem:[%s981 + $0x130] sm:$0xff]
        %v1083 = vld [vmem:[%s981 + $0x138] sm:$0xff]
        %v1084 = vld [vmem:[%s981 + $0x140] sm:$0xff]
        %v1085 = vld [vmem:[%s981 + $0x148] sm:$0xff]
        %v1086 = vld [vmem:[%s981 + $0x150] sm:$0xff]
        %v1087 = vld [vmem:[%s981 + $0x158] sm:$0xff]
        %v1088 = vld [vmem:[%s981 + $0x160] sm:$0xff]
        %v1089 = vld [vmem:[%s981 + $0x168] sm:$0xff]
        %v1090 = vld [vmem:[%s981 + $0x170] sm:$0xff]
        %v1091 = vld [vmem:[%s981 + $0x178] sm:$0xff]
        %v1092 = vld [vmem:[%s981 + $0x180] sm:$0xff]
        %v1093 = vld [vmem:[%s981 + $0x188] sm:$0xff]
        %v1094 = vld [vmem:[%s981 + $0x190] sm:$0xff]
        %v1095 = vld [vmem:[%s981 + $0x198] sm:$0xff]
        %v1096 = vld [vmem:[%s981 + $0x1a0] sm:$0xff]
        %v1097 = vld [vmem:[%s981 + $0x1a8] sm:$0xff]
        %v1098 = vld [vmem:[%s981 + $0x1b0] sm:$0xff]
        %v1099 = vld [vmem:[%s981 + $0x1b8] sm:$0xff]
        %v1100 = vld [vmem:[%s981 + $0x1c0] sm:$0xff]
        %v1101 = vld [vmem:[%s981 + $0x1c8] sm:$0xff]
        %v1102 = vld [vmem:[%s981 + $0x1d0] sm:$0xff]
        %v1103 = vld [vmem:[%s981 + $0x1d8] sm:$0xff]
        %v1104 = vld [vmem:[%s981 + $0x1e0] sm:$0xff]
        %v1105 = vld [vmem:[%s981 + $0x1e8] sm:$0xff]
        %v1106 = vld [vmem:[%s981 + $0x1f0] sm:$0xff]
        %v1107 = vld [vmem:[%s981 + $0x1f8] sm:$0xff]
        %v1108 = vld [vmem:[%s981 + $0x200] sm:$0xff]
        %v1109 = vld [vmem:[%s981 + $0x208] sm:$0xff]
        %v1110 = vld [vmem:[%s981 + $0x210] sm:$0xff]
        %v1111 = vld [vmem:[%s981 + $0x218] sm:$0xff]
        %v1112 = vld [vmem:[%s981 + $0x220] sm:$0xff]
        %v1113 = vld [vmem:[%s981 + $0x228] sm:$0xff]
        %v1114 = vld [vmem:[%s981 + $0x230] sm:$0xff]
        %v1115 = vld [vmem:[%s981 + $0x238] sm:$0xff]
        %v1116 = vld [vmem:[%s981 + $0x240] sm:$0xff]
        %v1117 = vld [vmem:[%s981 + $0x248] sm:$0xff]
        %v1118 = vld [vmem:[%s981 + $0x250] sm:$0xff]
        %v1119 = vld [vmem:[%s981 + $0x258] sm:$0xff]
        %v1120 = vld [vmem:[%s981 + $0x260] sm:$0xff]
        %v1121 = vld [vmem:[%s981 + $0x268] sm:$0xff]
        %v1122 = vld [vmem:[%s981 + $0x270] sm:$0xff]
        %v1123 = vld [vmem:[%s981 + $0x278] sm:$0xff]
        %v1124 = vld [vmem:[%s981 + $0x280] sm:$0xff]
        %v1125 = vld [vmem:[%s981 + $0x288] sm:$0xff]
        %v1126 = vld [vmem:[%s981 + $0x290] sm:$0xff]
        %v1127 = vld [vmem:[%s981 + $0x298] sm:$0xff]
        %v1128 = vld [vmem:[%s981 + $0x2a0] sm:$0xff]
        %v1129 = vld [vmem:[%s981 + $0x2a8] sm:$0xff]
        %v1130 = vld [vmem:[%s981 + $0x2b0] sm:$0xff]
        %v1131 = vld [vmem:[%s981 + $0x2b8] sm:$0xff]
        %v1132 = vld [vmem:[%s981 + $0x2c0] sm:$0xff]
        %v1133 = vld [vmem:[%s981 + $0x2c8] sm:$0xff]
        %v1134 = vld [vmem:[%s981 + $0x2d0] sm:$0xff]
        %v1135 = vld [vmem:[%s981 + $0x2d8] sm:$0xff]
        %v1136 = vld [vmem:[%s981 + $0x2e0] sm:$0xff]
        %v1137 = vld [vmem:[%s981 + $0x2e8] sm:$0xff]
        %v1138 = vld [vmem:[%s981 + $0x2f0] sm:$0xff]
        %v1139 = vld [vmem:[%s981 + $0x2f8] sm:$0xff]
        %v1140 = vld [vmem:[%s981 + $0x300] sm:$0xff]
        %v1141 = vld [vmem:[%s981 + $0x308] sm:$0xff]
        %v1142 = vld [vmem:[%s981 + $0x310] sm:$0xff]
        %v1143 = vld [vmem:[%s981 + $0x318] sm:$0xff]
        %v1144 = vld [vmem:[%s981 + $0x320] sm:$0xff]
        %v1145 = vld [vmem:[%s981 + $0x328] sm:$0xff]
        %v1146 = vld [vmem:[%s981 + $0x330] sm:$0xff]
        %v1147 = vld [vmem:[%s981 + $0x338] sm:$0xff]
        %v1148 = vld [vmem:[%s981 + $0x340] sm:$0xff]
        %v1149 = vld [vmem:[%s981 + $0x348] sm:$0xff]
        %v1150 = vld [vmem:[%s981 + $0x350] sm:$0xff]
        %v1151 = vld [vmem:[%s981 + $0x358] sm:$0xff]
        %v1152 = vld [vmem:[%s981 + $0x360] sm:$0xff]
        %v1153 = vld [vmem:[%s981 + $0x368] sm:$0xff]
        %v1154 = vld [vmem:[%s981 + $0x370] sm:$0xff]
        %v1155 = vld [vmem:[%s981 + $0x378] sm:$0xff]
        %v1156 = vld [vmem:[%s981 + $0x380] sm:$0xff]
        %v1157 = vld [vmem:[%s981 + $0x388] sm:$0xff]
        %v1158 = vld [vmem:[%s981 + $0x390] sm:$0xff]
        %v1159 = vld [vmem:[%s981 + $0x398] sm:$0xff]
        %v1160 = vld [vmem:[%s981 + $0x3a0] sm:$0xff]
        %v1161 = vld [vmem:[%s981 + $0x3a8] sm:$0xff]
        %v1162 = vld [vmem:[%s981 + $0x3b0] sm:$0xff]
        %v1163 = vld [vmem:[%s981 + $0x3b8] sm:$0xff]
        %v1164 = vld [vmem:[%s981 + $0x3c0] sm:$0xff]
        %v1165 = vld [vmem:[%s981 + $0x3c8] sm:$0xff]
        %v1166 = vld [vmem:[%s981 + $0x3d0] sm:$0xff]
        %v1167 = vld [vmem:[%s981 + $0x3d8] sm:$0xff]
        %v1168 = vld [vmem:[%s981 + $0x3e0] sm:$0xff]
        %v1169 = vld [vmem:[%s981 + $0x3e8] sm:$0xff]
        %v1170 = vld [vmem:[%s981 + $0x3f0] sm:$0xff]
        %v1171 = vld [vmem:[%s981 + $0x3f8] sm:$0xff]
        %v1172 = vpack.c.bf16 %v1045, %v1044
        %v1173 = vpack.c.bf16 %v1047, %v1046
        %v1174 = vpack.c.bf16 %v1049, %v1048
        %v1175 = vpack.c.bf16 %v1051, %v1050
        %v1176 = vpack.c.bf16 %v1053, %v1052
        %v1177 = vpack.c.bf16 %v1055, %v1054
        %v1178 = vpack.c.bf16 %v1057, %v1056
        %v1179 = vpack.c.bf16 %v1059, %v1058
        %v1180 = vpack.c.bf16 %v1061, %v1060
        %v1181 = vpack.c.bf16 %v1063, %v1062
        %v1182 = vpack.c.bf16 %v1065, %v1064
        %v1183 = vpack.c.bf16 %v1067, %v1066
        %v1184 = vpack.c.bf16 %v1069, %v1068
        %v1185 = vpack.c.bf16 %v1071, %v1070
        %v1186 = vpack.c.bf16 %v1073, %v1072
        %v1187 = vpack.c.bf16 %v1075, %v1074
        %v1188 = vpack.c.bf16 %v1077, %v1076
        %v1189 = vpack.c.bf16 %v1079, %v1078
        %v1190 = vpack.c.bf16 %v1081, %v1080
        %v1191 = vpack.c.bf16 %v1083, %v1082
        %v1192 = vpack.c.bf16 %v1085, %v1084
        %v1193 = vpack.c.bf16 %v1087, %v1086
        %v1194 = vpack.c.bf16 %v1089, %v1088
        %v1195 = vpack.c.bf16 %v1091, %v1090
        %v1196 = vpack.c.bf16 %v1093, %v1092
        %v1197 = vpack.c.bf16 %v1095, %v1094
        %v1198 = vpack.c.bf16 %v1097, %v1096
        %v1199 = vpack.c.bf16 %v1099, %v1098
        %v1200 = vpack.c.bf16 %v1101, %v1100
        %v1201 = vpack.c.bf16 %v1103, %v1102
        %v1202 = vpack.c.bf16 %v1105, %v1104
        %v1203 = vpack.c.bf16 %v1107, %v1106
        %v1204 = vpack.c.bf16 %v1109, %v1108
        %v1205 = vpack.c.bf16 %v1111, %v1110
        %v1206 = vpack.c.bf16 %v1113, %v1112
        %v1207 = vpack.c.bf16 %v1115, %v1114
        %v1208 = vpack.c.bf16 %v1117, %v1116
        %v1209 = vpack.c.bf16 %v1119, %v1118
        %v1210 = vpack.c.bf16 %v1121, %v1120
        %v1211 = vpack.c.bf16 %v1123, %v1122
        %v1212 = vpack.c.bf16 %v1125, %v1124
        %v1213 = vpack.c.bf16 %v1127, %v1126
        %v1214 = vpack.c.bf16 %v1129, %v1128
        %v1215 = vpack.c.bf16 %v1131, %v1130
        %v1216 = vpack.c.bf16 %v1133, %v1132
        %v1217 = vpack.c.bf16 %v1135, %v1134
        %v1218 = vpack.c.bf16 %v1137, %v1136
        %v1219 = vpack.c.bf16 %v1139, %v1138
        %v1220 = vpack.c.bf16 %v1141, %v1140
        %v1221 = vpack.c.bf16 %v1143, %v1142
        %v1222 = vpack.c.bf16 %v1145, %v1144
        %v1223 = vpack.c.bf16 %v1147, %v1146
        %v1224 = vpack.c.bf16 %v1149, %v1148
        %v1225 = vpack.c.bf16 %v1151, %v1150
        %v1226 = vpack.c.bf16 %v1153, %v1152
        %v1227 = vpack.c.bf16 %v1155, %v1154
        %v1228 = vpack.c.bf16 %v1157, %v1156
        %v1229 = vpack.c.bf16 %v1159, %v1158
        %v1230 = vpack.c.bf16 %v1161, %v1160
        %v1231 = vpack.c.bf16 %v1163, %v1162
        %v1232 = vpack.c.bf16 %v1165, %v1164
        %v1233 = vpack.c.bf16 %v1167, %v1166
        %v1234 = vpack.c.bf16 %v1169, %v1168
        %v1235 = vpack.c.bf16 %v1171, %v1170
        %v1236 = vld [vmem:[%s1] sm:$0xf]
        %v1237 = vld [vmem:[%s1 + $0x4] sm:$0xf]
        %v1238 = vld [vmem:[%s2] sm:$0x1]
        %v1240 = vperm.slane %v1238, 0
        %v1244 = vunpack.c.l.b16 %v1236
        %v1245 = vunpack.c.l.b16 %v1237
        %v1246 = vpack.c.b16 %v1245, %v1244
        %vm1248 = vcmask 130048
        %v1250 = vsel %vm1248, %v1172, 0
        %v1253 = vsel %vm1248, %v1173, 0
        %v1256 = vsel %vm1248, %v1174, 0
        %v1259 = vsel %vm1248, %v1175, 0
        %v1262 = vsel %vm1248, %v1176, 0
        %v1265 = vsel %vm1248, %v1177, 0
        %v1268 = vsel %vm1248, %v1178, 0
        %v1271 = vsel %vm1248, %v1179, 0
        %v1274 = vsel %vm1248, %v1180, 0
        %v1277 = vsel %vm1248, %v1181, 0
        %v1280 = vsel %vm1248, %v1182, 0
        %v1283 = vsel %vm1248, %v1183, 0
        %v1286 = vsel %vm1248, %v1184, 0
        %v1289 = vsel %vm1248, %v1185, 0
        %v1292 = vsel %vm1248, %v1186, 0
        %v1295 = vsel %vm1248, %v1187, 0
        %v1298 = vsel %vm1248, %v1188, 0
        %v1301 = vsel %vm1248, %v1189, 0
        %v1304 = vsel %vm1248, %v1190, 0
        %v1307 = vsel %vm1248, %v1191, 0
        %v1310 = vsel %vm1248, %v1192, 0
        %v1313 = vsel %vm1248, %v1193, 0
        %v1316 = vsel %vm1248, %v1194, 0
        %v1319 = vsel %vm1248, %v1195, 0
        %v1322 = vsel %vm1248, %v1196, 0
        %v1325 = vsel %vm1248, %v1197, 0
        %v1328 = vsel %vm1248, %v1198, 0
        %v1331 = vsel %vm1248, %v1199, 0
        %v1334 = vsel %vm1248, %v1200, 0
        %v1337 = vsel %vm1248, %v1201, 0
        %v1340 = vsel %vm1248, %v1202, 0
        %v1343 = vsel %vm1248, %v1203, 0
        %v1346 = vsel %vm1248, %v1204, 0
        %v1349 = vsel %vm1248, %v1205, 0
        %v1352 = vsel %vm1248, %v1206, 0
        %v1355 = vsel %vm1248, %v1207, 0
        %v1358 = vsel %vm1248, %v1208, 0
        %v1361 = vsel %vm1248, %v1209, 0
        %v1364 = vsel %vm1248, %v1210, 0
        %v1367 = vsel %vm1248, %v1211, 0
        %v1370 = vsel %vm1248, %v1212, 0
        %v1373 = vsel %vm1248, %v1213, 0
        %v1376 = vsel %vm1248, %v1214, 0
        %v1379 = vsel %vm1248, %v1215, 0
        %v1382 = vsel %vm1248, %v1216, 0
        %v1385 = vsel %vm1248, %v1217, 0
        %v1388 = vsel %vm1248, %v1218, 0
        %v1391 = vsel %vm1248, %v1219, 0
        %v1394 = vsel %vm1248, %v1220, 0
        %v1397 = vsel %vm1248, %v1221, 0
        %v1400 = vsel %vm1248, %v1222, 0
        %v1403 = vsel %vm1248, %v1223, 0
        %v1406 = vsel %vm1248, %v1224, 0
        %v1409 = vsel %vm1248, %v1225, 0
        %v1412 = vsel %vm1248, %v1226, 0
        %v1415 = vsel %vm1248, %v1227, 0
        %v1418 = vsel %vm1248, %v1228, 0
        %v1421 = vsel %vm1248, %v1229, 0
        %v1424 = vsel %vm1248, %v1230, 0
        %v1427 = vsel %vm1248, %v1231, 0
        %v1430 = vsel %vm1248, %v1232, 0
        %v1433 = vsel %vm1248, %v1233, 0
        %v1436 = vsel %vm1248, %v1234, 0
        %v1439 = vsel %vm1248, %v1235, 0
        %1441 = vmatpush.bf16.msra.mxu0 0
        %1442 = vmatpush.bf16.msra.mxu0 0
        %1443 = vmatpush.bf16.msra.mxu0 0
        %1444 = vmatpush.bf16.msra.mxu0 0
        %1445 = vmatpush.bf16.msra.mxu0 0
        %1446 = vmatpush.bf16.msra.mxu0 0
        %1447 = vmatpush.bf16.msra.mxu0 0
        %1448 = vmatpush.bf16.msra.mxu0 %v1246
        %1449 = vmatmul.bf16.gmra.mxu0 %v1250
        %v1450 = vpop.f32.mrf.mxu0
        %v1451 = vadd.f32 %v1240, %v1450
        %v1452 = vpop.f32.mrf.mxu0
        %v1453 = vadd.f32 %v1240, %v1452
        %1454 = vmatmul.bf16.gmra.mxu0 %v1253
        %v1455 = vpop.f32.mrf.mxu0
        %v1456 = vadd.f32 %v1240, %v1455
        %v1457 = vpop.f32.mrf.mxu0
        %v1458 = vadd.f32 %v1240, %v1457
        %1459 = vmatmul.bf16.gmra.mxu0 %v1256
        %v1460 = vpop.f32.mrf.mxu0
        %v1461 = vadd.f32 %v1240, %v1460
        %v1462 = vpop.f32.mrf.mxu0
        %v1463 = vadd.f32 %v1240, %v1462
        %1464 = vmatmul.bf16.gmra.mxu0 %v1259
        %v1465 = vpop.f32.mrf.mxu0
        %v1466 = vadd.f32 %v1240, %v1465
        %v1467 = vpop.f32.mrf.mxu0
        %v1468 = vadd.f32 %v1240, %v1467
        %1469 = vmatmul.bf16.gmra.mxu0 %v1262
        %v1470 = vpop.f32.mrf.mxu0
        %v1471 = vadd.f32 %v1240, %v1470
        %v1472 = vpop.f32.mrf.mxu0
        %v1473 = vadd.f32 %v1240, %v1472
        %1474 = vmatmul.bf16.gmra.mxu0 %v1265
        %v1475 = vpop.f32.mrf.mxu0
        %v1476 = vadd.f32 %v1240, %v1475
        %v1477 = vpop.f32.mrf.mxu0
        %v1478 = vadd.f32 %v1240, %v1477
        %1479 = vmatmul.bf16.gmra.mxu0 %v1268
        %v1480 = vpop.f32.mrf.mxu0
        %v1481 = vadd.f32 %v1240, %v1480
        %v1482 = vpop.f32.mrf.mxu0
        %v1483 = vadd.f32 %v1240, %v1482
        %1484 = vmatmul.bf16.gmra.mxu0 %v1271
        %v1485 = vpop.f32.mrf.mxu0
        %v1486 = vadd.f32 %v1240, %v1485
        %v1487 = vpop.f32.mrf.mxu0
        %v1488 = vadd.f32 %v1240, %v1487
        %1489 = vmatmul.bf16.gmra.mxu0 %v1274
        %v1490 = vpop.f32.mrf.mxu0
        %v1491 = vadd.f32 %v1240, %v1490
        %v1492 = vpop.f32.mrf.mxu0
        %v1493 = vadd.f32 %v1240, %v1492
        %1494 = vmatmul.bf16.gmra.mxu0 %v1277
        %v1495 = vpop.f32.mrf.mxu0
        %v1496 = vadd.f32 %v1240, %v1495
        %v1497 = vpop.f32.mrf.mxu0
        %v1498 = vadd.f32 %v1240, %v1497
        %1499 = vmatmul.bf16.gmra.mxu0 %v1280
        %v1500 = vpop.f32.mrf.mxu0
        %v1501 = vadd.f32 %v1240, %v1500
        %v1502 = vpop.f32.mrf.mxu0
        %v1503 = vadd.f32 %v1240, %v1502
        %1504 = vmatmul.bf16.gmra.mxu0 %v1283
        %v1505 = vpop.f32.mrf.mxu0
        %v1506 = vadd.f32 %v1240, %v1505
        %v1507 = vpop.f32.mrf.mxu0
        %v1508 = vadd.f32 %v1240, %v1507
        %1509 = vmatmul.bf16.gmra.mxu0 %v1286
        %v1510 = vpop.f32.mrf.mxu0
        %v1511 = vadd.f32 %v1240, %v1510
        %v1512 = vpop.f32.mrf.mxu0
        %v1513 = vadd.f32 %v1240, %v1512
        %1514 = vmatmul.bf16.gmra.mxu0 %v1289
        %v1515 = vpop.f32.mrf.mxu0
        %v1516 = vadd.f32 %v1240, %v1515
        %v1517 = vpop.f32.mrf.mxu0
        %v1518 = vadd.f32 %v1240, %v1517
        %1519 = vmatmul.bf16.gmra.mxu0 %v1292
        %v1520 = vpop.f32.mrf.mxu0
        %v1521 = vadd.f32 %v1240, %v1520
        %v1522 = vpop.f32.mrf.mxu0
        %v1523 = vadd.f32 %v1240, %v1522
        %1524 = vmatmul.bf16.gmra.mxu0 %v1295
        %v1525 = vpop.f32.mrf.mxu0
        %v1526 = vadd.f32 %v1240, %v1525
        %v1527 = vpop.f32.mrf.mxu0
        %v1528 = vadd.f32 %v1240, %v1527
        %1529 = vmatmul.bf16.gmra.mxu0 %v1298
        %v1530 = vpop.f32.mrf.mxu0
        %v1531 = vadd.f32 %v1240, %v1530
        %v1532 = vpop.f32.mrf.mxu0
        %v1533 = vadd.f32 %v1240, %v1532
        %1534 = vmatmul.bf16.gmra.mxu0 %v1301
        %v1535 = vpop.f32.mrf.mxu0
        %v1536 = vadd.f32 %v1240, %v1535
        %v1537 = vpop.f32.mrf.mxu0
        %v1538 = vadd.f32 %v1240, %v1537
        %1539 = vmatmul.bf16.gmra.mxu0 %v1304
        %v1540 = vpop.f32.mrf.mxu0
        %v1541 = vadd.f32 %v1240, %v1540
        %v1542 = vpop.f32.mrf.mxu0
        %v1543 = vadd.f32 %v1240, %v1542
        %1544 = vmatmul.bf16.gmra.mxu0 %v1307
        %v1545 = vpop.f32.mrf.mxu0
        %v1546 = vadd.f32 %v1240, %v1545
        %v1547 = vpop.f32.mrf.mxu0
        %v1548 = vadd.f32 %v1240, %v1547
        %1549 = vmatmul.bf16.gmra.mxu0 %v1310
        %v1550 = vpop.f32.mrf.mxu0
        %v1551 = vadd.f32 %v1240, %v1550
        %v1552 = vpop.f32.mrf.mxu0
        %v1553 = vadd.f32 %v1240, %v1552
        %1554 = vmatmul.bf16.gmra.mxu0 %v1313
        %v1555 = vpop.f32.mrf.mxu0
        %v1556 = vadd.f32 %v1240, %v1555
        %v1557 = vpop.f32.mrf.mxu0
        %v1558 = vadd.f32 %v1240, %v1557
        %1559 = vmatmul.bf16.gmra.mxu0 %v1316
        %v1560 = vpop.f32.mrf.mxu0
        %v1561 = vadd.f32 %v1240, %v1560
        %v1562 = vpop.f32.mrf.mxu0
        %v1563 = vadd.f32 %v1240, %v1562
        %1564 = vmatmul.bf16.gmra.mxu0 %v1319
        %v1565 = vpop.f32.mrf.mxu0
        %v1566 = vadd.f32 %v1240, %v1565
        %v1567 = vpop.f32.mrf.mxu0
        %v1568 = vadd.f32 %v1240, %v1567
        %1569 = vmatmul.bf16.gmra.mxu0 %v1322
        %v1570 = vpop.f32.mrf.mxu0
        %v1571 = vadd.f32 %v1240, %v1570
        %v1572 = vpop.f32.mrf.mxu0
        %v1573 = vadd.f32 %v1240, %v1572
        %1574 = vmatmul.bf16.gmra.mxu0 %v1325
        %v1575 = vpop.f32.mrf.mxu0
        %v1576 = vadd.f32 %v1240, %v1575
        %v1577 = vpop.f32.mrf.mxu0
        %v1578 = vadd.f32 %v1240, %v1577
        %1579 = vmatmul.bf16.gmra.mxu0 %v1328
        %v1580 = vpop.f32.mrf.mxu0
        %v1581 = vadd.f32 %v1240, %v1580
        %v1582 = vpop.f32.mrf.mxu0
        %v1583 = vadd.f32 %v1240, %v1582
        %1584 = vmatmul.bf16.gmra.mxu0 %v1331
        %v1585 = vpop.f32.mrf.mxu0
        %v1586 = vadd.f32 %v1240, %v1585
        %v1587 = vpop.f32.mrf.mxu0
        %v1588 = vadd.f32 %v1240, %v1587
        %1589 = vmatmul.bf16.gmra.mxu0 %v1334
        %v1590 = vpop.f32.mrf.mxu0
        %v1591 = vadd.f32 %v1240, %v1590
        %v1592 = vpop.f32.mrf.mxu0
        %v1593 = vadd.f32 %v1240, %v1592
        %1594 = vmatmul.bf16.gmra.mxu0 %v1337
        %v1595 = vpop.f32.mrf.mxu0
        %v1596 = vadd.f32 %v1240, %v1595
        %v1597 = vpop.f32.mrf.mxu0
        %v1598 = vadd.f32 %v1240, %v1597
        %1599 = vmatmul.bf16.gmra.mxu0 %v1340
        %v1600 = vpop.f32.mrf.mxu0
        %v1601 = vadd.f32 %v1240, %v1600
        %v1602 = vpop.f32.mrf.mxu0
        %v1603 = vadd.f32 %v1240, %v1602
        %1604 = vmatmul.bf16.gmra.mxu0 %v1343
        %v1605 = vpop.f32.mrf.mxu0
        %v1606 = vadd.f32 %v1240, %v1605
        %v1607 = vpop.f32.mrf.mxu0
        %v1608 = vadd.f32 %v1240, %v1607
        %1609 = vmatmul.bf16.gmra.mxu0 %v1346
        %v1610 = vpop.f32.mrf.mxu0
        %v1611 = vadd.f32 %v1240, %v1610
        %v1612 = vpop.f32.mrf.mxu0
        %v1613 = vadd.f32 %v1240, %v1612
        %1614 = vmatmul.bf16.gmra.mxu0 %v1349
        %v1615 = vpop.f32.mrf.mxu0
        %v1616 = vadd.f32 %v1240, %v1615
        %v1617 = vpop.f32.mrf.mxu0
        %v1618 = vadd.f32 %v1240, %v1617
        %1619 = vmatmul.bf16.gmra.mxu0 %v1352
        %v1620 = vpop.f32.mrf.mxu0
        %v1621 = vadd.f32 %v1240, %v1620
        %v1622 = vpop.f32.mrf.mxu0
        %v1623 = vadd.f32 %v1240, %v1622
        %1624 = vmatmul.bf16.gmra.mxu0 %v1355
        %v1625 = vpop.f32.mrf.mxu0
        %v1626 = vadd.f32 %v1240, %v1625
        %v1627 = vpop.f32.mrf.mxu0
        %v1628 = vadd.f32 %v1240, %v1627
        %1629 = vmatmul.bf16.gmra.mxu0 %v1358
        %v1630 = vpop.f32.mrf.mxu0
        %v1631 = vadd.f32 %v1240, %v1630
        %v1632 = vpop.f32.mrf.mxu0
        %v1633 = vadd.f32 %v1240, %v1632
        %1634 = vmatmul.bf16.gmra.mxu0 %v1361
        %v1635 = vpop.f32.mrf.mxu0
        %v1636 = vadd.f32 %v1240, %v1635
        %v1637 = vpop.f32.mrf.mxu0
        %v1638 = vadd.f32 %v1240, %v1637
        %1639 = vmatmul.bf16.gmra.mxu0 %v1364
        %v1640 = vpop.f32.mrf.mxu0
        %v1641 = vadd.f32 %v1240, %v1640
        %v1642 = vpop.f32.mrf.mxu0
        %v1643 = vadd.f32 %v1240, %v1642
        %1644 = vmatmul.bf16.gmra.mxu0 %v1367
        %v1645 = vpop.f32.mrf.mxu0
        %v1646 = vadd.f32 %v1240, %v1645
        %v1647 = vpop.f32.mrf.mxu0
        %v1648 = vadd.f32 %v1240, %v1647
        %1649 = vmatmul.bf16.gmra.mxu0 %v1370
        %v1650 = vpop.f32.mrf.mxu0
        %v1651 = vadd.f32 %v1240, %v1650
        %v1652 = vpop.f32.mrf.mxu0
        %v1653 = vadd.f32 %v1240, %v1652
        %1654 = vmatmul.bf16.gmra.mxu0 %v1373
        %v1655 = vpop.f32.mrf.mxu0
        %v1656 = vadd.f32 %v1240, %v1655
        %v1657 = vpop.f32.mrf.mxu0
        %v1658 = vadd.f32 %v1240, %v1657
        %1659 = vmatmul.bf16.gmra.mxu0 %v1376
        %v1660 = vpop.f32.mrf.mxu0
        %v1661 = vadd.f32 %v1240, %v1660
        %v1662 = vpop.f32.mrf.mxu0
        %v1663 = vadd.f32 %v1240, %v1662
        %1664 = vmatmul.bf16.gmra.mxu0 %v1379
        %v1665 = vpop.f32.mrf.mxu0
        %v1666 = vadd.f32 %v1240, %v1665
        %v1667 = vpop.f32.mrf.mxu0
        %v1668 = vadd.f32 %v1240, %v1667
        %1669 = vmatmul.bf16.gmra.mxu0 %v1382
        %v1670 = vpop.f32.mrf.mxu0
        %v1671 = vadd.f32 %v1240, %v1670
        %v1672 = vpop.f32.mrf.mxu0
        %v1673 = vadd.f32 %v1240, %v1672
        %1674 = vmatmul.bf16.gmra.mxu0 %v1385
        %v1675 = vpop.f32.mrf.mxu0
        %v1676 = vadd.f32 %v1240, %v1675
        %v1677 = vpop.f32.mrf.mxu0
        %v1678 = vadd.f32 %v1240, %v1677
        %1679 = vmatmul.bf16.gmra.mxu0 %v1388
        %v1680 = vpop.f32.mrf.mxu0
        %v1681 = vadd.f32 %v1240, %v1680
        %v1682 = vpop.f32.mrf.mxu0
        %v1683 = vadd.f32 %v1240, %v1682
        %1684 = vmatmul.bf16.gmra.mxu0 %v1391
        %v1685 = vpop.f32.mrf.mxu0
        %v1686 = vadd.f32 %v1240, %v1685
        %v1687 = vpop.f32.mrf.mxu0
        %v1688 = vadd.f32 %v1240, %v1687
        %1689 = vmatmul.bf16.gmra.mxu0 %v1394
        %v1690 = vpop.f32.mrf.mxu0
        %v1691 = vadd.f32 %v1240, %v1690
        %v1692 = vpop.f32.mrf.mxu0
        %v1693 = vadd.f32 %v1240, %v1692
        %1694 = vmatmul.bf16.gmra.mxu0 %v1397
        %v1695 = vpop.f32.mrf.mxu0
        %v1696 = vadd.f32 %v1240, %v1695
        %v1697 = vpop.f32.mrf.mxu0
        %v1698 = vadd.f32 %v1240, %v1697
        %1699 = vmatmul.bf16.gmra.mxu0 %v1400
        %v1700 = vpop.f32.mrf.mxu0
        %v1701 = vadd.f32 %v1240, %v1700
        %v1702 = vpop.f32.mrf.mxu0
        %v1703 = vadd.f32 %v1240, %v1702
        %1704 = vmatmul.bf16.gmra.mxu0 %v1403
        %v1705 = vpop.f32.mrf.mxu0
        %v1706 = vadd.f32 %v1240, %v1705
        %v1707 = vpop.f32.mrf.mxu0
        %v1708 = vadd.f32 %v1240, %v1707
        %1709 = vmatmul.bf16.gmra.mxu0 %v1406
        %v1710 = vpop.f32.mrf.mxu0
        %v1711 = vadd.f32 %v1240, %v1710
        %v1712 = vpop.f32.mrf.mxu0
        %v1713 = vadd.f32 %v1240, %v1712
        %1714 = vmatmul.bf16.gmra.mxu0 %v1409
        %v1715 = vpop.f32.mrf.mxu0
        %v1716 = vadd.f32 %v1240, %v1715
        %v1717 = vpop.f32.mrf.mxu0
        %v1718 = vadd.f32 %v1240, %v1717
        %1719 = vmatmul.bf16.gmra.mxu0 %v1412
        %v1720 = vpop.f32.mrf.mxu0
        %v1721 = vadd.f32 %v1240, %v1720
        %v1722 = vpop.f32.mrf.mxu0
        %v1723 = vadd.f32 %v1240, %v1722
        %1724 = vmatmul.bf16.gmra.mxu0 %v1415
        %v1725 = vpop.f32.mrf.mxu0
        %v1726 = vadd.f32 %v1240, %v1725
        %v1727 = vpop.f32.mrf.mxu0
        %v1728 = vadd.f32 %v1240, %v1727
        %1729 = vmatmul.bf16.gmra.mxu0 %v1418
        %v1730 = vpop.f32.mrf.mxu0
        %v1731 = vadd.f32 %v1240, %v1730
        %v1732 = vpop.f32.mrf.mxu0
        %v1733 = vadd.f32 %v1240, %v1732
        %1734 = vmatmul.bf16.gmra.mxu0 %v1421
        %v1735 = vpop.f32.mrf.mxu0
        %v1736 = vadd.f32 %v1240, %v1735
        %v1737 = vpop.f32.mrf.mxu0
        %v1738 = vadd.f32 %v1240, %v1737
        %1739 = vmatmul.bf16.gmra.mxu0 %v1424
        %v1740 = vpop.f32.mrf.mxu0
        %v1741 = vadd.f32 %v1240, %v1740
        %v1742 = vpop.f32.mrf.mxu0
        %v1743 = vadd.f32 %v1240, %v1742
        %1744 = vmatmul.bf16.gmra.mxu0 %v1427
        %v1745 = vpop.f32.mrf.mxu0
        %v1746 = vadd.f32 %v1240, %v1745
        %v1747 = vpop.f32.mrf.mxu0
        %v1748 = vadd.f32 %v1240, %v1747
        %1749 = vmatmul.bf16.gmra.mxu0 %v1430
        %v1750 = vpop.f32.mrf.mxu0
        %v1751 = vadd.f32 %v1240, %v1750
        %v1752 = vpop.f32.mrf.mxu0
        %v1753 = vadd.f32 %v1240, %v1752
        %1754 = vmatmul.bf16.gmra.mxu0 %v1433
        %v1755 = vpop.f32.mrf.mxu0
        %v1756 = vadd.f32 %v1240, %v1755
        %v1757 = vpop.f32.mrf.mxu0
        %v1758 = vadd.f32 %v1240, %v1757
        %1759 = vmatmul.bf16.gmra.mxu0 %v1436
        %v1760 = vpop.f32.mrf.mxu0
        %v1761 = vadd.f32 %v1240, %v1760
        %v1762 = vpop.f32.mrf.mxu0
        %v1763 = vadd.f32 %v1240, %v1762
        %1764 = vmatmul.bf16.gmra.mxu0 %v1439
        %v1765 = vpop.f32.mrf.mxu0
        %v1766 = vadd.f32 %v1240, %v1765
        %v1767 = vpop.f32.mrf.mxu0
        %v1768 = vadd.f32 %v1240, %v1767
        %1769 = vdwg.mxu0
        %v1770 = vmax.f32 %v1451, 0.0
        %v1771 = vmax.f32 %v1453, 0.0
        %v1772 = vmax.f32 %v1456, 0.0
        %v1773 = vmax.f32 %v1458, 0.0
        %v1774 = vmax.f32 %v1461, 0.0
        %v1775 = vmax.f32 %v1463, 0.0
        %v1776 = vmax.f32 %v1466, 0.0
        %v1777 = vmax.f32 %v1468, 0.0
        %v1778 = vmax.f32 %v1471, 0.0
        %v1779 = vmax.f32 %v1473, 0.0
        %v1780 = vmax.f32 %v1476, 0.0
        %v1781 = vmax.f32 %v1478, 0.0
        %v1782 = vmax.f32 %v1481, 0.0
        %v1783 = vmax.f32 %v1483, 0.0
        %v1784 = vmax.f32 %v1486, 0.0
        %v1785 = vmax.f32 %v1488, 0.0
        %v1786 = vmax.f32 %v1491, 0.0
        %v1787 = vmax.f32 %v1493, 0.0
        %v1788 = vmax.f32 %v1496, 0.0
        %v1789 = vmax.f32 %v1498, 0.0
        %v1790 = vmax.f32 %v1501, 0.0
        %v1791 = vmax.f32 %v1503, 0.0
        %v1792 = vmax.f32 %v1506, 0.0
        %v1793 = vmax.f32 %v1508, 0.0
        %v1794 = vmax.f32 %v1511, 0.0
        %v1795 = vmax.f32 %v1513, 0.0
        %v1796 = vmax.f32 %v1516, 0.0
        %v1797 = vmax.f32 %v1518, 0.0
        %v1798 = vmax.f32 %v1521, 0.0
        %v1799 = vmax.f32 %v1523, 0.0
        %v1800 = vmax.f32 %v1526, 0.0
        %v1801 = vmax.f32 %v1528, 0.0
        %v1802 = vmax.f32 %v1531, 0.0
        %v1803 = vmax.f32 %v1533, 0.0
        %v1804 = vmax.f32 %v1536, 0.0
        %v1805 = vmax.f32 %v1538, 0.0
        %v1806 = vmax.f32 %v1541, 0.0
        %v1807 = vmax.f32 %v1543, 0.0
        %v1808 = vmax.f32 %v1546, 0.0
        %v1809 = vmax.f32 %v1548, 0.0
        %v1810 = vmax.f32 %v1551, 0.0
        %v1811 = vmax.f32 %v1553, 0.0
        %v1812 = vmax.f32 %v1556, 0.0
        %v1813 = vmax.f32 %v1558, 0.0
        %v1814 = vmax.f32 %v1561, 0.0
        %v1815 = vmax.f32 %v1563, 0.0
        %v1816 = vmax.f32 %v1566, 0.0
        %v1817 = vmax.f32 %v1568, 0.0
        %v1818 = vmax.f32 %v1571, 0.0
        %v1819 = vmax.f32 %v1573, 0.0
        %v1820 = vmax.f32 %v1576, 0.0
        %v1821 = vmax.f32 %v1578, 0.0
        %v1822 = vmax.f32 %v1581, 0.0
        %v1823 = vmax.f32 %v1583, 0.0
        %v1824 = vmax.f32 %v1586, 0.0
        %v1825 = vmax.f32 %v1588, 0.0
        %v1826 = vmax.f32 %v1591, 0.0
        %v1827 = vmax.f32 %v1593, 0.0
        %v1828 = vmax.f32 %v1596, 0.0
        %v1829 = vmax.f32 %v1598, 0.0
        %v1830 = vmax.f32 %v1601, 0.0
        %v1831 = vmax.f32 %v1603, 0.0
        %v1832 = vmax.f32 %v1606, 0.0
        %v1833 = vmax.f32 %v1608, 0.0
        %v1834 = vmax.f32 %v1611, 0.0
        %v1835 = vmax.f32 %v1613, 0.0
        %v1836 = vmax.f32 %v1616, 0.0
        %v1837 = vmax.f32 %v1618, 0.0
        %v1838 = vmax.f32 %v1621, 0.0
        %v1839 = vmax.f32 %v1623, 0.0
        %v1840 = vmax.f32 %v1626, 0.0
        %v1841 = vmax.f32 %v1628, 0.0
        %v1842 = vmax.f32 %v1631, 0.0
        %v1843 = vmax.f32 %v1633, 0.0
        %v1844 = vmax.f32 %v1636, 0.0
        %v1845 = vmax.f32 %v1638, 0.0
        %v1846 = vmax.f32 %v1641, 0.0
        %v1847 = vmax.f32 %v1643, 0.0
        %v1848 = vmax.f32 %v1646, 0.0
        %v1849 = vmax.f32 %v1648, 0.0
        %v1850 = vmax.f32 %v1651, 0.0
        %v1851 = vmax.f32 %v1653, 0.0
        %v1852 = vmax.f32 %v1656, 0.0
        %v1853 = vmax.f32 %v1658, 0.0
        %v1854 = vmax.f32 %v1661, 0.0
        %v1855 = vmax.f32 %v1663, 0.0
        %v1856 = vmax.f32 %v1666, 0.0
        %v1857 = vmax.f32 %v1668, 0.0
        %v1858 = vmax.f32 %v1671, 0.0
        %v1859 = vmax.f32 %v1673, 0.0
        %v1860 = vmax.f32 %v1676, 0.0
        %v1861 = vmax.f32 %v1678, 0.0
        %v1862 = vmax.f32 %v1681, 0.0
        %v1863 = vmax.f32 %v1683, 0.0
        %v1864 = vmax.f32 %v1686, 0.0
        %v1865 = vmax.f32 %v1688, 0.0
        %v1866 = vmax.f32 %v1691, 0.0
        %v1867 = vmax.f32 %v1693, 0.0
        %v1868 = vmax.f32 %v1696, 0.0
        %v1869 = vmax.f32 %v1698, 0.0
        %v1870 = vmax.f32 %v1701, 0.0
        %v1871 = vmax.f32 %v1703, 0.0
        %v1872 = vmax.f32 %v1706, 0.0
        %v1873 = vmax.f32 %v1708, 0.0
        %v1874 = vmax.f32 %v1711, 0.0
        %v1875 = vmax.f32 %v1713, 0.0
        %v1876 = vmax.f32 %v1716, 0.0
        %v1877 = vmax.f32 %v1718, 0.0
        %v1878 = vmax.f32 %v1721, 0.0
        %v1879 = vmax.f32 %v1723, 0.0
        %v1880 = vmax.f32 %v1726, 0.0
        %v1881 = vmax.f32 %v1728, 0.0
        %v1882 = vmax.f32 %v1731, 0.0
        %v1883 = vmax.f32 %v1733, 0.0
        %v1884 = vmax.f32 %v1736, 0.0
        %v1885 = vmax.f32 %v1738, 0.0
        %v1886 = vmax.f32 %v1741, 0.0
        %v1887 = vmax.f32 %v1743, 0.0
        %v1888 = vmax.f32 %v1746, 0.0
        %v1889 = vmax.f32 %v1748, 0.0
        %v1890 = vmax.f32 %v1751, 0.0
        %v1891 = vmax.f32 %v1753, 0.0
        %v1892 = vmax.f32 %v1756, 0.0
        %v1893 = vmax.f32 %v1758, 0.0
        %v1894 = vmax.f32 %v1761, 0.0
        %v1895 = vmax.f32 %v1763, 0.0
        %v1896 = vmax.f32 %v1766, 0.0
        %v1897 = vmax.f32 %v1768, 0.0
        %v1898 = vpack.c.bf16 %v1771, %v1770
        %v1899 = vpack.c.bf16 %v1773, %v1772
        %v1900 = vpack.c.bf16 %v1775, %v1774
        %v1901 = vpack.c.bf16 %v1777, %v1776
        %v1902 = vpack.c.bf16 %v1779, %v1778
        %v1903 = vpack.c.bf16 %v1781, %v1780
        %v1904 = vpack.c.bf16 %v1783, %v1782
        %v1905 = vpack.c.bf16 %v1785, %v1784
        %v1906 = vpack.c.bf16 %v1787, %v1786
        %v1907 = vpack.c.bf16 %v1789, %v1788
        %v1908 = vpack.c.bf16 %v1791, %v1790
        %v1909 = vpack.c.bf16 %v1793, %v1792
        %v1910 = vpack.c.bf16 %v1795, %v1794
        %v1911 = vpack.c.bf16 %v1797, %v1796
        %v1912 = vpack.c.bf16 %v1799, %v1798
        %v1913 = vpack.c.bf16 %v1801, %v1800
        %v1914 = vpack.c.bf16 %v1803, %v1802
        %v1915 = vpack.c.bf16 %v1805, %v1804
        %v1916 = vpack.c.bf16 %v1807, %v1806
        %v1917 = vpack.c.bf16 %v1809, %v1808
        %v1918 = vpack.c.bf16 %v1811, %v1810
        %v1919 = vpack.c.bf16 %v1813, %v1812
        %v1920 = vpack.c.bf16 %v1815, %v1814
        %v1921 = vpack.c.bf16 %v1817, %v1816
        %v1922 = vpack.c.bf16 %v1819, %v1818
        %v1923 = vpack.c.bf16 %v1821, %v1820
        %v1924 = vpack.c.bf16 %v1823, %v1822
        %v1925 = vpack.c.bf16 %v1825, %v1824
        %v1926 = vpack.c.bf16 %v1827, %v1826
        %v1927 = vpack.c.bf16 %v1829, %v1828
        %v1928 = vpack.c.bf16 %v1831, %v1830
        %v1929 = vpack.c.bf16 %v1833, %v1832
        %v1930 = vpack.c.bf16 %v1835, %v1834
        %v1931 = vpack.c.bf16 %v1837, %v1836
        %v1932 = vpack.c.bf16 %v1839, %v1838
        %v1933 = vpack.c.bf16 %v1841, %v1840
        %v1934 = vpack.c.bf16 %v1843, %v1842
        %v1935 = vpack.c.bf16 %v1845, %v1844
        %v1936 = vpack.c.bf16 %v1847, %v1846
        %v1937 = vpack.c.bf16 %v1849, %v1848
        %v1938 = vpack.c.bf16 %v1851, %v1850
        %v1939 = vpack.c.bf16 %v1853, %v1852
        %v1940 = vpack.c.bf16 %v1855, %v1854
        %v1941 = vpack.c.bf16 %v1857, %v1856
        %v1942 = vpack.c.bf16 %v1859, %v1858
        %v1943 = vpack.c.bf16 %v1861, %v1860
        %v1944 = vpack.c.bf16 %v1863, %v1862
        %v1945 = vpack.c.bf16 %v1865, %v1864
        %v1946 = vpack.c.bf16 %v1867, %v1866
        %v1947 = vpack.c.bf16 %v1869, %v1868
        %v1948 = vpack.c.bf16 %v1871, %v1870
        %v1949 = vpack.c.bf16 %v1873, %v1872
        %v1950 = vpack.c.bf16 %v1875, %v1874
        %v1951 = vpack.c.bf16 %v1877, %v1876
        %v1952 = vpack.c.bf16 %v1879, %v1878
        %v1953 = vpack.c.bf16 %v1881, %v1880
        %v1954 = vpack.c.bf16 %v1883, %v1882
        %v1955 = vpack.c.bf16 %v1885, %v1884
        %v1956 = vpack.c.bf16 %v1887, %v1886
        %v1957 = vpack.c.bf16 %v1889, %v1888
        %v1958 = vpack.c.bf16 %v1891, %v1890
        %v1959 = vpack.c.bf16 %v1893, %v1892
        %v1960 = vpack.c.bf16 %v1895, %v1894
        %v1961 = vpack.c.bf16 %v1897, %v1896
        %v1962 = vld [vmem:[%s3] sm:$0xf]
        %v1963 = vld [vmem:[%s3 + $0x4] sm:$0xf]
        %v1964 = vld [vmem:[%s3 + $0x8] sm:$0xf]
        %v1965 = vld [vmem:[%s3 + $0xc] sm:$0xf]
        %v1966 = vld [vmem:[%s3 + $0x10] sm:$0xf]
        %v1967 = vld [vmem:[%s3 + $0x14] sm:$0xf]
        %v1968 = vld [vmem:[%s3 + $0x18] sm:$0xf]
        %v1969 = vld [vmem:[%s3 + $0x1c] sm:$0xf]
        %v1970 = vld [vmem:[%s4] sm:$0x1]
        %v1972 = vperm.slane %v1970, 0
        %v1982 = vunpack.c.l.b16 %v1962
        %v1983 = vunpack.c.l.b16 %v1963
        %v1984 = vunpack.c.l.b16 %v1964
        %v1985 = vunpack.c.l.b16 %v1965
        %v1986 = vunpack.c.l.b16 %v1966
        %v1987 = vunpack.c.l.b16 %v1967
        %v1988 = vunpack.c.l.b16 %v1968
        %v1989 = vunpack.c.l.b16 %v1969
        %v1990 = vpack.c.b16 %v1983, %v1982
        %v1991 = vpack.c.b16 %v1985, %v1984
        %v1992 = vpack.c.b16 %v1987, %v1986
        %v1993 = vpack.c.b16 %v1989, %v1988
        %vm1998 = vcmask 523264
        %v2000 = vsel %vm1998, %v1898, 0
        %v2003 = vsel %vm1998, %v1899, 0
        %v2006 = vsel %vm1998, %v1900, 0
        %v2009 = vsel %vm1998, %v1901, 0
        %v2012 = vsel %vm1998, %v1902, 0
        %v2015 = vsel %vm1998, %v1903, 0
        %v2018 = vsel %vm1998, %v1904, 0
        %v2021 = vsel %vm1998, %v1905, 0
        %v2024 = vsel %vm1998, %v1906, 0
        %v2027 = vsel %vm1998, %v1907, 0
        %v2030 = vsel %vm1998, %v1908, 0
        %v2033 = vsel %vm1998, %v1909, 0
        %v2036 = vsel %vm1998, %v1910, 0
        %v2039 = vsel %vm1998, %v1911, 0
        %v2042 = vsel %vm1998, %v1912, 0
        %v2045 = vsel %vm1998, %v1913, 0
        %v2048 = vsel %vm1998, %v1914, 0
        %v2051 = vsel %vm1998, %v1915, 0
        %v2054 = vsel %vm1998, %v1916, 0
        %v2057 = vsel %vm1998, %v1917, 0
        %v2060 = vsel %vm1998, %v1918, 0
        %v2063 = vsel %vm1998, %v1919, 0
        %v2066 = vsel %vm1998, %v1920, 0
        %v2069 = vsel %vm1998, %v1921, 0
        %v2072 = vsel %vm1998, %v1922, 0
        %v2075 = vsel %vm1998, %v1923, 0
        %v2078 = vsel %vm1998, %v1924, 0
        %v2081 = vsel %vm1998, %v1925, 0
        %v2084 = vsel %vm1998, %v1926, 0
        %v2087 = vsel %vm1998, %v1927, 0
        %v2090 = vsel %vm1998, %v1928, 0
        %v2093 = vsel %vm1998, %v1929, 0
        %v2096 = vsel %vm1998, %v1930, 0
        %v2099 = vsel %vm1998, %v1931, 0
        %v2102 = vsel %vm1998, %v1932, 0
        %v2105 = vsel %vm1998, %v1933, 0
        %v2108 = vsel %vm1998, %v1934, 0
        %v2111 = vsel %vm1998, %v1935, 0
        %v2114 = vsel %vm1998, %v1936, 0
        %v2117 = vsel %vm1998, %v1937, 0
        %v2120 = vsel %vm1998, %v1938, 0
        %v2123 = vsel %vm1998, %v1939, 0
        %v2126 = vsel %vm1998, %v1940, 0
        %v2129 = vsel %vm1998, %v1941, 0
        %v2132 = vsel %vm1998, %v1942, 0
        %v2135 = vsel %vm1998, %v1943, 0
        %v2138 = vsel %vm1998, %v1944, 0
        %v2141 = vsel %vm1998, %v1945, 0
        %v2144 = vsel %vm1998, %v1946, 0
        %v2147 = vsel %vm1998, %v1947, 0
        %v2150 = vsel %vm1998, %v1948, 0
        %v2153 = vsel %vm1998, %v1949, 0
        %v2156 = vsel %vm1998, %v1950, 0
        %v2159 = vsel %vm1998, %v1951, 0
        %v2162 = vsel %vm1998, %v1952, 0
        %v2165 = vsel %vm1998, %v1953, 0
        %v2168 = vsel %vm1998, %v1954, 0
        %v2171 = vsel %vm1998, %v1955, 0
        %v2174 = vsel %vm1998, %v1956, 0
        %v2177 = vsel %vm1998, %v1957, 0
        %v2180 = vsel %vm1998, %v1958, 0
        %v2183 = vsel %vm1998, %v1959, 0
        %v2186 = vsel %vm1998, %v1960, 0
        %v2189 = vsel %vm1998, %v1961, 0
        %2191 = vmatpush.bf16.msra.mxu0 0
        %2192 = vmatpush.bf16.msra.mxu0 0
        %2193 = vmatpush.bf16.msra.mxu0 0
        %2194 = vmatpush.bf16.msra.mxu0 0
        %2195 = vmatpush.bf16.msra.mxu0 %v1993
        %2196 = vmatpush.bf16.msra.mxu0 %v1992
        %2197 = vmatpush.bf16.msra.mxu0 %v1991
        %2198 = vmatpush.bf16.msra.mxu0 %v1990
        %2199 = vmatmul.bf16.gmra.mxu0 %v2000
        %v2200 = vpop.f32.mrf.mxu0
        %v2201 = vadd.f32 %v1972, %v2200
        %v2202 = vpop.f32.mrf.mxu0
        %v2203 = vadd.f32 %v1972, %v2202
        %2204 = vmatmul.bf16.gmra.mxu0 %v2003
        %v2205 = vpop.f32.mrf.mxu0
        %v2206 = vadd.f32 %v1972, %v2205
        %v2207 = vpop.f32.mrf.mxu0
        %v2208 = vadd.f32 %v1972, %v2207
        %2209 = vmatmul.bf16.gmra.mxu0 %v2006
        %v2210 = vpop.f32.mrf.mxu0
        %v2211 = vadd.f32 %v1972, %v2210
        %v2212 = vpop.f32.mrf.mxu0
        %v2213 = vadd.f32 %v1972, %v2212
        %2214 = vmatmul.bf16.gmra.mxu0 %v2009
        %v2215 = vpop.f32.mrf.mxu0
        %v2216 = vadd.f32 %v1972, %v2215
        %v2217 = vpop.f32.mrf.mxu0
        %v2218 = vadd.f32 %v1972, %v2217
        %2219 = vmatmul.bf16.gmra.mxu0 %v2012
        %v2220 = vpop.f32.mrf.mxu0
        %v2221 = vadd.f32 %v1972, %v2220
        %v2222 = vpop.f32.mrf.mxu0
        %v2223 = vadd.f32 %v1972, %v2222
        %2224 = vmatmul.bf16.gmra.mxu0 %v2015
        %v2225 = vpop.f32.mrf.mxu0
        %v2226 = vadd.f32 %v1972, %v2225
        %v2227 = vpop.f32.mrf.mxu0
        %v2228 = vadd.f32 %v1972, %v2227
        %2229 = vmatmul.bf16.gmra.mxu0 %v2018
        %v2230 = vpop.f32.mrf.mxu0
        %v2231 = vadd.f32 %v1972, %v2230
        %v2232 = vpop.f32.mrf.mxu0
        %v2233 = vadd.f32 %v1972, %v2232
        %2234 = vmatmul.bf16.gmra.mxu0 %v2021
        %v2235 = vpop.f32.mrf.mxu0
        %v2236 = vadd.f32 %v1972, %v2235
        %v2237 = vpop.f32.mrf.mxu0
        %v2238 = vadd.f32 %v1972, %v2237
        %2239 = vmatmul.bf16.gmra.mxu0 %v2024
        %v2240 = vpop.f32.mrf.mxu0
        %v2241 = vadd.f32 %v1972, %v2240
        %v2242 = vpop.f32.mrf.mxu0
        %v2243 = vadd.f32 %v1972, %v2242
        %2244 = vmatmul.bf16.gmra.mxu0 %v2027
        %v2245 = vpop.f32.mrf.mxu0
        %v2246 = vadd.f32 %v1972, %v2245
        %v2247 = vpop.f32.mrf.mxu0
        %v2248 = vadd.f32 %v1972, %v2247
        %2249 = vmatmul.bf16.gmra.mxu0 %v2030
        %v2250 = vpop.f32.mrf.mxu0
        %v2251 = vadd.f32 %v1972, %v2250
        %v2252 = vpop.f32.mrf.mxu0
        %v2253 = vadd.f32 %v1972, %v2252
        %2254 = vmatmul.bf16.gmra.mxu0 %v2033
        %v2255 = vpop.f32.mrf.mxu0
        %v2256 = vadd.f32 %v1972, %v2255
        %v2257 = vpop.f32.mrf.mxu0
        %v2258 = vadd.f32 %v1972, %v2257
        %2259 = vmatmul.bf16.gmra.mxu0 %v2036
        %v2260 = vpop.f32.mrf.mxu0
        %v2261 = vadd.f32 %v1972, %v2260
        %v2262 = vpop.f32.mrf.mxu0
        %v2263 = vadd.f32 %v1972, %v2262
        %2264 = vmatmul.bf16.gmra.mxu0 %v2039
        %v2265 = vpop.f32.mrf.mxu0
        %v2266 = vadd.f32 %v1972, %v2265
        %v2267 = vpop.f32.mrf.mxu0
        %v2268 = vadd.f32 %v1972, %v2267
        %2269 = vmatmul.bf16.gmra.mxu0 %v2042
        %v2270 = vpop.f32.mrf.mxu0
        %v2271 = vadd.f32 %v1972, %v2270
        %v2272 = vpop.f32.mrf.mxu0
        %v2273 = vadd.f32 %v1972, %v2272
        %2274 = vmatmul.bf16.gmra.mxu0 %v2045
        %v2275 = vpop.f32.mrf.mxu0
        %v2276 = vadd.f32 %v1972, %v2275
        %v2277 = vpop.f32.mrf.mxu0
        %v2278 = vadd.f32 %v1972, %v2277
        %2279 = vmatmul.bf16.gmra.mxu0 %v2048
        %v2280 = vpop.f32.mrf.mxu0
        %v2281 = vadd.f32 %v1972, %v2280
        %v2282 = vpop.f32.mrf.mxu0
        %v2283 = vadd.f32 %v1972, %v2282
        %2284 = vmatmul.bf16.gmra.mxu0 %v2051
        %v2285 = vpop.f32.mrf.mxu0
        %v2286 = vadd.f32 %v1972, %v2285
        %v2287 = vpop.f32.mrf.mxu0
        %v2288 = vadd.f32 %v1972, %v2287
        %2289 = vmatmul.bf16.gmra.mxu0 %v2054
        %v2290 = vpop.f32.mrf.mxu0
        %v2291 = vadd.f32 %v1972, %v2290
        %v2292 = vpop.f32.mrf.mxu0
        %v2293 = vadd.f32 %v1972, %v2292
        %2294 = vmatmul.bf16.gmra.mxu0 %v2057
        %v2295 = vpop.f32.mrf.mxu0
        %v2296 = vadd.f32 %v1972, %v2295
        %v2297 = vpop.f32.mrf.mxu0
        %v2298 = vadd.f32 %v1972, %v2297
        %2299 = vmatmul.bf16.gmra.mxu0 %v2060
        %v2300 = vpop.f32.mrf.mxu0
        %v2301 = vadd.f32 %v1972, %v2300
        %v2302 = vpop.f32.mrf.mxu0
        %v2303 = vadd.f32 %v1972, %v2302
        %2304 = vmatmul.bf16.gmra.mxu0 %v2063
        %v2305 = vpop.f32.mrf.mxu0
        %v2306 = vadd.f32 %v1972, %v2305
        %v2307 = vpop.f32.mrf.mxu0
        %v2308 = vadd.f32 %v1972, %v2307
        %2309 = vmatmul.bf16.gmra.mxu0 %v2066
        %v2310 = vpop.f32.mrf.mxu0
        %v2311 = vadd.f32 %v1972, %v2310
        %v2312 = vpop.f32.mrf.mxu0
        %v2313 = vadd.f32 %v1972, %v2312
        %2314 = vmatmul.bf16.gmra.mxu0 %v2069
        %v2315 = vpop.f32.mrf.mxu0
        %v2316 = vadd.f32 %v1972, %v2315
        %v2317 = vpop.f32.mrf.mxu0
        %v2318 = vadd.f32 %v1972, %v2317
        %2319 = vmatmul.bf16.gmra.mxu0 %v2072
        %v2320 = vpop.f32.mrf.mxu0
        %v2321 = vadd.f32 %v1972, %v2320
        %v2322 = vpop.f32.mrf.mxu0
        %v2323 = vadd.f32 %v1972, %v2322
        %2324 = vmatmul.bf16.gmra.mxu0 %v2075
        %v2325 = vpop.f32.mrf.mxu0
        %v2326 = vadd.f32 %v1972, %v2325
        %v2327 = vpop.f32.mrf.mxu0
        %v2328 = vadd.f32 %v1972, %v2327
        %2329 = vmatmul.bf16.gmra.mxu0 %v2078
        %v2330 = vpop.f32.mrf.mxu0
        %v2331 = vadd.f32 %v1972, %v2330
        %v2332 = vpop.f32.mrf.mxu0
        %v2333 = vadd.f32 %v1972, %v2332
        %2334 = vmatmul.bf16.gmra.mxu0 %v2081
        %v2335 = vpop.f32.mrf.mxu0
        %v2336 = vadd.f32 %v1972, %v2335
        %v2337 = vpop.f32.mrf.mxu0
        %v2338 = vadd.f32 %v1972, %v2337
        %2339 = vmatmul.bf16.gmra.mxu0 %v2084
        %v2340 = vpop.f32.mrf.mxu0
        %v2341 = vadd.f32 %v1972, %v2340
        %v2342 = vpop.f32.mrf.mxu0
        %v2343 = vadd.f32 %v1972, %v2342
        %2344 = vmatmul.bf16.gmra.mxu0 %v2087
        %v2345 = vpop.f32.mrf.mxu0
        %v2346 = vadd.f32 %v1972, %v2345
        %v2347 = vpop.f32.mrf.mxu0
        %v2348 = vadd.f32 %v1972, %v2347
        %2349 = vmatmul.bf16.gmra.mxu0 %v2090
        %v2350 = vpop.f32.mrf.mxu0
        %v2351 = vadd.f32 %v1972, %v2350
        %v2352 = vpop.f32.mrf.mxu0
        %v2353 = vadd.f32 %v1972, %v2352
        %2354 = vmatmul.bf16.gmra.mxu0 %v2093
        %v2355 = vpop.f32.mrf.mxu0
        %v2356 = vadd.f32 %v1972, %v2355
        %v2357 = vpop.f32.mrf.mxu0
        %v2358 = vadd.f32 %v1972, %v2357
        %2359 = vmatmul.bf16.gmra.mxu0 %v2096
        %v2360 = vpop.f32.mrf.mxu0
        %v2361 = vadd.f32 %v1972, %v2360
        %v2362 = vpop.f32.mrf.mxu0
        %v2363 = vadd.f32 %v1972, %v2362
        %2364 = vmatmul.bf16.gmra.mxu0 %v2099
        %v2365 = vpop.f32.mrf.mxu0
        %v2366 = vadd.f32 %v1972, %v2365
        %v2367 = vpop.f32.mrf.mxu0
        %v2368 = vadd.f32 %v1972, %v2367
        %2369 = vmatmul.bf16.gmra.mxu0 %v2102
        %v2370 = vpop.f32.mrf.mxu0
        %v2371 = vadd.f32 %v1972, %v2370
        %v2372 = vpop.f32.mrf.mxu0
        %v2373 = vadd.f32 %v1972, %v2372
        %2374 = vmatmul.bf16.gmra.mxu0 %v2105
        %v2375 = vpop.f32.mrf.mxu0
        %v2376 = vadd.f32 %v1972, %v2375
        %v2377 = vpop.f32.mrf.mxu0
        %v2378 = vadd.f32 %v1972, %v2377
        %2379 = vmatmul.bf16.gmra.mxu0 %v2108
        %v2380 = vpop.f32.mrf.mxu0
        %v2381 = vadd.f32 %v1972, %v2380
        %v2382 = vpop.f32.mrf.mxu0
        %v2383 = vadd.f32 %v1972, %v2382
        %2384 = vmatmul.bf16.gmra.mxu0 %v2111
        %v2385 = vpop.f32.mrf.mxu0
        %v2386 = vadd.f32 %v1972, %v2385
        %v2387 = vpop.f32.mrf.mxu0
        %v2388 = vadd.f32 %v1972, %v2387
        %2389 = vmatmul.bf16.gmra.mxu0 %v2114
        %v2390 = vpop.f32.mrf.mxu0
        %v2391 = vadd.f32 %v1972, %v2390
        %v2392 = vpop.f32.mrf.mxu0
        %v2393 = vadd.f32 %v1972, %v2392
        %2394 = vmatmul.bf16.gmra.mxu0 %v2117
        %v2395 = vpop.f32.mrf.mxu0
        %v2396 = vadd.f32 %v1972, %v2395
        %v2397 = vpop.f32.mrf.mxu0
        %v2398 = vadd.f32 %v1972, %v2397
        %2399 = vmatmul.bf16.gmra.mxu0 %v2120
        %v2400 = vpop.f32.mrf.mxu0
        %v2401 = vadd.f32 %v1972, %v2400
        %v2402 = vpop.f32.mrf.mxu0
        %v2403 = vadd.f32 %v1972, %v2402
        %2404 = vmatmul.bf16.gmra.mxu0 %v2123
        %v2405 = vpop.f32.mrf.mxu0
        %v2406 = vadd.f32 %v1972, %v2405
        %v2407 = vpop.f32.mrf.mxu0
        %v2408 = vadd.f32 %v1972, %v2407
        %2409 = vmatmul.bf16.gmra.mxu0 %v2126
        %v2410 = vpop.f32.mrf.mxu0
        %v2411 = vadd.f32 %v1972, %v2410
        %v2412 = vpop.f32.mrf.mxu0
        %v2413 = vadd.f32 %v1972, %v2412
        %2414 = vmatmul.bf16.gmra.mxu0 %v2129
        %v2415 = vpop.f32.mrf.mxu0
        %v2416 = vadd.f32 %v1972, %v2415
        %v2417 = vpop.f32.mrf.mxu0
        %v2418 = vadd.f32 %v1972, %v2417
        %2419 = vmatmul.bf16.gmra.mxu0 %v2132
        %v2420 = vpop.f32.mrf.mxu0
        %v2421 = vadd.f32 %v1972, %v2420
        %v2422 = vpop.f32.mrf.mxu0
        %v2423 = vadd.f32 %v1972, %v2422
        %2424 = vmatmul.bf16.gmra.mxu0 %v2135
        %v2425 = vpop.f32.mrf.mxu0
        %v2426 = vadd.f32 %v1972, %v2425
        %v2427 = vpop.f32.mrf.mxu0
        %v2428 = vadd.f32 %v1972, %v2427
        %2429 = vmatmul.bf16.gmra.mxu0 %v2138
        %v2430 = vpop.f32.mrf.mxu0
        %v2431 = vadd.f32 %v1972, %v2430
        %v2432 = vpop.f32.mrf.mxu0
        %v2433 = vadd.f32 %v1972, %v2432
        %2434 = vmatmul.bf16.gmra.mxu0 %v2141
        %v2435 = vpop.f32.mrf.mxu0
        %v2436 = vadd.f32 %v1972, %v2435
        %v2437 = vpop.f32.mrf.mxu0
        %v2438 = vadd.f32 %v1972, %v2437
        %2439 = vmatmul.bf16.gmra.mxu0 %v2144
        %v2440 = vpop.f32.mrf.mxu0
        %v2441 = vadd.f32 %v1972, %v2440
        %v2442 = vpop.f32.mrf.mxu0
        %v2443 = vadd.f32 %v1972, %v2442
        %2444 = vmatmul.bf16.gmra.mxu0 %v2147
        %v2445 = vpop.f32.mrf.mxu0
        %v2446 = vadd.f32 %v1972, %v2445
        %v2447 = vpop.f32.mrf.mxu0
        %v2448 = vadd.f32 %v1972, %v2447
        %2449 = vmatmul.bf16.gmra.mxu0 %v2150
        %v2450 = vpop.f32.mrf.mxu0
        %v2451 = vadd.f32 %v1972, %v2450
        %v2452 = vpop.f32.mrf.mxu0
        %v2453 = vadd.f32 %v1972, %v2452
        %2454 = vmatmul.bf16.gmra.mxu0 %v2153
        %v2455 = vpop.f32.mrf.mxu0
        %v2456 = vadd.f32 %v1972, %v2455
        %v2457 = vpop.f32.mrf.mxu0
        %v2458 = vadd.f32 %v1972, %v2457
        %2459 = vmatmul.bf16.gmra.mxu0 %v2156
        %v2460 = vpop.f32.mrf.mxu0
        %v2461 = vadd.f32 %v1972, %v2460
        %v2462 = vpop.f32.mrf.mxu0
        %v2463 = vadd.f32 %v1972, %v2462
        %2464 = vmatmul.bf16.gmra.mxu0 %v2159
        %v2465 = vpop.f32.mrf.mxu0
        %v2466 = vadd.f32 %v1972, %v2465
        %v2467 = vpop.f32.mrf.mxu0
        %v2468 = vadd.f32 %v1972, %v2467
        %2469 = vmatmul.bf16.gmra.mxu0 %v2162
        %v2470 = vpop.f32.mrf.mxu0
        %v2471 = vadd.f32 %v1972, %v2470
        %v2472 = vpop.f32.mrf.mxu0
        %v2473 = vadd.f32 %v1972, %v2472
        %2474 = vmatmul.bf16.gmra.mxu0 %v2165
        %v2475 = vpop.f32.mrf.mxu0
        %v2476 = vadd.f32 %v1972, %v2475
        %v2477 = vpop.f32.mrf.mxu0
        %v2478 = vadd.f32 %v1972, %v2477
        %2479 = vmatmul.bf16.gmra.mxu0 %v2168
        %v2480 = vpop.f32.mrf.mxu0
        %v2481 = vadd.f32 %v1972, %v2480
        %v2482 = vpop.f32.mrf.mxu0
        %v2483 = vadd.f32 %v1972, %v2482
        %2484 = vmatmul.bf16.gmra.mxu0 %v2171
        %v2485 = vpop.f32.mrf.mxu0
        %v2486 = vadd.f32 %v1972, %v2485
        %v2487 = vpop.f32.mrf.mxu0
        %v2488 = vadd.f32 %v1972, %v2487
        %2489 = vmatmul.bf16.gmra.mxu0 %v2174
        %v2490 = vpop.f32.mrf.mxu0
        %v2491 = vadd.f32 %v1972, %v2490
        %v2492 = vpop.f32.mrf.mxu0
        %v2493 = vadd.f32 %v1972, %v2492
        %2494 = vmatmul.bf16.gmra.mxu0 %v2177
        %v2495 = vpop.f32.mrf.mxu0
        %v2496 = vadd.f32 %v1972, %v2495
        %v2497 = vpop.f32.mrf.mxu0
        %v2498 = vadd.f32 %v1972, %v2497
        %2499 = vmatmul.bf16.gmra.mxu0 %v2180
        %v2500 = vpop.f32.mrf.mxu0
        %v2501 = vadd.f32 %v1972, %v2500
        %v2502 = vpop.f32.mrf.mxu0
        %v2503 = vadd.f32 %v1972, %v2502
        %2504 = vmatmul.bf16.gmra.mxu0 %v2183
        %v2505 = vpop.f32.mrf.mxu0
        %v2506 = vadd.f32 %v1972, %v2505
        %v2507 = vpop.f32.mrf.mxu0
        %v2508 = vadd.f32 %v1972, %v2507
        %2509 = vmatmul.bf16.gmra.mxu0 %v2186
        %v2510 = vpop.f32.mrf.mxu0
        %v2511 = vadd.f32 %v1972, %v2510
        %v2512 = vpop.f32.mrf.mxu0
        %v2513 = vadd.f32 %v1972, %v2512
        %2514 = vmatmul.bf16.gmra.mxu0 %v2189
        %v2515 = vpop.f32.mrf.mxu0
        %v2516 = vadd.f32 %v1972, %v2515
        %v2517 = vpop.f32.mrf.mxu0
        %v2518 = vadd.f32 %v1972, %v2517
        %2519 = vdwg.mxu0
        %v2520 = vmax.f32 %v2201, 0.0
        %v2521 = vmax.f32 %v2203, 0.0
        %v2522 = vmax.f32 %v2206, 0.0
        %v2523 = vmax.f32 %v2208, 0.0
        %v2524 = vmax.f32 %v2211, 0.0
        %v2525 = vmax.f32 %v2213, 0.0
        %v2526 = vmax.f32 %v2216, 0.0
        %v2527 = vmax.f32 %v2218, 0.0
        %v2528 = vmax.f32 %v2221, 0.0
        %v2529 = vmax.f32 %v2223, 0.0
        %v2530 = vmax.f32 %v2226, 0.0
        %v2531 = vmax.f32 %v2228, 0.0
        %v2532 = vmax.f32 %v2231, 0.0
        %v2533 = vmax.f32 %v2233, 0.0
        %v2534 = vmax.f32 %v2236, 0.0
        %v2535 = vmax.f32 %v2238, 0.0
        %v2536 = vmax.f32 %v2241, 0.0
        %v2537 = vmax.f32 %v2243, 0.0
        %v2538 = vmax.f32 %v2246, 0.0
        %v2539 = vmax.f32 %v2248, 0.0
        %v2540 = vmax.f32 %v2251, 0.0
        %v2541 = vmax.f32 %v2253, 0.0
        %v2542 = vmax.f32 %v2256, 0.0
        %v2543 = vmax.f32 %v2258, 0.0
        %v2544 = vmax.f32 %v2261, 0.0
        %v2545 = vmax.f32 %v2263, 0.0
        %v2546 = vmax.f32 %v2266, 0.0
        %v2547 = vmax.f32 %v2268, 0.0
        %v2548 = vmax.f32 %v2271, 0.0
        %v2549 = vmax.f32 %v2273, 0.0
        %v2550 = vmax.f32 %v2276, 0.0
        %v2551 = vmax.f32 %v2278, 0.0
        %v2552 = vmax.f32 %v2281, 0.0
        %v2553 = vmax.f32 %v2283, 0.0
        %v2554 = vmax.f32 %v2286, 0.0
        %v2555 = vmax.f32 %v2288, 0.0
        %v2556 = vmax.f32 %v2291, 0.0
        %v2557 = vmax.f32 %v2293, 0.0
        %v2558 = vmax.f32 %v2296, 0.0
        %v2559 = vmax.f32 %v2298, 0.0
        %v2560 = vmax.f32 %v2301, 0.0
        %v2561 = vmax.f32 %v2303, 0.0
        %v2562 = vmax.f32 %v2306, 0.0
        %v2563 = vmax.f32 %v2308, 0.0
        %v2564 = vmax.f32 %v2311, 0.0
        %v2565 = vmax.f32 %v2313, 0.0
        %v2566 = vmax.f32 %v2316, 0.0
        %v2567 = vmax.f32 %v2318, 0.0
        %v2568 = vmax.f32 %v2321, 0.0
        %v2569 = vmax.f32 %v2323, 0.0
        %v2570 = vmax.f32 %v2326, 0.0
        %v2571 = vmax.f32 %v2328, 0.0
        %v2572 = vmax.f32 %v2331, 0.0
        %v2573 = vmax.f32 %v2333, 0.0
        %v2574 = vmax.f32 %v2336, 0.0
        %v2575 = vmax.f32 %v2338, 0.0
        %v2576 = vmax.f32 %v2341, 0.0
        %v2577 = vmax.f32 %v2343, 0.0
        %v2578 = vmax.f32 %v2346, 0.0
        %v2579 = vmax.f32 %v2348, 0.0
        %v2580 = vmax.f32 %v2351, 0.0
        %v2581 = vmax.f32 %v2353, 0.0
        %v2582 = vmax.f32 %v2356, 0.0
        %v2583 = vmax.f32 %v2358, 0.0
        %v2584 = vmax.f32 %v2361, 0.0
        %v2585 = vmax.f32 %v2363, 0.0
        %v2586 = vmax.f32 %v2366, 0.0
        %v2587 = vmax.f32 %v2368, 0.0
        %v2588 = vmax.f32 %v2371, 0.0
        %v2589 = vmax.f32 %v2373, 0.0
        %v2590 = vmax.f32 %v2376, 0.0
        %v2591 = vmax.f32 %v2378, 0.0
        %v2592 = vmax.f32 %v2381, 0.0
        %v2593 = vmax.f32 %v2383, 0.0
        %v2594 = vmax.f32 %v2386, 0.0
        %v2595 = vmax.f32 %v2388, 0.0
        %v2596 = vmax.f32 %v2391, 0.0
        %v2597 = vmax.f32 %v2393, 0.0
        %v2598 = vmax.f32 %v2396, 0.0
        %v2599 = vmax.f32 %v2398, 0.0
        %v2600 = vmax.f32 %v2401, 0.0
        %v2601 = vmax.f32 %v2403, 0.0
        %v2602 = vmax.f32 %v2406, 0.0
        %v2603 = vmax.f32 %v2408, 0.0
        %v2604 = vmax.f32 %v2411, 0.0
        %v2605 = vmax.f32 %v2413, 0.0
        %v2606 = vmax.f32 %v2416, 0.0
        %v2607 = vmax.f32 %v2418, 0.0
        %v2608 = vmax.f32 %v2421, 0.0
        %v2609 = vmax.f32 %v2423, 0.0
        %v2610 = vmax.f32 %v2426, 0.0
        %v2611 = vmax.f32 %v2428, 0.0
        %v2612 = vmax.f32 %v2431, 0.0
        %v2613 = vmax.f32 %v2433, 0.0
        %v2614 = vmax.f32 %v2436, 0.0
        %v2615 = vmax.f32 %v2438, 0.0
        %v2616 = vmax.f32 %v2441, 0.0
        %v2617 = vmax.f32 %v2443, 0.0
        %v2618 = vmax.f32 %v2446, 0.0
        %v2619 = vmax.f32 %v2448, 0.0
        %v2620 = vmax.f32 %v2451, 0.0
        %v2621 = vmax.f32 %v2453, 0.0
        %v2622 = vmax.f32 %v2456, 0.0
        %v2623 = vmax.f32 %v2458, 0.0
        %v2624 = vmax.f32 %v2461, 0.0
        %v2625 = vmax.f32 %v2463, 0.0
        %v2626 = vmax.f32 %v2466, 0.0
        %v2627 = vmax.f32 %v2468, 0.0
        %v2628 = vmax.f32 %v2471, 0.0
        %v2629 = vmax.f32 %v2473, 0.0
        %v2630 = vmax.f32 %v2476, 0.0
        %v2631 = vmax.f32 %v2478, 0.0
        %v2632 = vmax.f32 %v2481, 0.0
        %v2633 = vmax.f32 %v2483, 0.0
        %v2634 = vmax.f32 %v2486, 0.0
        %v2635 = vmax.f32 %v2488, 0.0
        %v2636 = vmax.f32 %v2491, 0.0
        %v2637 = vmax.f32 %v2493, 0.0
        %v2638 = vmax.f32 %v2496, 0.0
        %v2639 = vmax.f32 %v2498, 0.0
        %v2640 = vmax.f32 %v2501, 0.0
        %v2641 = vmax.f32 %v2503, 0.0
        %v2642 = vmax.f32 %v2506, 0.0
        %v2643 = vmax.f32 %v2508, 0.0
        %v2644 = vmax.f32 %v2511, 0.0
        %v2645 = vmax.f32 %v2513, 0.0
        %v2646 = vmax.f32 %v2516, 0.0
        %v2647 = vmax.f32 %v2518, 0.0
        %v2648 = vpack.c.bf16 %v2521, %v2520
        %v2649 = vpack.c.bf16 %v2523, %v2522
        %v2650 = vpack.c.bf16 %v2525, %v2524
        %v2651 = vpack.c.bf16 %v2527, %v2526
        %v2652 = vpack.c.bf16 %v2529, %v2528
        %v2653 = vpack.c.bf16 %v2531, %v2530
        %v2654 = vpack.c.bf16 %v2533, %v2532
        %v2655 = vpack.c.bf16 %v2535, %v2534
        %v2656 = vpack.c.bf16 %v2537, %v2536
        %v2657 = vpack.c.bf16 %v2539, %v2538
        %v2658 = vpack.c.bf16 %v2541, %v2540
        %v2659 = vpack.c.bf16 %v2543, %v2542
        %v2660 = vpack.c.bf16 %v2545, %v2544
        %v2661 = vpack.c.bf16 %v2547, %v2546
        %v2662 = vpack.c.bf16 %v2549, %v2548
        %v2663 = vpack.c.bf16 %v2551, %v2550
        %v2664 = vpack.c.bf16 %v2553, %v2552
        %v2665 = vpack.c.bf16 %v2555, %v2554
        %v2666 = vpack.c.bf16 %v2557, %v2556
        %v2667 = vpack.c.bf16 %v2559, %v2558
        %v2668 = vpack.c.bf16 %v2561, %v2560
        %v2669 = vpack.c.bf16 %v2563, %v2562
        %v2670 = vpack.c.bf16 %v2565, %v2564
        %v2671 = vpack.c.bf16 %v2567, %v2566
        %v2672 = vpack.c.bf16 %v2569, %v2568
        %v2673 = vpack.c.bf16 %v2571, %v2570
        %v2674 = vpack.c.bf16 %v2573, %v2572
        %v2675 = vpack.c.bf16 %v2575, %v2574
        %v2676 = vpack.c.bf16 %v2577, %v2576
        %v2677 = vpack.c.bf16 %v2579, %v2578
        %v2678 = vpack.c.bf16 %v2581, %v2580
        %v2679 = vpack.c.bf16 %v2583, %v2582
        %v2680 = vpack.c.bf16 %v2585, %v2584
        %v2681 = vpack.c.bf16 %v2587, %v2586
        %v2682 = vpack.c.bf16 %v2589, %v2588
        %v2683 = vpack.c.bf16 %v2591, %v2590
        %v2684 = vpack.c.bf16 %v2593, %v2592
        %v2685 = vpack.c.bf16 %v2595, %v2594
        %v2686 = vpack.c.bf16 %v2597, %v2596
        %v2687 = vpack.c.bf16 %v2599, %v2598
        %v2688 = vpack.c.bf16 %v2601, %v2600
        %v2689 = vpack.c.bf16 %v2603, %v2602
        %v2690 = vpack.c.bf16 %v2605, %v2604
        %v2691 = vpack.c.bf16 %v2607, %v2606
        %v2692 = vpack.c.bf16 %v2609, %v2608
        %v2693 = vpack.c.bf16 %v2611, %v2610
        %v2694 = vpack.c.bf16 %v2613, %v2612
        %v2695 = vpack.c.bf16 %v2615, %v2614
        %v2696 = vpack.c.bf16 %v2617, %v2616
        %v2697 = vpack.c.bf16 %v2619, %v2618
        %v2698 = vpack.c.bf16 %v2621, %v2620
        %v2699 = vpack.c.bf16 %v2623, %v2622
        %v2700 = vpack.c.bf16 %v2625, %v2624
        %v2701 = vpack.c.bf16 %v2627, %v2626
        %v2702 = vpack.c.bf16 %v2629, %v2628
        %v2703 = vpack.c.bf16 %v2631, %v2630
        %v2704 = vpack.c.bf16 %v2633, %v2632
        %v2705 = vpack.c.bf16 %v2635, %v2634
        %v2706 = vpack.c.bf16 %v2637, %v2636
        %v2707 = vpack.c.bf16 %v2639, %v2638
        %v2708 = vpack.c.bf16 %v2641, %v2640
        %v2709 = vpack.c.bf16 %v2643, %v2642
        %v2710 = vpack.c.bf16 %v2645, %v2644
        %v2711 = vpack.c.bf16 %v2647, %v2646
        %v2712 = vld [vmem:[%s5] sm:$0xff]
        %v2713 = vld [vmem:[%s5 + $0x8] sm:$0xff]
        %v2714 = vld [vmem:[%s5 + $0x10] sm:$0xff]
        %v2715 = vld [vmem:[%s5 + $0x18] sm:$0xff]
        %v2716 = vld [vmem:[%s5 + $0x20] sm:$0xff]
        %v2717 = vld [vmem:[%s5 + $0x28] sm:$0xff]
        %v2718 = vld [vmem:[%s5 + $0x30] sm:$0xff]
        %v2719 = vld [vmem:[%s5 + $0x38] sm:$0xff]
        %v2720 = vld [vmem:[%s5 + $0x40] sm:$0xff]
        %v2721 = vld [vmem:[%s5 + $0x48] sm:$0xff]
        %v2722 = vld [vmem:[%s5 + $0x50] sm:$0xff]
        %v2723 = vld [vmem:[%s5 + $0x58] sm:$0xff]
        %v2724 = vld [vmem:[%s5 + $0x60] sm:$0xff]
        %v2725 = vld [vmem:[%s5 + $0x68] sm:$0xff]
        %v2726 = vld [vmem:[%s5 + $0x70] sm:$0xff]
        %v2727 = vld [vmem:[%s5 + $0x78] sm:$0xff]
        %v2728 = vld [vmem:[%s5 + $0x80] sm:$0xff]
        %v2729 = vld [vmem:[%s5 + $0x88] sm:$0xff]
        %v2730 = vld [vmem:[%s5 + $0x90] sm:$0xff]
        %v2731 = vld [vmem:[%s5 + $0x98] sm:$0xff]
        %v2732 = vld [vmem:[%s5 + $0xa0] sm:$0xff]
        %v2733 = vld [vmem:[%s5 + $0xa8] sm:$0xff]
        %v2734 = vld [vmem:[%s5 + $0xb0] sm:$0xff]
        %v2735 = vld [vmem:[%s5 + $0xb8] sm:$0xff]
        %v2736 = vld [vmem:[%s5 + $0xc0] sm:$0xff]
        %v2737 = vld [vmem:[%s5 + $0xc8] sm:$0xff]
        %v2738 = vld [vmem:[%s5 + $0xd0] sm:$0xff]
        %v2739 = vld [vmem:[%s5 + $0xd8] sm:$0xff]
        %v2740 = vld [vmem:[%s5 + $0xe0] sm:$0xff]
        %v2741 = vld [vmem:[%s5 + $0xe8] sm:$0xff]
        %v2742 = vld [vmem:[%s5 + $0xf0] sm:$0xff]
        %v2743 = vld [vmem:[%s5 + $0xf8] sm:$0xff]
        %v2744 = vld [vmem:[%s5 + $0x100] sm:$0xff]
        %v2745 = vld [vmem:[%s5 + $0x108] sm:$0xff]
        %v2746 = vld [vmem:[%s5 + $0x110] sm:$0xff]
        %v2747 = vld [vmem:[%s5 + $0x118] sm:$0xff]
        %v2748 = vld [vmem:[%s5 + $0x120] sm:$0xff]
        %v2749 = vld [vmem:[%s5 + $0x128] sm:$0xff]
        %v2750 = vld [vmem:[%s5 + $0x130] sm:$0xff]
        %v2751 = vld [vmem:[%s5 + $0x138] sm:$0xff]
        %v2752 = vld [vmem:[%s5 + $0x140] sm:$0xff]
        %v2753 = vld [vmem:[%s5 + $0x148] sm:$0xff]
        %v2754 = vld [vmem:[%s5 + $0x150] sm:$0xff]
        %v2755 = vld [vmem:[%s5 + $0x158] sm:$0xff]
        %v2756 = vld [vmem:[%s5 + $0x160] sm:$0xff]
        %v2757 = vld [vmem:[%s5 + $0x168] sm:$0xff]
        %v2758 = vld [vmem:[%s5 + $0x170] sm:$0xff]
        %v2759 = vld [vmem:[%s5 + $0x178] sm:$0xff]
        %v2760 = vld [vmem:[%s5 + $0x180] sm:$0xff]
        %v2761 = vld [vmem:[%s5 + $0x188] sm:$0xff]
        %v2762 = vld [vmem:[%s5 + $0x190] sm:$0xff]
        %v2763 = vld [vmem:[%s5 + $0x198] sm:$0xff]
        %v2764 = vld [vmem:[%s5 + $0x1a0] sm:$0xff]
        %v2765 = vld [vmem:[%s5 + $0x1a8] sm:$0xff]
        %v2766 = vld [vmem:[%s5 + $0x1b0] sm:$0xff]
        %v2767 = vld [vmem:[%s5 + $0x1b8] sm:$0xff]
        %v2768 = vld [vmem:[%s5 + $0x1c0] sm:$0xff]
        %v2769 = vld [vmem:[%s5 + $0x1c8] sm:$0xff]
        %v2770 = vld [vmem:[%s5 + $0x1d0] sm:$0xff]
        %v2771 = vld [vmem:[%s5 + $0x1d8] sm:$0xff]
        %v2772 = vld [vmem:[%s5 + $0x1e0] sm:$0xff]
        %v2773 = vld [vmem:[%s5 + $0x1e8] sm:$0xff]
        %v2774 = vld [vmem:[%s5 + $0x1f0] sm:$0xff]
        %v2775 = vld [vmem:[%s5 + $0x1f8] sm:$0xff]
        %v2776 = vld [vmem:[%s6] sm:$0xff]
        %v2778 = vperm.slane %v2776, 0
        %v2779 = vperm.slane %v2776, 1
        %v2780 = vperm.slane %v2776, 2
        %v2781 = vperm.slane %v2776, 3
        %v2782 = vperm.slane %v2776, 4
        %v2783 = vperm.slane %v2776, 5
        %v2784 = vperm.slane %v2776, 6
        %v2785 = vperm.slane %v2776, 7
        %v2858 = vunpack.c.l.b16 %v2712
        %v2859 = vunpack.c.h.b16 %v2712
        %v2860 = vunpack.c.l.b16 %v2713
        %v2861 = vunpack.c.h.b16 %v2713
        %v2862 = vunpack.c.l.b16 %v2714
        %v2863 = vunpack.c.h.b16 %v2714
        %v2864 = vunpack.c.l.b16 %v2715
        %v2865 = vunpack.c.h.b16 %v2715
        %v2866 = vunpack.c.l.b16 %v2716
        %v2867 = vunpack.c.h.b16 %v2716
        %v2868 = vunpack.c.l.b16 %v2717
        %v2869 = vunpack.c.h.b16 %v2717
        %v2870 = vunpack.c.l.b16 %v2718
        %v2871 = vunpack.c.h.b16 %v2718
        %v2872 = vunpack.c.l.b16 %v2719
        %v2873 = vunpack.c.h.b16 %v2719
        %v2874 = vunpack.c.l.b16 %v2720
        %v2875 = vunpack.c.h.b16 %v2720
        %v2876 = vunpack.c.l.b16 %v2721
        %v2877 = vunpack.c.h.b16 %v2721
        %v2878 = vunpack.c.l.b16 %v2722
        %v2879 = vunpack.c.h.b16 %v2722
        %v2880 = vunpack.c.l.b16 %v2723
        %v2881 = vunpack.c.h.b16 %v2723
        %v2882 = vunpack.c.l.b16 %v2724
        %v2883 = vunpack.c.h.b16 %v2724
        %v2884 = vunpack.c.l.b16 %v2725
        %v2885 = vunpack.c.h.b16 %v2725
        %v2886 = vunpack.c.l.b16 %v2726
        %v2887 = vunpack.c.h.b16 %v2726
        %v2888 = vunpack.c.l.b16 %v2727
        %v2889 = vunpack.c.h.b16 %v2727
        %v2890 = vunpack.c.l.b16 %v2728
        %v2891 = vunpack.c.h.b16 %v2728
        %v2892 = vunpack.c.l.b16 %v2729
        %v2893 = vunpack.c.h.b16 %v2729
        %v2894 = vunpack.c.l.b16 %v2730
        %v2895 = vunpack.c.h.b16 %v2730
        %v2896 = vunpack.c.l.b16 %v2731
        %v2897 = vunpack.c.h.b16 %v2731
        %v2898 = vunpack.c.l.b16 %v2732
        %v2899 = vunpack.c.h.b16 %v2732
        %v2900 = vunpack.c.l.b16 %v2733
        %v2901 = vunpack.c.h.b16 %v2733
        %v2902 = vunpack.c.l.b16 %v2734
        %v2903 = vunpack.c.h.b16 %v2734
        %v2904 = vunpack.c.l.b16 %v2735
        %v2905 = vunpack.c.h.b16 %v2735
        %v2906 = vunpack.c.l.b16 %v2736
        %v2907 = vunpack.c.h.b16 %v2736
        %v2908 = vunpack.c.l.b16 %v2737
        %v2909 = vunpack.c.h.b16 %v2737
        %v2910 = vunpack.c.l.b16 %v2738
        %v2911 = vunpack.c.h.b16 %v2738
        %v2912 = vunpack.c.l.b16 %v2739
        %v2913 = vunpack.c.h.b16 %v2739
        %v2914 = vunpack.c.l.b16 %v2740
        %v2915 = vunpack.c.h.b16 %v2740
        %v2916 = vunpack.c.l.b16 %v2741
        %v2917 = vunpack.c.h.b16 %v2741
        %v2918 = vunpack.c.l.b16 %v2742
        %v2919 = vunpack.c.h.b16 %v2742
        %v2920 = vunpack.c.l.b16 %v2743
        %v2921 = vunpack.c.h.b16 %v2743
        %v2922 = vunpack.c.l.b16 %v2744
        %v2923 = vunpack.c.h.b16 %v2744
        %v2924 = vunpack.c.l.b16 %v2745
        %v2925 = vunpack.c.h.b16 %v2745
        %v2926 = vunpack.c.l.b16 %v2746
        %v2927 = vunpack.c.h.b16 %v2746
        %v2928 = vunpack.c.l.b16 %v2747
        %v2929 = vunpack.c.h.b16 %v2747
        %v2930 = vunpack.c.l.b16 %v2748
        %v2931 = vunpack.c.h.b16 %v2748
        %v2932 = vunpack.c.l.b16 %v2749
        %v2933 = vunpack.c.h.b16 %v2749
        %v2934 = vunpack.c.l.b16 %v2750
        %v2935 = vunpack.c.h.b16 %v2750
        %v2936 = vunpack.c.l.b16 %v2751
        %v2937 = vunpack.c.h.b16 %v2751
        %v2938 = vunpack.c.l.b16 %v2752
        %v2939 = vunpack.c.h.b16 %v2752
        %v2940 = vunpack.c.l.b16 %v2753
        %v2941 = vunpack.c.h.b16 %v2753
        %v2942 = vunpack.c.l.b16 %v2754
        %v2943 = vunpack.c.h.b16 %v2754
        %v2944 = vunpack.c.l.b16 %v2755
        %v2945 = vunpack.c.h.b16 %v2755
        %v2946 = vunpack.c.l.b16 %v2756
        %v2947 = vunpack.c.h.b16 %v2756
        %v2948 = vunpack.c.l.b16 %v2757
        %v2949 = vunpack.c.h.b16 %v2757
        %v2950 = vunpack.c.l.b16 %v2758
        %v2951 = vunpack.c.h.b16 %v2758
        %v2952 = vunpack.c.l.b16 %v2759
        %v2953 = vunpack.c.h.b16 %v2759
        %v2954 = vunpack.c.l.b16 %v2760
        %v2955 = vunpack.c.h.b16 %v2760
        %v2956 = vunpack.c.l.b16 %v2761
        %v2957 = vunpack.c.h.b16 %v2761
        %v2958 = vunpack.c.l.b16 %v2762
        %v2959 = vunpack.c.h.b16 %v2762
        %v2960 = vunpack.c.l.b16 %v2763
        %v2961 = vunpack.c.h.b16 %v2763
        %v2962 = vunpack.c.l.b16 %v2764
        %v2963 = vunpack.c.h.b16 %v2764
        %v2964 = vunpack.c.l.b16 %v2765
        %v2965 = vunpack.c.h.b16 %v2765
        %v2966 = vunpack.c.l.b16 %v2766
        %v2967 = vunpack.c.h.b16 %v2766
        %v2968 = vunpack.c.l.b16 %v2767
        %v2969 = vunpack.c.h.b16 %v2767
        %v2970 = vunpack.c.l.b16 %v2768
        %v2971 = vunpack.c.h.b16 %v2768
        %v2972 = vunpack.c.l.b16 %v2769
        %v2973 = vunpack.c.h.b16 %v2769
        %v2974 = vunpack.c.l.b16 %v2770
        %v2975 = vunpack.c.h.b16 %v2770
        %v2976 = vunpack.c.l.b16 %v2771
        %v2977 = vunpack.c.h.b16 %v2771
        %v2978 = vunpack.c.l.b16 %v2772
        %v2979 = vunpack.c.h.b16 %v2772
        %v2980 = vunpack.c.l.b16 %v2773
        %v2981 = vunpack.c.h.b16 %v2773
        %v2982 = vunpack.c.l.b16 %v2774
        %v2983 = vunpack.c.h.b16 %v2774
        %v2984 = vunpack.c.l.b16 %v2775
        %v2985 = vunpack.c.h.b16 %v2775
        %v2986 = vpack.c.b16 %v2866, %v2858
        %v2987 = vpack.c.b16 %v2867, %v2859
        %v2988 = vpack.c.b16 %v2868, %v2860
        %v2989 = vpack.c.b16 %v2869, %v2861
        %v2990 = vpack.c.b16 %v2870, %v2862
        %v2991 = vpack.c.b16 %v2871, %v2863
        %v2992 = vpack.c.b16 %v2872, %v2864
        %v2993 = vpack.c.b16 %v2873, %v2865
        %v2994 = vpack.c.b16 %v2882, %v2874
        %v2995 = vpack.c.b16 %v2883, %v2875
        %v2996 = vpack.c.b16 %v2884, %v2876
        %v2997 = vpack.c.b16 %v2885, %v2877
        %v2998 = vpack.c.b16 %v2886, %v2878
        %v2999 = vpack.c.b16 %v2887, %v2879
        %v3000 = vpack.c.b16 %v2888, %v2880
        %v3001 = vpack.c.b16 %v2889, %v2881
        %v3002 = vpack.c.b16 %v2898, %v2890
        %v3003 = vpack.c.b16 %v2899, %v2891
        %v3004 = vpack.c.b16 %v2900, %v2892
        %v3005 = vpack.c.b16 %v2901, %v2893
        %v3006 = vpack.c.b16 %v2902, %v2894
        %v3007 = vpack.c.b16 %v2903, %v2895
        %v3008 = vpack.c.b16 %v2904, %v2896
        %v3009 = vpack.c.b16 %v2905, %v2897
        %v3010 = vpack.c.b16 %v2914, %v2906
        %v3011 = vpack.c.b16 %v2915, %v2907
        %v3012 = vpack.c.b16 %v2916, %v2908
        %v3013 = vpack.c.b16 %v2917, %v2909
        %v3014 = vpack.c.b16 %v2918, %v2910
        %v3015 = vpack.c.b16 %v2919, %v2911
        %v3016 = vpack.c.b16 %v2920, %v2912
        %v3017 = vpack.c.b16 %v2921, %v2913
        %v3018 = vpack.c.b16 %v2930, %v2922
        %v3019 = vpack.c.b16 %v2931, %v2923
        %v3020 = vpack.c.b16 %v2932, %v2924
        %v3021 = vpack.c.b16 %v2933, %v2925
        %v3022 = vpack.c.b16 %v2934, %v2926
        %v3023 = vpack.c.b16 %v2935, %v2927
        %v3024 = vpack.c.b16 %v2936, %v2928
        %v3025 = vpack.c.b16 %v2937, %v2929
        %v3026 = vpack.c.b16 %v2946, %v2938
        %v3027 = vpack.c.b16 %v2947, %v2939
        %v3028 = vpack.c.b16 %v2948, %v2940
        %v3029 = vpack.c.b16 %v2949, %v2941
        %v3030 = vpack.c.b16 %v2950, %v2942
        %v3031 = vpack.c.b16 %v2951, %v2943
        %v3032 = vpack.c.b16 %v2952, %v2944
        %v3033 = vpack.c.b16 %v2953, %v2945
        %v3034 = vpack.c.b16 %v2962, %v2954
        %v3035 = vpack.c.b16 %v2963, %v2955
        %v3036 = vpack.c.b16 %v2964, %v2956
        %v3037 = vpack.c.b16 %v2965, %v2957
        %v3038 = vpack.c.b16 %v2966, %v2958
        %v3039 = vpack.c.b16 %v2967, %v2959
        %v3040 = vpack.c.b16 %v2968, %v2960
        %v3041 = vpack.c.b16 %v2969, %v2961
        %v3042 = vpack.c.b16 %v2978, %v2970
        %v3043 = vpack.c.b16 %v2979, %v2971
        %v3044 = vpack.c.b16 %v2980, %v2972
        %v3045 = vpack.c.b16 %v2981, %v2973
        %v3046 = vpack.c.b16 %v2982, %v2974
        %v3047 = vpack.c.b16 %v2983, %v2975
        %v3048 = vpack.c.b16 %v2984, %v2976
        %v3049 = vpack.c.b16 %v2985, %v2977
        %3114 = vmatpush.bf16.msra.mxu0 %v3042
        %3115 = vmatpush.bf16.msra.mxu0 %v3034
        %3116 = vmatpush.bf16.msra.mxu0 %v3026
        %3117 = vmatpush.bf16.msra.mxu0 %v3018
        %3118 = vmatpush.bf16.msra.mxu0 %v3010
        %3119 = vmatpush.bf16.msra.mxu0 %v3002
        %3120 = vmatpush.bf16.msra.mxu0 %v2994
        %3121 = vmatpush.bf16.msra.mxu0 %v2986
        %3122 = vmatmul.bf16.gmra.mxu0 %v2648
        %v3123 = vpop.f32.mrf.mxu0
        %v3124 = vadd.f32 %v2778, %v3123
        %v3125 = vpop.f32.mrf.mxu0
        %v3126 = vadd.f32 %v2778, %v3125
        %3127 = vmatmul.bf16.gmra.mxu0 %v2649
        %v3128 = vpop.f32.mrf.mxu0
        %v3129 = vadd.f32 %v2778, %v3128
        %v3130 = vpop.f32.mrf.mxu0
        %v3131 = vadd.f32 %v2778, %v3130
        %3132 = vmatmul.bf16.gmra.mxu0 %v2650
        %v3133 = vpop.f32.mrf.mxu0
        %v3134 = vadd.f32 %v2778, %v3133
        %v3135 = vpop.f32.mrf.mxu0
        %v3136 = vadd.f32 %v2778, %v3135
        %3137 = vmatmul.bf16.gmra.mxu0 %v2651
        %v3138 = vpop.f32.mrf.mxu0
        %v3139 = vadd.f32 %v2778, %v3138
        %v3140 = vpop.f32.mrf.mxu0
        %v3141 = vadd.f32 %v2778, %v3140
        %3142 = vmatmul.bf16.gmra.mxu0 %v2652
        %v3143 = vpop.f32.mrf.mxu0
        %v3144 = vadd.f32 %v2778, %v3143
        %v3145 = vpop.f32.mrf.mxu0
        %v3146 = vadd.f32 %v2778, %v3145
        %3147 = vmatmul.bf16.gmra.mxu0 %v2653
        %v3148 = vpop.f32.mrf.mxu0
        %v3149 = vadd.f32 %v2778, %v3148
        %v3150 = vpop.f32.mrf.mxu0
        %v3151 = vadd.f32 %v2778, %v3150
        %3152 = vmatmul.bf16.gmra.mxu0 %v2654
        %v3153 = vpop.f32.mrf.mxu0
        %v3154 = vadd.f32 %v2778, %v3153
        %v3155 = vpop.f32.mrf.mxu0
        %v3156 = vadd.f32 %v2778, %v3155
        %3157 = vmatmul.bf16.gmra.mxu0 %v2655
        %v3158 = vpop.f32.mrf.mxu0
        %v3159 = vadd.f32 %v2778, %v3158
        %v3160 = vpop.f32.mrf.mxu0
        %v3161 = vadd.f32 %v2778, %v3160
        %3162 = vmatmul.bf16.gmra.mxu0 %v2656
        %v3163 = vpop.f32.mrf.mxu0
        %v3164 = vadd.f32 %v2778, %v3163
        %v3165 = vpop.f32.mrf.mxu0
        %v3166 = vadd.f32 %v2778, %v3165
        %3167 = vmatmul.bf16.gmra.mxu0 %v2657
        %v3168 = vpop.f32.mrf.mxu0
        %v3169 = vadd.f32 %v2778, %v3168
        %v3170 = vpop.f32.mrf.mxu0
        %v3171 = vadd.f32 %v2778, %v3170
        %3172 = vmatmul.bf16.gmra.mxu0 %v2658
        %v3173 = vpop.f32.mrf.mxu0
        %v3174 = vadd.f32 %v2778, %v3173
        %v3175 = vpop.f32.mrf.mxu0
        %v3176 = vadd.f32 %v2778, %v3175
        %3177 = vmatmul.bf16.gmra.mxu0 %v2659
        %v3178 = vpop.f32.mrf.mxu0
        %v3179 = vadd.f32 %v2778, %v3178
        %v3180 = vpop.f32.mrf.mxu0
        %v3181 = vadd.f32 %v2778, %v3180
        %3182 = vmatmul.bf16.gmra.mxu0 %v2660
        %v3183 = vpop.f32.mrf.mxu0
        %v3184 = vadd.f32 %v2778, %v3183
        %v3185 = vpop.f32.mrf.mxu0
        %v3186 = vadd.f32 %v2778, %v3185
        %3187 = vmatmul.bf16.gmra.mxu0 %v2661
        %v3188 = vpop.f32.mrf.mxu0
        %v3189 = vadd.f32 %v2778, %v3188
        %v3190 = vpop.f32.mrf.mxu0
        %v3191 = vadd.f32 %v2778, %v3190
        %3192 = vmatmul.bf16.gmra.mxu0 %v2662
        %v3193 = vpop.f32.mrf.mxu0
        %v3194 = vadd.f32 %v2778, %v3193
        %v3195 = vpop.f32.mrf.mxu0
        %v3196 = vadd.f32 %v2778, %v3195
        %3197 = vmatmul.bf16.gmra.mxu0 %v2663
        %v3198 = vpop.f32.mrf.mxu0
        %v3199 = vadd.f32 %v2778, %v3198
        %v3200 = vpop.f32.mrf.mxu0
        %v3201 = vadd.f32 %v2778, %v3200
        %3202 = vmatmul.bf16.gmra.mxu0 %v2664
        %v3203 = vpop.f32.mrf.mxu0
        %v3204 = vadd.f32 %v2778, %v3203
        %v3205 = vpop.f32.mrf.mxu0
        %v3206 = vadd.f32 %v2778, %v3205
        %3207 = vmatmul.bf16.gmra.mxu0 %v2665
        %v3208 = vpop.f32.mrf.mxu0
        %v3209 = vadd.f32 %v2778, %v3208
        %v3210 = vpop.f32.mrf.mxu0
        %v3211 = vadd.f32 %v2778, %v3210
        %3212 = vmatmul.bf16.gmra.mxu0 %v2666
        %v3213 = vpop.f32.mrf.mxu0
        %v3214 = vadd.f32 %v2778, %v3213
        %v3215 = vpop.f32.mrf.mxu0
        %v3216 = vadd.f32 %v2778, %v3215
        %3217 = vmatmul.bf16.gmra.mxu0 %v2667
        %v3218 = vpop.f32.mrf.mxu0
        %v3219 = vadd.f32 %v2778, %v3218
        %v3220 = vpop.f32.mrf.mxu0
        %v3221 = vadd.f32 %v2778, %v3220
        %3222 = vmatmul.bf16.gmra.mxu0 %v2668
        %v3223 = vpop.f32.mrf.mxu0
        %v3224 = vadd.f32 %v2778, %v3223
        %v3225 = vpop.f32.mrf.mxu0
        %v3226 = vadd.f32 %v2778, %v3225
        %3227 = vmatmul.bf16.gmra.mxu0 %v2669
        %v3228 = vpop.f32.mrf.mxu0
        %v3229 = vadd.f32 %v2778, %v3228
        %v3230 = vpop.f32.mrf.mxu0
        %v3231 = vadd.f32 %v2778, %v3230
        %3232 = vmatmul.bf16.gmra.mxu0 %v2670
        %v3233 = vpop.f32.mrf.mxu0
        %v3234 = vadd.f32 %v2778, %v3233
        %v3235 = vpop.f32.mrf.mxu0
        %v3236 = vadd.f32 %v2778, %v3235
        %3237 = vmatmul.bf16.gmra.mxu0 %v2671
        %v3238 = vpop.f32.mrf.mxu0
        %v3239 = vadd.f32 %v2778, %v3238
        %v3240 = vpop.f32.mrf.mxu0
        %v3241 = vadd.f32 %v2778, %v3240
        %3242 = vmatmul.bf16.gmra.mxu0 %v2672
        %v3243 = vpop.f32.mrf.mxu0
        %v3244 = vadd.f32 %v2778, %v3243
        %v3245 = vpop.f32.mrf.mxu0
        %v3246 = vadd.f32 %v2778, %v3245
        %3247 = vmatmul.bf16.gmra.mxu0 %v2673
        %v3248 = vpop.f32.mrf.mxu0
        %v3249 = vadd.f32 %v2778, %v3248
        %v3250 = vpop.f32.mrf.mxu0
        %v3251 = vadd.f32 %v2778, %v3250
        %3252 = vmatmul.bf16.gmra.mxu0 %v2674
        %v3253 = vpop.f32.mrf.mxu0
        %v3254 = vadd.f32 %v2778, %v3253
        %v3255 = vpop.f32.mrf.mxu0
        %v3256 = vadd.f32 %v2778, %v3255
        %3257 = vmatmul.bf16.gmra.mxu0 %v2675
        %v3258 = vpop.f32.mrf.mxu0
        %v3259 = vadd.f32 %v2778, %v3258
        %v3260 = vpop.f32.mrf.mxu0
        %v3261 = vadd.f32 %v2778, %v3260
        %3262 = vmatmul.bf16.gmra.mxu0 %v2676
        %v3263 = vpop.f32.mrf.mxu0
        %v3264 = vadd.f32 %v2778, %v3263
        %v3265 = vpop.f32.mrf.mxu0
        %v3266 = vadd.f32 %v2778, %v3265
        %3267 = vmatmul.bf16.gmra.mxu0 %v2677
        %v3268 = vpop.f32.mrf.mxu0
        %v3269 = vadd.f32 %v2778, %v3268
        %v3270 = vpop.f32.mrf.mxu0
        %v3271 = vadd.f32 %v2778, %v3270
        %3272 = vmatmul.bf16.gmra.mxu0 %v2678
        %v3273 = vpop.f32.mrf.mxu0
        %v3274 = vadd.f32 %v2778, %v3273
        %v3275 = vpop.f32.mrf.mxu0
        %v3276 = vadd.f32 %v2778, %v3275
        %3277 = vmatmul.bf16.gmra.mxu0 %v2679
        %v3278 = vpop.f32.mrf.mxu0
        %v3279 = vadd.f32 %v2778, %v3278
        %v3280 = vpop.f32.mrf.mxu0
        %v3281 = vadd.f32 %v2778, %v3280
        %3282 = vmatmul.bf16.gmra.mxu0 %v2680
        %v3283 = vpop.f32.mrf.mxu0
        %v3284 = vadd.f32 %v2778, %v3283
        %v3285 = vpop.f32.mrf.mxu0
        %v3286 = vadd.f32 %v2778, %v3285
        %3287 = vmatmul.bf16.gmra.mxu0 %v2681
        %v3288 = vpop.f32.mrf.mxu0
        %v3289 = vadd.f32 %v2778, %v3288
        %v3290 = vpop.f32.mrf.mxu0
        %v3291 = vadd.f32 %v2778, %v3290
        %3292 = vmatmul.bf16.gmra.mxu0 %v2682
        %v3293 = vpop.f32.mrf.mxu0
        %v3294 = vadd.f32 %v2778, %v3293
        %v3295 = vpop.f32.mrf.mxu0
        %v3296 = vadd.f32 %v2778, %v3295
        %3297 = vmatmul.bf16.gmra.mxu0 %v2683
        %v3298 = vpop.f32.mrf.mxu0
        %v3299 = vadd.f32 %v2778, %v3298
        %v3300 = vpop.f32.mrf.mxu0
        %v3301 = vadd.f32 %v2778, %v3300
        %3302 = vmatmul.bf16.gmra.mxu0 %v2684
        %v3303 = vpop.f32.mrf.mxu0
        %v3304 = vadd.f32 %v2778, %v3303
        %v3305 = vpop.f32.mrf.mxu0
        %v3306 = vadd.f32 %v2778, %v3305
        %3307 = vmatmul.bf16.gmra.mxu0 %v2685
        %v3308 = vpop.f32.mrf.mxu0
        %v3309 = vadd.f32 %v2778, %v3308
        %v3310 = vpop.f32.mrf.mxu0
        %v3311 = vadd.f32 %v2778, %v3310
        %3312 = vmatmul.bf16.gmra.mxu0 %v2686
        %v3313 = vpop.f32.mrf.mxu0
        %v3314 = vadd.f32 %v2778, %v3313
        %v3315 = vpop.f32.mrf.mxu0
        %v3316 = vadd.f32 %v2778, %v3315
        %3317 = vmatmul.bf16.gmra.mxu0 %v2687
        %v3318 = vpop.f32.mrf.mxu0
        %v3319 = vadd.f32 %v2778, %v3318
        %v3320 = vpop.f32.mrf.mxu0
        %v3321 = vadd.f32 %v2778, %v3320
        %3322 = vmatmul.bf16.gmra.mxu0 %v2688
        %v3323 = vpop.f32.mrf.mxu0
        %v3324 = vadd.f32 %v2778, %v3323
        %v3325 = vpop.f32.mrf.mxu0
        %v3326 = vadd.f32 %v2778, %v3325
        %3327 = vmatmul.bf16.gmra.mxu0 %v2689
        %v3328 = vpop.f32.mrf.mxu0
        %v3329 = vadd.f32 %v2778, %v3328
        %v3330 = vpop.f32.mrf.mxu0
        %v3331 = vadd.f32 %v2778, %v3330
        %3332 = vmatmul.bf16.gmra.mxu0 %v2690
        %v3333 = vpop.f32.mrf.mxu0
        %v3334 = vadd.f32 %v2778, %v3333
        %v3335 = vpop.f32.mrf.mxu0
        %v3336 = vadd.f32 %v2778, %v3335
        %3337 = vmatmul.bf16.gmra.mxu0 %v2691
        %v3338 = vpop.f32.mrf.mxu0
        %v3339 = vadd.f32 %v2778, %v3338
        %v3340 = vpop.f32.mrf.mxu0
        %v3341 = vadd.f32 %v2778, %v3340
        %3342 = vmatmul.bf16.gmra.mxu0 %v2692
        %v3343 = vpop.f32.mrf.mxu0
        %v3344 = vadd.f32 %v2778, %v3343
        %v3345 = vpop.f32.mrf.mxu0
        %v3346 = vadd.f32 %v2778, %v3345
        %3347 = vmatmul.bf16.gmra.mxu0 %v2693
        %v3348 = vpop.f32.mrf.mxu0
        %v3349 = vadd.f32 %v2778, %v3348
        %v3350 = vpop.f32.mrf.mxu0
        %v3351 = vadd.f32 %v2778, %v3350
        %3352 = vmatmul.bf16.gmra.mxu0 %v2694
        %v3353 = vpop.f32.mrf.mxu0
        %v3354 = vadd.f32 %v2778, %v3353
        %v3355 = vpop.f32.mrf.mxu0
        %v3356 = vadd.f32 %v2778, %v3355
        %3357 = vmatmul.bf16.gmra.mxu0 %v2695
        %v3358 = vpop.f32.mrf.mxu0
        %v3359 = vadd.f32 %v2778, %v3358
        %v3360 = vpop.f32.mrf.mxu0
        %v3361 = vadd.f32 %v2778, %v3360
        %3362 = vmatmul.bf16.gmra.mxu0 %v2696
        %v3363 = vpop.f32.mrf.mxu0
        %v3364 = vadd.f32 %v2778, %v3363
        %v3365 = vpop.f32.mrf.mxu0
        %v3366 = vadd.f32 %v2778, %v3365
        %3367 = vmatmul.bf16.gmra.mxu0 %v2697
        %v3368 = vpop.f32.mrf.mxu0
        %v3369 = vadd.f32 %v2778, %v3368
        %v3370 = vpop.f32.mrf.mxu0
        %v3371 = vadd.f32 %v2778, %v3370
        %3372 = vmatmul.bf16.gmra.mxu0 %v2698
        %v3373 = vpop.f32.mrf.mxu0
        %v3374 = vadd.f32 %v2778, %v3373
        %v3375 = vpop.f32.mrf.mxu0
        %v3376 = vadd.f32 %v2778, %v3375
        %3377 = vmatmul.bf16.gmra.mxu0 %v2699
        %v3378 = vpop.f32.mrf.mxu0
        %v3379 = vadd.f32 %v2778, %v3378
        %v3380 = vpop.f32.mrf.mxu0
        %v3381 = vadd.f32 %v2778, %v3380
        %3382 = vmatmul.bf16.gmra.mxu0 %v2700
        %v3383 = vpop.f32.mrf.mxu0
        %v3384 = vadd.f32 %v2778, %v3383
        %v3385 = vpop.f32.mrf.mxu0
        %v3386 = vadd.f32 %v2778, %v3385
        %3387 = vmatmul.bf16.gmra.mxu0 %v2701
        %v3388 = vpop.f32.mrf.mxu0
        %v3389 = vadd.f32 %v2778, %v3388
        %v3390 = vpop.f32.mrf.mxu0
        %v3391 = vadd.f32 %v2778, %v3390
        %3392 = vmatmul.bf16.gmra.mxu0 %v2702
        %v3393 = vpop.f32.mrf.mxu0
        %v3394 = vadd.f32 %v2778, %v3393
        %v3395 = vpop.f32.mrf.mxu0
        %v3396 = vadd.f32 %v2778, %v3395
        %3397 = vmatmul.bf16.gmra.mxu0 %v2703
        %v3398 = vpop.f32.mrf.mxu0
        %v3399 = vadd.f32 %v2778, %v3398
        %v3400 = vpop.f32.mrf.mxu0
        %v3401 = vadd.f32 %v2778, %v3400
        %3402 = vmatmul.bf16.gmra.mxu0 %v2704
        %v3403 = vpop.f32.mrf.mxu0
        %v3404 = vadd.f32 %v2778, %v3403
        %v3405 = vpop.f32.mrf.mxu0
        %v3406 = vadd.f32 %v2778, %v3405
        %3407 = vmatmul.bf16.gmra.mxu0 %v2705
        %v3408 = vpop.f32.mrf.mxu0
        %v3409 = vadd.f32 %v2778, %v3408
        %v3410 = vpop.f32.mrf.mxu0
        %v3411 = vadd.f32 %v2778, %v3410
        %3412 = vmatmul.bf16.gmra.mxu0 %v2706
        %v3413 = vpop.f32.mrf.mxu0
        %v3414 = vadd.f32 %v2778, %v3413
        %v3415 = vpop.f32.mrf.mxu0
        %v3416 = vadd.f32 %v2778, %v3415
        %3417 = vmatmul.bf16.gmra.mxu0 %v2707
        %v3418 = vpop.f32.mrf.mxu0
        %v3419 = vadd.f32 %v2778, %v3418
        %v3420 = vpop.f32.mrf.mxu0
        %v3421 = vadd.f32 %v2778, %v3420
        %3422 = vmatmul.bf16.gmra.mxu0 %v2708
        %v3423 = vpop.f32.mrf.mxu0
        %v3424 = vadd.f32 %v2778, %v3423
        %v3425 = vpop.f32.mrf.mxu0
        %v3426 = vadd.f32 %v2778, %v3425
        %3427 = vmatmul.bf16.gmra.mxu0 %v2709
        %v3428 = vpop.f32.mrf.mxu0
        %v3429 = vadd.f32 %v2778, %v3428
        %v3430 = vpop.f32.mrf.mxu0
        %v3431 = vadd.f32 %v2778, %v3430
        %3432 = vmatmul.bf16.gmra.mxu0 %v2710
        %v3433 = vpop.f32.mrf.mxu0
        %v3434 = vadd.f32 %v2778, %v3433
        %v3435 = vpop.f32.mrf.mxu0
        %v3436 = vadd.f32 %v2778, %v3435
        %3437 = vmatmul.bf16.gmra.mxu0 %v2711
        %v3438 = vpop.f32.mrf.mxu0
        %v3439 = vadd.f32 %v2778, %v3438
        %v3440 = vpop.f32.mrf.mxu0
        %v3441 = vadd.f32 %v2778, %v3440
        %3442 = vdwg.mxu0
        %3443 = vmatpush.bf16.msra.mxu0 %v3043
        %3444 = vmatpush.bf16.msra.mxu0 %v3035
        %3445 = vmatpush.bf16.msra.mxu0 %v3027
        %3446 = vmatpush.bf16.msra.mxu0 %v3019
        %3447 = vmatpush.bf16.msra.mxu0 %v3011
        %3448 = vmatpush.bf16.msra.mxu0 %v3003
        %3449 = vmatpush.bf16.msra.mxu0 %v2995
        %3450 = vmatpush.bf16.msra.mxu0 %v2987
        %3451 = vmatmul.bf16.gmra.mxu0 %v2648
        %v3452 = vpop.f32.mrf.mxu0
        %v3453 = vadd.f32 %v2779, %v3452
        %v3454 = vpop.f32.mrf.mxu0
        %v3455 = vadd.f32 %v2779, %v3454
        %3456 = vmatmul.bf16.gmra.mxu0 %v2649
        %v3457 = vpop.f32.mrf.mxu0
        %v3458 = vadd.f32 %v2779, %v3457
        %v3459 = vpop.f32.mrf.mxu0
        %v3460 = vadd.f32 %v2779, %v3459
        %3461 = vmatmul.bf16.gmra.mxu0 %v2650
        %v3462 = vpop.f32.mrf.mxu0
        %v3463 = vadd.f32 %v2779, %v3462
        %v3464 = vpop.f32.mrf.mxu0
        %v3465 = vadd.f32 %v2779, %v3464
        %3466 = vmatmul.bf16.gmra.mxu0 %v2651
        %v3467 = vpop.f32.mrf.mxu0
        %v3468 = vadd.f32 %v2779, %v3467
        %v3469 = vpop.f32.mrf.mxu0
        %v3470 = vadd.f32 %v2779, %v3469
        %3471 = vmatmul.bf16.gmra.mxu0 %v2652
        %v3472 = vpop.f32.mrf.mxu0
        %v3473 = vadd.f32 %v2779, %v3472
        %v3474 = vpop.f32.mrf.mxu0
        %v3475 = vadd.f32 %v2779, %v3474
        %3476 = vmatmul.bf16.gmra.mxu0 %v2653
        %v3477 = vpop.f32.mrf.mxu0
        %v3478 = vadd.f32 %v2779, %v3477
        %v3479 = vpop.f32.mrf.mxu0
        %v3480 = vadd.f32 %v2779, %v3479
        %3481 = vmatmul.bf16.gmra.mxu0 %v2654
        %v3482 = vpop.f32.mrf.mxu0
        %v3483 = vadd.f32 %v2779, %v3482
        %v3484 = vpop.f32.mrf.mxu0
        %v3485 = vadd.f32 %v2779, %v3484
        %3486 = vmatmul.bf16.gmra.mxu0 %v2655
        %v3487 = vpop.f32.mrf.mxu0
        %v3488 = vadd.f32 %v2779, %v3487
        %v3489 = vpop.f32.mrf.mxu0
        %v3490 = vadd.f32 %v2779, %v3489
        %3491 = vmatmul.bf16.gmra.mxu0 %v2656
        %v3492 = vpop.f32.mrf.mxu0
        %v3493 = vadd.f32 %v2779, %v3492
        %v3494 = vpop.f32.mrf.mxu0
        %v3495 = vadd.f32 %v2779, %v3494
        %3496 = vmatmul.bf16.gmra.mxu0 %v2657
        %v3497 = vpop.f32.mrf.mxu0
        %v3498 = vadd.f32 %v2779, %v3497
        %v3499 = vpop.f32.mrf.mxu0
        %v3500 = vadd.f32 %v2779, %v3499
        %3501 = vmatmul.bf16.gmra.mxu0 %v2658
        %v3502 = vpop.f32.mrf.mxu0
        %v3503 = vadd.f32 %v2779, %v3502
        %v3504 = vpop.f32.mrf.mxu0
        %v3505 = vadd.f32 %v2779, %v3504
        %3506 = vmatmul.bf16.gmra.mxu0 %v2659
        %v3507 = vpop.f32.mrf.mxu0
        %v3508 = vadd.f32 %v2779, %v3507
        %v3509 = vpop.f32.mrf.mxu0
        %v3510 = vadd.f32 %v2779, %v3509
        %3511 = vmatmul.bf16.gmra.mxu0 %v2660
        %v3512 = vpop.f32.mrf.mxu0
        %v3513 = vadd.f32 %v2779, %v3512
        %v3514 = vpop.f32.mrf.mxu0
        %v3515 = vadd.f32 %v2779, %v3514
        %3516 = vmatmul.bf16.gmra.mxu0 %v2661
        %v3517 = vpop.f32.mrf.mxu0
        %v3518 = vadd.f32 %v2779, %v3517
        %v3519 = vpop.f32.mrf.mxu0
        %v3520 = vadd.f32 %v2779, %v3519
        %3521 = vmatmul.bf16.gmra.mxu0 %v2662
        %v3522 = vpop.f32.mrf.mxu0
        %v3523 = vadd.f32 %v2779, %v3522
        %v3524 = vpop.f32.mrf.mxu0
        %v3525 = vadd.f32 %v2779, %v3524
        %3526 = vmatmul.bf16.gmra.mxu0 %v2663
        %v3527 = vpop.f32.mrf.mxu0
        %v3528 = vadd.f32 %v2779, %v3527
        %v3529 = vpop.f32.mrf.mxu0
        %v3530 = vadd.f32 %v2779, %v3529
        %3531 = vmatmul.bf16.gmra.mxu0 %v2664
        %v3532 = vpop.f32.mrf.mxu0
        %v3533 = vadd.f32 %v2779, %v3532
        %v3534 = vpop.f32.mrf.mxu0
        %v3535 = vadd.f32 %v2779, %v3534
        %3536 = vmatmul.bf16.gmra.mxu0 %v2665
        %v3537 = vpop.f32.mrf.mxu0
        %v3538 = vadd.f32 %v2779, %v3537
        %v3539 = vpop.f32.mrf.mxu0
        %v3540 = vadd.f32 %v2779, %v3539
        %3541 = vmatmul.bf16.gmra.mxu0 %v2666
        %v3542 = vpop.f32.mrf.mxu0
        %v3543 = vadd.f32 %v2779, %v3542
        %v3544 = vpop.f32.mrf.mxu0
        %v3545 = vadd.f32 %v2779, %v3544
        %3546 = vmatmul.bf16.gmra.mxu0 %v2667
        %v3547 = vpop.f32.mrf.mxu0
        %v3548 = vadd.f32 %v2779, %v3547
        %v3549 = vpop.f32.mrf.mxu0
        %v3550 = vadd.f32 %v2779, %v3549
        %3551 = vmatmul.bf16.gmra.mxu0 %v2668
        %v3552 = vpop.f32.mrf.mxu0
        %v3553 = vadd.f32 %v2779, %v3552
        %v3554 = vpop.f32.mrf.mxu0
        %v3555 = vadd.f32 %v2779, %v3554
        %3556 = vmatmul.bf16.gmra.mxu0 %v2669
        %v3557 = vpop.f32.mrf.mxu0
        %v3558 = vadd.f32 %v2779, %v3557
        %v3559 = vpop.f32.mrf.mxu0
        %v3560 = vadd.f32 %v2779, %v3559
        %3561 = vmatmul.bf16.gmra.mxu0 %v2670
        %v3562 = vpop.f32.mrf.mxu0
        %v3563 = vadd.f32 %v2779, %v3562
        %v3564 = vpop.f32.mrf.mxu0
        %v3565 = vadd.f32 %v2779, %v3564
        %3566 = vmatmul.bf16.gmra.mxu0 %v2671
        %v3567 = vpop.f32.mrf.mxu0
        %v3568 = vadd.f32 %v2779, %v3567
        %v3569 = vpop.f32.mrf.mxu0
        %v3570 = vadd.f32 %v2779, %v3569
        %3571 = vmatmul.bf16.gmra.mxu0 %v2672
        %v3572 = vpop.f32.mrf.mxu0
        %v3573 = vadd.f32 %v2779, %v3572
        %v3574 = vpop.f32.mrf.mxu0
        %v3575 = vadd.f32 %v2779, %v3574
        %3576 = vmatmul.bf16.gmra.mxu0 %v2673
        %v3577 = vpop.f32.mrf.mxu0
        %v3578 = vadd.f32 %v2779, %v3577
        %v3579 = vpop.f32.mrf.mxu0
        %v3580 = vadd.f32 %v2779, %v3579
        %3581 = vmatmul.bf16.gmra.mxu0 %v2674
        %v3582 = vpop.f32.mrf.mxu0
        %v3583 = vadd.f32 %v2779, %v3582
        %v3584 = vpop.f32.mrf.mxu0
        %v3585 = vadd.f32 %v2779, %v3584
        %3586 = vmatmul.bf16.gmra.mxu0 %v2675
        %v3587 = vpop.f32.mrf.mxu0
        %v3588 = vadd.f32 %v2779, %v3587
        %v3589 = vpop.f32.mrf.mxu0
        %v3590 = vadd.f32 %v2779, %v3589
        %3591 = vmatmul.bf16.gmra.mxu0 %v2676
        %v3592 = vpop.f32.mrf.mxu0
        %v3593 = vadd.f32 %v2779, %v3592
        %v3594 = vpop.f32.mrf.mxu0
        %v3595 = vadd.f32 %v2779, %v3594
        %3596 = vmatmul.bf16.gmra.mxu0 %v2677
        %v3597 = vpop.f32.mrf.mxu0
        %v3598 = vadd.f32 %v2779, %v3597
        %v3599 = vpop.f32.mrf.mxu0
        %v3600 = vadd.f32 %v2779, %v3599
        %3601 = vmatmul.bf16.gmra.mxu0 %v2678
        %v3602 = vpop.f32.mrf.mxu0
        %v3603 = vadd.f32 %v2779, %v3602
        %v3604 = vpop.f32.mrf.mxu0
        %v3605 = vadd.f32 %v2779, %v3604
        %3606 = vmatmul.bf16.gmra.mxu0 %v2679
        %v3607 = vpop.f32.mrf.mxu0
        %v3608 = vadd.f32 %v2779, %v3607
        %v3609 = vpop.f32.mrf.mxu0
        %v3610 = vadd.f32 %v2779, %v3609
        %3611 = vmatmul.bf16.gmra.mxu0 %v2680
        %v3612 = vpop.f32.mrf.mxu0
        %v3613 = vadd.f32 %v2779, %v3612
        %v3614 = vpop.f32.mrf.mxu0
        %v3615 = vadd.f32 %v2779, %v3614
        %3616 = vmatmul.bf16.gmra.mxu0 %v2681
        %v3617 = vpop.f32.mrf.mxu0
        %v3618 = vadd.f32 %v2779, %v3617
        %v3619 = vpop.f32.mrf.mxu0
        %v3620 = vadd.f32 %v2779, %v3619
        %3621 = vmatmul.bf16.gmra.mxu0 %v2682
        %v3622 = vpop.f32.mrf.mxu0
        %v3623 = vadd.f32 %v2779, %v3622
        %v3624 = vpop.f32.mrf.mxu0
        %v3625 = vadd.f32 %v2779, %v3624
        %3626 = vmatmul.bf16.gmra.mxu0 %v2683
        %v3627 = vpop.f32.mrf.mxu0
        %v3628 = vadd.f32 %v2779, %v3627
        %v3629 = vpop.f32.mrf.mxu0
        %v3630 = vadd.f32 %v2779, %v3629
        %3631 = vmatmul.bf16.gmra.mxu0 %v2684
        %v3632 = vpop.f32.mrf.mxu0
        %v3633 = vadd.f32 %v2779, %v3632
        %v3634 = vpop.f32.mrf.mxu0
        %v3635 = vadd.f32 %v2779, %v3634
        %3636 = vmatmul.bf16.gmra.mxu0 %v2685
        %v3637 = vpop.f32.mrf.mxu0
        %v3638 = vadd.f32 %v2779, %v3637
        %v3639 = vpop.f32.mrf.mxu0
        %v3640 = vadd.f32 %v2779, %v3639
        %3641 = vmatmul.bf16.gmra.mxu0 %v2686
        %v3642 = vpop.f32.mrf.mxu0
        %v3643 = vadd.f32 %v2779, %v3642
        %v3644 = vpop.f32.mrf.mxu0
        %v3645 = vadd.f32 %v2779, %v3644
        %3646 = vmatmul.bf16.gmra.mxu0 %v2687
        %v3647 = vpop.f32.mrf.mxu0
        %v3648 = vadd.f32 %v2779, %v3647
        %v3649 = vpop.f32.mrf.mxu0
        %v3650 = vadd.f32 %v2779, %v3649
        %3651 = vmatmul.bf16.gmra.mxu0 %v2688
        %v3652 = vpop.f32.mrf.mxu0
        %v3653 = vadd.f32 %v2779, %v3652
        %v3654 = vpop.f32.mrf.mxu0
        %v3655 = vadd.f32 %v2779, %v3654
        %3656 = vmatmul.bf16.gmra.mxu0 %v2689
        %v3657 = vpop.f32.mrf.mxu0
        %v3658 = vadd.f32 %v2779, %v3657
        %v3659 = vpop.f32.mrf.mxu0
        %v3660 = vadd.f32 %v2779, %v3659
        %3661 = vmatmul.bf16.gmra.mxu0 %v2690
        %v3662 = vpop.f32.mrf.mxu0
        %v3663 = vadd.f32 %v2779, %v3662
        %v3664 = vpop.f32.mrf.mxu0
        %v3665 = vadd.f32 %v2779, %v3664
        %3666 = vmatmul.bf16.gmra.mxu0 %v2691
        %v3667 = vpop.f32.mrf.mxu0
        %v3668 = vadd.f32 %v2779, %v3667
        %v3669 = vpop.f32.mrf.mxu0
        %v3670 = vadd.f32 %v2779, %v3669
        %3671 = vmatmul.bf16.gmra.mxu0 %v2692
        %v3672 = vpop.f32.mrf.mxu0
        %v3673 = vadd.f32 %v2779, %v3672
        %v3674 = vpop.f32.mrf.mxu0
        %v3675 = vadd.f32 %v2779, %v3674
        %3676 = vmatmul.bf16.gmra.mxu0 %v2693
        %v3677 = vpop.f32.mrf.mxu0
        %v3678 = vadd.f32 %v2779, %v3677
        %v3679 = vpop.f32.mrf.mxu0
        %v3680 = vadd.f32 %v2779, %v3679
        %3681 = vmatmul.bf16.gmra.mxu0 %v2694
        %v3682 = vpop.f32.mrf.mxu0
        %v3683 = vadd.f32 %v2779, %v3682
        %v3684 = vpop.f32.mrf.mxu0
        %v3685 = vadd.f32 %v2779, %v3684
        %3686 = vmatmul.bf16.gmra.mxu0 %v2695
        %v3687 = vpop.f32.mrf.mxu0
        %v3688 = vadd.f32 %v2779, %v3687
        %v3689 = vpop.f32.mrf.mxu0
        %v3690 = vadd.f32 %v2779, %v3689
        %3691 = vmatmul.bf16.gmra.mxu0 %v2696
        %v3692 = vpop.f32.mrf.mxu0
        %v3693 = vadd.f32 %v2779, %v3692
        %v3694 = vpop.f32.mrf.mxu0
        %v3695 = vadd.f32 %v2779, %v3694
        %3696 = vmatmul.bf16.gmra.mxu0 %v2697
        %v3697 = vpop.f32.mrf.mxu0
        %v3698 = vadd.f32 %v2779, %v3697
        %v3699 = vpop.f32.mrf.mxu0
        %v3700 = vadd.f32 %v2779, %v3699
        %3701 = vmatmul.bf16.gmra.mxu0 %v2698
        %v3702 = vpop.f32.mrf.mxu0
        %v3703 = vadd.f32 %v2779, %v3702
        %v3704 = vpop.f32.mrf.mxu0
        %v3705 = vadd.f32 %v2779, %v3704
        %3706 = vmatmul.bf16.gmra.mxu0 %v2699
        %v3707 = vpop.f32.mrf.mxu0
        %v3708 = vadd.f32 %v2779, %v3707
        %v3709 = vpop.f32.mrf.mxu0
        %v3710 = vadd.f32 %v2779, %v3709
        %3711 = vmatmul.bf16.gmra.mxu0 %v2700
        %v3712 = vpop.f32.mrf.mxu0
        %v3713 = vadd.f32 %v2779, %v3712
        %v3714 = vpop.f32.mrf.mxu0
        %v3715 = vadd.f32 %v2779, %v3714
        %3716 = vmatmul.bf16.gmra.mxu0 %v2701
        %v3717 = vpop.f32.mrf.mxu0
        %v3718 = vadd.f32 %v2779, %v3717
        %v3719 = vpop.f32.mrf.mxu0
        %v3720 = vadd.f32 %v2779, %v3719
        %3721 = vmatmul.bf16.gmra.mxu0 %v2702
        %v3722 = vpop.f32.mrf.mxu0
        %v3723 = vadd.f32 %v2779, %v3722
        %v3724 = vpop.f32.mrf.mxu0
        %v3725 = vadd.f32 %v2779, %v3724
        %3726 = vmatmul.bf16.gmra.mxu0 %v2703
        %v3727 = vpop.f32.mrf.mxu0
        %v3728 = vadd.f32 %v2779, %v3727
        %v3729 = vpop.f32.mrf.mxu0
        %v3730 = vadd.f32 %v2779, %v3729
        %3731 = vmatmul.bf16.gmra.mxu0 %v2704
        %v3732 = vpop.f32.mrf.mxu0
        %v3733 = vadd.f32 %v2779, %v3732
        %v3734 = vpop.f32.mrf.mxu0
        %v3735 = vadd.f32 %v2779, %v3734
        %3736 = vmatmul.bf16.gmra.mxu0 %v2705
        %v3737 = vpop.f32.mrf.mxu0
        %v3738 = vadd.f32 %v2779, %v3737
        %v3739 = vpop.f32.mrf.mxu0
        %v3740 = vadd.f32 %v2779, %v3739
        %3741 = vmatmul.bf16.gmra.mxu0 %v2706
        %v3742 = vpop.f32.mrf.mxu0
        %v3743 = vadd.f32 %v2779, %v3742
        %v3744 = vpop.f32.mrf.mxu0
        %v3745 = vadd.f32 %v2779, %v3744
        %3746 = vmatmul.bf16.gmra.mxu0 %v2707
        %v3747 = vpop.f32.mrf.mxu0
        %v3748 = vadd.f32 %v2779, %v3747
        %v3749 = vpop.f32.mrf.mxu0
        %v3750 = vadd.f32 %v2779, %v3749
        %3751 = vmatmul.bf16.gmra.mxu0 %v2708
        %v3752 = vpop.f32.mrf.mxu0
        %v3753 = vadd.f32 %v2779, %v3752
        %v3754 = vpop.f32.mrf.mxu0
        %v3755 = vadd.f32 %v2779, %v3754
        %3756 = vmatmul.bf16.gmra.mxu0 %v2709
        %v3757 = vpop.f32.mrf.mxu0
        %v3758 = vadd.f32 %v2779, %v3757
        %v3759 = vpop.f32.mrf.mxu0
        %v3760 = vadd.f32 %v2779, %v3759
        %3761 = vmatmul.bf16.gmra.mxu0 %v2710
        %v3762 = vpop.f32.mrf.mxu0
        %v3763 = vadd.f32 %v2779, %v3762
        %v3764 = vpop.f32.mrf.mxu0
        %v3765 = vadd.f32 %v2779, %v3764
        %3766 = vmatmul.bf16.gmra.mxu0 %v2711
        %v3767 = vpop.f32.mrf.mxu0
        %v3768 = vadd.f32 %v2779, %v3767
        %v3769 = vpop.f32.mrf.mxu0
        %v3770 = vadd.f32 %v2779, %v3769
        %3771 = vdwg.mxu0
        %3772 = vmatpush.bf16.msra.mxu0 %v3044
        %3773 = vmatpush.bf16.msra.mxu0 %v3036
        %3774 = vmatpush.bf16.msra.mxu0 %v3028
        %3775 = vmatpush.bf16.msra.mxu0 %v3020
        %3776 = vmatpush.bf16.msra.mxu0 %v3012
        %3777 = vmatpush.bf16.msra.mxu0 %v3004
        %3778 = vmatpush.bf16.msra.mxu0 %v2996
        %3779 = vmatpush.bf16.msra.mxu0 %v2988
        %3780 = vmatmul.bf16.gmra.mxu0 %v2648
        %v3781 = vpop.f32.mrf.mxu0
        %v3782 = vadd.f32 %v2780, %v3781
        %v3783 = vpop.f32.mrf.mxu0
        %v3784 = vadd.f32 %v2780, %v3783
        %3785 = vmatmul.bf16.gmra.mxu0 %v2649
        %v3786 = vpop.f32.mrf.mxu0
        %v3787 = vadd.f32 %v2780, %v3786
        %v3788 = vpop.f32.mrf.mxu0
        %v3789 = vadd.f32 %v2780, %v3788
        %3790 = vmatmul.bf16.gmra.mxu0 %v2650
        %v3791 = vpop.f32.mrf.mxu0
        %v3792 = vadd.f32 %v2780, %v3791
        %v3793 = vpop.f32.mrf.mxu0
        %v3794 = vadd.f32 %v2780, %v3793
        %3795 = vmatmul.bf16.gmra.mxu0 %v2651
        %v3796 = vpop.f32.mrf.mxu0
        %v3797 = vadd.f32 %v2780, %v3796
        %v3798 = vpop.f32.mrf.mxu0
        %v3799 = vadd.f32 %v2780, %v3798
        %3800 = vmatmul.bf16.gmra.mxu0 %v2652
        %v3801 = vpop.f32.mrf.mxu0
        %v3802 = vadd.f32 %v2780, %v3801
        %v3803 = vpop.f32.mrf.mxu0
        %v3804 = vadd.f32 %v2780, %v3803
        %3805 = vmatmul.bf16.gmra.mxu0 %v2653
        %v3806 = vpop.f32.mrf.mxu0
        %v3807 = vadd.f32 %v2780, %v3806
        %v3808 = vpop.f32.mrf.mxu0
        %v3809 = vadd.f32 %v2780, %v3808
        %3810 = vmatmul.bf16.gmra.mxu0 %v2654
        %v3811 = vpop.f32.mrf.mxu0
        %v3812 = vadd.f32 %v2780, %v3811
        %v3813 = vpop.f32.mrf.mxu0
        %v3814 = vadd.f32 %v2780, %v3813
        %3815 = vmatmul.bf16.gmra.mxu0 %v2655
        %v3816 = vpop.f32.mrf.mxu0
        %v3817 = vadd.f32 %v2780, %v3816
        %v3818 = vpop.f32.mrf.mxu0
        %v3819 = vadd.f32 %v2780, %v3818
        %3820 = vmatmul.bf16.gmra.mxu0 %v2656
        %v3821 = vpop.f32.mrf.mxu0
        %v3822 = vadd.f32 %v2780, %v3821
        %v3823 = vpop.f32.mrf.mxu0
        %v3824 = vadd.f32 %v2780, %v3823
        %3825 = vmatmul.bf16.gmra.mxu0 %v2657
        %v3826 = vpop.f32.mrf.mxu0
        %v3827 = vadd.f32 %v2780, %v3826
        %v3828 = vpop.f32.mrf.mxu0
        %v3829 = vadd.f32 %v2780, %v3828
        %3830 = vmatmul.bf16.gmra.mxu0 %v2658
        %v3831 = vpop.f32.mrf.mxu0
        %v3832 = vadd.f32 %v2780, %v3831
        %v3833 = vpop.f32.mrf.mxu0
        %v3834 = vadd.f32 %v2780, %v3833
        %3835 = vmatmul.bf16.gmra.mxu0 %v2659
        %v3836 = vpop.f32.mrf.mxu0
        %v3837 = vadd.f32 %v2780, %v3836
        %v3838 = vpop.f32.mrf.mxu0
        %v3839 = vadd.f32 %v2780, %v3838
        %3840 = vmatmul.bf16.gmra.mxu0 %v2660
        %v3841 = vpop.f32.mrf.mxu0
        %v3842 = vadd.f32 %v2780, %v3841
        %v3843 = vpop.f32.mrf.mxu0
        %v3844 = vadd.f32 %v2780, %v3843
        %3845 = vmatmul.bf16.gmra.mxu0 %v2661
        %v3846 = vpop.f32.mrf.mxu0
        %v3847 = vadd.f32 %v2780, %v3846
        %v3848 = vpop.f32.mrf.mxu0
        %v3849 = vadd.f32 %v2780, %v3848
        %3850 = vmatmul.bf16.gmra.mxu0 %v2662
        %v3851 = vpop.f32.mrf.mxu0
        %v3852 = vadd.f32 %v2780, %v3851
        %v3853 = vpop.f32.mrf.mxu0
        %v3854 = vadd.f32 %v2780, %v3853
        %3855 = vmatmul.bf16.gmra.mxu0 %v2663
        %v3856 = vpop.f32.mrf.mxu0
        %v3857 = vadd.f32 %v2780, %v3856
        %v3858 = vpop.f32.mrf.mxu0
        %v3859 = vadd.f32 %v2780, %v3858
        %3860 = vmatmul.bf16.gmra.mxu0 %v2664
        %v3861 = vpop.f32.mrf.mxu0
        %v3862 = vadd.f32 %v2780, %v3861
        %v3863 = vpop.f32.mrf.mxu0
        %v3864 = vadd.f32 %v2780, %v3863
        %3865 = vmatmul.bf16.gmra.mxu0 %v2665
        %v3866 = vpop.f32.mrf.mxu0
        %v3867 = vadd.f32 %v2780, %v3866
        %v3868 = vpop.f32.mrf.mxu0
        %v3869 = vadd.f32 %v2780, %v3868
        %3870 = vmatmul.bf16.gmra.mxu0 %v2666
        %v3871 = vpop.f32.mrf.mxu0
        %v3872 = vadd.f32 %v2780, %v3871
        %v3873 = vpop.f32.mrf.mxu0
        %v3874 = vadd.f32 %v2780, %v3873
        %3875 = vmatmul.bf16.gmra.mxu0 %v2667
        %v3876 = vpop.f32.mrf.mxu0
        %v3877 = vadd.f32 %v2780, %v3876
        %v3878 = vpop.f32.mrf.mxu0
        %v3879 = vadd.f32 %v2780, %v3878
        %3880 = vmatmul.bf16.gmra.mxu0 %v2668
        %v3881 = vpop.f32.mrf.mxu0
        %v3882 = vadd.f32 %v2780, %v3881
        %v3883 = vpop.f32.mrf.mxu0
        %v3884 = vadd.f32 %v2780, %v3883
        %3885 = vmatmul.bf16.gmra.mxu0 %v2669
        %v3886 = vpop.f32.mrf.mxu0
        %v3887 = vadd.f32 %v2780, %v3886
        %v3888 = vpop.f32.mrf.mxu0
        %v3889 = vadd.f32 %v2780, %v3888
        %3890 = vmatmul.bf16.gmra.mxu0 %v2670
        %v3891 = vpop.f32.mrf.mxu0
        %v3892 = vadd.f32 %v2780, %v3891
        %v3893 = vpop.f32.mrf.mxu0
        %v3894 = vadd.f32 %v2780, %v3893
        %3895 = vmatmul.bf16.gmra.mxu0 %v2671
        %v3896 = vpop.f32.mrf.mxu0
        %v3897 = vadd.f32 %v2780, %v3896
        %v3898 = vpop.f32.mrf.mxu0
        %v3899 = vadd.f32 %v2780, %v3898
        %3900 = vmatmul.bf16.gmra.mxu0 %v2672
        %v3901 = vpop.f32.mrf.mxu0
        %v3902 = vadd.f32 %v2780, %v3901
        %v3903 = vpop.f32.mrf.mxu0
        %v3904 = vadd.f32 %v2780, %v3903
        %3905 = vmatmul.bf16.gmra.mxu0 %v2673
        %v3906 = vpop.f32.mrf.mxu0
        %v3907 = vadd.f32 %v2780, %v3906
        %v3908 = vpop.f32.mrf.mxu0
        %v3909 = vadd.f32 %v2780, %v3908
        %3910 = vmatmul.bf16.gmra.mxu0 %v2674
        %v3911 = vpop.f32.mrf.mxu0
        %v3912 = vadd.f32 %v2780, %v3911
        %v3913 = vpop.f32.mrf.mxu0
        %v3914 = vadd.f32 %v2780, %v3913
        %3915 = vmatmul.bf16.gmra.mxu0 %v2675
        %v3916 = vpop.f32.mrf.mxu0
        %v3917 = vadd.f32 %v2780, %v3916
        %v3918 = vpop.f32.mrf.mxu0
        %v3919 = vadd.f32 %v2780, %v3918
        %3920 = vmatmul.bf16.gmra.mxu0 %v2676
        %v3921 = vpop.f32.mrf.mxu0
        %v3922 = vadd.f32 %v2780, %v3921
        %v3923 = vpop.f32.mrf.mxu0
        %v3924 = vadd.f32 %v2780, %v3923
        %3925 = vmatmul.bf16.gmra.mxu0 %v2677
        %v3926 = vpop.f32.mrf.mxu0
        %v3927 = vadd.f32 %v2780, %v3926
        %v3928 = vpop.f32.mrf.mxu0
        %v3929 = vadd.f32 %v2780, %v3928
        %3930 = vmatmul.bf16.gmra.mxu0 %v2678
        %v3931 = vpop.f32.mrf.mxu0
        %v3932 = vadd.f32 %v2780, %v3931
        %v3933 = vpop.f32.mrf.mxu0
        %v3934 = vadd.f32 %v2780, %v3933
        %3935 = vmatmul.bf16.gmra.mxu0 %v2679
        %v3936 = vpop.f32.mrf.mxu0
        %v3937 = vadd.f32 %v2780, %v3936
        %v3938 = vpop.f32.mrf.mxu0
        %v3939 = vadd.f32 %v2780, %v3938
        %3940 = vmatmul.bf16.gmra.mxu0 %v2680
        %v3941 = vpop.f32.mrf.mxu0
        %v3942 = vadd.f32 %v2780, %v3941
        %v3943 = vpop.f32.mrf.mxu0
        %v3944 = vadd.f32 %v2780, %v3943
        %3945 = vmatmul.bf16.gmra.mxu0 %v2681
        %v3946 = vpop.f32.mrf.mxu0
        %v3947 = vadd.f32 %v2780, %v3946
        %v3948 = vpop.f32.mrf.mxu0
        %v3949 = vadd.f32 %v2780, %v3948
        %3950 = vmatmul.bf16.gmra.mxu0 %v2682
        %v3951 = vpop.f32.mrf.mxu0
        %v3952 = vadd.f32 %v2780, %v3951
        %v3953 = vpop.f32.mrf.mxu0
        %v3954 = vadd.f32 %v2780, %v3953
        %3955 = vmatmul.bf16.gmra.mxu0 %v2683
        %v3956 = vpop.f32.mrf.mxu0
        %v3957 = vadd.f32 %v2780, %v3956
        %v3958 = vpop.f32.mrf.mxu0
        %v3959 = vadd.f32 %v2780, %v3958
        %3960 = vmatmul.bf16.gmra.mxu0 %v2684
        %v3961 = vpop.f32.mrf.mxu0
        %v3962 = vadd.f32 %v2780, %v3961
        %v3963 = vpop.f32.mrf.mxu0
        %v3964 = vadd.f32 %v2780, %v3963
        %3965 = vmatmul.bf16.gmra.mxu0 %v2685
        %v3966 = vpop.f32.mrf.mxu0
        %v3967 = vadd.f32 %v2780, %v3966
        %v3968 = vpop.f32.mrf.mxu0
        %v3969 = vadd.f32 %v2780, %v3968
        %3970 = vmatmul.bf16.gmra.mxu0 %v2686
        %v3971 = vpop.f32.mrf.mxu0
        %v3972 = vadd.f32 %v2780, %v3971
        %v3973 = vpop.f32.mrf.mxu0
        %v3974 = vadd.f32 %v2780, %v3973
        %3975 = vmatmul.bf16.gmra.mxu0 %v2687
        %v3976 = vpop.f32.mrf.mxu0
        %v3977 = vadd.f32 %v2780, %v3976
        %v3978 = vpop.f32.mrf.mxu0
        %v3979 = vadd.f32 %v2780, %v3978
        %3980 = vmatmul.bf16.gmra.mxu0 %v2688
        %v3981 = vpop.f32.mrf.mxu0
        %v3982 = vadd.f32 %v2780, %v3981
        %v3983 = vpop.f32.mrf.mxu0
        %v3984 = vadd.f32 %v2780, %v3983
        %3985 = vmatmul.bf16.gmra.mxu0 %v2689
        %v3986 = vpop.f32.mrf.mxu0
        %v3987 = vadd.f32 %v2780, %v3986
        %v3988 = vpop.f32.mrf.mxu0
        %v3989 = vadd.f32 %v2780, %v3988
        %3990 = vmatmul.bf16.gmra.mxu0 %v2690
        %v3991 = vpop.f32.mrf.mxu0
        %v3992 = vadd.f32 %v2780, %v3991
        %v3993 = vpop.f32.mrf.mxu0
        %v3994 = vadd.f32 %v2780, %v3993
        %3995 = vmatmul.bf16.gmra.mxu0 %v2691
        %v3996 = vpop.f32.mrf.mxu0
        %v3997 = vadd.f32 %v2780, %v3996
        %v3998 = vpop.f32.mrf.mxu0
        %v3999 = vadd.f32 %v2780, %v3998
        %4000 = vmatmul.bf16.gmra.mxu0 %v2692
        %v4001 = vpop.f32.mrf.mxu0
        %v4002 = vadd.f32 %v2780, %v4001
        %v4003 = vpop.f32.mrf.mxu0
        %v4004 = vadd.f32 %v2780, %v4003
        %4005 = vmatmul.bf16.gmra.mxu0 %v2693
        %v4006 = vpop.f32.mrf.mxu0
        %v4007 = vadd.f32 %v2780, %v4006
        %v4008 = vpop.f32.mrf.mxu0
        %v4009 = vadd.f32 %v2780, %v4008
        %4010 = vmatmul.bf16.gmra.mxu0 %v2694
        %v4011 = vpop.f32.mrf.mxu0
        %v4012 = vadd.f32 %v2780, %v4011
        %v4013 = vpop.f32.mrf.mxu0
        %v4014 = vadd.f32 %v2780, %v4013
        %4015 = vmatmul.bf16.gmra.mxu0 %v2695
        %v4016 = vpop.f32.mrf.mxu0
        %v4017 = vadd.f32 %v2780, %v4016
        %v4018 = vpop.f32.mrf.mxu0
        %v4019 = vadd.f32 %v2780, %v4018
        %4020 = vmatmul.bf16.gmra.mxu0 %v2696
        %v4021 = vpop.f32.mrf.mxu0
        %v4022 = vadd.f32 %v2780, %v4021
        %v4023 = vpop.f32.mrf.mxu0
        %v4024 = vadd.f32 %v2780, %v4023
        %4025 = vmatmul.bf16.gmra.mxu0 %v2697
        %v4026 = vpop.f32.mrf.mxu0
        %v4027 = vadd.f32 %v2780, %v4026
        %v4028 = vpop.f32.mrf.mxu0
        %v4029 = vadd.f32 %v2780, %v4028
        %4030 = vmatmul.bf16.gmra.mxu0 %v2698
        %v4031 = vpop.f32.mrf.mxu0
        %v4032 = vadd.f32 %v2780, %v4031
        %v4033 = vpop.f32.mrf.mxu0
        %v4034 = vadd.f32 %v2780, %v4033
        %4035 = vmatmul.bf16.gmra.mxu0 %v2699
        %v4036 = vpop.f32.mrf.mxu0
        %v4037 = vadd.f32 %v2780, %v4036
        %v4038 = vpop.f32.mrf.mxu0
        %v4039 = vadd.f32 %v2780, %v4038
        %4040 = vmatmul.bf16.gmra.mxu0 %v2700
        %v4041 = vpop.f32.mrf.mxu0
        %v4042 = vadd.f32 %v2780, %v4041
        %v4043 = vpop.f32.mrf.mxu0
        %v4044 = vadd.f32 %v2780, %v4043
        %4045 = vmatmul.bf16.gmra.mxu0 %v2701
        %v4046 = vpop.f32.mrf.mxu0
        %v4047 = vadd.f32 %v2780, %v4046
        %v4048 = vpop.f32.mrf.mxu0
        %v4049 = vadd.f32 %v2780, %v4048
        %4050 = vmatmul.bf16.gmra.mxu0 %v2702
        %v4051 = vpop.f32.mrf.mxu0
        %v4052 = vadd.f32 %v2780, %v4051
        %v4053 = vpop.f32.mrf.mxu0
        %v4054 = vadd.f32 %v2780, %v4053
        %4055 = vmatmul.bf16.gmra.mxu0 %v2703
        %v4056 = vpop.f32.mrf.mxu0
        %v4057 = vadd.f32 %v2780, %v4056
        %v4058 = vpop.f32.mrf.mxu0
        %v4059 = vadd.f32 %v2780, %v4058
        %4060 = vmatmul.bf16.gmra.mxu0 %v2704
        %v4061 = vpop.f32.mrf.mxu0
        %v4062 = vadd.f32 %v2780, %v4061
        %v4063 = vpop.f32.mrf.mxu0
        %v4064 = vadd.f32 %v2780, %v4063
        %4065 = vmatmul.bf16.gmra.mxu0 %v2705
        %v4066 = vpop.f32.mrf.mxu0
        %v4067 = vadd.f32 %v2780, %v4066
        %v4068 = vpop.f32.mrf.mxu0
        %v4069 = vadd.f32 %v2780, %v4068
        %4070 = vmatmul.bf16.gmra.mxu0 %v2706
        %v4071 = vpop.f32.mrf.mxu0
        %v4072 = vadd.f32 %v2780, %v4071
        %v4073 = vpop.f32.mrf.mxu0
        %v4074 = vadd.f32 %v2780, %v4073
        %4075 = vmatmul.bf16.gmra.mxu0 %v2707
        %v4076 = vpop.f32.mrf.mxu0
        %v4077 = vadd.f32 %v2780, %v4076
        %v4078 = vpop.f32.mrf.mxu0
        %v4079 = vadd.f32 %v2780, %v4078
        %4080 = vmatmul.bf16.gmra.mxu0 %v2708
        %v4081 = vpop.f32.mrf.mxu0
        %v4082 = vadd.f32 %v2780, %v4081
        %v4083 = vpop.f32.mrf.mxu0
        %v4084 = vadd.f32 %v2780, %v4083
        %4085 = vmatmul.bf16.gmra.mxu0 %v2709
        %v4086 = vpop.f32.mrf.mxu0
        %v4087 = vadd.f32 %v2780, %v4086
        %v4088 = vpop.f32.mrf.mxu0
        %v4089 = vadd.f32 %v2780, %v4088
        %4090 = vmatmul.bf16.gmra.mxu0 %v2710
        %v4091 = vpop.f32.mrf.mxu0
        %v4092 = vadd.f32 %v2780, %v4091
        %v4093 = vpop.f32.mrf.mxu0
        %v4094 = vadd.f32 %v2780, %v4093
        %4095 = vmatmul.bf16.gmra.mxu0 %v2711
        %v4096 = vpop.f32.mrf.mxu0
        %v4097 = vadd.f32 %v2780, %v4096
        %v4098 = vpop.f32.mrf.mxu0
        %v4099 = vadd.f32 %v2780, %v4098
        %4100 = vdwg.mxu0
        %4101 = vmatpush.bf16.msra.mxu0 %v3045
        %4102 = vmatpush.bf16.msra.mxu0 %v3037
        %4103 = vmatpush.bf16.msra.mxu0 %v3029
        %4104 = vmatpush.bf16.msra.mxu0 %v3021
        %4105 = vmatpush.bf16.msra.mxu0 %v3013
        %4106 = vmatpush.bf16.msra.mxu0 %v3005
        %4107 = vmatpush.bf16.msra.mxu0 %v2997
        %4108 = vmatpush.bf16.msra.mxu0 %v2989
        %4109 = vmatmul.bf16.gmra.mxu0 %v2648
        %v4110 = vpop.f32.mrf.mxu0
        %v4111 = vadd.f32 %v2781, %v4110
        %v4112 = vpop.f32.mrf.mxu0
        %v4113 = vadd.f32 %v2781, %v4112
        %4114 = vmatmul.bf16.gmra.mxu0 %v2649
        %v4115 = vpop.f32.mrf.mxu0
        %v4116 = vadd.f32 %v2781, %v4115
        %v4117 = vpop.f32.mrf.mxu0
        %v4118 = vadd.f32 %v2781, %v4117
        %4119 = vmatmul.bf16.gmra.mxu0 %v2650
        %v4120 = vpop.f32.mrf.mxu0
        %v4121 = vadd.f32 %v2781, %v4120
        %v4122 = vpop.f32.mrf.mxu0
        %v4123 = vadd.f32 %v2781, %v4122
        %4124 = vmatmul.bf16.gmra.mxu0 %v2651
        %v4125 = vpop.f32.mrf.mxu0
        %v4126 = vadd.f32 %v2781, %v4125
        %v4127 = vpop.f32.mrf.mxu0
        %v4128 = vadd.f32 %v2781, %v4127
        %4129 = vmatmul.bf16.gmra.mxu0 %v2652
        %v4130 = vpop.f32.mrf.mxu0
        %v4131 = vadd.f32 %v2781, %v4130
        %v4132 = vpop.f32.mrf.mxu0
        %v4133 = vadd.f32 %v2781, %v4132
        %4134 = vmatmul.bf16.gmra.mxu0 %v2653
        %v4135 = vpop.f32.mrf.mxu0
        %v4136 = vadd.f32 %v2781, %v4135
        %v4137 = vpop.f32.mrf.mxu0
        %v4138 = vadd.f32 %v2781, %v4137
        %4139 = vmatmul.bf16.gmra.mxu0 %v2654
        %v4140 = vpop.f32.mrf.mxu0
        %v4141 = vadd.f32 %v2781, %v4140
        %v4142 = vpop.f32.mrf.mxu0
        %v4143 = vadd.f32 %v2781, %v4142
        %4144 = vmatmul.bf16.gmra.mxu0 %v2655
        %v4145 = vpop.f32.mrf.mxu0
        %v4146 = vadd.f32 %v2781, %v4145
        %v4147 = vpop.f32.mrf.mxu0
        %v4148 = vadd.f32 %v2781, %v4147
        %4149 = vmatmul.bf16.gmra.mxu0 %v2656
        %v4150 = vpop.f32.mrf.mxu0
        %v4151 = vadd.f32 %v2781, %v4150
        %v4152 = vpop.f32.mrf.mxu0
        %v4153 = vadd.f32 %v2781, %v4152
        %4154 = vmatmul.bf16.gmra.mxu0 %v2657
        %v4155 = vpop.f32.mrf.mxu0
        %v4156 = vadd.f32 %v2781, %v4155
        %v4157 = vpop.f32.mrf.mxu0
        %v4158 = vadd.f32 %v2781, %v4157
        %4159 = vmatmul.bf16.gmra.mxu0 %v2658
        %v4160 = vpop.f32.mrf.mxu0
        %v4161 = vadd.f32 %v2781, %v4160
        %v4162 = vpop.f32.mrf.mxu0
        %v4163 = vadd.f32 %v2781, %v4162
        %4164 = vmatmul.bf16.gmra.mxu0 %v2659
        %v4165 = vpop.f32.mrf.mxu0
        %v4166 = vadd.f32 %v2781, %v4165
        %v4167 = vpop.f32.mrf.mxu0
        %v4168 = vadd.f32 %v2781, %v4167
        %4169 = vmatmul.bf16.gmra.mxu0 %v2660
        %v4170 = vpop.f32.mrf.mxu0
        %v4171 = vadd.f32 %v2781, %v4170
        %v4172 = vpop.f32.mrf.mxu0
        %v4173 = vadd.f32 %v2781, %v4172
        %4174 = vmatmul.bf16.gmra.mxu0 %v2661
        %v4175 = vpop.f32.mrf.mxu0
        %v4176 = vadd.f32 %v2781, %v4175
        %v4177 = vpop.f32.mrf.mxu0
        %v4178 = vadd.f32 %v2781, %v4177
        %4179 = vmatmul.bf16.gmra.mxu0 %v2662
        %v4180 = vpop.f32.mrf.mxu0
        %v4181 = vadd.f32 %v2781, %v4180
        %v4182 = vpop.f32.mrf.mxu0
        %v4183 = vadd.f32 %v2781, %v4182
        %4184 = vmatmul.bf16.gmra.mxu0 %v2663
        %v4185 = vpop.f32.mrf.mxu0
        %v4186 = vadd.f32 %v2781, %v4185
        %v4187 = vpop.f32.mrf.mxu0
        %v4188 = vadd.f32 %v2781, %v4187
        %4189 = vmatmul.bf16.gmra.mxu0 %v2664
        %v4190 = vpop.f32.mrf.mxu0
        %v4191 = vadd.f32 %v2781, %v4190
        %v4192 = vpop.f32.mrf.mxu0
        %v4193 = vadd.f32 %v2781, %v4192
        %4194 = vmatmul.bf16.gmra.mxu0 %v2665
        %v4195 = vpop.f32.mrf.mxu0
        %v4196 = vadd.f32 %v2781, %v4195
        %v4197 = vpop.f32.mrf.mxu0
        %v4198 = vadd.f32 %v2781, %v4197
        %4199 = vmatmul.bf16.gmra.mxu0 %v2666
        %v4200 = vpop.f32.mrf.mxu0
        %v4201 = vadd.f32 %v2781, %v4200
        %v4202 = vpop.f32.mrf.mxu0
        %v4203 = vadd.f32 %v2781, %v4202
        %4204 = vmatmul.bf16.gmra.mxu0 %v2667
        %v4205 = vpop.f32.mrf.mxu0
        %v4206 = vadd.f32 %v2781, %v4205
        %v4207 = vpop.f32.mrf.mxu0
        %v4208 = vadd.f32 %v2781, %v4207
        %4209 = vmatmul.bf16.gmra.mxu0 %v2668
        %v4210 = vpop.f32.mrf.mxu0
        %v4211 = vadd.f32 %v2781, %v4210
        %v4212 = vpop.f32.mrf.mxu0
        %v4213 = vadd.f32 %v2781, %v4212
        %4214 = vmatmul.bf16.gmra.mxu0 %v2669
        %v4215 = vpop.f32.mrf.mxu0
        %v4216 = vadd.f32 %v2781, %v4215
        %v4217 = vpop.f32.mrf.mxu0
        %v4218 = vadd.f32 %v2781, %v4217
        %4219 = vmatmul.bf16.gmra.mxu0 %v2670
        %v4220 = vpop.f32.mrf.mxu0
        %v4221 = vadd.f32 %v2781, %v4220
        %v4222 = vpop.f32.mrf.mxu0
        %v4223 = vadd.f32 %v2781, %v4222
        %4224 = vmatmul.bf16.gmra.mxu0 %v2671
        %v4225 = vpop.f32.mrf.mxu0
        %v4226 = vadd.f32 %v2781, %v4225
        %v4227 = vpop.f32.mrf.mxu0
        %v4228 = vadd.f32 %v2781, %v4227
        %4229 = vmatmul.bf16.gmra.mxu0 %v2672
        %v4230 = vpop.f32.mrf.mxu0
        %v4231 = vadd.f32 %v2781, %v4230
        %v4232 = vpop.f32.mrf.mxu0
        %v4233 = vadd.f32 %v2781, %v4232
        %4234 = vmatmul.bf16.gmra.mxu0 %v2673
        %v4235 = vpop.f32.mrf.mxu0
        %v4236 = vadd.f32 %v2781, %v4235
        %v4237 = vpop.f32.mrf.mxu0
        %v4238 = vadd.f32 %v2781, %v4237
        %4239 = vmatmul.bf16.gmra.mxu0 %v2674
        %v4240 = vpop.f32.mrf.mxu0
        %v4241 = vadd.f32 %v2781, %v4240
        %v4242 = vpop.f32.mrf.mxu0
        %v4243 = vadd.f32 %v2781, %v4242
        %4244 = vmatmul.bf16.gmra.mxu0 %v2675
        %v4245 = vpop.f32.mrf.mxu0
        %v4246 = vadd.f32 %v2781, %v4245
        %v4247 = vpop.f32.mrf.mxu0
        %v4248 = vadd.f32 %v2781, %v4247
        %4249 = vmatmul.bf16.gmra.mxu0 %v2676
        %v4250 = vpop.f32.mrf.mxu0
        %v4251 = vadd.f32 %v2781, %v4250
        %v4252 = vpop.f32.mrf.mxu0
        %v4253 = vadd.f32 %v2781, %v4252
        %4254 = vmatmul.bf16.gmra.mxu0 %v2677
        %v4255 = vpop.f32.mrf.mxu0
        %v4256 = vadd.f32 %v2781, %v4255
        %v4257 = vpop.f32.mrf.mxu0
        %v4258 = vadd.f32 %v2781, %v4257
        %4259 = vmatmul.bf16.gmra.mxu0 %v2678
        %v4260 = vpop.f32.mrf.mxu0
        %v4261 = vadd.f32 %v2781, %v4260
        %v4262 = vpop.f32.mrf.mxu0
        %v4263 = vadd.f32 %v2781, %v4262
        %4264 = vmatmul.bf16.gmra.mxu0 %v2679
        %v4265 = vpop.f32.mrf.mxu0
        %v4266 = vadd.f32 %v2781, %v4265
        %v4267 = vpop.f32.mrf.mxu0
        %v4268 = vadd.f32 %v2781, %v4267
        %4269 = vmatmul.bf16.gmra.mxu0 %v2680
        %v4270 = vpop.f32.mrf.mxu0
        %v4271 = vadd.f32 %v2781, %v4270
        %v4272 = vpop.f32.mrf.mxu0
        %v4273 = vadd.f32 %v2781, %v4272
        %4274 = vmatmul.bf16.gmra.mxu0 %v2681
        %v4275 = vpop.f32.mrf.mxu0
        %v4276 = vadd.f32 %v2781, %v4275
        %v4277 = vpop.f32.mrf.mxu0
        %v4278 = vadd.f32 %v2781, %v4277
        %4279 = vmatmul.bf16.gmra.mxu0 %v2682
        %v4280 = vpop.f32.mrf.mxu0
        %v4281 = vadd.f32 %v2781, %v4280
        %v4282 = vpop.f32.mrf.mxu0
        %v4283 = vadd.f32 %v2781, %v4282
        %4284 = vmatmul.bf16.gmra.mxu0 %v2683
        %v4285 = vpop.f32.mrf.mxu0
        %v4286 = vadd.f32 %v2781, %v4285
        %v4287 = vpop.f32.mrf.mxu0
        %v4288 = vadd.f32 %v2781, %v4287
        %4289 = vmatmul.bf16.gmra.mxu0 %v2684
        %v4290 = vpop.f32.mrf.mxu0
        %v4291 = vadd.f32 %v2781, %v4290
        %v4292 = vpop.f32.mrf.mxu0
        %v4293 = vadd.f32 %v2781, %v4292
        %4294 = vmatmul.bf16.gmra.mxu0 %v2685
        %v4295 = vpop.f32.mrf.mxu0
        %v4296 = vadd.f32 %v2781, %v4295
        %v4297 = vpop.f32.mrf.mxu0
        %v4298 = vadd.f32 %v2781, %v4297
        %4299 = vmatmul.bf16.gmra.mxu0 %v2686
        %v4300 = vpop.f32.mrf.mxu0
        %v4301 = vadd.f32 %v2781, %v4300
        %v4302 = vpop.f32.mrf.mxu0
        %v4303 = vadd.f32 %v2781, %v4302
        %4304 = vmatmul.bf16.gmra.mxu0 %v2687
        %v4305 = vpop.f32.mrf.mxu0
        %v4306 = vadd.f32 %v2781, %v4305
        %v4307 = vpop.f32.mrf.mxu0
        %v4308 = vadd.f32 %v2781, %v4307
        %4309 = vmatmul.bf16.gmra.mxu0 %v2688
        %v4310 = vpop.f32.mrf.mxu0
        %v4311 = vadd.f32 %v2781, %v4310
        %v4312 = vpop.f32.mrf.mxu0
        %v4313 = vadd.f32 %v2781, %v4312
        %4314 = vmatmul.bf16.gmra.mxu0 %v2689
        %v4315 = vpop.f32.mrf.mxu0
        %v4316 = vadd.f32 %v2781, %v4315
        %v4317 = vpop.f32.mrf.mxu0
        %v4318 = vadd.f32 %v2781, %v4317
        %4319 = vmatmul.bf16.gmra.mxu0 %v2690
        %v4320 = vpop.f32.mrf.mxu0
        %v4321 = vadd.f32 %v2781, %v4320
        %v4322 = vpop.f32.mrf.mxu0
        %v4323 = vadd.f32 %v2781, %v4322
        %4324 = vmatmul.bf16.gmra.mxu0 %v2691
        %v4325 = vpop.f32.mrf.mxu0
        %v4326 = vadd.f32 %v2781, %v4325
        %v4327 = vpop.f32.mrf.mxu0
        %v4328 = vadd.f32 %v2781, %v4327
        %4329 = vmatmul.bf16.gmra.mxu0 %v2692
        %v4330 = vpop.f32.mrf.mxu0
        %v4331 = vadd.f32 %v2781, %v4330
        %v4332 = vpop.f32.mrf.mxu0
        %v4333 = vadd.f32 %v2781, %v4332
        %4334 = vmatmul.bf16.gmra.mxu0 %v2693
        %v4335 = vpop.f32.mrf.mxu0
        %v4336 = vadd.f32 %v2781, %v4335
        %v4337 = vpop.f32.mrf.mxu0
        %v4338 = vadd.f32 %v2781, %v4337
        %4339 = vmatmul.bf16.gmra.mxu0 %v2694
        %v4340 = vpop.f32.mrf.mxu0
        %v4341 = vadd.f32 %v2781, %v4340
        %v4342 = vpop.f32.mrf.mxu0
        %v4343 = vadd.f32 %v2781, %v4342
        %4344 = vmatmul.bf16.gmra.mxu0 %v2695
        %v4345 = vpop.f32.mrf.mxu0
        %v4346 = vadd.f32 %v2781, %v4345
        %v4347 = vpop.f32.mrf.mxu0
        %v4348 = vadd.f32 %v2781, %v4347
        %4349 = vmatmul.bf16.gmra.mxu0 %v2696
        %v4350 = vpop.f32.mrf.mxu0
        %v4351 = vadd.f32 %v2781, %v4350
        %v4352 = vpop.f32.mrf.mxu0
        %v4353 = vadd.f32 %v2781, %v4352
        %4354 = vmatmul.bf16.gmra.mxu0 %v2697
        %v4355 = vpop.f32.mrf.mxu0
        %v4356 = vadd.f32 %v2781, %v4355
        %v4357 = vpop.f32.mrf.mxu0
        %v4358 = vadd.f32 %v2781, %v4357
        %4359 = vmatmul.bf16.gmra.mxu0 %v2698
        %v4360 = vpop.f32.mrf.mxu0
        %v4361 = vadd.f32 %v2781, %v4360
        %v4362 = vpop.f32.mrf.mxu0
        %v4363 = vadd.f32 %v2781, %v4362
        %4364 = vmatmul.bf16.gmra.mxu0 %v2699
        %v4365 = vpop.f32.mrf.mxu0
        %v4366 = vadd.f32 %v2781, %v4365
        %v4367 = vpop.f32.mrf.mxu0
        %v4368 = vadd.f32 %v2781, %v4367
        %4369 = vmatmul.bf16.gmra.mxu0 %v2700
        %v4370 = vpop.f32.mrf.mxu0
        %v4371 = vadd.f32 %v2781, %v4370
        %v4372 = vpop.f32.mrf.mxu0
        %v4373 = vadd.f32 %v2781, %v4372
        %4374 = vmatmul.bf16.gmra.mxu0 %v2701
        %v4375 = vpop.f32.mrf.mxu0
        %v4376 = vadd.f32 %v2781, %v4375
        %v4377 = vpop.f32.mrf.mxu0
        %v4378 = vadd.f32 %v2781, %v4377
        %4379 = vmatmul.bf16.gmra.mxu0 %v2702
        %v4380 = vpop.f32.mrf.mxu0
        %v4381 = vadd.f32 %v2781, %v4380
        %v4382 = vpop.f32.mrf.mxu0
        %v4383 = vadd.f32 %v2781, %v4382
        %4384 = vmatmul.bf16.gmra.mxu0 %v2703
        %v4385 = vpop.f32.mrf.mxu0
        %v4386 = vadd.f32 %v2781, %v4385
        %v4387 = vpop.f32.mrf.mxu0
        %v4388 = vadd.f32 %v2781, %v4387
        %4389 = vmatmul.bf16.gmra.mxu0 %v2704
        %v4390 = vpop.f32.mrf.mxu0
        %v4391 = vadd.f32 %v2781, %v4390
        %v4392 = vpop.f32.mrf.mxu0
        %v4393 = vadd.f32 %v2781, %v4392
        %4394 = vmatmul.bf16.gmra.mxu0 %v2705
        %v4395 = vpop.f32.mrf.mxu0
        %v4396 = vadd.f32 %v2781, %v4395
        %v4397 = vpop.f32.mrf.mxu0
        %v4398 = vadd.f32 %v2781, %v4397
        %4399 = vmatmul.bf16.gmra.mxu0 %v2706
        %v4400 = vpop.f32.mrf.mxu0
        %v4401 = vadd.f32 %v2781, %v4400
        %v4402 = vpop.f32.mrf.mxu0
        %v4403 = vadd.f32 %v2781, %v4402
        %4404 = vmatmul.bf16.gmra.mxu0 %v2707
        %v4405 = vpop.f32.mrf.mxu0
        %v4406 = vadd.f32 %v2781, %v4405
        %v4407 = vpop.f32.mrf.mxu0
        %v4408 = vadd.f32 %v2781, %v4407
        %4409 = vmatmul.bf16.gmra.mxu0 %v2708
        %v4410 = vpop.f32.mrf.mxu0
        %v4411 = vadd.f32 %v2781, %v4410
        %v4412 = vpop.f32.mrf.mxu0
        %v4413 = vadd.f32 %v2781, %v4412
        %4414 = vmatmul.bf16.gmra.mxu0 %v2709
        %v4415 = vpop.f32.mrf.mxu0
        %v4416 = vadd.f32 %v2781, %v4415
        %v4417 = vpop.f32.mrf.mxu0
        %v4418 = vadd.f32 %v2781, %v4417
        %4419 = vmatmul.bf16.gmra.mxu0 %v2710
        %v4420 = vpop.f32.mrf.mxu0
        %v4421 = vadd.f32 %v2781, %v4420
        %v4422 = vpop.f32.mrf.mxu0
        %v4423 = vadd.f32 %v2781, %v4422
        %4424 = vmatmul.bf16.gmra.mxu0 %v2711
        %v4425 = vpop.f32.mrf.mxu0
        %v4426 = vadd.f32 %v2781, %v4425
        %v4427 = vpop.f32.mrf.mxu0
        %v4428 = vadd.f32 %v2781, %v4427
        %4429 = vdwg.mxu0
        %4430 = vmatpush.bf16.msra.mxu0 %v3046
        %4431 = vmatpush.bf16.msra.mxu0 %v3038
        %4432 = vmatpush.bf16.msra.mxu0 %v3030
        %4433 = vmatpush.bf16.msra.mxu0 %v3022
        %4434 = vmatpush.bf16.msra.mxu0 %v3014
        %4435 = vmatpush.bf16.msra.mxu0 %v3006
        %4436 = vmatpush.bf16.msra.mxu0 %v2998
        %4437 = vmatpush.bf16.msra.mxu0 %v2990
        %4438 = vmatmul.bf16.gmra.mxu0 %v2648
        %v4439 = vpop.f32.mrf.mxu0
        %v4440 = vadd.f32 %v2782, %v4439
        %v4441 = vpop.f32.mrf.mxu0
        %v4442 = vadd.f32 %v2782, %v4441
        %4443 = vmatmul.bf16.gmra.mxu0 %v2649
        %v4444 = vpop.f32.mrf.mxu0
        %v4445 = vadd.f32 %v2782, %v4444
        %v4446 = vpop.f32.mrf.mxu0
        %v4447 = vadd.f32 %v2782, %v4446
        %4448 = vmatmul.bf16.gmra.mxu0 %v2650
        %v4449 = vpop.f32.mrf.mxu0
        %v4450 = vadd.f32 %v2782, %v4449
        %v4451 = vpop.f32.mrf.mxu0
        %v4452 = vadd.f32 %v2782, %v4451
        %4453 = vmatmul.bf16.gmra.mxu0 %v2651
        %v4454 = vpop.f32.mrf.mxu0
        %v4455 = vadd.f32 %v2782, %v4454
        %v4456 = vpop.f32.mrf.mxu0
        %v4457 = vadd.f32 %v2782, %v4456
        %4458 = vmatmul.bf16.gmra.mxu0 %v2652
        %v4459 = vpop.f32.mrf.mxu0
        %v4460 = vadd.f32 %v2782, %v4459
        %v4461 = vpop.f32.mrf.mxu0
        %v4462 = vadd.f32 %v2782, %v4461
        %4463 = vmatmul.bf16.gmra.mxu0 %v2653
        %v4464 = vpop.f32.mrf.mxu0
        %v4465 = vadd.f32 %v2782, %v4464
        %v4466 = vpop.f32.mrf.mxu0
        %v4467 = vadd.f32 %v2782, %v4466
        %4468 = vmatmul.bf16.gmra.mxu0 %v2654
        %v4469 = vpop.f32.mrf.mxu0
        %v4470 = vadd.f32 %v2782, %v4469
        %v4471 = vpop.f32.mrf.mxu0
        %v4472 = vadd.f32 %v2782, %v4471
        %4473 = vmatmul.bf16.gmra.mxu0 %v2655
        %v4474 = vpop.f32.mrf.mxu0
        %v4475 = vadd.f32 %v2782, %v4474
        %v4476 = vpop.f32.mrf.mxu0
        %v4477 = vadd.f32 %v2782, %v4476
        %4478 = vmatmul.bf16.gmra.mxu0 %v2656
        %v4479 = vpop.f32.mrf.mxu0
        %v4480 = vadd.f32 %v2782, %v4479
        %v4481 = vpop.f32.mrf.mxu0
        %v4482 = vadd.f32 %v2782, %v4481
        %4483 = vmatmul.bf16.gmra.mxu0 %v2657
        %v4484 = vpop.f32.mrf.mxu0
        %v4485 = vadd.f32 %v2782, %v4484
        %v4486 = vpop.f32.mrf.mxu0
        %v4487 = vadd.f32 %v2782, %v4486
        %4488 = vmatmul.bf16.gmra.mxu0 %v2658
        %v4489 = vpop.f32.mrf.mxu0
        %v4490 = vadd.f32 %v2782, %v4489
        %v4491 = vpop.f32.mrf.mxu0
        %v4492 = vadd.f32 %v2782, %v4491
        %4493 = vmatmul.bf16.gmra.mxu0 %v2659
        %v4494 = vpop.f32.mrf.mxu0
        %v4495 = vadd.f32 %v2782, %v4494
        %v4496 = vpop.f32.mrf.mxu0
        %v4497 = vadd.f32 %v2782, %v4496
        %4498 = vmatmul.bf16.gmra.mxu0 %v2660
        %v4499 = vpop.f32.mrf.mxu0
        %v4500 = vadd.f32 %v2782, %v4499
        %v4501 = vpop.f32.mrf.mxu0
        %v4502 = vadd.f32 %v2782, %v4501
        %4503 = vmatmul.bf16.gmra.mxu0 %v2661
        %v4504 = vpop.f32.mrf.mxu0
        %v4505 = vadd.f32 %v2782, %v4504
        %v4506 = vpop.f32.mrf.mxu0
        %v4507 = vadd.f32 %v2782, %v4506
        %4508 = vmatmul.bf16.gmra.mxu0 %v2662
        %v4509 = vpop.f32.mrf.mxu0
        %v4510 = vadd.f32 %v2782, %v4509
        %v4511 = vpop.f32.mrf.mxu0
        %v4512 = vadd.f32 %v2782, %v4511
        %4513 = vmatmul.bf16.gmra.mxu0 %v2663
        %v4514 = vpop.f32.mrf.mxu0
        %v4515 = vadd.f32 %v2782, %v4514
        %v4516 = vpop.f32.mrf.mxu0
        %v4517 = vadd.f32 %v2782, %v4516
        %4518 = vmatmul.bf16.gmra.mxu0 %v2664
        %v4519 = vpop.f32.mrf.mxu0
        %v4520 = vadd.f32 %v2782, %v4519
        %v4521 = vpop.f32.mrf.mxu0
        %v4522 = vadd.f32 %v2782, %v4521
        %4523 = vmatmul.bf16.gmra.mxu0 %v2665
        %v4524 = vpop.f32.mrf.mxu0
        %v4525 = vadd.f32 %v2782, %v4524
        %v4526 = vpop.f32.mrf.mxu0
        %v4527 = vadd.f32 %v2782, %v4526
        %4528 = vmatmul.bf16.gmra.mxu0 %v2666
        %v4529 = vpop.f32.mrf.mxu0
        %v4530 = vadd.f32 %v2782, %v4529
        %v4531 = vpop.f32.mrf.mxu0
        %v4532 = vadd.f32 %v2782, %v4531
        %4533 = vmatmul.bf16.gmra.mxu0 %v2667
        %v4534 = vpop.f32.mrf.mxu0
        %v4535 = vadd.f32 %v2782, %v4534
        %v4536 = vpop.f32.mrf.mxu0
        %v4537 = vadd.f32 %v2782, %v4536
        %4538 = vmatmul.bf16.gmra.mxu0 %v2668
        %v4539 = vpop.f32.mrf.mxu0
        %v4540 = vadd.f32 %v2782, %v4539
        %v4541 = vpop.f32.mrf.mxu0
        %v4542 = vadd.f32 %v2782, %v4541
        %4543 = vmatmul.bf16.gmra.mxu0 %v2669
        %v4544 = vpop.f32.mrf.mxu0
        %v4545 = vadd.f32 %v2782, %v4544
        %v4546 = vpop.f32.mrf.mxu0
        %v4547 = vadd.f32 %v2782, %v4546
        %4548 = vmatmul.bf16.gmra.mxu0 %v2670
        %v4549 = vpop.f32.mrf.mxu0
        %v4550 = vadd.f32 %v2782, %v4549
        %v4551 = vpop.f32.mrf.mxu0
        %v4552 = vadd.f32 %v2782, %v4551
        %4553 = vmatmul.bf16.gmra.mxu0 %v2671
        %v4554 = vpop.f32.mrf.mxu0
        %v4555 = vadd.f32 %v2782, %v4554
        %v4556 = vpop.f32.mrf.mxu0
        %v4557 = vadd.f32 %v2782, %v4556
        %4558 = vmatmul.bf16.gmra.mxu0 %v2672
        %v4559 = vpop.f32.mrf.mxu0
        %v4560 = vadd.f32 %v2782, %v4559
        %v4561 = vpop.f32.mrf.mxu0
        %v4562 = vadd.f32 %v2782, %v4561
        %4563 = vmatmul.bf16.gmra.mxu0 %v2673
        %v4564 = vpop.f32.mrf.mxu0
        %v4565 = vadd.f32 %v2782, %v4564
        %v4566 = vpop.f32.mrf.mxu0
        %v4567 = vadd.f32 %v2782, %v4566
        %4568 = vmatmul.bf16.gmra.mxu0 %v2674
        %v4569 = vpop.f32.mrf.mxu0
        %v4570 = vadd.f32 %v2782, %v4569
        %v4571 = vpop.f32.mrf.mxu0
        %v4572 = vadd.f32 %v2782, %v4571
        %4573 = vmatmul.bf16.gmra.mxu0 %v2675
        %v4574 = vpop.f32.mrf.mxu0
        %v4575 = vadd.f32 %v2782, %v4574
        %v4576 = vpop.f32.mrf.mxu0
        %v4577 = vadd.f32 %v2782, %v4576
        %4578 = vmatmul.bf16.gmra.mxu0 %v2676
        %v4579 = vpop.f32.mrf.mxu0
        %v4580 = vadd.f32 %v2782, %v4579
        %v4581 = vpop.f32.mrf.mxu0
        %v4582 = vadd.f32 %v2782, %v4581
        %4583 = vmatmul.bf16.gmra.mxu0 %v2677
        %v4584 = vpop.f32.mrf.mxu0
        %v4585 = vadd.f32 %v2782, %v4584
        %v4586 = vpop.f32.mrf.mxu0
        %v4587 = vadd.f32 %v2782, %v4586
        %4588 = vmatmul.bf16.gmra.mxu0 %v2678
        %v4589 = vpop.f32.mrf.mxu0
        %v4590 = vadd.f32 %v2782, %v4589
        %v4591 = vpop.f32.mrf.mxu0
        %v4592 = vadd.f32 %v2782, %v4591
        %4593 = vmatmul.bf16.gmra.mxu0 %v2679
        %v4594 = vpop.f32.mrf.mxu0
        %v4595 = vadd.f32 %v2782, %v4594
        %v4596 = vpop.f32.mrf.mxu0
        %v4597 = vadd.f32 %v2782, %v4596
        %4598 = vmatmul.bf16.gmra.mxu0 %v2680
        %v4599 = vpop.f32.mrf.mxu0
        %v4600 = vadd.f32 %v2782, %v4599
        %v4601 = vpop.f32.mrf.mxu0
        %v4602 = vadd.f32 %v2782, %v4601
        %4603 = vmatmul.bf16.gmra.mxu0 %v2681
        %v4604 = vpop.f32.mrf.mxu0
        %v4605 = vadd.f32 %v2782, %v4604
        %v4606 = vpop.f32.mrf.mxu0
        %v4607 = vadd.f32 %v2782, %v4606
        %4608 = vmatmul.bf16.gmra.mxu0 %v2682
        %v4609 = vpop.f32.mrf.mxu0
        %v4610 = vadd.f32 %v2782, %v4609
        %v4611 = vpop.f32.mrf.mxu0
        %v4612 = vadd.f32 %v2782, %v4611
        %4613 = vmatmul.bf16.gmra.mxu0 %v2683
        %v4614 = vpop.f32.mrf.mxu0
        %v4615 = vadd.f32 %v2782, %v4614
        %v4616 = vpop.f32.mrf.mxu0
        %v4617 = vadd.f32 %v2782, %v4616
        %4618 = vmatmul.bf16.gmra.mxu0 %v2684
        %v4619 = vpop.f32.mrf.mxu0
        %v4620 = vadd.f32 %v2782, %v4619
        %v4621 = vpop.f32.mrf.mxu0
        %v4622 = vadd.f32 %v2782, %v4621
        %4623 = vmatmul.bf16.gmra.mxu0 %v2685
        %v4624 = vpop.f32.mrf.mxu0
        %v4625 = vadd.f32 %v2782, %v4624
        %v4626 = vpop.f32.mrf.mxu0
        %v4627 = vadd.f32 %v2782, %v4626
        %4628 = vmatmul.bf16.gmra.mxu0 %v2686
        %v4629 = vpop.f32.mrf.mxu0
        %v4630 = vadd.f32 %v2782, %v4629
        %v4631 = vpop.f32.mrf.mxu0
        %v4632 = vadd.f32 %v2782, %v4631
        %4633 = vmatmul.bf16.gmra.mxu0 %v2687
        %v4634 = vpop.f32.mrf.mxu0
        %v4635 = vadd.f32 %v2782, %v4634
        %v4636 = vpop.f32.mrf.mxu0
        %v4637 = vadd.f32 %v2782, %v4636
        %4638 = vmatmul.bf16.gmra.mxu0 %v2688
        %v4639 = vpop.f32.mrf.mxu0
        %v4640 = vadd.f32 %v2782, %v4639
        %v4641 = vpop.f32.mrf.mxu0
        %v4642 = vadd.f32 %v2782, %v4641
        %4643 = vmatmul.bf16.gmra.mxu0 %v2689
        %v4644 = vpop.f32.mrf.mxu0
        %v4645 = vadd.f32 %v2782, %v4644
        %v4646 = vpop.f32.mrf.mxu0
        %v4647 = vadd.f32 %v2782, %v4646
        %4648 = vmatmul.bf16.gmra.mxu0 %v2690
        %v4649 = vpop.f32.mrf.mxu0
        %v4650 = vadd.f32 %v2782, %v4649
        %v4651 = vpop.f32.mrf.mxu0
        %v4652 = vadd.f32 %v2782, %v4651
        %4653 = vmatmul.bf16.gmra.mxu0 %v2691
        %v4654 = vpop.f32.mrf.mxu0
        %v4655 = vadd.f32 %v2782, %v4654
        %v4656 = vpop.f32.mrf.mxu0
        %v4657 = vadd.f32 %v2782, %v4656
        %4658 = vmatmul.bf16.gmra.mxu0 %v2692
        %v4659 = vpop.f32.mrf.mxu0
        %v4660 = vadd.f32 %v2782, %v4659
        %v4661 = vpop.f32.mrf.mxu0
        %v4662 = vadd.f32 %v2782, %v4661
        %4663 = vmatmul.bf16.gmra.mxu0 %v2693
        %v4664 = vpop.f32.mrf.mxu0
        %v4665 = vadd.f32 %v2782, %v4664
        %v4666 = vpop.f32.mrf.mxu0
        %v4667 = vadd.f32 %v2782, %v4666
        %4668 = vmatmul.bf16.gmra.mxu0 %v2694
        %v4669 = vpop.f32.mrf.mxu0
        %v4670 = vadd.f32 %v2782, %v4669
        %v4671 = vpop.f32.mrf.mxu0
        %v4672 = vadd.f32 %v2782, %v4671
        %4673 = vmatmul.bf16.gmra.mxu0 %v2695
        %v4674 = vpop.f32.mrf.mxu0
        %v4675 = vadd.f32 %v2782, %v4674
        %v4676 = vpop.f32.mrf.mxu0
        %v4677 = vadd.f32 %v2782, %v4676
        %4678 = vmatmul.bf16.gmra.mxu0 %v2696
        %v4679 = vpop.f32.mrf.mxu0
        %v4680 = vadd.f32 %v2782, %v4679
        %v4681 = vpop.f32.mrf.mxu0
        %v4682 = vadd.f32 %v2782, %v4681
        %4683 = vmatmul.bf16.gmra.mxu0 %v2697
        %v4684 = vpop.f32.mrf.mxu0
        %v4685 = vadd.f32 %v2782, %v4684
        %v4686 = vpop.f32.mrf.mxu0
        %v4687 = vadd.f32 %v2782, %v4686
        %4688 = vmatmul.bf16.gmra.mxu0 %v2698
        %v4689 = vpop.f32.mrf.mxu0
        %v4690 = vadd.f32 %v2782, %v4689
        %v4691 = vpop.f32.mrf.mxu0
        %v4692 = vadd.f32 %v2782, %v4691
        %4693 = vmatmul.bf16.gmra.mxu0 %v2699
        %v4694 = vpop.f32.mrf.mxu0
        %v4695 = vadd.f32 %v2782, %v4694
        %v4696 = vpop.f32.mrf.mxu0
        %v4697 = vadd.f32 %v2782, %v4696
        %4698 = vmatmul.bf16.gmra.mxu0 %v2700
        %v4699 = vpop.f32.mrf.mxu0
        %v4700 = vadd.f32 %v2782, %v4699
        %v4701 = vpop.f32.mrf.mxu0
        %v4702 = vadd.f32 %v2782, %v4701
        %4703 = vmatmul.bf16.gmra.mxu0 %v2701
        %v4704 = vpop.f32.mrf.mxu0
        %v4705 = vadd.f32 %v2782, %v4704
        %v4706 = vpop.f32.mrf.mxu0
        %v4707 = vadd.f32 %v2782, %v4706
        %4708 = vmatmul.bf16.gmra.mxu0 %v2702
        %v4709 = vpop.f32.mrf.mxu0
        %v4710 = vadd.f32 %v2782, %v4709
        %v4711 = vpop.f32.mrf.mxu0
        %v4712 = vadd.f32 %v2782, %v4711
        %4713 = vmatmul.bf16.gmra.mxu0 %v2703
        %v4714 = vpop.f32.mrf.mxu0
        %v4715 = vadd.f32 %v2782, %v4714
        %v4716 = vpop.f32.mrf.mxu0
        %v4717 = vadd.f32 %v2782, %v4716
        %4718 = vmatmul.bf16.gmra.mxu0 %v2704
        %v4719 = vpop.f32.mrf.mxu0
        %v4720 = vadd.f32 %v2782, %v4719
        %v4721 = vpop.f32.mrf.mxu0
        %v4722 = vadd.f32 %v2782, %v4721
        %4723 = vmatmul.bf16.gmra.mxu0 %v2705
        %v4724 = vpop.f32.mrf.mxu0
        %v4725 = vadd.f32 %v2782, %v4724
        %v4726 = vpop.f32.mrf.mxu0
        %v4727 = vadd.f32 %v2782, %v4726
        %4728 = vmatmul.bf16.gmra.mxu0 %v2706
        %v4729 = vpop.f32.mrf.mxu0
        %v4730 = vadd.f32 %v2782, %v4729
        %v4731 = vpop.f32.mrf.mxu0
        %v4732 = vadd.f32 %v2782, %v4731
        %4733 = vmatmul.bf16.gmra.mxu0 %v2707
        %v4734 = vpop.f32.mrf.mxu0
        %v4735 = vadd.f32 %v2782, %v4734
        %v4736 = vpop.f32.mrf.mxu0
        %v4737 = vadd.f32 %v2782, %v4736
        %4738 = vmatmul.bf16.gmra.mxu0 %v2708
        %v4739 = vpop.f32.mrf.mxu0
        %v4740 = vadd.f32 %v2782, %v4739
        %v4741 = vpop.f32.mrf.mxu0
        %v4742 = vadd.f32 %v2782, %v4741
        %4743 = vmatmul.bf16.gmra.mxu0 %v2709
        %v4744 = vpop.f32.mrf.mxu0
        %v4745 = vadd.f32 %v2782, %v4744
        %v4746 = vpop.f32.mrf.mxu0
        %v4747 = vadd.f32 %v2782, %v4746
        %4748 = vmatmul.bf16.gmra.mxu0 %v2710
        %v4749 = vpop.f32.mrf.mxu0
        %v4750 = vadd.f32 %v2782, %v4749
        %v4751 = vpop.f32.mrf.mxu0
        %v4752 = vadd.f32 %v2782, %v4751
        %4753 = vmatmul.bf16.gmra.mxu0 %v2711
        %v4754 = vpop.f32.mrf.mxu0
        %v4755 = vadd.f32 %v2782, %v4754
        %v4756 = vpop.f32.mrf.mxu0
        %v4757 = vadd.f32 %v2782, %v4756
        %4758 = vdwg.mxu0
        %4759 = vmatpush.bf16.msra.mxu0 %v3047
        %4760 = vmatpush.bf16.msra.mxu0 %v3039
        %4761 = vmatpush.bf16.msra.mxu0 %v3031
        %4762 = vmatpush.bf16.msra.mxu0 %v3023
        %4763 = vmatpush.bf16.msra.mxu0 %v3015
        %4764 = vmatpush.bf16.msra.mxu0 %v3007
        %4765 = vmatpush.bf16.msra.mxu0 %v2999
        %4766 = vmatpush.bf16.msra.mxu0 %v2991
        %4767 = vmatmul.bf16.gmra.mxu0 %v2648
        %v4768 = vpop.f32.mrf.mxu0
        %v4769 = vadd.f32 %v2783, %v4768
        %v4770 = vpop.f32.mrf.mxu0
        %v4771 = vadd.f32 %v2783, %v4770
        %4772 = vmatmul.bf16.gmra.mxu0 %v2649
        %v4773 = vpop.f32.mrf.mxu0
        %v4774 = vadd.f32 %v2783, %v4773
        %v4775 = vpop.f32.mrf.mxu0
        %v4776 = vadd.f32 %v2783, %v4775
        %4777 = vmatmul.bf16.gmra.mxu0 %v2650
        %v4778 = vpop.f32.mrf.mxu0
        %v4779 = vadd.f32 %v2783, %v4778
        %v4780 = vpop.f32.mrf.mxu0
        %v4781 = vadd.f32 %v2783, %v4780
        %4782 = vmatmul.bf16.gmra.mxu0 %v2651
        %v4783 = vpop.f32.mrf.mxu0
        %v4784 = vadd.f32 %v2783, %v4783
        %v4785 = vpop.f32.mrf.mxu0
        %v4786 = vadd.f32 %v2783, %v4785
        %4787 = vmatmul.bf16.gmra.mxu0 %v2652
        %v4788 = vpop.f32.mrf.mxu0
        %v4789 = vadd.f32 %v2783, %v4788
        %v4790 = vpop.f32.mrf.mxu0
        %v4791 = vadd.f32 %v2783, %v4790
        %4792 = vmatmul.bf16.gmra.mxu0 %v2653
        %v4793 = vpop.f32.mrf.mxu0
        %v4794 = vadd.f32 %v2783, %v4793
        %v4795 = vpop.f32.mrf.mxu0
        %v4796 = vadd.f32 %v2783, %v4795
        %4797 = vmatmul.bf16.gmra.mxu0 %v2654
        %v4798 = vpop.f32.mrf.mxu0
        %v4799 = vadd.f32 %v2783, %v4798
        %v4800 = vpop.f32.mrf.mxu0
        %v4801 = vadd.f32 %v2783, %v4800
        %4802 = vmatmul.bf16.gmra.mxu0 %v2655
        %v4803 = vpop.f32.mrf.mxu0
        %v4804 = vadd.f32 %v2783, %v4803
        %v4805 = vpop.f32.mrf.mxu0
        %v4806 = vadd.f32 %v2783, %v4805
        %4807 = vmatmul.bf16.gmra.mxu0 %v2656
        %v4808 = vpop.f32.mrf.mxu0
        %v4809 = vadd.f32 %v2783, %v4808
        %v4810 = vpop.f32.mrf.mxu0
        %v4811 = vadd.f32 %v2783, %v4810
        %4812 = vmatmul.bf16.gmra.mxu0 %v2657
        %v4813 = vpop.f32.mrf.mxu0
        %v4814 = vadd.f32 %v2783, %v4813
        %v4815 = vpop.f32.mrf.mxu0
        %v4816 = vadd.f32 %v2783, %v4815
        %4817 = vmatmul.bf16.gmra.mxu0 %v2658
        %v4818 = vpop.f32.mrf.mxu0
        %v4819 = vadd.f32 %v2783, %v4818
        %v4820 = vpop.f32.mrf.mxu0
        %v4821 = vadd.f32 %v2783, %v4820
        %4822 = vmatmul.bf16.gmra.mxu0 %v2659
        %v4823 = vpop.f32.mrf.mxu0
        %v4824 = vadd.f32 %v2783, %v4823
        %v4825 = vpop.f32.mrf.mxu0
        %v4826 = vadd.f32 %v2783, %v4825
        %4827 = vmatmul.bf16.gmra.mxu0 %v2660
        %v4828 = vpop.f32.mrf.mxu0
        %v4829 = vadd.f32 %v2783, %v4828
        %v4830 = vpop.f32.mrf.mxu0
        %v4831 = vadd.f32 %v2783, %v4830
        %4832 = vmatmul.bf16.gmra.mxu0 %v2661
        %v4833 = vpop.f32.mrf.mxu0
        %v4834 = vadd.f32 %v2783, %v4833
        %v4835 = vpop.f32.mrf.mxu0
        %v4836 = vadd.f32 %v2783, %v4835
        %4837 = vmatmul.bf16.gmra.mxu0 %v2662
        %v4838 = vpop.f32.mrf.mxu0
        %v4839 = vadd.f32 %v2783, %v4838
        %v4840 = vpop.f32.mrf.mxu0
        %v4841 = vadd.f32 %v2783, %v4840
        %4842 = vmatmul.bf16.gmra.mxu0 %v2663
        %v4843 = vpop.f32.mrf.mxu0
        %v4844 = vadd.f32 %v2783, %v4843
        %v4845 = vpop.f32.mrf.mxu0
        %v4846 = vadd.f32 %v2783, %v4845
        %4847 = vmatmul.bf16.gmra.mxu0 %v2664
        %v4848 = vpop.f32.mrf.mxu0
        %v4849 = vadd.f32 %v2783, %v4848
        %v4850 = vpop.f32.mrf.mxu0
        %v4851 = vadd.f32 %v2783, %v4850
        %4852 = vmatmul.bf16.gmra.mxu0 %v2665
        %v4853 = vpop.f32.mrf.mxu0
        %v4854 = vadd.f32 %v2783, %v4853
        %v4855 = vpop.f32.mrf.mxu0
        %v4856 = vadd.f32 %v2783, %v4855
        %4857 = vmatmul.bf16.gmra.mxu0 %v2666
        %v4858 = vpop.f32.mrf.mxu0
        %v4859 = vadd.f32 %v2783, %v4858
        %v4860 = vpop.f32.mrf.mxu0
        %v4861 = vadd.f32 %v2783, %v4860
        %4862 = vmatmul.bf16.gmra.mxu0 %v2667
        %v4863 = vpop.f32.mrf.mxu0
        %v4864 = vadd.f32 %v2783, %v4863
        %v4865 = vpop.f32.mrf.mxu0
        %v4866 = vadd.f32 %v2783, %v4865
        %4867 = vmatmul.bf16.gmra.mxu0 %v2668
        %v4868 = vpop.f32.mrf.mxu0
        %v4869 = vadd.f32 %v2783, %v4868
        %v4870 = vpop.f32.mrf.mxu0
        %v4871 = vadd.f32 %v2783, %v4870
        %4872 = vmatmul.bf16.gmra.mxu0 %v2669
        %v4873 = vpop.f32.mrf.mxu0
        %v4874 = vadd.f32 %v2783, %v4873
        %v4875 = vpop.f32.mrf.mxu0
        %v4876 = vadd.f32 %v2783, %v4875
        %4877 = vmatmul.bf16.gmra.mxu0 %v2670
        %v4878 = vpop.f32.mrf.mxu0
        %v4879 = vadd.f32 %v2783, %v4878
        %v4880 = vpop.f32.mrf.mxu0
        %v4881 = vadd.f32 %v2783, %v4880
        %4882 = vmatmul.bf16.gmra.mxu0 %v2671
        %v4883 = vpop.f32.mrf.mxu0
        %v4884 = vadd.f32 %v2783, %v4883
        %v4885 = vpop.f32.mrf.mxu0
        %v4886 = vadd.f32 %v2783, %v4885
        %4887 = vmatmul.bf16.gmra.mxu0 %v2672
        %v4888 = vpop.f32.mrf.mxu0
        %v4889 = vadd.f32 %v2783, %v4888
        %v4890 = vpop.f32.mrf.mxu0
        %v4891 = vadd.f32 %v2783, %v4890
        %4892 = vmatmul.bf16.gmra.mxu0 %v2673
        %v4893 = vpop.f32.mrf.mxu0
        %v4894 = vadd.f32 %v2783, %v4893
        %v4895 = vpop.f32.mrf.mxu0
        %v4896 = vadd.f32 %v2783, %v4895
        %4897 = vmatmul.bf16.gmra.mxu0 %v2674
        %v4898 = vpop.f32.mrf.mxu0
        %v4899 = vadd.f32 %v2783, %v4898
        %v4900 = vpop.f32.mrf.mxu0
        %v4901 = vadd.f32 %v2783, %v4900
        %4902 = vmatmul.bf16.gmra.mxu0 %v2675
        %v4903 = vpop.f32.mrf.mxu0
        %v4904 = vadd.f32 %v2783, %v4903
        %v4905 = vpop.f32.mrf.mxu0
        %v4906 = vadd.f32 %v2783, %v4905
        %4907 = vmatmul.bf16.gmra.mxu0 %v2676
        %v4908 = vpop.f32.mrf.mxu0
        %v4909 = vadd.f32 %v2783, %v4908
        %v4910 = vpop.f32.mrf.mxu0
        %v4911 = vadd.f32 %v2783, %v4910
        %4912 = vmatmul.bf16.gmra.mxu0 %v2677
        %v4913 = vpop.f32.mrf.mxu0
        %v4914 = vadd.f32 %v2783, %v4913
        %v4915 = vpop.f32.mrf.mxu0
        %v4916 = vadd.f32 %v2783, %v4915
        %4917 = vmatmul.bf16.gmra.mxu0 %v2678
        %v4918 = vpop.f32.mrf.mxu0
        %v4919 = vadd.f32 %v2783, %v4918
        %v4920 = vpop.f32.mrf.mxu0
        %v4921 = vadd.f32 %v2783, %v4920
        %4922 = vmatmul.bf16.gmra.mxu0 %v2679
        %v4923 = vpop.f32.mrf.mxu0
        %v4924 = vadd.f32 %v2783, %v4923
        %v4925 = vpop.f32.mrf.mxu0
        %v4926 = vadd.f32 %v2783, %v4925
        %4927 = vmatmul.bf16.gmra.mxu0 %v2680
        %v4928 = vpop.f32.mrf.mxu0
        %v4929 = vadd.f32 %v2783, %v4928
        %v4930 = vpop.f32.mrf.mxu0
        %v4931 = vadd.f32 %v2783, %v4930
        %4932 = vmatmul.bf16.gmra.mxu0 %v2681
        %v4933 = vpop.f32.mrf.mxu0
        %v4934 = vadd.f32 %v2783, %v4933
        %v4935 = vpop.f32.mrf.mxu0
        %v4936 = vadd.f32 %v2783, %v4935
        %4937 = vmatmul.bf16.gmra.mxu0 %v2682
        %v4938 = vpop.f32.mrf.mxu0
        %v4939 = vadd.f32 %v2783, %v4938
        %v4940 = vpop.f32.mrf.mxu0
        %v4941 = vadd.f32 %v2783, %v4940
        %4942 = vmatmul.bf16.gmra.mxu0 %v2683
        %v4943 = vpop.f32.mrf.mxu0
        %v4944 = vadd.f32 %v2783, %v4943
        %v4945 = vpop.f32.mrf.mxu0
        %v4946 = vadd.f32 %v2783, %v4945
        %4947 = vmatmul.bf16.gmra.mxu0 %v2684
        %v4948 = vpop.f32.mrf.mxu0
        %v4949 = vadd.f32 %v2783, %v4948
        %v4950 = vpop.f32.mrf.mxu0
        %v4951 = vadd.f32 %v2783, %v4950
        %4952 = vmatmul.bf16.gmra.mxu0 %v2685
        %v4953 = vpop.f32.mrf.mxu0
        %v4954 = vadd.f32 %v2783, %v4953
        %v4955 = vpop.f32.mrf.mxu0
        %v4956 = vadd.f32 %v2783, %v4955
        %4957 = vmatmul.bf16.gmra.mxu0 %v2686
        %v4958 = vpop.f32.mrf.mxu0
        %v4959 = vadd.f32 %v2783, %v4958
        %v4960 = vpop.f32.mrf.mxu0
        %v4961 = vadd.f32 %v2783, %v4960
        %4962 = vmatmul.bf16.gmra.mxu0 %v2687
        %v4963 = vpop.f32.mrf.mxu0
        %v4964 = vadd.f32 %v2783, %v4963
        %v4965 = vpop.f32.mrf.mxu0
        %v4966 = vadd.f32 %v2783, %v4965
        %4967 = vmatmul.bf16.gmra.mxu0 %v2688
        %v4968 = vpop.f32.mrf.mxu0
        %v4969 = vadd.f32 %v2783, %v4968
        %v4970 = vpop.f32.mrf.mxu0
        %v4971 = vadd.f32 %v2783, %v4970
        %4972 = vmatmul.bf16.gmra.mxu0 %v2689
        %v4973 = vpop.f32.mrf.mxu0
        %v4974 = vadd.f32 %v2783, %v4973
        %v4975 = vpop.f32.mrf.mxu0
        %v4976 = vadd.f32 %v2783, %v4975
        %4977 = vmatmul.bf16.gmra.mxu0 %v2690
        %v4978 = vpop.f32.mrf.mxu0
        %v4979 = vadd.f32 %v2783, %v4978
        %v4980 = vpop.f32.mrf.mxu0
        %v4981 = vadd.f32 %v2783, %v4980
        %4982 = vmatmul.bf16.gmra.mxu0 %v2691
        %v4983 = vpop.f32.mrf.mxu0
        %v4984 = vadd.f32 %v2783, %v4983
        %v4985 = vpop.f32.mrf.mxu0
        %v4986 = vadd.f32 %v2783, %v4985
        %4987 = vmatmul.bf16.gmra.mxu0 %v2692
        %v4988 = vpop.f32.mrf.mxu0
        %v4989 = vadd.f32 %v2783, %v4988
        %v4990 = vpop.f32.mrf.mxu0
        %v4991 = vadd.f32 %v2783, %v4990
        %4992 = vmatmul.bf16.gmra.mxu0 %v2693
        %v4993 = vpop.f32.mrf.mxu0
        %v4994 = vadd.f32 %v2783, %v4993
        %v4995 = vpop.f32.mrf.mxu0
        %v4996 = vadd.f32 %v2783, %v4995
        %4997 = vmatmul.bf16.gmra.mxu0 %v2694
        %v4998 = vpop.f32.mrf.mxu0
        %v4999 = vadd.f32 %v2783, %v4998
        %v5000 = vpop.f32.mrf.mxu0
        %v5001 = vadd.f32 %v2783, %v5000
        %5002 = vmatmul.bf16.gmra.mxu0 %v2695
        %v5003 = vpop.f32.mrf.mxu0
        %v5004 = vadd.f32 %v2783, %v5003
        %v5005 = vpop.f32.mrf.mxu0
        %v5006 = vadd.f32 %v2783, %v5005
        %5007 = vmatmul.bf16.gmra.mxu0 %v2696
        %v5008 = vpop.f32.mrf.mxu0
        %v5009 = vadd.f32 %v2783, %v5008
        %v5010 = vpop.f32.mrf.mxu0
        %v5011 = vadd.f32 %v2783, %v5010
        %5012 = vmatmul.bf16.gmra.mxu0 %v2697
        %v5013 = vpop.f32.mrf.mxu0
        %v5014 = vadd.f32 %v2783, %v5013
        %v5015 = vpop.f32.mrf.mxu0
        %v5016 = vadd.f32 %v2783, %v5015
        %5017 = vmatmul.bf16.gmra.mxu0 %v2698
        %v5018 = vpop.f32.mrf.mxu0
        %v5019 = vadd.f32 %v2783, %v5018
        %v5020 = vpop.f32.mrf.mxu0
        %v5021 = vadd.f32 %v2783, %v5020
        %5022 = vmatmul.bf16.gmra.mxu0 %v2699
        %v5023 = vpop.f32.mrf.mxu0
        %v5024 = vadd.f32 %v2783, %v5023
        %v5025 = vpop.f32.mrf.mxu0
        %v5026 = vadd.f32 %v2783, %v5025
        %5027 = vmatmul.bf16.gmra.mxu0 %v2700
        %v5028 = vpop.f32.mrf.mxu0
        %v5029 = vadd.f32 %v2783, %v5028
        %v5030 = vpop.f32.mrf.mxu0
        %v5031 = vadd.f32 %v2783, %v5030
        %5032 = vmatmul.bf16.gmra.mxu0 %v2701
        %v5033 = vpop.f32.mrf.mxu0
        %v5034 = vadd.f32 %v2783, %v5033
        %v5035 = vpop.f32.mrf.mxu0
        %v5036 = vadd.f32 %v2783, %v5035
        %5037 = vmatmul.bf16.gmra.mxu0 %v2702
        %v5038 = vpop.f32.mrf.mxu0
        %v5039 = vadd.f32 %v2783, %v5038
        %v5040 = vpop.f32.mrf.mxu0
        %v5041 = vadd.f32 %v2783, %v5040
        %5042 = vmatmul.bf16.gmra.mxu0 %v2703
        %v5043 = vpop.f32.mrf.mxu0
        %v5044 = vadd.f32 %v2783, %v5043
        %v5045 = vpop.f32.mrf.mxu0
        %v5046 = vadd.f32 %v2783, %v5045
        %5047 = vmatmul.bf16.gmra.mxu0 %v2704
        %v5048 = vpop.f32.mrf.mxu0
        %v5049 = vadd.f32 %v2783, %v5048
        %v5050 = vpop.f32.mrf.mxu0
        %v5051 = vadd.f32 %v2783, %v5050
        %5052 = vmatmul.bf16.gmra.mxu0 %v2705
        %v5053 = vpop.f32.mrf.mxu0
        %v5054 = vadd.f32 %v2783, %v5053
        %v5055 = vpop.f32.mrf.mxu0
        %v5056 = vadd.f32 %v2783, %v5055
        %5057 = vmatmul.bf16.gmra.mxu0 %v2706
        %v5058 = vpop.f32.mrf.mxu0
        %v5059 = vadd.f32 %v2783, %v5058
        %v5060 = vpop.f32.mrf.mxu0
        %v5061 = vadd.f32 %v2783, %v5060
        %5062 = vmatmul.bf16.gmra.mxu0 %v2707
        %v5063 = vpop.f32.mrf.mxu0
        %v5064 = vadd.f32 %v2783, %v5063
        %v5065 = vpop.f32.mrf.mxu0
        %v5066 = vadd.f32 %v2783, %v5065
        %5067 = vmatmul.bf16.gmra.mxu0 %v2708
        %v5068 = vpop.f32.mrf.mxu0
        %v5069 = vadd.f32 %v2783, %v5068
        %v5070 = vpop.f32.mrf.mxu0
        %v5071 = vadd.f32 %v2783, %v5070
        %5072 = vmatmul.bf16.gmra.mxu0 %v2709
        %v5073 = vpop.f32.mrf.mxu0
        %v5074 = vadd.f32 %v2783, %v5073
        %v5075 = vpop.f32.mrf.mxu0
        %v5076 = vadd.f32 %v2783, %v5075
        %5077 = vmatmul.bf16.gmra.mxu0 %v2710
        %v5078 = vpop.f32.mrf.mxu0
        %v5079 = vadd.f32 %v2783, %v5078
        %v5080 = vpop.f32.mrf.mxu0
        %v5081 = vadd.f32 %v2783, %v5080
        %5082 = vmatmul.bf16.gmra.mxu0 %v2711
        %v5083 = vpop.f32.mrf.mxu0
        %v5084 = vadd.f32 %v2783, %v5083
        %v5085 = vpop.f32.mrf.mxu0
        %v5086 = vadd.f32 %v2783, %v5085
        %5087 = vdwg.mxu0
        %5088 = vmatpush.bf16.msra.mxu0 %v3048
        %5089 = vmatpush.bf16.msra.mxu0 %v3040
        %5090 = vmatpush.bf16.msra.mxu0 %v3032
        %5091 = vmatpush.bf16.msra.mxu0 %v3024
        %5092 = vmatpush.bf16.msra.mxu0 %v3016
        %5093 = vmatpush.bf16.msra.mxu0 %v3008
        %5094 = vmatpush.bf16.msra.mxu0 %v3000
        %5095 = vmatpush.bf16.msra.mxu0 %v2992
        %5096 = vmatmul.bf16.gmra.mxu0 %v2648
        %v5097 = vpop.f32.mrf.mxu0
        %v5098 = vadd.f32 %v2784, %v5097
        %v5099 = vpop.f32.mrf.mxu0
        %v5100 = vadd.f32 %v2784, %v5099
        %5101 = vmatmul.bf16.gmra.mxu0 %v2649
        %v5102 = vpop.f32.mrf.mxu0
        %v5103 = vadd.f32 %v2784, %v5102
        %v5104 = vpop.f32.mrf.mxu0
        %v5105 = vadd.f32 %v2784, %v5104
        %5106 = vmatmul.bf16.gmra.mxu0 %v2650
        %v5107 = vpop.f32.mrf.mxu0
        %v5108 = vadd.f32 %v2784, %v5107
        %v5109 = vpop.f32.mrf.mxu0
        %v5110 = vadd.f32 %v2784, %v5109
        %5111 = vmatmul.bf16.gmra.mxu0 %v2651
        %v5112 = vpop.f32.mrf.mxu0
        %v5113 = vadd.f32 %v2784, %v5112
        %v5114 = vpop.f32.mrf.mxu0
        %v5115 = vadd.f32 %v2784, %v5114
        %5116 = vmatmul.bf16.gmra.mxu0 %v2652
        %v5117 = vpop.f32.mrf.mxu0
        %v5118 = vadd.f32 %v2784, %v5117
        %v5119 = vpop.f32.mrf.mxu0
        %v5120 = vadd.f32 %v2784, %v5119
        %5121 = vmatmul.bf16.gmra.mxu0 %v2653
        %v5122 = vpop.f32.mrf.mxu0
        %v5123 = vadd.f32 %v2784, %v5122
        %v5124 = vpop.f32.mrf.mxu0
        %v5125 = vadd.f32 %v2784, %v5124
        %5126 = vmatmul.bf16.gmra.mxu0 %v2654
        %v5127 = vpop.f32.mrf.mxu0
        %v5128 = vadd.f32 %v2784, %v5127
        %v5129 = vpop.f32.mrf.mxu0
        %v5130 = vadd.f32 %v2784, %v5129
        %5131 = vmatmul.bf16.gmra.mxu0 %v2655
        %v5132 = vpop.f32.mrf.mxu0
        %v5133 = vadd.f32 %v2784, %v5132
        %v5134 = vpop.f32.mrf.mxu0
        %v5135 = vadd.f32 %v2784, %v5134
        %5136 = vmatmul.bf16.gmra.mxu0 %v2656
        %v5137 = vpop.f32.mrf.mxu0
        %v5138 = vadd.f32 %v2784, %v5137
        %v5139 = vpop.f32.mrf.mxu0
        %v5140 = vadd.f32 %v2784, %v5139
        %5141 = vmatmul.bf16.gmra.mxu0 %v2657
        %v5142 = vpop.f32.mrf.mxu0
        %v5143 = vadd.f32 %v2784, %v5142
        %v5144 = vpop.f32.mrf.mxu0
        %v5145 = vadd.f32 %v2784, %v5144
        %5146 = vmatmul.bf16.gmra.mxu0 %v2658
        %v5147 = vpop.f32.mrf.mxu0
        %v5148 = vadd.f32 %v2784, %v5147
        %v5149 = vpop.f32.mrf.mxu0
        %v5150 = vadd.f32 %v2784, %v5149
        %5151 = vmatmul.bf16.gmra.mxu0 %v2659
        %v5152 = vpop.f32.mrf.mxu0
        %v5153 = vadd.f32 %v2784, %v5152
        %v5154 = vpop.f32.mrf.mxu0
        %v5155 = vadd.f32 %v2784, %v5154
        %5156 = vmatmul.bf16.gmra.mxu0 %v2660
        %v5157 = vpop.f32.mrf.mxu0
        %v5158 = vadd.f32 %v2784, %v5157
        %v5159 = vpop.f32.mrf.mxu0
        %v5160 = vadd.f32 %v2784, %v5159
        %5161 = vmatmul.bf16.gmra.mxu0 %v2661
        %v5162 = vpop.f32.mrf.mxu0
        %v5163 = vadd.f32 %v2784, %v5162
        %v5164 = vpop.f32.mrf.mxu0
        %v5165 = vadd.f32 %v2784, %v5164
        %5166 = vmatmul.bf16.gmra.mxu0 %v2662
        %v5167 = vpop.f32.mrf.mxu0
        %v5168 = vadd.f32 %v2784, %v5167
        %v5169 = vpop.f32.mrf.mxu0
        %v5170 = vadd.f32 %v2784, %v5169
        %5171 = vmatmul.bf16.gmra.mxu0 %v2663
        %v5172 = vpop.f32.mrf.mxu0
        %v5173 = vadd.f32 %v2784, %v5172
        %v5174 = vpop.f32.mrf.mxu0
        %v5175 = vadd.f32 %v2784, %v5174
        %5176 = vmatmul.bf16.gmra.mxu0 %v2664
        %v5177 = vpop.f32.mrf.mxu0
        %v5178 = vadd.f32 %v2784, %v5177
        %v5179 = vpop.f32.mrf.mxu0
        %v5180 = vadd.f32 %v2784, %v5179
        %5181 = vmatmul.bf16.gmra.mxu0 %v2665
        %v5182 = vpop.f32.mrf.mxu0
        %v5183 = vadd.f32 %v2784, %v5182
        %v5184 = vpop.f32.mrf.mxu0
        %v5185 = vadd.f32 %v2784, %v5184
        %5186 = vmatmul.bf16.gmra.mxu0 %v2666
        %v5187 = vpop.f32.mrf.mxu0
        %v5188 = vadd.f32 %v2784, %v5187
        %v5189 = vpop.f32.mrf.mxu0
        %v5190 = vadd.f32 %v2784, %v5189
        %5191 = vmatmul.bf16.gmra.mxu0 %v2667
        %v5192 = vpop.f32.mrf.mxu0
        %v5193 = vadd.f32 %v2784, %v5192
        %v5194 = vpop.f32.mrf.mxu0
        %v5195 = vadd.f32 %v2784, %v5194
        %5196 = vmatmul.bf16.gmra.mxu0 %v2668
        %v5197 = vpop.f32.mrf.mxu0
        %v5198 = vadd.f32 %v2784, %v5197
        %v5199 = vpop.f32.mrf.mxu0
        %v5200 = vadd.f32 %v2784, %v5199
        %5201 = vmatmul.bf16.gmra.mxu0 %v2669
        %v5202 = vpop.f32.mrf.mxu0
        %v5203 = vadd.f32 %v2784, %v5202
        %v5204 = vpop.f32.mrf.mxu0
        %v5205 = vadd.f32 %v2784, %v5204
        %5206 = vmatmul.bf16.gmra.mxu0 %v2670
        %v5207 = vpop.f32.mrf.mxu0
        %v5208 = vadd.f32 %v2784, %v5207
        %v5209 = vpop.f32.mrf.mxu0
        %v5210 = vadd.f32 %v2784, %v5209
        %5211 = vmatmul.bf16.gmra.mxu0 %v2671
        %v5212 = vpop.f32.mrf.mxu0
        %v5213 = vadd.f32 %v2784, %v5212
        %v5214 = vpop.f32.mrf.mxu0
        %v5215 = vadd.f32 %v2784, %v5214
        %5216 = vmatmul.bf16.gmra.mxu0 %v2672
        %v5217 = vpop.f32.mrf.mxu0
        %v5218 = vadd.f32 %v2784, %v5217
        %v5219 = vpop.f32.mrf.mxu0
        %v5220 = vadd.f32 %v2784, %v5219
        %5221 = vmatmul.bf16.gmra.mxu0 %v2673
        %v5222 = vpop.f32.mrf.mxu0
        %v5223 = vadd.f32 %v2784, %v5222
        %v5224 = vpop.f32.mrf.mxu0
        %v5225 = vadd.f32 %v2784, %v5224
        %5226 = vmatmul.bf16.gmra.mxu0 %v2674
        %v5227 = vpop.f32.mrf.mxu0
        %v5228 = vadd.f32 %v2784, %v5227
        %v5229 = vpop.f32.mrf.mxu0
        %v5230 = vadd.f32 %v2784, %v5229
        %5231 = vmatmul.bf16.gmra.mxu0 %v2675
        %v5232 = vpop.f32.mrf.mxu0
        %v5233 = vadd.f32 %v2784, %v5232
        %v5234 = vpop.f32.mrf.mxu0
        %v5235 = vadd.f32 %v2784, %v5234
        %5236 = vmatmul.bf16.gmra.mxu0 %v2676
        %v5237 = vpop.f32.mrf.mxu0
        %v5238 = vadd.f32 %v2784, %v5237
        %v5239 = vpop.f32.mrf.mxu0
        %v5240 = vadd.f32 %v2784, %v5239
        %5241 = vmatmul.bf16.gmra.mxu0 %v2677
        %v5242 = vpop.f32.mrf.mxu0
        %v5243 = vadd.f32 %v2784, %v5242
        %v5244 = vpop.f32.mrf.mxu0
        %v5245 = vadd.f32 %v2784, %v5244
        %5246 = vmatmul.bf16.gmra.mxu0 %v2678
        %v5247 = vpop.f32.mrf.mxu0
        %v5248 = vadd.f32 %v2784, %v5247
        %v5249 = vpop.f32.mrf.mxu0
        %v5250 = vadd.f32 %v2784, %v5249
        %5251 = vmatmul.bf16.gmra.mxu0 %v2679
        %v5252 = vpop.f32.mrf.mxu0
        %v5253 = vadd.f32 %v2784, %v5252
        %v5254 = vpop.f32.mrf.mxu0
        %v5255 = vadd.f32 %v2784, %v5254
        %5256 = vmatmul.bf16.gmra.mxu0 %v2680
        %v5257 = vpop.f32.mrf.mxu0
        %v5258 = vadd.f32 %v2784, %v5257
        %v5259 = vpop.f32.mrf.mxu0
        %v5260 = vadd.f32 %v2784, %v5259
        %5261 = vmatmul.bf16.gmra.mxu0 %v2681
        %v5262 = vpop.f32.mrf.mxu0
        %v5263 = vadd.f32 %v2784, %v5262
        %v5264 = vpop.f32.mrf.mxu0
        %v5265 = vadd.f32 %v2784, %v5264
        %5266 = vmatmul.bf16.gmra.mxu0 %v2682
        %v5267 = vpop.f32.mrf.mxu0
        %v5268 = vadd.f32 %v2784, %v5267
        %v5269 = vpop.f32.mrf.mxu0
        %v5270 = vadd.f32 %v2784, %v5269
        %5271 = vmatmul.bf16.gmra.mxu0 %v2683
        %v5272 = vpop.f32.mrf.mxu0
        %v5273 = vadd.f32 %v2784, %v5272
        %v5274 = vpop.f32.mrf.mxu0
        %v5275 = vadd.f32 %v2784, %v5274
        %5276 = vmatmul.bf16.gmra.mxu0 %v2684
        %v5277 = vpop.f32.mrf.mxu0
        %v5278 = vadd.f32 %v2784, %v5277
        %v5279 = vpop.f32.mrf.mxu0
        %v5280 = vadd.f32 %v2784, %v5279
        %5281 = vmatmul.bf16.gmra.mxu0 %v2685
        %v5282 = vpop.f32.mrf.mxu0
        %v5283 = vadd.f32 %v2784, %v5282
        %v5284 = vpop.f32.mrf.mxu0
        %v5285 = vadd.f32 %v2784, %v5284
        %5286 = vmatmul.bf16.gmra.mxu0 %v2686
        %v5287 = vpop.f32.mrf.mxu0
        %v5288 = vadd.f32 %v2784, %v5287
        %v5289 = vpop.f32.mrf.mxu0
        %v5290 = vadd.f32 %v2784, %v5289
        %5291 = vmatmul.bf16.gmra.mxu0 %v2687
        %v5292 = vpop.f32.mrf.mxu0
        %v5293 = vadd.f32 %v2784, %v5292
        %v5294 = vpop.f32.mrf.mxu0
        %v5295 = vadd.f32 %v2784, %v5294
        %5296 = vmatmul.bf16.gmra.mxu0 %v2688
        %v5297 = vpop.f32.mrf.mxu0
        %v5298 = vadd.f32 %v2784, %v5297
        %v5299 = vpop.f32.mrf.mxu0
        %v5300 = vadd.f32 %v2784, %v5299
        %5301 = vmatmul.bf16.gmra.mxu0 %v2689
        %v5302 = vpop.f32.mrf.mxu0
        %v5303 = vadd.f32 %v2784, %v5302
        %v5304 = vpop.f32.mrf.mxu0
        %v5305 = vadd.f32 %v2784, %v5304
        %5306 = vmatmul.bf16.gmra.mxu0 %v2690
        %v5307 = vpop.f32.mrf.mxu0
        %v5308 = vadd.f32 %v2784, %v5307
        %v5309 = vpop.f32.mrf.mxu0
        %v5310 = vadd.f32 %v2784, %v5309
        %5311 = vmatmul.bf16.gmra.mxu0 %v2691
        %v5312 = vpop.f32.mrf.mxu0
        %v5313 = vadd.f32 %v2784, %v5312
        %v5314 = vpop.f32.mrf.mxu0
        %v5315 = vadd.f32 %v2784, %v5314
        %5316 = vmatmul.bf16.gmra.mxu0 %v2692
        %v5317 = vpop.f32.mrf.mxu0
        %v5318 = vadd.f32 %v2784, %v5317
        %v5319 = vpop.f32.mrf.mxu0
        %v5320 = vadd.f32 %v2784, %v5319
        %5321 = vmatmul.bf16.gmra.mxu0 %v2693
        %v5322 = vpop.f32.mrf.mxu0
        %v5323 = vadd.f32 %v2784, %v5322
        %v5324 = vpop.f32.mrf.mxu0
        %v5325 = vadd.f32 %v2784, %v5324
        %5326 = vmatmul.bf16.gmra.mxu0 %v2694
        %v5327 = vpop.f32.mrf.mxu0
        %v5328 = vadd.f32 %v2784, %v5327
        %v5329 = vpop.f32.mrf.mxu0
        %v5330 = vadd.f32 %v2784, %v5329
        %5331 = vmatmul.bf16.gmra.mxu0 %v2695
        %v5332 = vpop.f32.mrf.mxu0
        %v5333 = vadd.f32 %v2784, %v5332
        %v5334 = vpop.f32.mrf.mxu0
        %v5335 = vadd.f32 %v2784, %v5334
        %5336 = vmatmul.bf16.gmra.mxu0 %v2696
        %v5337 = vpop.f32.mrf.mxu0
        %v5338 = vadd.f32 %v2784, %v5337
        %v5339 = vpop.f32.mrf.mxu0
        %v5340 = vadd.f32 %v2784, %v5339
        %5341 = vmatmul.bf16.gmra.mxu0 %v2697
        %v5342 = vpop.f32.mrf.mxu0
        %v5343 = vadd.f32 %v2784, %v5342
        %v5344 = vpop.f32.mrf.mxu0
        %v5345 = vadd.f32 %v2784, %v5344
        %5346 = vmatmul.bf16.gmra.mxu0 %v2698
        %v5347 = vpop.f32.mrf.mxu0
        %v5348 = vadd.f32 %v2784, %v5347
        %v5349 = vpop.f32.mrf.mxu0
        %v5350 = vadd.f32 %v2784, %v5349
        %5351 = vmatmul.bf16.gmra.mxu0 %v2699
        %v5352 = vpop.f32.mrf.mxu0
        %v5353 = vadd.f32 %v2784, %v5352
        %v5354 = vpop.f32.mrf.mxu0
        %v5355 = vadd.f32 %v2784, %v5354
        %5356 = vmatmul.bf16.gmra.mxu0 %v2700
        %v5357 = vpop.f32.mrf.mxu0
        %v5358 = vadd.f32 %v2784, %v5357
        %v5359 = vpop.f32.mrf.mxu0
        %v5360 = vadd.f32 %v2784, %v5359
        %5361 = vmatmul.bf16.gmra.mxu0 %v2701
        %v5362 = vpop.f32.mrf.mxu0
        %v5363 = vadd.f32 %v2784, %v5362
        %v5364 = vpop.f32.mrf.mxu0
        %v5365 = vadd.f32 %v2784, %v5364
        %5366 = vmatmul.bf16.gmra.mxu0 %v2702
        %v5367 = vpop.f32.mrf.mxu0
        %v5368 = vadd.f32 %v2784, %v5367
        %v5369 = vpop.f32.mrf.mxu0
        %v5370 = vadd.f32 %v2784, %v5369
        %5371 = vmatmul.bf16.gmra.mxu0 %v2703
        %v5372 = vpop.f32.mrf.mxu0
        %v5373 = vadd.f32 %v2784, %v5372
        %v5374 = vpop.f32.mrf.mxu0
        %v5375 = vadd.f32 %v2784, %v5374
        %5376 = vmatmul.bf16.gmra.mxu0 %v2704
        %v5377 = vpop.f32.mrf.mxu0
        %v5378 = vadd.f32 %v2784, %v5377
        %v5379 = vpop.f32.mrf.mxu0
        %v5380 = vadd.f32 %v2784, %v5379
        %5381 = vmatmul.bf16.gmra.mxu0 %v2705
        %v5382 = vpop.f32.mrf.mxu0
        %v5383 = vadd.f32 %v2784, %v5382
        %v5384 = vpop.f32.mrf.mxu0
        %v5385 = vadd.f32 %v2784, %v5384
        %5386 = vmatmul.bf16.gmra.mxu0 %v2706
        %v5387 = vpop.f32.mrf.mxu0
        %v5388 = vadd.f32 %v2784, %v5387
        %v5389 = vpop.f32.mrf.mxu0
        %v5390 = vadd.f32 %v2784, %v5389
        %5391 = vmatmul.bf16.gmra.mxu0 %v2707
        %v5392 = vpop.f32.mrf.mxu0
        %v5393 = vadd.f32 %v2784, %v5392
        %v5394 = vpop.f32.mrf.mxu0
        %v5395 = vadd.f32 %v2784, %v5394
        %5396 = vmatmul.bf16.gmra.mxu0 %v2708
        %v5397 = vpop.f32.mrf.mxu0
        %v5398 = vadd.f32 %v2784, %v5397
        %v5399 = vpop.f32.mrf.mxu0
        %v5400 = vadd.f32 %v2784, %v5399
        %5401 = vmatmul.bf16.gmra.mxu0 %v2709
        %v5402 = vpop.f32.mrf.mxu0
        %v5403 = vadd.f32 %v2784, %v5402
        %v5404 = vpop.f32.mrf.mxu0
        %v5405 = vadd.f32 %v2784, %v5404
        %5406 = vmatmul.bf16.gmra.mxu0 %v2710
        %v5407 = vpop.f32.mrf.mxu0
        %v5408 = vadd.f32 %v2784, %v5407
        %v5409 = vpop.f32.mrf.mxu0
        %v5410 = vadd.f32 %v2784, %v5409
        %5411 = vmatmul.bf16.gmra.mxu0 %v2711
        %v5412 = vpop.f32.mrf.mxu0
        %v5413 = vadd.f32 %v2784, %v5412
        %v5414 = vpop.f32.mrf.mxu0
        %v5415 = vadd.f32 %v2784, %v5414
        %5416 = vdwg.mxu0
        %5417 = vmatpush.bf16.msra.mxu0 %v3049
        %5418 = vmatpush.bf16.msra.mxu0 %v3041
        %5419 = vmatpush.bf16.msra.mxu0 %v3033
        %5420 = vmatpush.bf16.msra.mxu0 %v3025
        %5421 = vmatpush.bf16.msra.mxu0 %v3017
        %5422 = vmatpush.bf16.msra.mxu0 %v3009
        %5423 = vmatpush.bf16.msra.mxu0 %v3001
        %5424 = vmatpush.bf16.msra.mxu0 %v2993
        %5425 = vmatmul.bf16.gmra.mxu0 %v2648
        %v5426 = vpop.f32.mrf.mxu0
        %v5427 = vadd.f32 %v2785, %v5426
        %v5428 = vpop.f32.mrf.mxu0
        %v5429 = vadd.f32 %v2785, %v5428
        %5430 = vmatmul.bf16.gmra.mxu0 %v2649
        %v5431 = vpop.f32.mrf.mxu0
        %v5432 = vadd.f32 %v2785, %v5431
        %v5433 = vpop.f32.mrf.mxu0
        %v5434 = vadd.f32 %v2785, %v5433
        %5435 = vmatmul.bf16.gmra.mxu0 %v2650
        %v5436 = vpop.f32.mrf.mxu0
        %v5437 = vadd.f32 %v2785, %v5436
        %v5438 = vpop.f32.mrf.mxu0
        %v5439 = vadd.f32 %v2785, %v5438
        %5440 = vmatmul.bf16.gmra.mxu0 %v2651
        %v5441 = vpop.f32.mrf.mxu0
        %v5442 = vadd.f32 %v2785, %v5441
        %v5443 = vpop.f32.mrf.mxu0
        %v5444 = vadd.f32 %v2785, %v5443
        %5445 = vmatmul.bf16.gmra.mxu0 %v2652
        %v5446 = vpop.f32.mrf.mxu0
        %v5447 = vadd.f32 %v2785, %v5446
        %v5448 = vpop.f32.mrf.mxu0
        %v5449 = vadd.f32 %v2785, %v5448
        %5450 = vmatmul.bf16.gmra.mxu0 %v2653
        %v5451 = vpop.f32.mrf.mxu0
        %v5452 = vadd.f32 %v2785, %v5451
        %v5453 = vpop.f32.mrf.mxu0
        %v5454 = vadd.f32 %v2785, %v5453
        %5455 = vmatmul.bf16.gmra.mxu0 %v2654
        %v5456 = vpop.f32.mrf.mxu0
        %v5457 = vadd.f32 %v2785, %v5456
        %v5458 = vpop.f32.mrf.mxu0
        %v5459 = vadd.f32 %v2785, %v5458
        %5460 = vmatmul.bf16.gmra.mxu0 %v2655
        %v5461 = vpop.f32.mrf.mxu0
        %v5462 = vadd.f32 %v2785, %v5461
        %v5463 = vpop.f32.mrf.mxu0
        %v5464 = vadd.f32 %v2785, %v5463
        %5465 = vmatmul.bf16.gmra.mxu0 %v2656
        %v5466 = vpop.f32.mrf.mxu0
        %v5467 = vadd.f32 %v2785, %v5466
        %v5468 = vpop.f32.mrf.mxu0
        %v5469 = vadd.f32 %v2785, %v5468
        %5470 = vmatmul.bf16.gmra.mxu0 %v2657
        %v5471 = vpop.f32.mrf.mxu0
        %v5472 = vadd.f32 %v2785, %v5471
        %v5473 = vpop.f32.mrf.mxu0
        %v5474 = vadd.f32 %v2785, %v5473
        %5475 = vmatmul.bf16.gmra.mxu0 %v2658
        %v5476 = vpop.f32.mrf.mxu0
        %v5477 = vadd.f32 %v2785, %v5476
        %v5478 = vpop.f32.mrf.mxu0
        %v5479 = vadd.f32 %v2785, %v5478
        %5480 = vmatmul.bf16.gmra.mxu0 %v2659
        %v5481 = vpop.f32.mrf.mxu0
        %v5482 = vadd.f32 %v2785, %v5481
        %v5483 = vpop.f32.mrf.mxu0
        %v5484 = vadd.f32 %v2785, %v5483
        %5485 = vmatmul.bf16.gmra.mxu0 %v2660
        %v5486 = vpop.f32.mrf.mxu0
        %v5487 = vadd.f32 %v2785, %v5486
        %v5488 = vpop.f32.mrf.mxu0
        %v5489 = vadd.f32 %v2785, %v5488
        %5490 = vmatmul.bf16.gmra.mxu0 %v2661
        %v5491 = vpop.f32.mrf.mxu0
        %v5492 = vadd.f32 %v2785, %v5491
        %v5493 = vpop.f32.mrf.mxu0
        %v5494 = vadd.f32 %v2785, %v5493
        %5495 = vmatmul.bf16.gmra.mxu0 %v2662
        %v5496 = vpop.f32.mrf.mxu0
        %v5497 = vadd.f32 %v2785, %v5496
        %v5498 = vpop.f32.mrf.mxu0
        %v5499 = vadd.f32 %v2785, %v5498
        %5500 = vmatmul.bf16.gmra.mxu0 %v2663
        %v5501 = vpop.f32.mrf.mxu0
        %v5502 = vadd.f32 %v2785, %v5501
        %v5503 = vpop.f32.mrf.mxu0
        %v5504 = vadd.f32 %v2785, %v5503
        %5505 = vmatmul.bf16.gmra.mxu0 %v2664
        %v5506 = vpop.f32.mrf.mxu0
        %v5507 = vadd.f32 %v2785, %v5506
        %v5508 = vpop.f32.mrf.mxu0
        %v5509 = vadd.f32 %v2785, %v5508
        %5510 = vmatmul.bf16.gmra.mxu0 %v2665
        %v5511 = vpop.f32.mrf.mxu0
        %v5512 = vadd.f32 %v2785, %v5511
        %v5513 = vpop.f32.mrf.mxu0
        %v5514 = vadd.f32 %v2785, %v5513
        %5515 = vmatmul.bf16.gmra.mxu0 %v2666
        %v5516 = vpop.f32.mrf.mxu0
        %v5517 = vadd.f32 %v2785, %v5516
        %v5518 = vpop.f32.mrf.mxu0
        %v5519 = vadd.f32 %v2785, %v5518
        %5520 = vmatmul.bf16.gmra.mxu0 %v2667
        %v5521 = vpop.f32.mrf.mxu0
        %v5522 = vadd.f32 %v2785, %v5521
        %v5523 = vpop.f32.mrf.mxu0
        %v5524 = vadd.f32 %v2785, %v5523
        %5525 = vmatmul.bf16.gmra.mxu0 %v2668
        %v5526 = vpop.f32.mrf.mxu0
        %v5527 = vadd.f32 %v2785, %v5526
        %v5528 = vpop.f32.mrf.mxu0
        %v5529 = vadd.f32 %v2785, %v5528
        %5530 = vmatmul.bf16.gmra.mxu0 %v2669
        %v5531 = vpop.f32.mrf.mxu0
        %v5532 = vadd.f32 %v2785, %v5531
        %v5533 = vpop.f32.mrf.mxu0
        %v5534 = vadd.f32 %v2785, %v5533
        %5535 = vmatmul.bf16.gmra.mxu0 %v2670
        %v5536 = vpop.f32.mrf.mxu0
        %v5537 = vadd.f32 %v2785, %v5536
        %v5538 = vpop.f32.mrf.mxu0
        %v5539 = vadd.f32 %v2785, %v5538
        %5540 = vmatmul.bf16.gmra.mxu0 %v2671
        %v5541 = vpop.f32.mrf.mxu0
        %v5542 = vadd.f32 %v2785, %v5541
        %v5543 = vpop.f32.mrf.mxu0
        %v5544 = vadd.f32 %v2785, %v5543
        %5545 = vmatmul.bf16.gmra.mxu0 %v2672
        %v5546 = vpop.f32.mrf.mxu0
        %v5547 = vadd.f32 %v2785, %v5546
        %v5548 = vpop.f32.mrf.mxu0
        %v5549 = vadd.f32 %v2785, %v5548
        %5550 = vmatmul.bf16.gmra.mxu0 %v2673
        %v5551 = vpop.f32.mrf.mxu0
        %v5552 = vadd.f32 %v2785, %v5551
        %v5553 = vpop.f32.mrf.mxu0
        %v5554 = vadd.f32 %v2785, %v5553
        %5555 = vmatmul.bf16.gmra.mxu0 %v2674
        %v5556 = vpop.f32.mrf.mxu0
        %v5557 = vadd.f32 %v2785, %v5556
        %v5558 = vpop.f32.mrf.mxu0
        %v5559 = vadd.f32 %v2785, %v5558
        %5560 = vmatmul.bf16.gmra.mxu0 %v2675
        %v5561 = vpop.f32.mrf.mxu0
        %v5562 = vadd.f32 %v2785, %v5561
        %v5563 = vpop.f32.mrf.mxu0
        %v5564 = vadd.f32 %v2785, %v5563
        %5565 = vmatmul.bf16.gmra.mxu0 %v2676
        %v5566 = vpop.f32.mrf.mxu0
        %v5567 = vadd.f32 %v2785, %v5566
        %v5568 = vpop.f32.mrf.mxu0
        %v5569 = vadd.f32 %v2785, %v5568
        %5570 = vmatmul.bf16.gmra.mxu0 %v2677
        %v5571 = vpop.f32.mrf.mxu0
        %v5572 = vadd.f32 %v2785, %v5571
        %v5573 = vpop.f32.mrf.mxu0
        %v5574 = vadd.f32 %v2785, %v5573
        %5575 = vmatmul.bf16.gmra.mxu0 %v2678
        %v5576 = vpop.f32.mrf.mxu0
        %v5577 = vadd.f32 %v2785, %v5576
        %v5578 = vpop.f32.mrf.mxu0
        %v5579 = vadd.f32 %v2785, %v5578
        %5580 = vmatmul.bf16.gmra.mxu0 %v2679
        %v5581 = vpop.f32.mrf.mxu0
        %v5582 = vadd.f32 %v2785, %v5581
        %v5583 = vpop.f32.mrf.mxu0
        %v5584 = vadd.f32 %v2785, %v5583
        %5585 = vmatmul.bf16.gmra.mxu0 %v2680
        %v5586 = vpop.f32.mrf.mxu0
        %v5587 = vadd.f32 %v2785, %v5586
        %v5588 = vpop.f32.mrf.mxu0
        %v5589 = vadd.f32 %v2785, %v5588
        %5590 = vmatmul.bf16.gmra.mxu0 %v2681
        %v5591 = vpop.f32.mrf.mxu0
        %v5592 = vadd.f32 %v2785, %v5591
        %v5593 = vpop.f32.mrf.mxu0
        %v5594 = vadd.f32 %v2785, %v5593
        %5595 = vmatmul.bf16.gmra.mxu0 %v2682
        %v5596 = vpop.f32.mrf.mxu0
        %v5597 = vadd.f32 %v2785, %v5596
        %v5598 = vpop.f32.mrf.mxu0
        %v5599 = vadd.f32 %v2785, %v5598
        %5600 = vmatmul.bf16.gmra.mxu0 %v2683
        %v5601 = vpop.f32.mrf.mxu0
        %v5602 = vadd.f32 %v2785, %v5601
        %v5603 = vpop.f32.mrf.mxu0
        %v5604 = vadd.f32 %v2785, %v5603
        %5605 = vmatmul.bf16.gmra.mxu0 %v2684
        %v5606 = vpop.f32.mrf.mxu0
        %v5607 = vadd.f32 %v2785, %v5606
        %v5608 = vpop.f32.mrf.mxu0
        %v5609 = vadd.f32 %v2785, %v5608
        %5610 = vmatmul.bf16.gmra.mxu0 %v2685
        %v5611 = vpop.f32.mrf.mxu0
        %v5612 = vadd.f32 %v2785, %v5611
        %v5613 = vpop.f32.mrf.mxu0
        %v5614 = vadd.f32 %v2785, %v5613
        %5615 = vmatmul.bf16.gmra.mxu0 %v2686
        %v5616 = vpop.f32.mrf.mxu0
        %v5617 = vadd.f32 %v2785, %v5616
        %v5618 = vpop.f32.mrf.mxu0
        %v5619 = vadd.f32 %v2785, %v5618
        %5620 = vmatmul.bf16.gmra.mxu0 %v2687
        %v5621 = vpop.f32.mrf.mxu0
        %v5622 = vadd.f32 %v2785, %v5621
        %v5623 = vpop.f32.mrf.mxu0
        %v5624 = vadd.f32 %v2785, %v5623
        %5625 = vmatmul.bf16.gmra.mxu0 %v2688
        %v5626 = vpop.f32.mrf.mxu0
        %v5627 = vadd.f32 %v2785, %v5626
        %v5628 = vpop.f32.mrf.mxu0
        %v5629 = vadd.f32 %v2785, %v5628
        %5630 = vmatmul.bf16.gmra.mxu0 %v2689
        %v5631 = vpop.f32.mrf.mxu0
        %v5632 = vadd.f32 %v2785, %v5631
        %v5633 = vpop.f32.mrf.mxu0
        %v5634 = vadd.f32 %v2785, %v5633
        %5635 = vmatmul.bf16.gmra.mxu0 %v2690
        %v5636 = vpop.f32.mrf.mxu0
        %v5637 = vadd.f32 %v2785, %v5636
        %v5638 = vpop.f32.mrf.mxu0
        %v5639 = vadd.f32 %v2785, %v5638
        %5640 = vmatmul.bf16.gmra.mxu0 %v2691
        %v5641 = vpop.f32.mrf.mxu0
        %v5642 = vadd.f32 %v2785, %v5641
        %v5643 = vpop.f32.mrf.mxu0
        %v5644 = vadd.f32 %v2785, %v5643
        %5645 = vmatmul.bf16.gmra.mxu0 %v2692
        %v5646 = vpop.f32.mrf.mxu0
        %v5647 = vadd.f32 %v2785, %v5646
        %v5648 = vpop.f32.mrf.mxu0
        %v5649 = vadd.f32 %v2785, %v5648
        %5650 = vmatmul.bf16.gmra.mxu0 %v2693
        %v5651 = vpop.f32.mrf.mxu0
        %v5652 = vadd.f32 %v2785, %v5651
        %v5653 = vpop.f32.mrf.mxu0
        %v5654 = vadd.f32 %v2785, %v5653
        %5655 = vmatmul.bf16.gmra.mxu0 %v2694
        %v5656 = vpop.f32.mrf.mxu0
        %v5657 = vadd.f32 %v2785, %v5656
        %v5658 = vpop.f32.mrf.mxu0
        %v5659 = vadd.f32 %v2785, %v5658
        %5660 = vmatmul.bf16.gmra.mxu0 %v2695
        %v5661 = vpop.f32.mrf.mxu0
        %v5662 = vadd.f32 %v2785, %v5661
        %v5663 = vpop.f32.mrf.mxu0
        %v5664 = vadd.f32 %v2785, %v5663
        %5665 = vmatmul.bf16.gmra.mxu0 %v2696
        %v5666 = vpop.f32.mrf.mxu0
        %v5667 = vadd.f32 %v2785, %v5666
        %v5668 = vpop.f32.mrf.mxu0
        %v5669 = vadd.f32 %v2785, %v5668
        %5670 = vmatmul.bf16.gmra.mxu0 %v2697
        %v5671 = vpop.f32.mrf.mxu0
        %v5672 = vadd.f32 %v2785, %v5671
        %v5673 = vpop.f32.mrf.mxu0
        %v5674 = vadd.f32 %v2785, %v5673
        %5675 = vmatmul.bf16.gmra.mxu0 %v2698
        %v5676 = vpop.f32.mrf.mxu0
        %v5677 = vadd.f32 %v2785, %v5676
        %v5678 = vpop.f32.mrf.mxu0
        %v5679 = vadd.f32 %v2785, %v5678
        %5680 = vmatmul.bf16.gmra.mxu0 %v2699
        %v5681 = vpop.f32.mrf.mxu0
        %v5682 = vadd.f32 %v2785, %v5681
        %v5683 = vpop.f32.mrf.mxu0
        %v5684 = vadd.f32 %v2785, %v5683
        %5685 = vmatmul.bf16.gmra.mxu0 %v2700
        %v5686 = vpop.f32.mrf.mxu0
        %v5687 = vadd.f32 %v2785, %v5686
        %v5688 = vpop.f32.mrf.mxu0
        %v5689 = vadd.f32 %v2785, %v5688
        %5690 = vmatmul.bf16.gmra.mxu0 %v2701
        %v5691 = vpop.f32.mrf.mxu0
        %v5692 = vadd.f32 %v2785, %v5691
        %v5693 = vpop.f32.mrf.mxu0
        %v5694 = vadd.f32 %v2785, %v5693
        %5695 = vmatmul.bf16.gmra.mxu0 %v2702
        %v5696 = vpop.f32.mrf.mxu0
        %v5697 = vadd.f32 %v2785, %v5696
        %v5698 = vpop.f32.mrf.mxu0
        %v5699 = vadd.f32 %v2785, %v5698
        %5700 = vmatmul.bf16.gmra.mxu0 %v2703
        %v5701 = vpop.f32.mrf.mxu0
        %v5702 = vadd.f32 %v2785, %v5701
        %v5703 = vpop.f32.mrf.mxu0
        %v5704 = vadd.f32 %v2785, %v5703
        %5705 = vmatmul.bf16.gmra.mxu0 %v2704
        %v5706 = vpop.f32.mrf.mxu0
        %v5707 = vadd.f32 %v2785, %v5706
        %v5708 = vpop.f32.mrf.mxu0
        %v5709 = vadd.f32 %v2785, %v5708
        %5710 = vmatmul.bf16.gmra.mxu0 %v2705
        %v5711 = vpop.f32.mrf.mxu0
        %v5712 = vadd.f32 %v2785, %v5711
        %v5713 = vpop.f32.mrf.mxu0
        %v5714 = vadd.f32 %v2785, %v5713
        %5715 = vmatmul.bf16.gmra.mxu0 %v2706
        %v5716 = vpop.f32.mrf.mxu0
        %v5717 = vadd.f32 %v2785, %v5716
        %v5718 = vpop.f32.mrf.mxu0
        %v5719 = vadd.f32 %v2785, %v5718
        %5720 = vmatmul.bf16.gmra.mxu0 %v2707
        %v5721 = vpop.f32.mrf.mxu0
        %v5722 = vadd.f32 %v2785, %v5721
        %v5723 = vpop.f32.mrf.mxu0
        %v5724 = vadd.f32 %v2785, %v5723
        %5725 = vmatmul.bf16.gmra.mxu0 %v2708
        %v5726 = vpop.f32.mrf.mxu0
        %v5727 = vadd.f32 %v2785, %v5726
        %v5728 = vpop.f32.mrf.mxu0
        %v5729 = vadd.f32 %v2785, %v5728
        %5730 = vmatmul.bf16.gmra.mxu0 %v2709
        %v5731 = vpop.f32.mrf.mxu0
        %v5732 = vadd.f32 %v2785, %v5731
        %v5733 = vpop.f32.mrf.mxu0
        %v5734 = vadd.f32 %v2785, %v5733
        %5735 = vmatmul.bf16.gmra.mxu0 %v2710
        %v5736 = vpop.f32.mrf.mxu0
        %v5737 = vadd.f32 %v2785, %v5736
        %v5738 = vpop.f32.mrf.mxu0
        %v5739 = vadd.f32 %v2785, %v5738
        %5740 = vmatmul.bf16.gmra.mxu0 %v2711
        %v5741 = vpop.f32.mrf.mxu0
        %v5742 = vadd.f32 %v2785, %v5741
        %v5743 = vpop.f32.mrf.mxu0
        %v5744 = vadd.f32 %v2785, %v5743
        %5745 = vdwg.mxu0
        %v5746 = vmax.f32 %v3124, 0.0
        %v5747 = vmax.f32 %v3453, 0.0
        %v5748 = vmax.f32 %v3782, 0.0
        %v5749 = vmax.f32 %v4111, 0.0
        %v5750 = vmax.f32 %v4440, 0.0
        %v5751 = vmax.f32 %v4769, 0.0
        %v5752 = vmax.f32 %v5098, 0.0
        %v5753 = vmax.f32 %v5427, 0.0
        %v5754 = vmax.f32 %v3126, 0.0
        %v5755 = vmax.f32 %v3455, 0.0
        %v5756 = vmax.f32 %v3784, 0.0
        %v5757 = vmax.f32 %v4113, 0.0
        %v5758 = vmax.f32 %v4442, 0.0
        %v5759 = vmax.f32 %v4771, 0.0
        %v5760 = vmax.f32 %v5100, 0.0
        %v5761 = vmax.f32 %v5429, 0.0
        %v5762 = vmax.f32 %v3129, 0.0
        %v5763 = vmax.f32 %v3458, 0.0
        %v5764 = vmax.f32 %v3787, 0.0
        %v5765 = vmax.f32 %v4116, 0.0
        %v5766 = vmax.f32 %v4445, 0.0
        %v5767 = vmax.f32 %v4774, 0.0
        %v5768 = vmax.f32 %v5103, 0.0
        %v5769 = vmax.f32 %v5432, 0.0
        %v5770 = vmax.f32 %v3131, 0.0
        %v5771 = vmax.f32 %v3460, 0.0
        %v5772 = vmax.f32 %v3789, 0.0
        %v5773 = vmax.f32 %v4118, 0.0
        %v5774 = vmax.f32 %v4447, 0.0
        %v5775 = vmax.f32 %v4776, 0.0
        %v5776 = vmax.f32 %v5105, 0.0
        %v5777 = vmax.f32 %v5434, 0.0
        %v5778 = vmax.f32 %v3134, 0.0
        %v5779 = vmax.f32 %v3463, 0.0
        %v5780 = vmax.f32 %v3792, 0.0
        %v5781 = vmax.f32 %v4121, 0.0
        %v5782 = vmax.f32 %v4450, 0.0
        %v5783 = vmax.f32 %v4779, 0.0
        %v5784 = vmax.f32 %v5108, 0.0
        %v5785 = vmax.f32 %v5437, 0.0
        %v5786 = vmax.f32 %v3136, 0.0
        %v5787 = vmax.f32 %v3465, 0.0
        %v5788 = vmax.f32 %v3794, 0.0
        %v5789 = vmax.f32 %v4123, 0.0
        %v5790 = vmax.f32 %v4452, 0.0
        %v5791 = vmax.f32 %v4781, 0.0
        %v5792 = vmax.f32 %v5110, 0.0
        %v5793 = vmax.f32 %v5439, 0.0
        %v5794 = vmax.f32 %v3139, 0.0
        %v5795 = vmax.f32 %v3468, 0.0
        %v5796 = vmax.f32 %v3797, 0.0
        %v5797 = vmax.f32 %v4126, 0.0
        %v5798 = vmax.f32 %v4455, 0.0
        %v5799 = vmax.f32 %v4784, 0.0
        %v5800 = vmax.f32 %v5113, 0.0
        %v5801 = vmax.f32 %v5442, 0.0
        %v5802 = vmax.f32 %v3141, 0.0
        %v5803 = vmax.f32 %v3470, 0.0
        %v5804 = vmax.f32 %v3799, 0.0
        %v5805 = vmax.f32 %v4128, 0.0
        %v5806 = vmax.f32 %v4457, 0.0
        %v5807 = vmax.f32 %v4786, 0.0
        %v5808 = vmax.f32 %v5115, 0.0
        %v5809 = vmax.f32 %v5444, 0.0
        %v5810 = vmax.f32 %v3144, 0.0
        %v5811 = vmax.f32 %v3473, 0.0
        %v5812 = vmax.f32 %v3802, 0.0
        %v5813 = vmax.f32 %v4131, 0.0
        %v5814 = vmax.f32 %v4460, 0.0
        %v5815 = vmax.f32 %v4789, 0.0
        %v5816 = vmax.f32 %v5118, 0.0
        %v5817 = vmax.f32 %v5447, 0.0
        %v5818 = vmax.f32 %v3146, 0.0
        %v5819 = vmax.f32 %v3475, 0.0
        %v5820 = vmax.f32 %v3804, 0.0
        %v5821 = vmax.f32 %v4133, 0.0
        %v5822 = vmax.f32 %v4462, 0.0
        %v5823 = vmax.f32 %v4791, 0.0
        %v5824 = vmax.f32 %v5120, 0.0
        %v5825 = vmax.f32 %v5449, 0.0
        %v5826 = vmax.f32 %v3149, 0.0
        %v5827 = vmax.f32 %v3478, 0.0
        %v5828 = vmax.f32 %v3807, 0.0
        %v5829 = vmax.f32 %v4136, 0.0
        %v5830 = vmax.f32 %v4465, 0.0
        %v5831 = vmax.f32 %v4794, 0.0
        %v5832 = vmax.f32 %v5123, 0.0
        %v5833 = vmax.f32 %v5452, 0.0
        %v5834 = vmax.f32 %v3151, 0.0
        %v5835 = vmax.f32 %v3480, 0.0
        %v5836 = vmax.f32 %v3809, 0.0
        %v5837 = vmax.f32 %v4138, 0.0
        %v5838 = vmax.f32 %v4467, 0.0
        %v5839 = vmax.f32 %v4796, 0.0
        %v5840 = vmax.f32 %v5125, 0.0
        %v5841 = vmax.f32 %v5454, 0.0
        %v5842 = vmax.f32 %v3154, 0.0
        %v5843 = vmax.f32 %v3483, 0.0
        %v5844 = vmax.f32 %v3812, 0.0
        %v5845 = vmax.f32 %v4141, 0.0
        %v5846 = vmax.f32 %v4470, 0.0
        %v5847 = vmax.f32 %v4799, 0.0
        %v5848 = vmax.f32 %v5128, 0.0
        %v5849 = vmax.f32 %v5457, 0.0
        %v5850 = vmax.f32 %v3156, 0.0
        %v5851 = vmax.f32 %v3485, 0.0
        %v5852 = vmax.f32 %v3814, 0.0
        %v5853 = vmax.f32 %v4143, 0.0
        %v5854 = vmax.f32 %v4472, 0.0
        %v5855 = vmax.f32 %v4801, 0.0
        %v5856 = vmax.f32 %v5130, 0.0
        %v5857 = vmax.f32 %v5459, 0.0
        %v5858 = vmax.f32 %v3159, 0.0
        %v5859 = vmax.f32 %v3488, 0.0
        %v5860 = vmax.f32 %v3817, 0.0
        %v5861 = vmax.f32 %v4146, 0.0
        %v5862 = vmax.f32 %v4475, 0.0
        %v5863 = vmax.f32 %v4804, 0.0
        %v5864 = vmax.f32 %v5133, 0.0
        %v5865 = vmax.f32 %v5462, 0.0
        %v5866 = vmax.f32 %v3161, 0.0
        %v5867 = vmax.f32 %v3490, 0.0
        %v5868 = vmax.f32 %v3819, 0.0
        %v5869 = vmax.f32 %v4148, 0.0
        %v5870 = vmax.f32 %v4477, 0.0
        %v5871 = vmax.f32 %v4806, 0.0
        %v5872 = vmax.f32 %v5135, 0.0
        %v5873 = vmax.f32 %v5464, 0.0
        %v5874 = vmax.f32 %v3164, 0.0
        %v5875 = vmax.f32 %v3493, 0.0
        %v5876 = vmax.f32 %v3822, 0.0
        %v5877 = vmax.f32 %v4151, 0.0
        %v5878 = vmax.f32 %v4480, 0.0
        %v5879 = vmax.f32 %v4809, 0.0
        %v5880 = vmax.f32 %v5138, 0.0
        %v5881 = vmax.f32 %v5467, 0.0
        %v5882 = vmax.f32 %v3166, 0.0
        %v5883 = vmax.f32 %v3495, 0.0
        %v5884 = vmax.f32 %v3824, 0.0
        %v5885 = vmax.f32 %v4153, 0.0
        %v5886 = vmax.f32 %v4482, 0.0
        %v5887 = vmax.f32 %v4811, 0.0
        %v5888 = vmax.f32 %v5140, 0.0
        %v5889 = vmax.f32 %v5469, 0.0
        %v5890 = vmax.f32 %v3169, 0.0
        %v5891 = vmax.f32 %v3498, 0.0
        %v5892 = vmax.f32 %v3827, 0.0
        %v5893 = vmax.f32 %v4156, 0.0
        %v5894 = vmax.f32 %v4485, 0.0
        %v5895 = vmax.f32 %v4814, 0.0
        %v5896 = vmax.f32 %v5143, 0.0
        %v5897 = vmax.f32 %v5472, 0.0
        %v5898 = vmax.f32 %v3171, 0.0
        %v5899 = vmax.f32 %v3500, 0.0
        %v5900 = vmax.f32 %v3829, 0.0
        %v5901 = vmax.f32 %v4158, 0.0
        %v5902 = vmax.f32 %v4487, 0.0
        %v5903 = vmax.f32 %v4816, 0.0
        %v5904 = vmax.f32 %v5145, 0.0
        %v5905 = vmax.f32 %v5474, 0.0
        %v5906 = vmax.f32 %v3174, 0.0
        %v5907 = vmax.f32 %v3503, 0.0
        %v5908 = vmax.f32 %v3832, 0.0
        %v5909 = vmax.f32 %v4161, 0.0
        %v5910 = vmax.f32 %v4490, 0.0
        %v5911 = vmax.f32 %v4819, 0.0
        %v5912 = vmax.f32 %v5148, 0.0
        %v5913 = vmax.f32 %v5477, 0.0
        %v5914 = vmax.f32 %v3176, 0.0
        %v5915 = vmax.f32 %v3505, 0.0
        %v5916 = vmax.f32 %v3834, 0.0
        %v5917 = vmax.f32 %v4163, 0.0
        %v5918 = vmax.f32 %v4492, 0.0
        %v5919 = vmax.f32 %v4821, 0.0
        %v5920 = vmax.f32 %v5150, 0.0
        %v5921 = vmax.f32 %v5479, 0.0
        %v5922 = vmax.f32 %v3179, 0.0
        %v5923 = vmax.f32 %v3508, 0.0
        %v5924 = vmax.f32 %v3837, 0.0
        %v5925 = vmax.f32 %v4166, 0.0
        %v5926 = vmax.f32 %v4495, 0.0
        %v5927 = vmax.f32 %v4824, 0.0
        %v5928 = vmax.f32 %v5153, 0.0
        %v5929 = vmax.f32 %v5482, 0.0
        %v5930 = vmax.f32 %v3181, 0.0
        %v5931 = vmax.f32 %v3510, 0.0
        %v5932 = vmax.f32 %v3839, 0.0
        %v5933 = vmax.f32 %v4168, 0.0
        %v5934 = vmax.f32 %v4497, 0.0
        %v5935 = vmax.f32 %v4826, 0.0
        %v5936 = vmax.f32 %v5155, 0.0
        %v5937 = vmax.f32 %v5484, 0.0
        %v5938 = vmax.f32 %v3184, 0.0
        %v5939 = vmax.f32 %v3513, 0.0
        %v5940 = vmax.f32 %v3842, 0.0
        %v5941 = vmax.f32 %v4171, 0.0
        %v5942 = vmax.f32 %v4500, 0.0
        %v5943 = vmax.f32 %v4829, 0.0
        %v5944 = vmax.f32 %v5158, 0.0
        %v5945 = vmax.f32 %v5487, 0.0
        %v5946 = vmax.f32 %v3186, 0.0
        %v5947 = vmax.f32 %v3515, 0.0
        %v5948 = vmax.f32 %v3844, 0.0
        %v5949 = vmax.f32 %v4173, 0.0
        %v5950 = vmax.f32 %v4502, 0.0
        %v5951 = vmax.f32 %v4831, 0.0
        %v5952 = vmax.f32 %v5160, 0.0
        %v5953 = vmax.f32 %v5489, 0.0
        %v5954 = vmax.f32 %v3189, 0.0
        %v5955 = vmax.f32 %v3518, 0.0
        %v5956 = vmax.f32 %v3847, 0.0
        %v5957 = vmax.f32 %v4176, 0.0
        %v5958 = vmax.f32 %v4505, 0.0
        %v5959 = vmax.f32 %v4834, 0.0
        %v5960 = vmax.f32 %v5163, 0.0
        %v5961 = vmax.f32 %v5492, 0.0
        %v5962 = vmax.f32 %v3191, 0.0
        %v5963 = vmax.f32 %v3520, 0.0
        %v5964 = vmax.f32 %v3849, 0.0
        %v5965 = vmax.f32 %v4178, 0.0
        %v5966 = vmax.f32 %v4507, 0.0
        %v5967 = vmax.f32 %v4836, 0.0
        %v5968 = vmax.f32 %v5165, 0.0
        %v5969 = vmax.f32 %v5494, 0.0
        %v5970 = vmax.f32 %v3194, 0.0
        %v5971 = vmax.f32 %v3523, 0.0
        %v5972 = vmax.f32 %v3852, 0.0
        %v5973 = vmax.f32 %v4181, 0.0
        %v5974 = vmax.f32 %v4510, 0.0
        %v5975 = vmax.f32 %v4839, 0.0
        %v5976 = vmax.f32 %v5168, 0.0
        %v5977 = vmax.f32 %v5497, 0.0
        %v5978 = vmax.f32 %v3196, 0.0
        %v5979 = vmax.f32 %v3525, 0.0
        %v5980 = vmax.f32 %v3854, 0.0
        %v5981 = vmax.f32 %v4183, 0.0
        %v5982 = vmax.f32 %v4512, 0.0
        %v5983 = vmax.f32 %v4841, 0.0
        %v5984 = vmax.f32 %v5170, 0.0
        %v5985 = vmax.f32 %v5499, 0.0
        %v5986 = vmax.f32 %v3199, 0.0
        %v5987 = vmax.f32 %v3528, 0.0
        %v5988 = vmax.f32 %v3857, 0.0
        %v5989 = vmax.f32 %v4186, 0.0
        %v5990 = vmax.f32 %v4515, 0.0
        %v5991 = vmax.f32 %v4844, 0.0
        %v5992 = vmax.f32 %v5173, 0.0
        %v5993 = vmax.f32 %v5502, 0.0
        %v5994 = vmax.f32 %v3201, 0.0
        %v5995 = vmax.f32 %v3530, 0.0
        %v5996 = vmax.f32 %v3859, 0.0
        %v5997 = vmax.f32 %v4188, 0.0
        %v5998 = vmax.f32 %v4517, 0.0
        %v5999 = vmax.f32 %v4846, 0.0
        %v6000 = vmax.f32 %v5175, 0.0
        %v6001 = vmax.f32 %v5504, 0.0
        %v6002 = vmax.f32 %v3204, 0.0
        %v6003 = vmax.f32 %v3533, 0.0
        %v6004 = vmax.f32 %v3862, 0.0
        %v6005 = vmax.f32 %v4191, 0.0
        %v6006 = vmax.f32 %v4520, 0.0
        %v6007 = vmax.f32 %v4849, 0.0
        %v6008 = vmax.f32 %v5178, 0.0
        %v6009 = vmax.f32 %v5507, 0.0
        %v6010 = vmax.f32 %v3206, 0.0
        %v6011 = vmax.f32 %v3535, 0.0
        %v6012 = vmax.f32 %v3864, 0.0
        %v6013 = vmax.f32 %v4193, 0.0
        %v6014 = vmax.f32 %v4522, 0.0
        %v6015 = vmax.f32 %v4851, 0.0
        %v6016 = vmax.f32 %v5180, 0.0
        %v6017 = vmax.f32 %v5509, 0.0
        %v6018 = vmax.f32 %v3209, 0.0
        %v6019 = vmax.f32 %v3538, 0.0
        %v6020 = vmax.f32 %v3867, 0.0
        %v6021 = vmax.f32 %v4196, 0.0
        %v6022 = vmax.f32 %v4525, 0.0
        %v6023 = vmax.f32 %v4854, 0.0
        %v6024 = vmax.f32 %v5183, 0.0
        %v6025 = vmax.f32 %v5512, 0.0
        %v6026 = vmax.f32 %v3211, 0.0
        %v6027 = vmax.f32 %v3540, 0.0
        %v6028 = vmax.f32 %v3869, 0.0
        %v6029 = vmax.f32 %v4198, 0.0
        %v6030 = vmax.f32 %v4527, 0.0
        %v6031 = vmax.f32 %v4856, 0.0
        %v6032 = vmax.f32 %v5185, 0.0
        %v6033 = vmax.f32 %v5514, 0.0
        %v6034 = vmax.f32 %v3214, 0.0
        %v6035 = vmax.f32 %v3543, 0.0
        %v6036 = vmax.f32 %v3872, 0.0
        %v6037 = vmax.f32 %v4201, 0.0
        %v6038 = vmax.f32 %v4530, 0.0
        %v6039 = vmax.f32 %v4859, 0.0
        %v6040 = vmax.f32 %v5188, 0.0
        %v6041 = vmax.f32 %v5517, 0.0
        %v6042 = vmax.f32 %v3216, 0.0
        %v6043 = vmax.f32 %v3545, 0.0
        %v6044 = vmax.f32 %v3874, 0.0
        %v6045 = vmax.f32 %v4203, 0.0
        %v6046 = vmax.f32 %v4532, 0.0
        %v6047 = vmax.f32 %v4861, 0.0
        %v6048 = vmax.f32 %v5190, 0.0
        %v6049 = vmax.f32 %v5519, 0.0
        %v6050 = vmax.f32 %v3219, 0.0
        %v6051 = vmax.f32 %v3548, 0.0
        %v6052 = vmax.f32 %v3877, 0.0
        %v6053 = vmax.f32 %v4206, 0.0
        %v6054 = vmax.f32 %v4535, 0.0
        %v6055 = vmax.f32 %v4864, 0.0
        %v6056 = vmax.f32 %v5193, 0.0
        %v6057 = vmax.f32 %v5522, 0.0
        %v6058 = vmax.f32 %v3221, 0.0
        %v6059 = vmax.f32 %v3550, 0.0
        %v6060 = vmax.f32 %v3879, 0.0
        %v6061 = vmax.f32 %v4208, 0.0
        %v6062 = vmax.f32 %v4537, 0.0
        %v6063 = vmax.f32 %v4866, 0.0
        %v6064 = vmax.f32 %v5195, 0.0
        %v6065 = vmax.f32 %v5524, 0.0
        %v6066 = vmax.f32 %v3224, 0.0
        %v6067 = vmax.f32 %v3553, 0.0
        %v6068 = vmax.f32 %v3882, 0.0
        %v6069 = vmax.f32 %v4211, 0.0
        %v6070 = vmax.f32 %v4540, 0.0
        %v6071 = vmax.f32 %v4869, 0.0
        %v6072 = vmax.f32 %v5198, 0.0
        %v6073 = vmax.f32 %v5527, 0.0
        %v6074 = vmax.f32 %v3226, 0.0
        %v6075 = vmax.f32 %v3555, 0.0
        %v6076 = vmax.f32 %v3884, 0.0
        %v6077 = vmax.f32 %v4213, 0.0
        %v6078 = vmax.f32 %v4542, 0.0
        %v6079 = vmax.f32 %v4871, 0.0
        %v6080 = vmax.f32 %v5200, 0.0
        %v6081 = vmax.f32 %v5529, 0.0
        %v6082 = vmax.f32 %v3229, 0.0
        %v6083 = vmax.f32 %v3558, 0.0
        %v6084 = vmax.f32 %v3887, 0.0
        %v6085 = vmax.f32 %v4216, 0.0
        %v6086 = vmax.f32 %v4545, 0.0
        %v6087 = vmax.f32 %v4874, 0.0
        %v6088 = vmax.f32 %v5203, 0.0
        %v6089 = vmax.f32 %v5532, 0.0
        %v6090 = vmax.f32 %v3231, 0.0
        %v6091 = vmax.f32 %v3560, 0.0
        %v6092 = vmax.f32 %v3889, 0.0
        %v6093 = vmax.f32 %v4218, 0.0
        %v6094 = vmax.f32 %v4547, 0.0
        %v6095 = vmax.f32 %v4876, 0.0
        %v6096 = vmax.f32 %v5205, 0.0
        %v6097 = vmax.f32 %v5534, 0.0
        %v6098 = vmax.f32 %v3234, 0.0
        %v6099 = vmax.f32 %v3563, 0.0
        %v6100 = vmax.f32 %v3892, 0.0
        %v6101 = vmax.f32 %v4221, 0.0
        %v6102 = vmax.f32 %v4550, 0.0
        %v6103 = vmax.f32 %v4879, 0.0
        %v6104 = vmax.f32 %v5208, 0.0
        %v6105 = vmax.f32 %v5537, 0.0
        %v6106 = vmax.f32 %v3236, 0.0
        %v6107 = vmax.f32 %v3565, 0.0
        %v6108 = vmax.f32 %v3894, 0.0
        %v6109 = vmax.f32 %v4223, 0.0
        %v6110 = vmax.f32 %v4552, 0.0
        %v6111 = vmax.f32 %v4881, 0.0
        %v6112 = vmax.f32 %v5210, 0.0
        %v6113 = vmax.f32 %v5539, 0.0
        %v6114 = vmax.f32 %v3239, 0.0
        %v6115 = vmax.f32 %v3568, 0.0
        %v6116 = vmax.f32 %v3897, 0.0
        %v6117 = vmax.f32 %v4226, 0.0
        %v6118 = vmax.f32 %v4555, 0.0
        %v6119 = vmax.f32 %v4884, 0.0
        %v6120 = vmax.f32 %v5213, 0.0
        %v6121 = vmax.f32 %v5542, 0.0
        %v6122 = vmax.f32 %v3241, 0.0
        %v6123 = vmax.f32 %v3570, 0.0
        %v6124 = vmax.f32 %v3899, 0.0
        %v6125 = vmax.f32 %v4228, 0.0
        %v6126 = vmax.f32 %v4557, 0.0
        %v6127 = vmax.f32 %v4886, 0.0
        %v6128 = vmax.f32 %v5215, 0.0
        %v6129 = vmax.f32 %v5544, 0.0
        %v6130 = vmax.f32 %v3244, 0.0
        %v6131 = vmax.f32 %v3573, 0.0
        %v6132 = vmax.f32 %v3902, 0.0
        %v6133 = vmax.f32 %v4231, 0.0
        %v6134 = vmax.f32 %v4560, 0.0
        %v6135 = vmax.f32 %v4889, 0.0
        %v6136 = vmax.f32 %v5218, 0.0
        %v6137 = vmax.f32 %v5547, 0.0
        %v6138 = vmax.f32 %v3246, 0.0
        %v6139 = vmax.f32 %v3575, 0.0
        %v6140 = vmax.f32 %v3904, 0.0
        %v6141 = vmax.f32 %v4233, 0.0
        %v6142 = vmax.f32 %v4562, 0.0
        %v6143 = vmax.f32 %v4891, 0.0
        %v6144 = vmax.f32 %v5220, 0.0
        %v6145 = vmax.f32 %v5549, 0.0
        %v6146 = vmax.f32 %v3249, 0.0
        %v6147 = vmax.f32 %v3578, 0.0
        %v6148 = vmax.f32 %v3907, 0.0
        %v6149 = vmax.f32 %v4236, 0.0
        %v6150 = vmax.f32 %v4565, 0.0
        %v6151 = vmax.f32 %v4894, 0.0
        %v6152 = vmax.f32 %v5223, 0.0
        %v6153 = vmax.f32 %v5552, 0.0
        %v6154 = vmax.f32 %v3251, 0.0
        %v6155 = vmax.f32 %v3580, 0.0
        %v6156 = vmax.f32 %v3909, 0.0
        %v6157 = vmax.f32 %v4238, 0.0
        %v6158 = vmax.f32 %v4567, 0.0
        %v6159 = vmax.f32 %v4896, 0.0
        %v6160 = vmax.f32 %v5225, 0.0
        %v6161 = vmax.f32 %v5554, 0.0
        %v6162 = vmax.f32 %v3254, 0.0
        %v6163 = vmax.f32 %v3583, 0.0
        %v6164 = vmax.f32 %v3912, 0.0
        %v6165 = vmax.f32 %v4241, 0.0
        %v6166 = vmax.f32 %v4570, 0.0
        %v6167 = vmax.f32 %v4899, 0.0
        %v6168 = vmax.f32 %v5228, 0.0
        %v6169 = vmax.f32 %v5557, 0.0
        %v6170 = vmax.f32 %v3256, 0.0
        %v6171 = vmax.f32 %v3585, 0.0
        %v6172 = vmax.f32 %v3914, 0.0
        %v6173 = vmax.f32 %v4243, 0.0
        %v6174 = vmax.f32 %v4572, 0.0
        %v6175 = vmax.f32 %v4901, 0.0
        %v6176 = vmax.f32 %v5230, 0.0
        %v6177 = vmax.f32 %v5559, 0.0
        %v6178 = vmax.f32 %v3259, 0.0
        %v6179 = vmax.f32 %v3588, 0.0
        %v6180 = vmax.f32 %v3917, 0.0
        %v6181 = vmax.f32 %v4246, 0.0
        %v6182 = vmax.f32 %v4575, 0.0
        %v6183 = vmax.f32 %v4904, 0.0
        %v6184 = vmax.f32 %v5233, 0.0
        %v6185 = vmax.f32 %v5562, 0.0
        %v6186 = vmax.f32 %v3261, 0.0
        %v6187 = vmax.f32 %v3590, 0.0
        %v6188 = vmax.f32 %v3919, 0.0
        %v6189 = vmax.f32 %v4248, 0.0
        %v6190 = vmax.f32 %v4577, 0.0
        %v6191 = vmax.f32 %v4906, 0.0
        %v6192 = vmax.f32 %v5235, 0.0
        %v6193 = vmax.f32 %v5564, 0.0
        %v6194 = vmax.f32 %v3264, 0.0
        %v6195 = vmax.f32 %v3593, 0.0
        %v6196 = vmax.f32 %v3922, 0.0
        %v6197 = vmax.f32 %v4251, 0.0
        %v6198 = vmax.f32 %v4580, 0.0
        %v6199 = vmax.f32 %v4909, 0.0
        %v6200 = vmax.f32 %v5238, 0.0
        %v6201 = vmax.f32 %v5567, 0.0
        %v6202 = vmax.f32 %v3266, 0.0
        %v6203 = vmax.f32 %v3595, 0.0
        %v6204 = vmax.f32 %v3924, 0.0
        %v6205 = vmax.f32 %v4253, 0.0
        %v6206 = vmax.f32 %v4582, 0.0
        %v6207 = vmax.f32 %v4911, 0.0
        %v6208 = vmax.f32 %v5240, 0.0
        %v6209 = vmax.f32 %v5569, 0.0
        %v6210 = vmax.f32 %v3269, 0.0
        %v6211 = vmax.f32 %v3598, 0.0
        %v6212 = vmax.f32 %v3927, 0.0
        %v6213 = vmax.f32 %v4256, 0.0
        %v6214 = vmax.f32 %v4585, 0.0
        %v6215 = vmax.f32 %v4914, 0.0
        %v6216 = vmax.f32 %v5243, 0.0
        %v6217 = vmax.f32 %v5572, 0.0
        %v6218 = vmax.f32 %v3271, 0.0
        %v6219 = vmax.f32 %v3600, 0.0
        %v6220 = vmax.f32 %v3929, 0.0
        %v6221 = vmax.f32 %v4258, 0.0
        %v6222 = vmax.f32 %v4587, 0.0
        %v6223 = vmax.f32 %v4916, 0.0
        %v6224 = vmax.f32 %v5245, 0.0
        %v6225 = vmax.f32 %v5574, 0.0
        %v6226 = vmax.f32 %v3274, 0.0
        %v6227 = vmax.f32 %v3603, 0.0
        %v6228 = vmax.f32 %v3932, 0.0
        %v6229 = vmax.f32 %v4261, 0.0
        %v6230 = vmax.f32 %v4590, 0.0
        %v6231 = vmax.f32 %v4919, 0.0
        %v6232 = vmax.f32 %v5248, 0.0
        %v6233 = vmax.f32 %v5577, 0.0
        %v6234 = vmax.f32 %v3276, 0.0
        %v6235 = vmax.f32 %v3605, 0.0
        %v6236 = vmax.f32 %v3934, 0.0
        %v6237 = vmax.f32 %v4263, 0.0
        %v6238 = vmax.f32 %v4592, 0.0
        %v6239 = vmax.f32 %v4921, 0.0
        %v6240 = vmax.f32 %v5250, 0.0
        %v6241 = vmax.f32 %v5579, 0.0
        %v6242 = vmax.f32 %v3279, 0.0
        %v6243 = vmax.f32 %v3608, 0.0
        %v6244 = vmax.f32 %v3937, 0.0
        %v6245 = vmax.f32 %v4266, 0.0
        %v6246 = vmax.f32 %v4595, 0.0
        %v6247 = vmax.f32 %v4924, 0.0
        %v6248 = vmax.f32 %v5253, 0.0
        %v6249 = vmax.f32 %v5582, 0.0
        %v6250 = vmax.f32 %v3281, 0.0
        %v6251 = vmax.f32 %v3610, 0.0
        %v6252 = vmax.f32 %v3939, 0.0
        %v6253 = vmax.f32 %v4268, 0.0
        %v6254 = vmax.f32 %v4597, 0.0
        %v6255 = vmax.f32 %v4926, 0.0
        %v6256 = vmax.f32 %v5255, 0.0
        %v6257 = vmax.f32 %v5584, 0.0
        %v6258 = vmax.f32 %v3284, 0.0
        %v6259 = vmax.f32 %v3613, 0.0
        %v6260 = vmax.f32 %v3942, 0.0
        %v6261 = vmax.f32 %v4271, 0.0
        %v6262 = vmax.f32 %v4600, 0.0
        %v6263 = vmax.f32 %v4929, 0.0
        %v6264 = vmax.f32 %v5258, 0.0
        %v6265 = vmax.f32 %v5587, 0.0
        %v6266 = vmax.f32 %v3286, 0.0
        %v6267 = vmax.f32 %v3615, 0.0
        %v6268 = vmax.f32 %v3944, 0.0
        %v6269 = vmax.f32 %v4273, 0.0
        %v6270 = vmax.f32 %v4602, 0.0
        %v6271 = vmax.f32 %v4931, 0.0
        %v6272 = vmax.f32 %v5260, 0.0
        %v6273 = vmax.f32 %v5589, 0.0
        %v6274 = vmax.f32 %v3289, 0.0
        %v6275 = vmax.f32 %v3618, 0.0
        %v6276 = vmax.f32 %v3947, 0.0
        %v6277 = vmax.f32 %v4276, 0.0
        %v6278 = vmax.f32 %v4605, 0.0
        %v6279 = vmax.f32 %v4934, 0.0
        %v6280 = vmax.f32 %v5263, 0.0
        %v6281 = vmax.f32 %v5592, 0.0
        %v6282 = vmax.f32 %v3291, 0.0
        %v6283 = vmax.f32 %v3620, 0.0
        %v6284 = vmax.f32 %v3949, 0.0
        %v6285 = vmax.f32 %v4278, 0.0
        %v6286 = vmax.f32 %v4607, 0.0
        %v6287 = vmax.f32 %v4936, 0.0
        %v6288 = vmax.f32 %v5265, 0.0
        %v6289 = vmax.f32 %v5594, 0.0
        %v6290 = vmax.f32 %v3294, 0.0
        %v6291 = vmax.f32 %v3623, 0.0
        %v6292 = vmax.f32 %v3952, 0.0
        %v6293 = vmax.f32 %v4281, 0.0
        %v6294 = vmax.f32 %v4610, 0.0
        %v6295 = vmax.f32 %v4939, 0.0
        %v6296 = vmax.f32 %v5268, 0.0
        %v6297 = vmax.f32 %v5597, 0.0
        %v6298 = vmax.f32 %v3296, 0.0
        %v6299 = vmax.f32 %v3625, 0.0
        %v6300 = vmax.f32 %v3954, 0.0
        %v6301 = vmax.f32 %v4283, 0.0
        %v6302 = vmax.f32 %v4612, 0.0
        %v6303 = vmax.f32 %v4941, 0.0
        %v6304 = vmax.f32 %v5270, 0.0
        %v6305 = vmax.f32 %v5599, 0.0
        %v6306 = vmax.f32 %v3299, 0.0
        %v6307 = vmax.f32 %v3628, 0.0
        %v6308 = vmax.f32 %v3957, 0.0
        %v6309 = vmax.f32 %v4286, 0.0
        %v6310 = vmax.f32 %v4615, 0.0
        %v6311 = vmax.f32 %v4944, 0.0
        %v6312 = vmax.f32 %v5273, 0.0
        %v6313 = vmax.f32 %v5602, 0.0
        %v6314 = vmax.f32 %v3301, 0.0
        %v6315 = vmax.f32 %v3630, 0.0
        %v6316 = vmax.f32 %v3959, 0.0
        %v6317 = vmax.f32 %v4288, 0.0
        %v6318 = vmax.f32 %v4617, 0.0
        %v6319 = vmax.f32 %v4946, 0.0
        %v6320 = vmax.f32 %v5275, 0.0
        %v6321 = vmax.f32 %v5604, 0.0
        %v6322 = vmax.f32 %v3304, 0.0
        %v6323 = vmax.f32 %v3633, 0.0
        %v6324 = vmax.f32 %v3962, 0.0
        %v6325 = vmax.f32 %v4291, 0.0
        %v6326 = vmax.f32 %v4620, 0.0
        %v6327 = vmax.f32 %v4949, 0.0
        %v6328 = vmax.f32 %v5278, 0.0
        %v6329 = vmax.f32 %v5607, 0.0
        %v6330 = vmax.f32 %v3306, 0.0
        %v6331 = vmax.f32 %v3635, 0.0
        %v6332 = vmax.f32 %v3964, 0.0
        %v6333 = vmax.f32 %v4293, 0.0
        %v6334 = vmax.f32 %v4622, 0.0
        %v6335 = vmax.f32 %v4951, 0.0
        %v6336 = vmax.f32 %v5280, 0.0
        %v6337 = vmax.f32 %v5609, 0.0
        %v6338 = vmax.f32 %v3309, 0.0
        %v6339 = vmax.f32 %v3638, 0.0
        %v6340 = vmax.f32 %v3967, 0.0
        %v6341 = vmax.f32 %v4296, 0.0
        %v6342 = vmax.f32 %v4625, 0.0
        %v6343 = vmax.f32 %v4954, 0.0
        %v6344 = vmax.f32 %v5283, 0.0
        %v6345 = vmax.f32 %v5612, 0.0
        %v6346 = vmax.f32 %v3311, 0.0
        %v6347 = vmax.f32 %v3640, 0.0
        %v6348 = vmax.f32 %v3969, 0.0
        %v6349 = vmax.f32 %v4298, 0.0
        %v6350 = vmax.f32 %v4627, 0.0
        %v6351 = vmax.f32 %v4956, 0.0
        %v6352 = vmax.f32 %v5285, 0.0
        %v6353 = vmax.f32 %v5614, 0.0
        %v6354 = vmax.f32 %v3314, 0.0
        %v6355 = vmax.f32 %v3643, 0.0
        %v6356 = vmax.f32 %v3972, 0.0
        %v6357 = vmax.f32 %v4301, 0.0
        %v6358 = vmax.f32 %v4630, 0.0
        %v6359 = vmax.f32 %v4959, 0.0
        %v6360 = vmax.f32 %v5288, 0.0
        %v6361 = vmax.f32 %v5617, 0.0
        %v6362 = vmax.f32 %v3316, 0.0
        %v6363 = vmax.f32 %v3645, 0.0
        %v6364 = vmax.f32 %v3974, 0.0
        %v6365 = vmax.f32 %v4303, 0.0
        %v6366 = vmax.f32 %v4632, 0.0
        %v6367 = vmax.f32 %v4961, 0.0
        %v6368 = vmax.f32 %v5290, 0.0
        %v6369 = vmax.f32 %v5619, 0.0
        %v6370 = vmax.f32 %v3319, 0.0
        %v6371 = vmax.f32 %v3648, 0.0
        %v6372 = vmax.f32 %v3977, 0.0
        %v6373 = vmax.f32 %v4306, 0.0
        %v6374 = vmax.f32 %v4635, 0.0
        %v6375 = vmax.f32 %v4964, 0.0
        %v6376 = vmax.f32 %v5293, 0.0
        %v6377 = vmax.f32 %v5622, 0.0
        %v6378 = vmax.f32 %v3321, 0.0
        %v6379 = vmax.f32 %v3650, 0.0
        %v6380 = vmax.f32 %v3979, 0.0
        %v6381 = vmax.f32 %v4308, 0.0
        %v6382 = vmax.f32 %v4637, 0.0
        %v6383 = vmax.f32 %v4966, 0.0
        %v6384 = vmax.f32 %v5295, 0.0
        %v6385 = vmax.f32 %v5624, 0.0
        %v6386 = vmax.f32 %v3324, 0.0
        %v6387 = vmax.f32 %v3653, 0.0
        %v6388 = vmax.f32 %v3982, 0.0
        %v6389 = vmax.f32 %v4311, 0.0
        %v6390 = vmax.f32 %v4640, 0.0
        %v6391 = vmax.f32 %v4969, 0.0
        %v6392 = vmax.f32 %v5298, 0.0
        %v6393 = vmax.f32 %v5627, 0.0
        %v6394 = vmax.f32 %v3326, 0.0
        %v6395 = vmax.f32 %v3655, 0.0
        %v6396 = vmax.f32 %v3984, 0.0
        %v6397 = vmax.f32 %v4313, 0.0
        %v6398 = vmax.f32 %v4642, 0.0
        %v6399 = vmax.f32 %v4971, 0.0
        %v6400 = vmax.f32 %v5300, 0.0
        %v6401 = vmax.f32 %v5629, 0.0
        %v6402 = vmax.f32 %v3329, 0.0
        %v6403 = vmax.f32 %v3658, 0.0
        %v6404 = vmax.f32 %v3987, 0.0
        %v6405 = vmax.f32 %v4316, 0.0
        %v6406 = vmax.f32 %v4645, 0.0
        %v6407 = vmax.f32 %v4974, 0.0
        %v6408 = vmax.f32 %v5303, 0.0
        %v6409 = vmax.f32 %v5632, 0.0
        %v6410 = vmax.f32 %v3331, 0.0
        %v6411 = vmax.f32 %v3660, 0.0
        %v6412 = vmax.f32 %v3989, 0.0
        %v6413 = vmax.f32 %v4318, 0.0
        %v6414 = vmax.f32 %v4647, 0.0
        %v6415 = vmax.f32 %v4976, 0.0
        %v6416 = vmax.f32 %v5305, 0.0
        %v6417 = vmax.f32 %v5634, 0.0
        %v6418 = vmax.f32 %v3334, 0.0
        %v6419 = vmax.f32 %v3663, 0.0
        %v6420 = vmax.f32 %v3992, 0.0
        %v6421 = vmax.f32 %v4321, 0.0
        %v6422 = vmax.f32 %v4650, 0.0
        %v6423 = vmax.f32 %v4979, 0.0
        %v6424 = vmax.f32 %v5308, 0.0
        %v6425 = vmax.f32 %v5637, 0.0
        %v6426 = vmax.f32 %v3336, 0.0
        %v6427 = vmax.f32 %v3665, 0.0
        %v6428 = vmax.f32 %v3994, 0.0
        %v6429 = vmax.f32 %v4323, 0.0
        %v6430 = vmax.f32 %v4652, 0.0
        %v6431 = vmax.f32 %v4981, 0.0
        %v6432 = vmax.f32 %v5310, 0.0
        %v6433 = vmax.f32 %v5639, 0.0
        %v6434 = vmax.f32 %v3339, 0.0
        %v6435 = vmax.f32 %v3668, 0.0
        %v6436 = vmax.f32 %v3997, 0.0
        %v6437 = vmax.f32 %v4326, 0.0
        %v6438 = vmax.f32 %v4655, 0.0
        %v6439 = vmax.f32 %v4984, 0.0
        %v6440 = vmax.f32 %v5313, 0.0
        %v6441 = vmax.f32 %v5642, 0.0
        %v6442 = vmax.f32 %v3341, 0.0
        %v6443 = vmax.f32 %v3670, 0.0
        %v6444 = vmax.f32 %v3999, 0.0
        %v6445 = vmax.f32 %v4328, 0.0
        %v6446 = vmax.f32 %v4657, 0.0
        %v6447 = vmax.f32 %v4986, 0.0
        %v6448 = vmax.f32 %v5315, 0.0
        %v6449 = vmax.f32 %v5644, 0.0
        %v6450 = vmax.f32 %v3344, 0.0
        %v6451 = vmax.f32 %v3673, 0.0
        %v6452 = vmax.f32 %v4002, 0.0
        %v6453 = vmax.f32 %v4331, 0.0
        %v6454 = vmax.f32 %v4660, 0.0
        %v6455 = vmax.f32 %v4989, 0.0
        %v6456 = vmax.f32 %v5318, 0.0
        %v6457 = vmax.f32 %v5647, 0.0
        %v6458 = vmax.f32 %v3346, 0.0
        %v6459 = vmax.f32 %v3675, 0.0
        %v6460 = vmax.f32 %v4004, 0.0
        %v6461 = vmax.f32 %v4333, 0.0
        %v6462 = vmax.f32 %v4662, 0.0
        %v6463 = vmax.f32 %v4991, 0.0
        %v6464 = vmax.f32 %v5320, 0.0
        %v6465 = vmax.f32 %v5649, 0.0
        %v6466 = vmax.f32 %v3349, 0.0
        %v6467 = vmax.f32 %v3678, 0.0
        %v6468 = vmax.f32 %v4007, 0.0
        %v6469 = vmax.f32 %v4336, 0.0
        %v6470 = vmax.f32 %v4665, 0.0
        %v6471 = vmax.f32 %v4994, 0.0
        %v6472 = vmax.f32 %v5323, 0.0
        %v6473 = vmax.f32 %v5652, 0.0
        %v6474 = vmax.f32 %v3351, 0.0
        %v6475 = vmax.f32 %v3680, 0.0
        %v6476 = vmax.f32 %v4009, 0.0
        %v6477 = vmax.f32 %v4338, 0.0
        %v6478 = vmax.f32 %v4667, 0.0
        %v6479 = vmax.f32 %v4996, 0.0
        %v6480 = vmax.f32 %v5325, 0.0
        %v6481 = vmax.f32 %v5654, 0.0
        %v6482 = vmax.f32 %v3354, 0.0
        %v6483 = vmax.f32 %v3683, 0.0
        %v6484 = vmax.f32 %v4012, 0.0
        %v6485 = vmax.f32 %v4341, 0.0
        %v6486 = vmax.f32 %v4670, 0.0
        %v6487 = vmax.f32 %v4999, 0.0
        %v6488 = vmax.f32 %v5328, 0.0
        %v6489 = vmax.f32 %v5657, 0.0
        %v6490 = vmax.f32 %v3356, 0.0
        %v6491 = vmax.f32 %v3685, 0.0
        %v6492 = vmax.f32 %v4014, 0.0
        %v6493 = vmax.f32 %v4343, 0.0
        %v6494 = vmax.f32 %v4672, 0.0
        %v6495 = vmax.f32 %v5001, 0.0
        %v6496 = vmax.f32 %v5330, 0.0
        %v6497 = vmax.f32 %v5659, 0.0
        %v6498 = vmax.f32 %v3359, 0.0
        %v6499 = vmax.f32 %v3688, 0.0
        %v6500 = vmax.f32 %v4017, 0.0
        %v6501 = vmax.f32 %v4346, 0.0
        %v6502 = vmax.f32 %v4675, 0.0
        %v6503 = vmax.f32 %v5004, 0.0
        %v6504 = vmax.f32 %v5333, 0.0
        %v6505 = vmax.f32 %v5662, 0.0
        %v6506 = vmax.f32 %v3361, 0.0
        %v6507 = vmax.f32 %v3690, 0.0
        %v6508 = vmax.f32 %v4019, 0.0
        %v6509 = vmax.f32 %v4348, 0.0
        %v6510 = vmax.f32 %v4677, 0.0
        %v6511 = vmax.f32 %v5006, 0.0
        %v6512 = vmax.f32 %v5335, 0.0
        %v6513 = vmax.f32 %v5664, 0.0
        %v6514 = vmax.f32 %v3364, 0.0
        %v6515 = vmax.f32 %v3693, 0.0
        %v6516 = vmax.f32 %v4022, 0.0
        %v6517 = vmax.f32 %v4351, 0.0
        %v6518 = vmax.f32 %v4680, 0.0
        %v6519 = vmax.f32 %v5009, 0.0
        %v6520 = vmax.f32 %v5338, 0.0
        %v6521 = vmax.f32 %v5667, 0.0
        %v6522 = vmax.f32 %v3366, 0.0
        %v6523 = vmax.f32 %v3695, 0.0
        %v6524 = vmax.f32 %v4024, 0.0
        %v6525 = vmax.f32 %v4353, 0.0
        %v6526 = vmax.f32 %v4682, 0.0
        %v6527 = vmax.f32 %v5011, 0.0
        %v6528 = vmax.f32 %v5340, 0.0
        %v6529 = vmax.f32 %v5669, 0.0
        %v6530 = vmax.f32 %v3369, 0.0
        %v6531 = vmax.f32 %v3698, 0.0
        %v6532 = vmax.f32 %v4027, 0.0
        %v6533 = vmax.f32 %v4356, 0.0
        %v6534 = vmax.f32 %v4685, 0.0
        %v6535 = vmax.f32 %v5014, 0.0
        %v6536 = vmax.f32 %v5343, 0.0
        %v6537 = vmax.f32 %v5672, 0.0
        %v6538 = vmax.f32 %v3371, 0.0
        %v6539 = vmax.f32 %v3700, 0.0
        %v6540 = vmax.f32 %v4029, 0.0
        %v6541 = vmax.f32 %v4358, 0.0
        %v6542 = vmax.f32 %v4687, 0.0
        %v6543 = vmax.f32 %v5016, 0.0
        %v6544 = vmax.f32 %v5345, 0.0
        %v6545 = vmax.f32 %v5674, 0.0
        %v6546 = vmax.f32 %v3374, 0.0
        %v6547 = vmax.f32 %v3703, 0.0
        %v6548 = vmax.f32 %v4032, 0.0
        %v6549 = vmax.f32 %v4361, 0.0
        %v6550 = vmax.f32 %v4690, 0.0
        %v6551 = vmax.f32 %v5019, 0.0
        %v6552 = vmax.f32 %v5348, 0.0
        %v6553 = vmax.f32 %v5677, 0.0
        %v6554 = vmax.f32 %v3376, 0.0
        %v6555 = vmax.f32 %v3705, 0.0
        %v6556 = vmax.f32 %v4034, 0.0
        %v6557 = vmax.f32 %v4363, 0.0
        %v6558 = vmax.f32 %v4692, 0.0
        %v6559 = vmax.f32 %v5021, 0.0
        %v6560 = vmax.f32 %v5350, 0.0
        %v6561 = vmax.f32 %v5679, 0.0
        %v6562 = vmax.f32 %v3379, 0.0
        %v6563 = vmax.f32 %v3708, 0.0
        %v6564 = vmax.f32 %v4037, 0.0
        %v6565 = vmax.f32 %v4366, 0.0
        %v6566 = vmax.f32 %v4695, 0.0
        %v6567 = vmax.f32 %v5024, 0.0
        %v6568 = vmax.f32 %v5353, 0.0
        %v6569 = vmax.f32 %v5682, 0.0
        %v6570 = vmax.f32 %v3381, 0.0
        %v6571 = vmax.f32 %v3710, 0.0
        %v6572 = vmax.f32 %v4039, 0.0
        %v6573 = vmax.f32 %v4368, 0.0
        %v6574 = vmax.f32 %v4697, 0.0
        %v6575 = vmax.f32 %v5026, 0.0
        %v6576 = vmax.f32 %v5355, 0.0
        %v6577 = vmax.f32 %v5684, 0.0
        %v6578 = vmax.f32 %v3384, 0.0
        %v6579 = vmax.f32 %v3713, 0.0
        %v6580 = vmax.f32 %v4042, 0.0
        %v6581 = vmax.f32 %v4371, 0.0
        %v6582 = vmax.f32 %v4700, 0.0
        %v6583 = vmax.f32 %v5029, 0.0
        %v6584 = vmax.f32 %v5358, 0.0
        %v6585 = vmax.f32 %v5687, 0.0
        %v6586 = vmax.f32 %v3386, 0.0
        %v6587 = vmax.f32 %v3715, 0.0
        %v6588 = vmax.f32 %v4044, 0.0
        %v6589 = vmax.f32 %v4373, 0.0
        %v6590 = vmax.f32 %v4702, 0.0
        %v6591 = vmax.f32 %v5031, 0.0
        %v6592 = vmax.f32 %v5360, 0.0
        %v6593 = vmax.f32 %v5689, 0.0
        %v6594 = vmax.f32 %v3389, 0.0
        %v6595 = vmax.f32 %v3718, 0.0
        %v6596 = vmax.f32 %v4047, 0.0
        %v6597 = vmax.f32 %v4376, 0.0
        %v6598 = vmax.f32 %v4705, 0.0
        %v6599 = vmax.f32 %v5034, 0.0
        %v6600 = vmax.f32 %v5363, 0.0
        %v6601 = vmax.f32 %v5692, 0.0
        %v6602 = vmax.f32 %v3391, 0.0
        %v6603 = vmax.f32 %v3720, 0.0
        %v6604 = vmax.f32 %v4049, 0.0
        %v6605 = vmax.f32 %v4378, 0.0
        %v6606 = vmax.f32 %v4707, 0.0
        %v6607 = vmax.f32 %v5036, 0.0
        %v6608 = vmax.f32 %v5365, 0.0
        %v6609 = vmax.f32 %v5694, 0.0
        %v6610 = vmax.f32 %v3394, 0.0
        %v6611 = vmax.f32 %v3723, 0.0
        %v6612 = vmax.f32 %v4052, 0.0
        %v6613 = vmax.f32 %v4381, 0.0
        %v6614 = vmax.f32 %v4710, 0.0
        %v6615 = vmax.f32 %v5039, 0.0
        %v6616 = vmax.f32 %v5368, 0.0
        %v6617 = vmax.f32 %v5697, 0.0
        %v6618 = vmax.f32 %v3396, 0.0
        %v6619 = vmax.f32 %v3725, 0.0
        %v6620 = vmax.f32 %v4054, 0.0
        %v6621 = vmax.f32 %v4383, 0.0
        %v6622 = vmax.f32 %v4712, 0.0
        %v6623 = vmax.f32 %v5041, 0.0
        %v6624 = vmax.f32 %v5370, 0.0
        %v6625 = vmax.f32 %v5699, 0.0
        %v6626 = vmax.f32 %v3399, 0.0
        %v6627 = vmax.f32 %v3728, 0.0
        %v6628 = vmax.f32 %v4057, 0.0
        %v6629 = vmax.f32 %v4386, 0.0
        %v6630 = vmax.f32 %v4715, 0.0
        %v6631 = vmax.f32 %v5044, 0.0
        %v6632 = vmax.f32 %v5373, 0.0
        %v6633 = vmax.f32 %v5702, 0.0
        %v6634 = vmax.f32 %v3401, 0.0
        %v6635 = vmax.f32 %v3730, 0.0
        %v6636 = vmax.f32 %v4059, 0.0
        %v6637 = vmax.f32 %v4388, 0.0
        %v6638 = vmax.f32 %v4717, 0.0
        %v6639 = vmax.f32 %v5046, 0.0
        %v6640 = vmax.f32 %v5375, 0.0
        %v6641 = vmax.f32 %v5704, 0.0
        %v6642 = vmax.f32 %v3404, 0.0
        %v6643 = vmax.f32 %v3733, 0.0
        %v6644 = vmax.f32 %v4062, 0.0
        %v6645 = vmax.f32 %v4391, 0.0
        %v6646 = vmax.f32 %v4720, 0.0
        %v6647 = vmax.f32 %v5049, 0.0
        %v6648 = vmax.f32 %v5378, 0.0
        %v6649 = vmax.f32 %v5707, 0.0
        %v6650 = vmax.f32 %v3406, 0.0
        %v6651 = vmax.f32 %v3735, 0.0
        %v6652 = vmax.f32 %v4064, 0.0
        %v6653 = vmax.f32 %v4393, 0.0
        %v6654 = vmax.f32 %v4722, 0.0
        %v6655 = vmax.f32 %v5051, 0.0
        %v6656 = vmax.f32 %v5380, 0.0
        %v6657 = vmax.f32 %v5709, 0.0
        %v6658 = vmax.f32 %v3409, 0.0
        %v6659 = vmax.f32 %v3738, 0.0
        %v6660 = vmax.f32 %v4067, 0.0
        %v6661 = vmax.f32 %v4396, 0.0
        %v6662 = vmax.f32 %v4725, 0.0
        %v6663 = vmax.f32 %v5054, 0.0
        %v6664 = vmax.f32 %v5383, 0.0
        %v6665 = vmax.f32 %v5712, 0.0
        %v6666 = vmax.f32 %v3411, 0.0
        %v6667 = vmax.f32 %v3740, 0.0
        %v6668 = vmax.f32 %v4069, 0.0
        %v6669 = vmax.f32 %v4398, 0.0
        %v6670 = vmax.f32 %v4727, 0.0
        %v6671 = vmax.f32 %v5056, 0.0
        %v6672 = vmax.f32 %v5385, 0.0
        %v6673 = vmax.f32 %v5714, 0.0
        %v6674 = vmax.f32 %v3414, 0.0
        %v6675 = vmax.f32 %v3743, 0.0
        %v6676 = vmax.f32 %v4072, 0.0
        %v6677 = vmax.f32 %v4401, 0.0
        %v6678 = vmax.f32 %v4730, 0.0
        %v6679 = vmax.f32 %v5059, 0.0
        %v6680 = vmax.f32 %v5388, 0.0
        %v6681 = vmax.f32 %v5717, 0.0
        %v6682 = vmax.f32 %v3416, 0.0
        %v6683 = vmax.f32 %v3745, 0.0
        %v6684 = vmax.f32 %v4074, 0.0
        %v6685 = vmax.f32 %v4403, 0.0
        %v6686 = vmax.f32 %v4732, 0.0
        %v6687 = vmax.f32 %v5061, 0.0
        %v6688 = vmax.f32 %v5390, 0.0
        %v6689 = vmax.f32 %v5719, 0.0
        %v6690 = vmax.f32 %v3419, 0.0
        %v6691 = vmax.f32 %v3748, 0.0
        %v6692 = vmax.f32 %v4077, 0.0
        %v6693 = vmax.f32 %v4406, 0.0
        %v6694 = vmax.f32 %v4735, 0.0
        %v6695 = vmax.f32 %v5064, 0.0
        %v6696 = vmax.f32 %v5393, 0.0
        %v6697 = vmax.f32 %v5722, 0.0
        %v6698 = vmax.f32 %v3421, 0.0
        %v6699 = vmax.f32 %v3750, 0.0
        %v6700 = vmax.f32 %v4079, 0.0
        %v6701 = vmax.f32 %v4408, 0.0
        %v6702 = vmax.f32 %v4737, 0.0
        %v6703 = vmax.f32 %v5066, 0.0
        %v6704 = vmax.f32 %v5395, 0.0
        %v6705 = vmax.f32 %v5724, 0.0
        %v6706 = vmax.f32 %v3424, 0.0
        %v6707 = vmax.f32 %v3753, 0.0
        %v6708 = vmax.f32 %v4082, 0.0
        %v6709 = vmax.f32 %v4411, 0.0
        %v6710 = vmax.f32 %v4740, 0.0
        %v6711 = vmax.f32 %v5069, 0.0
        %v6712 = vmax.f32 %v5398, 0.0
        %v6713 = vmax.f32 %v5727, 0.0
        %v6714 = vmax.f32 %v3426, 0.0
        %v6715 = vmax.f32 %v3755, 0.0
        %v6716 = vmax.f32 %v4084, 0.0
        %v6717 = vmax.f32 %v4413, 0.0
        %v6718 = vmax.f32 %v4742, 0.0
        %v6719 = vmax.f32 %v5071, 0.0
        %v6720 = vmax.f32 %v5400, 0.0
        %v6721 = vmax.f32 %v5729, 0.0
        %v6722 = vmax.f32 %v3429, 0.0
        %v6723 = vmax.f32 %v3758, 0.0
        %v6724 = vmax.f32 %v4087, 0.0
        %v6725 = vmax.f32 %v4416, 0.0
        %v6726 = vmax.f32 %v4745, 0.0
        %v6727 = vmax.f32 %v5074, 0.0
        %v6728 = vmax.f32 %v5403, 0.0
        %v6729 = vmax.f32 %v5732, 0.0
        %v6730 = vmax.f32 %v3431, 0.0
        %v6731 = vmax.f32 %v3760, 0.0
        %v6732 = vmax.f32 %v4089, 0.0
        %v6733 = vmax.f32 %v4418, 0.0
        %v6734 = vmax.f32 %v4747, 0.0
        %v6735 = vmax.f32 %v5076, 0.0
        %v6736 = vmax.f32 %v5405, 0.0
        %v6737 = vmax.f32 %v5734, 0.0
        %v6738 = vmax.f32 %v3434, 0.0
        %v6739 = vmax.f32 %v3763, 0.0
        %v6740 = vmax.f32 %v4092, 0.0
        %v6741 = vmax.f32 %v4421, 0.0
        %v6742 = vmax.f32 %v4750, 0.0
        %v6743 = vmax.f32 %v5079, 0.0
        %v6744 = vmax.f32 %v5408, 0.0
        %v6745 = vmax.f32 %v5737, 0.0
        %v6746 = vmax.f32 %v3436, 0.0
        %v6747 = vmax.f32 %v3765, 0.0
        %v6748 = vmax.f32 %v4094, 0.0
        %v6749 = vmax.f32 %v4423, 0.0
        %v6750 = vmax.f32 %v4752, 0.0
        %v6751 = vmax.f32 %v5081, 0.0
        %v6752 = vmax.f32 %v5410, 0.0
        %v6753 = vmax.f32 %v5739, 0.0
        %v6754 = vmax.f32 %v3439, 0.0
        %v6755 = vmax.f32 %v3768, 0.0
        %v6756 = vmax.f32 %v4097, 0.0
        %v6757 = vmax.f32 %v4426, 0.0
        %v6758 = vmax.f32 %v4755, 0.0
        %v6759 = vmax.f32 %v5084, 0.0
        %v6760 = vmax.f32 %v5413, 0.0
        %v6761 = vmax.f32 %v5742, 0.0
        %v6762 = vmax.f32 %v3441, 0.0
        %v6763 = vmax.f32 %v3770, 0.0
        %v6764 = vmax.f32 %v4099, 0.0
        %v6765 = vmax.f32 %v4428, 0.0
        %v6766 = vmax.f32 %v4757, 0.0
        %v6767 = vmax.f32 %v5086, 0.0
        %v6768 = vmax.f32 %v5415, 0.0
        %v6769 = vmax.f32 %v5744, 0.0
        %v6770 = vmax.f32 %v5746, %v5754
        %v6771 = vmax.f32 %v6770, %v5762
        %v6772 = vmax.f32 %v6771, %v5770
        %v6773 = vmax.f32 %v6772, %v5778
        %v6774 = vmax.f32 %v6773, %v5786
        %v6775 = vmax.f32 %v6774, %v5794
        %v6776 = vmax.f32 %v6775, %v5802
        %v6777 = vmax.f32 %v6776, %v5810
        %v6778 = vmax.f32 %v6777, %v5818
        %v6779 = vmax.f32 %v6778, %v5826
        %v6780 = vmax.f32 %v6779, %v5834
        %v6781 = vmax.f32 %v6780, %v5842
        %v6782 = vmax.f32 %v6781, %v5850
        %v6783 = vmax.f32 %v6782, %v5858
        %v6784 = vmax.f32 %v6783, %v5866
        %v6785 = vrot.slane %v6784, 4
        %v6786 = vmax.f32 %v6784, %v6785
        %v6787 = vrot.slane %v6786, 2
        %v6788 = vmax.f32 %v6786, %v6787
        %v6789 = vrot.slane %v6788, 1
        %v6790 = vmax.f32 %v6788, %v6789
        %v6791 = vmax.f32 %v5747, %v5755
        %v6792 = vmax.f32 %v6791, %v5763
        %v6793 = vmax.f32 %v6792, %v5771
        %v6794 = vmax.f32 %v6793, %v5779
        %v6795 = vmax.f32 %v6794, %v5787
        %v6796 = vmax.f32 %v6795, %v5795
        %v6797 = vmax.f32 %v6796, %v5803
        %v6798 = vmax.f32 %v6797, %v5811
        %v6799 = vmax.f32 %v6798, %v5819
        %v6800 = vmax.f32 %v6799, %v5827
        %v6801 = vmax.f32 %v6800, %v5835
        %v6802 = vmax.f32 %v6801, %v5843
        %v6803 = vmax.f32 %v6802, %v5851
        %v6804 = vmax.f32 %v6803, %v5859
        %v6805 = vmax.f32 %v6804, %v5867
        %v6806 = vrot.slane %v6805, 4
        %v6807 = vmax.f32 %v6805, %v6806
        %v6808 = vrot.slane %v6807, 2
        %v6809 = vmax.f32 %v6807, %v6808
        %v6810 = vrot.slane %v6809, 1
        %v6811 = vmax.f32 %v6809, %v6810
        %v6812 = vmax.f32 %v5748, %v5756
        %v6813 = vmax.f32 %v6812, %v5764
        %v6814 = vmax.f32 %v6813, %v5772
        %v6815 = vmax.f32 %v6814, %v5780
        %v6816 = vmax.f32 %v6815, %v5788
        %v6817 = vmax.f32 %v6816, %v5796
        %v6818 = vmax.f32 %v6817, %v5804
        %v6819 = vmax.f32 %v6818, %v5812
        %v6820 = vmax.f32 %v6819, %v5820
        %v6821 = vmax.f32 %v6820, %v5828
        %v6822 = vmax.f32 %v6821, %v5836
        %v6823 = vmax.f32 %v6822, %v5844
        %v6824 = vmax.f32 %v6823, %v5852
        %v6825 = vmax.f32 %v6824, %v5860
        %v6826 = vmax.f32 %v6825, %v5868
        %v6827 = vrot.slane %v6826, 4
        %v6828 = vmax.f32 %v6826, %v6827
        %v6829 = vrot.slane %v6828, 2
        %v6830 = vmax.f32 %v6828, %v6829
        %v6831 = vrot.slane %v6830, 1
        %v6832 = vmax.f32 %v6830, %v6831
        %v6833 = vmax.f32 %v5749, %v5757
        %v6834 = vmax.f32 %v6833, %v5765
        %v6835 = vmax.f32 %v6834, %v5773
        %v6836 = vmax.f32 %v6835, %v5781
        %v6837 = vmax.f32 %v6836, %v5789
        %v6838 = vmax.f32 %v6837, %v5797
        %v6839 = vmax.f32 %v6838, %v5805
        %v6840 = vmax.f32 %v6839, %v5813
        %v6841 = vmax.f32 %v6840, %v5821
        %v6842 = vmax.f32 %v6841, %v5829
        %v6843 = vmax.f32 %v6842, %v5837
        %v6844 = vmax.f32 %v6843, %v5845
        %v6845 = vmax.f32 %v6844, %v5853
        %v6846 = vmax.f32 %v6845, %v5861
        %v6847 = vmax.f32 %v6846, %v5869
        %v6848 = vrot.slane %v6847, 4
        %v6849 = vmax.f32 %v6847, %v6848
        %v6850 = vrot.slane %v6849, 2
        %v6851 = vmax.f32 %v6849, %v6850
        %v6852 = vrot.slane %v6851, 1
        %v6853 = vmax.f32 %v6851, %v6852
        %v6854 = vmax.f32 %v5750, %v5758
        %v6855 = vmax.f32 %v6854, %v5766
        %v6856 = vmax.f32 %v6855, %v5774
        %v6857 = vmax.f32 %v6856, %v5782
        %v6858 = vmax.f32 %v6857, %v5790
        %v6859 = vmax.f32 %v6858, %v5798
        %v6860 = vmax.f32 %v6859, %v5806
        %v6861 = vmax.f32 %v6860, %v5814
        %v6862 = vmax.f32 %v6861, %v5822
        %v6863 = vmax.f32 %v6862, %v5830
        %v6864 = vmax.f32 %v6863, %v5838
        %v6865 = vmax.f32 %v6864, %v5846
        %v6866 = vmax.f32 %v6865, %v5854
        %v6867 = vmax.f32 %v6866, %v5862
        %v6868 = vmax.f32 %v6867, %v5870
        %v6869 = vrot.slane %v6868, 4
        %v6870 = vmax.f32 %v6868, %v6869
        %v6871 = vrot.slane %v6870, 2
        %v6872 = vmax.f32 %v6870, %v6871
        %v6873 = vrot.slane %v6872, 1
        %v6874 = vmax.f32 %v6872, %v6873
        %v6875 = vmax.f32 %v5751, %v5759
        %v6876 = vmax.f32 %v6875, %v5767
        %v6877 = vmax.f32 %v6876, %v5775
        %v6878 = vmax.f32 %v6877, %v5783
        %v6879 = vmax.f32 %v6878, %v5791
        %v6880 = vmax.f32 %v6879, %v5799
        %v6881 = vmax.f32 %v6880, %v5807
        %v6882 = vmax.f32 %v6881, %v5815
        %v6883 = vmax.f32 %v6882, %v5823
        %v6884 = vmax.f32 %v6883, %v5831
        %v6885 = vmax.f32 %v6884, %v5839
        %v6886 = vmax.f32 %v6885, %v5847
        %v6887 = vmax.f32 %v6886, %v5855
        %v6888 = vmax.f32 %v6887, %v5863
        %v6889 = vmax.f32 %v6888, %v5871
        %v6890 = vrot.slane %v6889, 4
        %v6891 = vmax.f32 %v6889, %v6890
        %v6892 = vrot.slane %v6891, 2
        %v6893 = vmax.f32 %v6891, %v6892
        %v6894 = vrot.slane %v6893, 1
        %v6895 = vmax.f32 %v6893, %v6894
        %v6896 = vmax.f32 %v5752, %v5760
        %v6897 = vmax.f32 %v6896, %v5768
        %v6898 = vmax.f32 %v6897, %v5776
        %v6899 = vmax.f32 %v6898, %v5784
        %v6900 = vmax.f32 %v6899, %v5792
        %v6901 = vmax.f32 %v6900, %v5800
        %v6902 = vmax.f32 %v6901, %v5808
        %v6903 = vmax.f32 %v6902, %v5816
        %v6904 = vmax.f32 %v6903, %v5824
        %v6905 = vmax.f32 %v6904, %v5832
        %v6906 = vmax.f32 %v6905, %v5840
        %v6907 = vmax.f32 %v6906, %v5848
        %v6908 = vmax.f32 %v6907, %v5856
        %v6909 = vmax.f32 %v6908, %v5864
        %v6910 = vmax.f32 %v6909, %v5872
        %v6911 = vrot.slane %v6910, 4
        %v6912 = vmax.f32 %v6910, %v6911
        %v6913 = vrot.slane %v6912, 2
        %v6914 = vmax.f32 %v6912, %v6913
        %v6915 = vrot.slane %v6914, 1
        %v6916 = vmax.f32 %v6914, %v6915
        %v6917 = vmax.f32 %v5753, %v5761
        %v6918 = vmax.f32 %v6917, %v5769
        %v6919 = vmax.f32 %v6918, %v5777
        %v6920 = vmax.f32 %v6919, %v5785
        %v6921 = vmax.f32 %v6920, %v5793
        %v6922 = vmax.f32 %v6921, %v5801
        %v6923 = vmax.f32 %v6922, %v5809
        %v6924 = vmax.f32 %v6923, %v5817
        %v6925 = vmax.f32 %v6924, %v5825
        %v6926 = vmax.f32 %v6925, %v5833
        %v6927 = vmax.f32 %v6926, %v5841
        %v6928 = vmax.f32 %v6927, %v5849
        %v6929 = vmax.f32 %v6928, %v5857
        %v6930 = vmax.f32 %v6929, %v5865
        %v6931 = vmax.f32 %v6930, %v5873
        %v6932 = vrot.slane %v6931, 4
        %v6933 = vmax.f32 %v6931, %v6932
        %v6934 = vrot.slane %v6933, 2
        %v6935 = vmax.f32 %v6933, %v6934
        %v6936 = vrot.slane %v6935, 1
        %v6937 = vmax.f32 %v6935, %v6936
        %v6938 = vmax.f32 %v5874, %v5882
        %v6939 = vmax.f32 %v6938, %v5890
        %v6940 = vmax.f32 %v6939, %v5898
        %v6941 = vmax.f32 %v6940, %v5906
        %v6942 = vmax.f32 %v6941, %v5914
        %v6943 = vmax.f32 %v6942, %v5922
        %v6944 = vmax.f32 %v6943, %v5930
        %v6945 = vmax.f32 %v6944, %v5938
        %v6946 = vmax.f32 %v6945, %v5946
        %v6947 = vmax.f32 %v6946, %v5954
        %v6948 = vmax.f32 %v6947, %v5962
        %v6949 = vmax.f32 %v6948, %v5970
        %v6950 = vmax.f32 %v6949, %v5978
        %v6951 = vmax.f32 %v6950, %v5986
        %v6952 = vmax.f32 %v6951, %v5994
        %v6953 = vrot.slane %v6952, 4
        %v6954 = vmax.f32 %v6952, %v6953
        %v6955 = vrot.slane %v6954, 2
        %v6956 = vmax.f32 %v6954, %v6955
        %v6957 = vrot.slane %v6956, 1
        %v6958 = vmax.f32 %v6956, %v6957
        %v6959 = vmax.f32 %v5875, %v5883
        %v6960 = vmax.f32 %v6959, %v5891
        %v6961 = vmax.f32 %v6960, %v5899
        %v6962 = vmax.f32 %v6961, %v5907
        %v6963 = vmax.f32 %v6962, %v5915
        %v6964 = vmax.f32 %v6963, %v5923
        %v6965 = vmax.f32 %v6964, %v5931
        %v6966 = vmax.f32 %v6965, %v5939
        %v6967 = vmax.f32 %v6966, %v5947
        %v6968 = vmax.f32 %v6967, %v5955
        %v6969 = vmax.f32 %v6968, %v5963
        %v6970 = vmax.f32 %v6969, %v5971
        %v6971 = vmax.f32 %v6970, %v5979
        %v6972 = vmax.f32 %v6971, %v5987
        %v6973 = vmax.f32 %v6972, %v5995
        %v6974 = vrot.slane %v6973, 4
        %v6975 = vmax.f32 %v6973, %v6974
        %v6976 = vrot.slane %v6975, 2
        %v6977 = vmax.f32 %v6975, %v6976
        %v6978 = vrot.slane %v6977, 1
        %v6979 = vmax.f32 %v6977, %v6978
        %v6980 = vmax.f32 %v5876, %v5884
        %v6981 = vmax.f32 %v6980, %v5892
        %v6982 = vmax.f32 %v6981, %v5900
        %v6983 = vmax.f32 %v6982, %v5908
        %v6984 = vmax.f32 %v6983, %v5916
        %v6985 = vmax.f32 %v6984, %v5924
        %v6986 = vmax.f32 %v6985, %v5932
        %v6987 = vmax.f32 %v6986, %v5940
        %v6988 = vmax.f32 %v6987, %v5948
        %v6989 = vmax.f32 %v6988, %v5956
        %v6990 = vmax.f32 %v6989, %v5964
        %v6991 = vmax.f32 %v6990, %v5972
        %v6992 = vmax.f32 %v6991, %v5980
        %v6993 = vmax.f32 %v6992, %v5988
        %v6994 = vmax.f32 %v6993, %v5996
        %v6995 = vrot.slane %v6994, 4
        %v6996 = vmax.f32 %v6994, %v6995
        %v6997 = vrot.slane %v6996, 2
        %v6998 = vmax.f32 %v6996, %v6997
        %v6999 = vrot.slane %v6998, 1
        %v7000 = vmax.f32 %v6998, %v6999
        %v7001 = vmax.f32 %v5877, %v5885
        %v7002 = vmax.f32 %v7001, %v5893
        %v7003 = vmax.f32 %v7002, %v5901
        %v7004 = vmax.f32 %v7003, %v5909
        %v7005 = vmax.f32 %v7004, %v5917
        %v7006 = vmax.f32 %v7005, %v5925
        %v7007 = vmax.f32 %v7006, %v5933
        %v7008 = vmax.f32 %v7007, %v5941
        %v7009 = vmax.f32 %v7008, %v5949
        %v7010 = vmax.f32 %v7009, %v5957
        %v7011 = vmax.f32 %v7010, %v5965
        %v7012 = vmax.f32 %v7011, %v5973
        %v7013 = vmax.f32 %v7012, %v5981
        %v7014 = vmax.f32 %v7013, %v5989
        %v7015 = vmax.f32 %v7014, %v5997
        %v7016 = vrot.slane %v7015, 4
        %v7017 = vmax.f32 %v7015, %v7016
        %v7018 = vrot.slane %v7017, 2
        %v7019 = vmax.f32 %v7017, %v7018
        %v7020 = vrot.slane %v7019, 1
        %v7021 = vmax.f32 %v7019, %v7020
        %v7022 = vmax.f32 %v5878, %v5886
        %v7023 = vmax.f32 %v7022, %v5894
        %v7024 = vmax.f32 %v7023, %v5902
        %v7025 = vmax.f32 %v7024, %v5910
        %v7026 = vmax.f32 %v7025, %v5918
        %v7027 = vmax.f32 %v7026, %v5926
        %v7028 = vmax.f32 %v7027, %v5934
        %v7029 = vmax.f32 %v7028, %v5942
        %v7030 = vmax.f32 %v7029, %v5950
        %v7031 = vmax.f32 %v7030, %v5958
        %v7032 = vmax.f32 %v7031, %v5966
        %v7033 = vmax.f32 %v7032, %v5974
        %v7034 = vmax.f32 %v7033, %v5982
        %v7035 = vmax.f32 %v7034, %v5990
        %v7036 = vmax.f32 %v7035, %v5998
        %v7037 = vrot.slane %v7036, 4
        %v7038 = vmax.f32 %v7036, %v7037
        %v7039 = vrot.slane %v7038, 2
        %v7040 = vmax.f32 %v7038, %v7039
        %v7041 = vrot.slane %v7040, 1
        %v7042 = vmax.f32 %v7040, %v7041
        %v7043 = vmax.f32 %v5879, %v5887
        %v7044 = vmax.f32 %v7043, %v5895
        %v7045 = vmax.f32 %v7044, %v5903
        %v7046 = vmax.f32 %v7045, %v5911
        %v7047 = vmax.f32 %v7046, %v5919
        %v7048 = vmax.f32 %v7047, %v5927
        %v7049 = vmax.f32 %v7048, %v5935
        %v7050 = vmax.f32 %v7049, %v5943
        %v7051 = vmax.f32 %v7050, %v5951
        %v7052 = vmax.f32 %v7051, %v5959
        %v7053 = vmax.f32 %v7052, %v5967
        %v7054 = vmax.f32 %v7053, %v5975
        %v7055 = vmax.f32 %v7054, %v5983
        %v7056 = vmax.f32 %v7055, %v5991
        %v7057 = vmax.f32 %v7056, %v5999
        %v7058 = vrot.slane %v7057, 4
        %v7059 = vmax.f32 %v7057, %v7058
        %v7060 = vrot.slane %v7059, 2
        %v7061 = vmax.f32 %v7059, %v7060
        %v7062 = vrot.slane %v7061, 1
        %v7063 = vmax.f32 %v7061, %v7062
        %v7064 = vmax.f32 %v5880, %v5888
        %v7065 = vmax.f32 %v7064, %v5896
        %v7066 = vmax.f32 %v7065, %v5904
        %v7067 = vmax.f32 %v7066, %v5912
        %v7068 = vmax.f32 %v7067, %v5920
        %v7069 = vmax.f32 %v7068, %v5928
        %v7070 = vmax.f32 %v7069, %v5936
        %v7071 = vmax.f32 %v7070, %v5944
        %v7072 = vmax.f32 %v7071, %v5952
        %v7073 = vmax.f32 %v7072, %v5960
        %v7074 = vmax.f32 %v7073, %v5968
        %v7075 = vmax.f32 %v7074, %v5976
        %v7076 = vmax.f32 %v7075, %v5984
        %v7077 = vmax.f32 %v7076, %v5992
        %v7078 = vmax.f32 %v7077, %v6000
        %v7079 = vrot.slane %v7078, 4
        %v7080 = vmax.f32 %v7078, %v7079
        %v7081 = vrot.slane %v7080, 2
        %v7082 = vmax.f32 %v7080, %v7081
        %v7083 = vrot.slane %v7082, 1
        %v7084 = vmax.f32 %v7082, %v7083
        %v7085 = vmax.f32 %v5881, %v5889
        %v7086 = vmax.f32 %v7085, %v5897
        %v7087 = vmax.f32 %v7086, %v5905
        %v7088 = vmax.f32 %v7087, %v5913
        %v7089 = vmax.f32 %v7088, %v5921
        %v7090 = vmax.f32 %v7089, %v5929
        %v7091 = vmax.f32 %v7090, %v5937
        %v7092 = vmax.f32 %v7091, %v5945
        %v7093 = vmax.f32 %v7092, %v5953
        %v7094 = vmax.f32 %v7093, %v5961
        %v7095 = vmax.f32 %v7094, %v5969
        %v7096 = vmax.f32 %v7095, %v5977
        %v7097 = vmax.f32 %v7096, %v5985
        %v7098 = vmax.f32 %v7097, %v5993
        %v7099 = vmax.f32 %v7098, %v6001
        %v7100 = vrot.slane %v7099, 4
        %v7101 = vmax.f32 %v7099, %v7100
        %v7102 = vrot.slane %v7101, 2
        %v7103 = vmax.f32 %v7101, %v7102
        %v7104 = vrot.slane %v7103, 1
        %v7105 = vmax.f32 %v7103, %v7104
        %v7106 = vmax.f32 %v6002, %v6010
        %v7107 = vmax.f32 %v7106, %v6018
        %v7108 = vmax.f32 %v7107, %v6026
        %v7109 = vmax.f32 %v7108, %v6034
        %v7110 = vmax.f32 %v7109, %v6042
        %v7111 = vmax.f32 %v7110, %v6050
        %v7112 = vmax.f32 %v7111, %v6058
        %v7113 = vmax.f32 %v7112, %v6066
        %v7114 = vmax.f32 %v7113, %v6074
        %v7115 = vmax.f32 %v7114, %v6082
        %v7116 = vmax.f32 %v7115, %v6090
        %v7117 = vmax.f32 %v7116, %v6098
        %v7118 = vmax.f32 %v7117, %v6106
        %v7119 = vmax.f32 %v7118, %v6114
        %v7120 = vmax.f32 %v7119, %v6122
        %v7121 = vrot.slane %v7120, 4
        %v7122 = vmax.f32 %v7120, %v7121
        %v7123 = vrot.slane %v7122, 2
        %v7124 = vmax.f32 %v7122, %v7123
        %v7125 = vrot.slane %v7124, 1
        %v7126 = vmax.f32 %v7124, %v7125
        %v7127 = vmax.f32 %v6003, %v6011
        %v7128 = vmax.f32 %v7127, %v6019
        %v7129 = vmax.f32 %v7128, %v6027
        %v7130 = vmax.f32 %v7129, %v6035
        %v7131 = vmax.f32 %v7130, %v6043
        %v7132 = vmax.f32 %v7131, %v6051
        %v7133 = vmax.f32 %v7132, %v6059
        %v7134 = vmax.f32 %v7133, %v6067
        %v7135 = vmax.f32 %v7134, %v6075
        %v7136 = vmax.f32 %v7135, %v6083
        %v7137 = vmax.f32 %v7136, %v6091
        %v7138 = vmax.f32 %v7137, %v6099
        %v7139 = vmax.f32 %v7138, %v6107
        %v7140 = vmax.f32 %v7139, %v6115
        %v7141 = vmax.f32 %v7140, %v6123
        %v7142 = vrot.slane %v7141, 4
        %v7143 = vmax.f32 %v7141, %v7142
        %v7144 = vrot.slane %v7143, 2
        %v7145 = vmax.f32 %v7143, %v7144
        %v7146 = vrot.slane %v7145, 1
        %v7147 = vmax.f32 %v7145, %v7146
        %v7148 = vmax.f32 %v6004, %v6012
        %v7149 = vmax.f32 %v7148, %v6020
        %v7150 = vmax.f32 %v7149, %v6028
        %v7151 = vmax.f32 %v7150, %v6036
        %v7152 = vmax.f32 %v7151, %v6044
        %v7153 = vmax.f32 %v7152, %v6052
        %v7154 = vmax.f32 %v7153, %v6060
        %v7155 = vmax.f32 %v7154, %v6068
        %v7156 = vmax.f32 %v7155, %v6076
        %v7157 = vmax.f32 %v7156, %v6084
        %v7158 = vmax.f32 %v7157, %v6092
        %v7159 = vmax.f32 %v7158, %v6100
        %v7160 = vmax.f32 %v7159, %v6108
        %v7161 = vmax.f32 %v7160, %v6116
        %v7162 = vmax.f32 %v7161, %v6124
        %v7163 = vrot.slane %v7162, 4
        %v7164 = vmax.f32 %v7162, %v7163
        %v7165 = vrot.slane %v7164, 2
        %v7166 = vmax.f32 %v7164, %v7165
        %v7167 = vrot.slane %v7166, 1
        %v7168 = vmax.f32 %v7166, %v7167
        %v7169 = vmax.f32 %v6005, %v6013
        %v7170 = vmax.f32 %v7169, %v6021
        %v7171 = vmax.f32 %v7170, %v6029
        %v7172 = vmax.f32 %v7171, %v6037
        %v7173 = vmax.f32 %v7172, %v6045
        %v7174 = vmax.f32 %v7173, %v6053
        %v7175 = vmax.f32 %v7174, %v6061
        %v7176 = vmax.f32 %v7175, %v6069
        %v7177 = vmax.f32 %v7176, %v6077
        %v7178 = vmax.f32 %v7177, %v6085
        %v7179 = vmax.f32 %v7178, %v6093
        %v7180 = vmax.f32 %v7179, %v6101
        %v7181 = vmax.f32 %v7180, %v6109
        %v7182 = vmax.f32 %v7181, %v6117
        %v7183 = vmax.f32 %v7182, %v6125
        %v7184 = vrot.slane %v7183, 4
        %v7185 = vmax.f32 %v7183, %v7184
        %v7186 = vrot.slane %v7185, 2
        %v7187 = vmax.f32 %v7185, %v7186
        %v7188 = vrot.slane %v7187, 1
        %v7189 = vmax.f32 %v7187, %v7188
        %v7190 = vmax.f32 %v6006, %v6014
        %v7191 = vmax.f32 %v7190, %v6022
        %v7192 = vmax.f32 %v7191, %v6030
        %v7193 = vmax.f32 %v7192, %v6038
        %v7194 = vmax.f32 %v7193, %v6046
        %v7195 = vmax.f32 %v7194, %v6054
        %v7196 = vmax.f32 %v7195, %v6062
        %v7197 = vmax.f32 %v7196, %v6070
        %v7198 = vmax.f32 %v7197, %v6078
        %v7199 = vmax.f32 %v7198, %v6086
        %v7200 = vmax.f32 %v7199, %v6094
        %v7201 = vmax.f32 %v7200, %v6102
        %v7202 = vmax.f32 %v7201, %v6110
        %v7203 = vmax.f32 %v7202, %v6118
        %v7204 = vmax.f32 %v7203, %v6126
        %v7205 = vrot.slane %v7204, 4
        %v7206 = vmax.f32 %v7204, %v7205
        %v7207 = vrot.slane %v7206, 2
        %v7208 = vmax.f32 %v7206, %v7207
        %v7209 = vrot.slane %v7208, 1
        %v7210 = vmax.f32 %v7208, %v7209
        %v7211 = vmax.f32 %v6007, %v6015
        %v7212 = vmax.f32 %v7211, %v6023
        %v7213 = vmax.f32 %v7212, %v6031
        %v7214 = vmax.f32 %v7213, %v6039
        %v7215 = vmax.f32 %v7214, %v6047
        %v7216 = vmax.f32 %v7215, %v6055
        %v7217 = vmax.f32 %v7216, %v6063
        %v7218 = vmax.f32 %v7217, %v6071
        %v7219 = vmax.f32 %v7218, %v6079
        %v7220 = vmax.f32 %v7219, %v6087
        %v7221 = vmax.f32 %v7220, %v6095
        %v7222 = vmax.f32 %v7221, %v6103
        %v7223 = vmax.f32 %v7222, %v6111
        %v7224 = vmax.f32 %v7223, %v6119
        %v7225 = vmax.f32 %v7224, %v6127
        %v7226 = vrot.slane %v7225, 4
        %v7227 = vmax.f32 %v7225, %v7226
        %v7228 = vrot.slane %v7227, 2
        %v7229 = vmax.f32 %v7227, %v7228
        %v7230 = vrot.slane %v7229, 1
        %v7231 = vmax.f32 %v7229, %v7230
        %v7232 = vmax.f32 %v6008, %v6016
        %v7233 = vmax.f32 %v7232, %v6024
        %v7234 = vmax.f32 %v7233, %v6032
        %v7235 = vmax.f32 %v7234, %v6040
        %v7236 = vmax.f32 %v7235, %v6048
        %v7237 = vmax.f32 %v7236, %v6056
        %v7238 = vmax.f32 %v7237, %v6064
        %v7239 = vmax.f32 %v7238, %v6072
        %v7240 = vmax.f32 %v7239, %v6080
        %v7241 = vmax.f32 %v7240, %v6088
        %v7242 = vmax.f32 %v7241, %v6096
        %v7243 = vmax.f32 %v7242, %v6104
        %v7244 = vmax.f32 %v7243, %v6112
        %v7245 = vmax.f32 %v7244, %v6120
        %v7246 = vmax.f32 %v7245, %v6128
        %v7247 = vrot.slane %v7246, 4
        %v7248 = vmax.f32 %v7246, %v7247
        %v7249 = vrot.slane %v7248, 2
        %v7250 = vmax.f32 %v7248, %v7249
        %v7251 = vrot.slane %v7250, 1
        %v7252 = vmax.f32 %v7250, %v7251
        %v7253 = vmax.f32 %v6009, %v6017
        %v7254 = vmax.f32 %v7253, %v6025
        %v7255 = vmax.f32 %v7254, %v6033
        %v7256 = vmax.f32 %v7255, %v6041
        %v7257 = vmax.f32 %v7256, %v6049
        %v7258 = vmax.f32 %v7257, %v6057
        %v7259 = vmax.f32 %v7258, %v6065
        %v7260 = vmax.f32 %v7259, %v6073
        %v7261 = vmax.f32 %v7260, %v6081
        %v7262 = vmax.f32 %v7261, %v6089
        %v7263 = vmax.f32 %v7262, %v6097
        %v7264 = vmax.f32 %v7263, %v6105
        %v7265 = vmax.f32 %v7264, %v6113
        %v7266 = vmax.f32 %v7265, %v6121
        %v7267 = vmax.f32 %v7266, %v6129
        %v7268 = vrot.slane %v7267, 4
        %v7269 = vmax.f32 %v7267, %v7268
        %v7270 = vrot.slane %v7269, 2
        %v7271 = vmax.f32 %v7269, %v7270
        %v7272 = vrot.slane %v7271, 1
        %v7273 = vmax.f32 %v7271, %v7272
        %v7274 = vmax.f32 %v6130, %v6138
        %v7275 = vmax.f32 %v7274, %v6146
        %v7276 = vmax.f32 %v7275, %v6154
        %v7277 = vmax.f32 %v7276, %v6162
        %v7278 = vmax.f32 %v7277, %v6170
        %v7279 = vmax.f32 %v7278, %v6178
        %v7280 = vmax.f32 %v7279, %v6186
        %v7281 = vmax.f32 %v7280, %v6194
        %v7282 = vmax.f32 %v7281, %v6202
        %v7283 = vmax.f32 %v7282, %v6210
        %v7284 = vmax.f32 %v7283, %v6218
        %v7285 = vmax.f32 %v7284, %v6226
        %v7286 = vmax.f32 %v7285, %v6234
        %v7287 = vmax.f32 %v7286, %v6242
        %v7288 = vmax.f32 %v7287, %v6250
        %v7289 = vrot.slane %v7288, 4
        %v7290 = vmax.f32 %v7288, %v7289
        %v7291 = vrot.slane %v7290, 2
        %v7292 = vmax.f32 %v7290, %v7291
        %v7293 = vrot.slane %v7292, 1
        %v7294 = vmax.f32 %v7292, %v7293
        %v7295 = vmax.f32 %v6131, %v6139
        %v7296 = vmax.f32 %v7295, %v6147
        %v7297 = vmax.f32 %v7296, %v6155
        %v7298 = vmax.f32 %v7297, %v6163
        %v7299 = vmax.f32 %v7298, %v6171
        %v7300 = vmax.f32 %v7299, %v6179
        %v7301 = vmax.f32 %v7300, %v6187
        %v7302 = vmax.f32 %v7301, %v6195
        %v7303 = vmax.f32 %v7302, %v6203
        %v7304 = vmax.f32 %v7303, %v6211
        %v7305 = vmax.f32 %v7304, %v6219
        %v7306 = vmax.f32 %v7305, %v6227
        %v7307 = vmax.f32 %v7306, %v6235
        %v7308 = vmax.f32 %v7307, %v6243
        %v7309 = vmax.f32 %v7308, %v6251
        %v7310 = vrot.slane %v7309, 4
        %v7311 = vmax.f32 %v7309, %v7310
        %v7312 = vrot.slane %v7311, 2
        %v7313 = vmax.f32 %v7311, %v7312
        %v7314 = vrot.slane %v7313, 1
        %v7315 = vmax.f32 %v7313, %v7314
        %v7316 = vmax.f32 %v6132, %v6140
        %v7317 = vmax.f32 %v7316, %v6148
        %v7318 = vmax.f32 %v7317, %v6156
        %v7319 = vmax.f32 %v7318, %v6164
        %v7320 = vmax.f32 %v7319, %v6172
        %v7321 = vmax.f32 %v7320, %v6180
        %v7322 = vmax.f32 %v7321, %v6188
        %v7323 = vmax.f32 %v7322, %v6196
        %v7324 = vmax.f32 %v7323, %v6204
        %v7325 = vmax.f32 %v7324, %v6212
        %v7326 = vmax.f32 %v7325, %v6220
        %v7327 = vmax.f32 %v7326, %v6228
        %v7328 = vmax.f32 %v7327, %v6236
        %v7329 = vmax.f32 %v7328, %v6244
        %v7330 = vmax.f32 %v7329, %v6252
        %v7331 = vrot.slane %v7330, 4
        %v7332 = vmax.f32 %v7330, %v7331
        %v7333 = vrot.slane %v7332, 2
        %v7334 = vmax.f32 %v7332, %v7333
        %v7335 = vrot.slane %v7334, 1
        %v7336 = vmax.f32 %v7334, %v7335
        %v7337 = vmax.f32 %v6133, %v6141
        %v7338 = vmax.f32 %v7337, %v6149
        %v7339 = vmax.f32 %v7338, %v6157
        %v7340 = vmax.f32 %v7339, %v6165
        %v7341 = vmax.f32 %v7340, %v6173
        %v7342 = vmax.f32 %v7341, %v6181
        %v7343 = vmax.f32 %v7342, %v6189
        %v7344 = vmax.f32 %v7343, %v6197
        %v7345 = vmax.f32 %v7344, %v6205
        %v7346 = vmax.f32 %v7345, %v6213
        %v7347 = vmax.f32 %v7346, %v6221
        %v7348 = vmax.f32 %v7347, %v6229
        %v7349 = vmax.f32 %v7348, %v6237
        %v7350 = vmax.f32 %v7349, %v6245
        %v7351 = vmax.f32 %v7350, %v6253
        %v7352 = vrot.slane %v7351, 4
        %v7353 = vmax.f32 %v7351, %v7352
        %v7354 = vrot.slane %v7353, 2
        %v7355 = vmax.f32 %v7353, %v7354
        %v7356 = vrot.slane %v7355, 1
        %v7357 = vmax.f32 %v7355, %v7356
        %v7358 = vmax.f32 %v6134, %v6142
        %v7359 = vmax.f32 %v7358, %v6150
        %v7360 = vmax.f32 %v7359, %v6158
        %v7361 = vmax.f32 %v7360, %v6166
        %v7362 = vmax.f32 %v7361, %v6174
        %v7363 = vmax.f32 %v7362, %v6182
        %v7364 = vmax.f32 %v7363, %v6190
        %v7365 = vmax.f32 %v7364, %v6198
        %v7366 = vmax.f32 %v7365, %v6206
        %v7367 = vmax.f32 %v7366, %v6214
        %v7368 = vmax.f32 %v7367, %v6222
        %v7369 = vmax.f32 %v7368, %v6230
        %v7370 = vmax.f32 %v7369, %v6238
        %v7371 = vmax.f32 %v7370, %v6246
        %v7372 = vmax.f32 %v7371, %v6254
        %v7373 = vrot.slane %v7372, 4
        %v7374 = vmax.f32 %v7372, %v7373
        %v7375 = vrot.slane %v7374, 2
        %v7376 = vmax.f32 %v7374, %v7375
        %v7377 = vrot.slane %v7376, 1
        %v7378 = vmax.f32 %v7376, %v7377
        %v7379 = vmax.f32 %v6135, %v6143
        %v7380 = vmax.f32 %v7379, %v6151
        %v7381 = vmax.f32 %v7380, %v6159
        %v7382 = vmax.f32 %v7381, %v6167
        %v7383 = vmax.f32 %v7382, %v6175
        %v7384 = vmax.f32 %v7383, %v6183
        %v7385 = vmax.f32 %v7384, %v6191
        %v7386 = vmax.f32 %v7385, %v6199
        %v7387 = vmax.f32 %v7386, %v6207
        %v7388 = vmax.f32 %v7387, %v6215
        %v7389 = vmax.f32 %v7388, %v6223
        %v7390 = vmax.f32 %v7389, %v6231
        %v7391 = vmax.f32 %v7390, %v6239
        %v7392 = vmax.f32 %v7391, %v6247
        %v7393 = vmax.f32 %v7392, %v6255
        %v7394 = vrot.slane %v7393, 4
        %v7395 = vmax.f32 %v7393, %v7394
        %v7396 = vrot.slane %v7395, 2
        %v7397 = vmax.f32 %v7395, %v7396
        %v7398 = vrot.slane %v7397, 1
        %v7399 = vmax.f32 %v7397, %v7398
        %v7400 = vmax.f32 %v6136, %v6144
        %v7401 = vmax.f32 %v7400, %v6152
        %v7402 = vmax.f32 %v7401, %v6160
        %v7403 = vmax.f32 %v7402, %v6168
        %v7404 = vmax.f32 %v7403, %v6176
        %v7405 = vmax.f32 %v7404, %v6184
        %v7406 = vmax.f32 %v7405, %v6192
        %v7407 = vmax.f32 %v7406, %v6200
        %v7408 = vmax.f32 %v7407, %v6208
        %v7409 = vmax.f32 %v7408, %v6216
        %v7410 = vmax.f32 %v7409, %v6224
        %v7411 = vmax.f32 %v7410, %v6232
        %v7412 = vmax.f32 %v7411, %v6240
        %v7413 = vmax.f32 %v7412, %v6248
        %v7414 = vmax.f32 %v7413, %v6256
        %v7415 = vrot.slane %v7414, 4
        %v7416 = vmax.f32 %v7414, %v7415
        %v7417 = vrot.slane %v7416, 2
        %v7418 = vmax.f32 %v7416, %v7417
        %v7419 = vrot.slane %v7418, 1
        %v7420 = vmax.f32 %v7418, %v7419
        %v7421 = vmax.f32 %v6137, %v6145
        %v7422 = vmax.f32 %v7421, %v6153
        %v7423 = vmax.f32 %v7422, %v6161
        %v7424 = vmax.f32 %v7423, %v6169
        %v7425 = vmax.f32 %v7424, %v6177
        %v7426 = vmax.f32 %v7425, %v6185
        %v7427 = vmax.f32 %v7426, %v6193
        %v7428 = vmax.f32 %v7427, %v6201
        %v7429 = vmax.f32 %v7428, %v6209
        %v7430 = vmax.f32 %v7429, %v6217
        %v7431 = vmax.f32 %v7430, %v6225
        %v7432 = vmax.f32 %v7431, %v6233
        %v7433 = vmax.f32 %v7432, %v6241
        %v7434 = vmax.f32 %v7433, %v6249
        %v7435 = vmax.f32 %v7434, %v6257
        %v7436 = vrot.slane %v7435, 4
        %v7437 = vmax.f32 %v7435, %v7436
        %v7438 = vrot.slane %v7437, 2
        %v7439 = vmax.f32 %v7437, %v7438
        %v7440 = vrot.slane %v7439, 1
        %v7441 = vmax.f32 %v7439, %v7440
        %v7442 = vmax.f32 %v6258, %v6266
        %v7443 = vmax.f32 %v7442, %v6274
        %v7444 = vmax.f32 %v7443, %v6282
        %v7445 = vmax.f32 %v7444, %v6290
        %v7446 = vmax.f32 %v7445, %v6298
        %v7447 = vmax.f32 %v7446, %v6306
        %v7448 = vmax.f32 %v7447, %v6314
        %v7449 = vmax.f32 %v7448, %v6322
        %v7450 = vmax.f32 %v7449, %v6330
        %v7451 = vmax.f32 %v7450, %v6338
        %v7452 = vmax.f32 %v7451, %v6346
        %v7453 = vmax.f32 %v7452, %v6354
        %v7454 = vmax.f32 %v7453, %v6362
        %v7455 = vmax.f32 %v7454, %v6370
        %v7456 = vmax.f32 %v7455, %v6378
        %v7457 = vrot.slane %v7456, 4
        %v7458 = vmax.f32 %v7456, %v7457
        %v7459 = vrot.slane %v7458, 2
        %v7460 = vmax.f32 %v7458, %v7459
        %v7461 = vrot.slane %v7460, 1
        %v7462 = vmax.f32 %v7460, %v7461
        %v7463 = vmax.f32 %v6259, %v6267
        %v7464 = vmax.f32 %v7463, %v6275
        %v7465 = vmax.f32 %v7464, %v6283
        %v7466 = vmax.f32 %v7465, %v6291
        %v7467 = vmax.f32 %v7466, %v6299
        %v7468 = vmax.f32 %v7467, %v6307
        %v7469 = vmax.f32 %v7468, %v6315
        %v7470 = vmax.f32 %v7469, %v6323
        %v7471 = vmax.f32 %v7470, %v6331
        %v7472 = vmax.f32 %v7471, %v6339
        %v7473 = vmax.f32 %v7472, %v6347
        %v7474 = vmax.f32 %v7473, %v6355
        %v7475 = vmax.f32 %v7474, %v6363
        %v7476 = vmax.f32 %v7475, %v6371
        %v7477 = vmax.f32 %v7476, %v6379
        %v7478 = vrot.slane %v7477, 4
        %v7479 = vmax.f32 %v7477, %v7478
        %v7480 = vrot.slane %v7479, 2
        %v7481 = vmax.f32 %v7479, %v7480
        %v7482 = vrot.slane %v7481, 1
        %v7483 = vmax.f32 %v7481, %v7482
        %v7484 = vmax.f32 %v6260, %v6268
        %v7485 = vmax.f32 %v7484, %v6276
        %v7486 = vmax.f32 %v7485, %v6284
        %v7487 = vmax.f32 %v7486, %v6292
        %v7488 = vmax.f32 %v7487, %v6300
        %v7489 = vmax.f32 %v7488, %v6308
        %v7490 = vmax.f32 %v7489, %v6316
        %v7491 = vmax.f32 %v7490, %v6324
        %v7492 = vmax.f32 %v7491, %v6332
        %v7493 = vmax.f32 %v7492, %v6340
        %v7494 = vmax.f32 %v7493, %v6348
        %v7495 = vmax.f32 %v7494, %v6356
        %v7496 = vmax.f32 %v7495, %v6364
        %v7497 = vmax.f32 %v7496, %v6372
        %v7498 = vmax.f32 %v7497, %v6380
        %v7499 = vrot.slane %v7498, 4
        %v7500 = vmax.f32 %v7498, %v7499
        %v7501 = vrot.slane %v7500, 2
        %v7502 = vmax.f32 %v7500, %v7501
        %v7503 = vrot.slane %v7502, 1
        %v7504 = vmax.f32 %v7502, %v7503
        %v7505 = vmax.f32 %v6261, %v6269
        %v7506 = vmax.f32 %v7505, %v6277
        %v7507 = vmax.f32 %v7506, %v6285
        %v7508 = vmax.f32 %v7507, %v6293
        %v7509 = vmax.f32 %v7508, %v6301
        %v7510 = vmax.f32 %v7509, %v6309
        %v7511 = vmax.f32 %v7510, %v6317
        %v7512 = vmax.f32 %v7511, %v6325
        %v7513 = vmax.f32 %v7512, %v6333
        %v7514 = vmax.f32 %v7513, %v6341
        %v7515 = vmax.f32 %v7514, %v6349
        %v7516 = vmax.f32 %v7515, %v6357
        %v7517 = vmax.f32 %v7516, %v6365
        %v7518 = vmax.f32 %v7517, %v6373
        %v7519 = vmax.f32 %v7518, %v6381
        %v7520 = vrot.slane %v7519, 4
        %v7521 = vmax.f32 %v7519, %v7520
        %v7522 = vrot.slane %v7521, 2
        %v7523 = vmax.f32 %v7521, %v7522
        %v7524 = vrot.slane %v7523, 1
        %v7525 = vmax.f32 %v7523, %v7524
        %v7526 = vmax.f32 %v6262, %v6270
        %v7527 = vmax.f32 %v7526, %v6278
        %v7528 = vmax.f32 %v7527, %v6286
        %v7529 = vmax.f32 %v7528, %v6294
        %v7530 = vmax.f32 %v7529, %v6302
        %v7531 = vmax.f32 %v7530, %v6310
        %v7532 = vmax.f32 %v7531, %v6318
        %v7533 = vmax.f32 %v7532, %v6326
        %v7534 = vmax.f32 %v7533, %v6334
        %v7535 = vmax.f32 %v7534, %v6342
        %v7536 = vmax.f32 %v7535, %v6350
        %v7537 = vmax.f32 %v7536, %v6358
        %v7538 = vmax.f32 %v7537, %v6366
        %v7539 = vmax.f32 %v7538, %v6374
        %v7540 = vmax.f32 %v7539, %v6382
        %v7541 = vrot.slane %v7540, 4
        %v7542 = vmax.f32 %v7540, %v7541
        %v7543 = vrot.slane %v7542, 2
        %v7544 = vmax.f32 %v7542, %v7543
        %v7545 = vrot.slane %v7544, 1
        %v7546 = vmax.f32 %v7544, %v7545
        %v7547 = vmax.f32 %v6263, %v6271
        %v7548 = vmax.f32 %v7547, %v6279
        %v7549 = vmax.f32 %v7548, %v6287
        %v7550 = vmax.f32 %v7549, %v6295
        %v7551 = vmax.f32 %v7550, %v6303
        %v7552 = vmax.f32 %v7551, %v6311
        %v7553 = vmax.f32 %v7552, %v6319
        %v7554 = vmax.f32 %v7553, %v6327
        %v7555 = vmax.f32 %v7554, %v6335
        %v7556 = vmax.f32 %v7555, %v6343
        %v7557 = vmax.f32 %v7556, %v6351
        %v7558 = vmax.f32 %v7557, %v6359
        %v7559 = vmax.f32 %v7558, %v6367
        %v7560 = vmax.f32 %v7559, %v6375
        %v7561 = vmax.f32 %v7560, %v6383
        %v7562 = vrot.slane %v7561, 4
        %v7563 = vmax.f32 %v7561, %v7562
        %v7564 = vrot.slane %v7563, 2
        %v7565 = vmax.f32 %v7563, %v7564
        %v7566 = vrot.slane %v7565, 1
        %v7567 = vmax.f32 %v7565, %v7566
        %v7568 = vmax.f32 %v6264, %v6272
        %v7569 = vmax.f32 %v7568, %v6280
        %v7570 = vmax.f32 %v7569, %v6288
        %v7571 = vmax.f32 %v7570, %v6296
        %v7572 = vmax.f32 %v7571, %v6304
        %v7573 = vmax.f32 %v7572, %v6312
        %v7574 = vmax.f32 %v7573, %v6320
        %v7575 = vmax.f32 %v7574, %v6328
        %v7576 = vmax.f32 %v7575, %v6336
        %v7577 = vmax.f32 %v7576, %v6344
        %v7578 = vmax.f32 %v7577, %v6352
        %v7579 = vmax.f32 %v7578, %v6360
        %v7580 = vmax.f32 %v7579, %v6368
        %v7581 = vmax.f32 %v7580, %v6376
        %v7582 = vmax.f32 %v7581, %v6384
        %v7583 = vrot.slane %v7582, 4
        %v7584 = vmax.f32 %v7582, %v7583
        %v7585 = vrot.slane %v7584, 2
        %v7586 = vmax.f32 %v7584, %v7585
        %v7587 = vrot.slane %v7586, 1
        %v7588 = vmax.f32 %v7586, %v7587
        %v7589 = vmax.f32 %v6265, %v6273
        %v7590 = vmax.f32 %v7589, %v6281
        %v7591 = vmax.f32 %v7590, %v6289
        %v7592 = vmax.f32 %v7591, %v6297
        %v7593 = vmax.f32 %v7592, %v6305
        %v7594 = vmax.f32 %v7593, %v6313
        %v7595 = vmax.f32 %v7594, %v6321
        %v7596 = vmax.f32 %v7595, %v6329
        %v7597 = vmax.f32 %v7596, %v6337
        %v7598 = vmax.f32 %v7597, %v6345
        %v7599 = vmax.f32 %v7598, %v6353
        %v7600 = vmax.f32 %v7599, %v6361
        %v7601 = vmax.f32 %v7600, %v6369
        %v7602 = vmax.f32 %v7601, %v6377
        %v7603 = vmax.f32 %v7602, %v6385
        %v7604 = vrot.slane %v7603, 4
        %v7605 = vmax.f32 %v7603, %v7604
        %v7606 = vrot.slane %v7605, 2
        %v7607 = vmax.f32 %v7605, %v7606
        %v7608 = vrot.slane %v7607, 1
        %v7609 = vmax.f32 %v7607, %v7608
        %v7610 = vmax.f32 %v6386, %v6394
        %v7611 = vmax.f32 %v7610, %v6402
        %v7612 = vmax.f32 %v7611, %v6410
        %v7613 = vmax.f32 %v7612, %v6418
        %v7614 = vmax.f32 %v7613, %v6426
        %v7615 = vmax.f32 %v7614, %v6434
        %v7616 = vmax.f32 %v7615, %v6442
        %v7617 = vmax.f32 %v7616, %v6450
        %v7618 = vmax.f32 %v7617, %v6458
        %v7619 = vmax.f32 %v7618, %v6466
        %v7620 = vmax.f32 %v7619, %v6474
        %v7621 = vmax.f32 %v7620, %v6482
        %v7622 = vmax.f32 %v7621, %v6490
        %v7623 = vmax.f32 %v7622, %v6498
        %v7624 = vmax.f32 %v7623, %v6506
        %v7625 = vrot.slane %v7624, 4
        %v7626 = vmax.f32 %v7624, %v7625
        %v7627 = vrot.slane %v7626, 2
        %v7628 = vmax.f32 %v7626, %v7627
        %v7629 = vrot.slane %v7628, 1
        %v7630 = vmax.f32 %v7628, %v7629
        %v7631 = vmax.f32 %v6387, %v6395
        %v7632 = vmax.f32 %v7631, %v6403
        %v7633 = vmax.f32 %v7632, %v6411
        %v7634 = vmax.f32 %v7633, %v6419
        %v7635 = vmax.f32 %v7634, %v6427
        %v7636 = vmax.f32 %v7635, %v6435
        %v7637 = vmax.f32 %v7636, %v6443
        %v7638 = vmax.f32 %v7637, %v6451
        %v7639 = vmax.f32 %v7638, %v6459
        %v7640 = vmax.f32 %v7639, %v6467
        %v7641 = vmax.f32 %v7640, %v6475
        %v7642 = vmax.f32 %v7641, %v6483
        %v7643 = vmax.f32 %v7642, %v6491
        %v7644 = vmax.f32 %v7643, %v6499
        %v7645 = vmax.f32 %v7644, %v6507
        %v7646 = vrot.slane %v7645, 4
        %v7647 = vmax.f32 %v7645, %v7646
        %v7648 = vrot.slane %v7647, 2
        %v7649 = vmax.f32 %v7647, %v7648
        %v7650 = vrot.slane %v7649, 1
        %v7651 = vmax.f32 %v7649, %v7650
        %v7652 = vmax.f32 %v6388, %v6396
        %v7653 = vmax.f32 %v7652, %v6404
        %v7654 = vmax.f32 %v7653, %v6412
        %v7655 = vmax.f32 %v7654, %v6420
        %v7656 = vmax.f32 %v7655, %v6428
        %v7657 = vmax.f32 %v7656, %v6436
        %v7658 = vmax.f32 %v7657, %v6444
        %v7659 = vmax.f32 %v7658, %v6452
        %v7660 = vmax.f32 %v7659, %v6460
        %v7661 = vmax.f32 %v7660, %v6468
        %v7662 = vmax.f32 %v7661, %v6476
        %v7663 = vmax.f32 %v7662, %v6484
        %v7664 = vmax.f32 %v7663, %v6492
        %v7665 = vmax.f32 %v7664, %v6500
        %v7666 = vmax.f32 %v7665, %v6508
        %v7667 = vrot.slane %v7666, 4
        %v7668 = vmax.f32 %v7666, %v7667
        %v7669 = vrot.slane %v7668, 2
        %v7670 = vmax.f32 %v7668, %v7669
        %v7671 = vrot.slane %v7670, 1
        %v7672 = vmax.f32 %v7670, %v7671
        %v7673 = vmax.f32 %v6389, %v6397
        %v7674 = vmax.f32 %v7673, %v6405
        %v7675 = vmax.f32 %v7674, %v6413
        %v7676 = vmax.f32 %v7675, %v6421
        %v7677 = vmax.f32 %v7676, %v6429
        %v7678 = vmax.f32 %v7677, %v6437
        %v7679 = vmax.f32 %v7678, %v6445
        %v7680 = vmax.f32 %v7679, %v6453
        %v7681 = vmax.f32 %v7680, %v6461
        %v7682 = vmax.f32 %v7681, %v6469
        %v7683 = vmax.f32 %v7682, %v6477
        %v7684 = vmax.f32 %v7683, %v6485
        %v7685 = vmax.f32 %v7684, %v6493
        %v7686 = vmax.f32 %v7685, %v6501
        %v7687 = vmax.f32 %v7686, %v6509
        %v7688 = vrot.slane %v7687, 4
        %v7689 = vmax.f32 %v7687, %v7688
        %v7690 = vrot.slane %v7689, 2
        %v7691 = vmax.f32 %v7689, %v7690
        %v7692 = vrot.slane %v7691, 1
        %v7693 = vmax.f32 %v7691, %v7692
        %v7694 = vmax.f32 %v6390, %v6398
        %v7695 = vmax.f32 %v7694, %v6406
        %v7696 = vmax.f32 %v7695, %v6414
        %v7697 = vmax.f32 %v7696, %v6422
        %v7698 = vmax.f32 %v7697, %v6430
        %v7699 = vmax.f32 %v7698, %v6438
        %v7700 = vmax.f32 %v7699, %v6446
        %v7701 = vmax.f32 %v7700, %v6454
        %v7702 = vmax.f32 %v7701, %v6462
        %v7703 = vmax.f32 %v7702, %v6470
        %v7704 = vmax.f32 %v7703, %v6478
        %v7705 = vmax.f32 %v7704, %v6486
        %v7706 = vmax.f32 %v7705, %v6494
        %v7707 = vmax.f32 %v7706, %v6502
        %v7708 = vmax.f32 %v7707, %v6510
        %v7709 = vrot.slane %v7708, 4
        %v7710 = vmax.f32 %v7708, %v7709
        %v7711 = vrot.slane %v7710, 2
        %v7712 = vmax.f32 %v7710, %v7711
        %v7713 = vrot.slane %v7712, 1
        %v7714 = vmax.f32 %v7712, %v7713
        %v7715 = vmax.f32 %v6391, %v6399
        %v7716 = vmax.f32 %v7715, %v6407
        %v7717 = vmax.f32 %v7716, %v6415
        %v7718 = vmax.f32 %v7717, %v6423
        %v7719 = vmax.f32 %v7718, %v6431
        %v7720 = vmax.f32 %v7719, %v6439
        %v7721 = vmax.f32 %v7720, %v6447
        %v7722 = vmax.f32 %v7721, %v6455
        %v7723 = vmax.f32 %v7722, %v6463
        %v7724 = vmax.f32 %v7723, %v6471
        %v7725 = vmax.f32 %v7724, %v6479
        %v7726 = vmax.f32 %v7725, %v6487
        %v7727 = vmax.f32 %v7726, %v6495
        %v7728 = vmax.f32 %v7727, %v6503
        %v7729 = vmax.f32 %v7728, %v6511
        %v7730 = vrot.slane %v7729, 4
        %v7731 = vmax.f32 %v7729, %v7730
        %v7732 = vrot.slane %v7731, 2
        %v7733 = vmax.f32 %v7731, %v7732
        %v7734 = vrot.slane %v7733, 1
        %v7735 = vmax.f32 %v7733, %v7734
        %v7736 = vmax.f32 %v6392, %v6400
        %v7737 = vmax.f32 %v7736, %v6408
        %v7738 = vmax.f32 %v7737, %v6416
        %v7739 = vmax.f32 %v7738, %v6424
        %v7740 = vmax.f32 %v7739, %v6432
        %v7741 = vmax.f32 %v7740, %v6440
        %v7742 = vmax.f32 %v7741, %v6448
        %v7743 = vmax.f32 %v7742, %v6456
        %v7744 = vmax.f32 %v7743, %v6464
        %v7745 = vmax.f32 %v7744, %v6472
        %v7746 = vmax.f32 %v7745, %v6480
        %v7747 = vmax.f32 %v7746, %v6488
        %v7748 = vmax.f32 %v7747, %v6496
        %v7749 = vmax.f32 %v7748, %v6504
        %v7750 = vmax.f32 %v7749, %v6512
        %v7751 = vrot.slane %v7750, 4
        %v7752 = vmax.f32 %v7750, %v7751
        %v7753 = vrot.slane %v7752, 2
        %v7754 = vmax.f32 %v7752, %v7753
        %v7755 = vrot.slane %v7754, 1
        %v7756 = vmax.f32 %v7754, %v7755
        %v7757 = vmax.f32 %v6393, %v6401
        %v7758 = vmax.f32 %v7757, %v6409
        %v7759 = vmax.f32 %v7758, %v6417
        %v7760 = vmax.f32 %v7759, %v6425
        %v7761 = vmax.f32 %v7760, %v6433
        %v7762 = vmax.f32 %v7761, %v6441
        %v7763 = vmax.f32 %v7762, %v6449
        %v7764 = vmax.f32 %v7763, %v6457
        %v7765 = vmax.f32 %v7764, %v6465
        %v7766 = vmax.f32 %v7765, %v6473
        %v7767 = vmax.f32 %v7766, %v6481
        %v7768 = vmax.f32 %v7767, %v6489
        %v7769 = vmax.f32 %v7768, %v6497
        %v7770 = vmax.f32 %v7769, %v6505
        %v7771 = vmax.f32 %v7770, %v6513
        %v7772 = vrot.slane %v7771, 4
        %v7773 = vmax.f32 %v7771, %v7772
        %v7774 = vrot.slane %v7773, 2
        %v7775 = vmax.f32 %v7773, %v7774
        %v7776 = vrot.slane %v7775, 1
        %v7777 = vmax.f32 %v7775, %v7776
        %v7778 = vmax.f32 %v6514, %v6522
        %v7779 = vmax.f32 %v7778, %v6530
        %v7780 = vmax.f32 %v7779, %v6538
        %v7781 = vmax.f32 %v7780, %v6546
        %v7782 = vmax.f32 %v7781, %v6554
        %v7783 = vmax.f32 %v7782, %v6562
        %v7784 = vmax.f32 %v7783, %v6570
        %v7785 = vmax.f32 %v7784, %v6578
        %v7786 = vmax.f32 %v7785, %v6586
        %v7787 = vmax.f32 %v7786, %v6594
        %v7788 = vmax.f32 %v7787, %v6602
        %v7789 = vmax.f32 %v7788, %v6610
        %v7790 = vmax.f32 %v7789, %v6618
        %v7791 = vmax.f32 %v7790, %v6626
        %v7792 = vmax.f32 %v7791, %v6634
        %v7793 = vrot.slane %v7792, 4
        %v7794 = vmax.f32 %v7792, %v7793
        %v7795 = vrot.slane %v7794, 2
        %v7796 = vmax.f32 %v7794, %v7795
        %v7797 = vrot.slane %v7796, 1
        %v7798 = vmax.f32 %v7796, %v7797
        %v7799 = vmax.f32 %v6515, %v6523
        %v7800 = vmax.f32 %v7799, %v6531
        %v7801 = vmax.f32 %v7800, %v6539
        %v7802 = vmax.f32 %v7801, %v6547
        %v7803 = vmax.f32 %v7802, %v6555
        %v7804 = vmax.f32 %v7803, %v6563
        %v7805 = vmax.f32 %v7804, %v6571
        %v7806 = vmax.f32 %v7805, %v6579
        %v7807 = vmax.f32 %v7806, %v6587
        %v7808 = vmax.f32 %v7807, %v6595
        %v7809 = vmax.f32 %v7808, %v6603
        %v7810 = vmax.f32 %v7809, %v6611
        %v7811 = vmax.f32 %v7810, %v6619
        %v7812 = vmax.f32 %v7811, %v6627
        %v7813 = vmax.f32 %v7812, %v6635
        %v7814 = vrot.slane %v7813, 4
        %v7815 = vmax.f32 %v7813, %v7814
        %v7816 = vrot.slane %v7815, 2
        %v7817 = vmax.f32 %v7815, %v7816
        %v7818 = vrot.slane %v7817, 1
        %v7819 = vmax.f32 %v7817, %v7818
        %v7820 = vmax.f32 %v6516, %v6524
        %v7821 = vmax.f32 %v7820, %v6532
        %v7822 = vmax.f32 %v7821, %v6540
        %v7823 = vmax.f32 %v7822, %v6548
        %v7824 = vmax.f32 %v7823, %v6556
        %v7825 = vmax.f32 %v7824, %v6564
        %v7826 = vmax.f32 %v7825, %v6572
        %v7827 = vmax.f32 %v7826, %v6580
        %v7828 = vmax.f32 %v7827, %v6588
        %v7829 = vmax.f32 %v7828, %v6596
        %v7830 = vmax.f32 %v7829, %v6604
        %v7831 = vmax.f32 %v7830, %v6612
        %v7832 = vmax.f32 %v7831, %v6620
        %v7833 = vmax.f32 %v7832, %v6628
        %v7834 = vmax.f32 %v7833, %v6636
        %v7835 = vrot.slane %v7834, 4
        %v7836 = vmax.f32 %v7834, %v7835
        %v7837 = vrot.slane %v7836, 2
        %v7838 = vmax.f32 %v7836, %v7837
        %v7839 = vrot.slane %v7838, 1
        %v7840 = vmax.f32 %v7838, %v7839
        %v7841 = vmax.f32 %v6517, %v6525
        %v7842 = vmax.f32 %v7841, %v6533
        %v7843 = vmax.f32 %v7842, %v6541
        %v7844 = vmax.f32 %v7843, %v6549
        %v7845 = vmax.f32 %v7844, %v6557
        %v7846 = vmax.f32 %v7845, %v6565
        %v7847 = vmax.f32 %v7846, %v6573
        %v7848 = vmax.f32 %v7847, %v6581
        %v7849 = vmax.f32 %v7848, %v6589
        %v7850 = vmax.f32 %v7849, %v6597
        %v7851 = vmax.f32 %v7850, %v6605
        %v7852 = vmax.f32 %v7851, %v6613
        %v7853 = vmax.f32 %v7852, %v6621
        %v7854 = vmax.f32 %v7853, %v6629
        %v7855 = vmax.f32 %v7854, %v6637
        %v7856 = vrot.slane %v7855, 4
        %v7857 = vmax.f32 %v7855, %v7856
        %v7858 = vrot.slane %v7857, 2
        %v7859 = vmax.f32 %v7857, %v7858
        %v7860 = vrot.slane %v7859, 1
        %v7861 = vmax.f32 %v7859, %v7860
        %v7862 = vmax.f32 %v6518, %v6526
        %v7863 = vmax.f32 %v7862, %v6534
        %v7864 = vmax.f32 %v7863, %v6542
        %v7865 = vmax.f32 %v7864, %v6550
        %v7866 = vmax.f32 %v7865, %v6558
        %v7867 = vmax.f32 %v7866, %v6566
        %v7868 = vmax.f32 %v7867, %v6574
        %v7869 = vmax.f32 %v7868, %v6582
        %v7870 = vmax.f32 %v7869, %v6590
        %v7871 = vmax.f32 %v7870, %v6598
        %v7872 = vmax.f32 %v7871, %v6606
        %v7873 = vmax.f32 %v7872, %v6614
        %v7874 = vmax.f32 %v7873, %v6622
        %v7875 = vmax.f32 %v7874, %v6630
        %v7876 = vmax.f32 %v7875, %v6638
        %v7877 = vrot.slane %v7876, 4
        %v7878 = vmax.f32 %v7876, %v7877
        %v7879 = vrot.slane %v7878, 2
        %v7880 = vmax.f32 %v7878, %v7879
        %v7881 = vrot.slane %v7880, 1
        %v7882 = vmax.f32 %v7880, %v7881
        %v7883 = vmax.f32 %v6519, %v6527
        %v7884 = vmax.f32 %v7883, %v6535
        %v7885 = vmax.f32 %v7884, %v6543
        %v7886 = vmax.f32 %v7885, %v6551
        %v7887 = vmax.f32 %v7886, %v6559
        %v7888 = vmax.f32 %v7887, %v6567
        %v7889 = vmax.f32 %v7888, %v6575
        %v7890 = vmax.f32 %v7889, %v6583
        %v7891 = vmax.f32 %v7890, %v6591
        %v7892 = vmax.f32 %v7891, %v6599
        %v7893 = vmax.f32 %v7892, %v6607
        %v7894 = vmax.f32 %v7893, %v6615
        %v7895 = vmax.f32 %v7894, %v6623
        %v7896 = vmax.f32 %v7895, %v6631
        %v7897 = vmax.f32 %v7896, %v6639
        %v7898 = vrot.slane %v7897, 4
        %v7899 = vmax.f32 %v7897, %v7898
        %v7900 = vrot.slane %v7899, 2
        %v7901 = vmax.f32 %v7899, %v7900
        %v7902 = vrot.slane %v7901, 1
        %v7903 = vmax.f32 %v7901, %v7902
        %v7904 = vmax.f32 %v6520, %v6528
        %v7905 = vmax.f32 %v7904, %v6536
        %v7906 = vmax.f32 %v7905, %v6544
        %v7907 = vmax.f32 %v7906, %v6552
        %v7908 = vmax.f32 %v7907, %v6560
        %v7909 = vmax.f32 %v7908, %v6568
        %v7910 = vmax.f32 %v7909, %v6576
        %v7911 = vmax.f32 %v7910, %v6584
        %v7912 = vmax.f32 %v7911, %v6592
        %v7913 = vmax.f32 %v7912, %v6600
        %v7914 = vmax.f32 %v7913, %v6608
        %v7915 = vmax.f32 %v7914, %v6616
        %v7916 = vmax.f32 %v7915, %v6624
        %v7917 = vmax.f32 %v7916, %v6632
        %v7918 = vmax.f32 %v7917, %v6640
        %v7919 = vrot.slane %v7918, 4
        %v7920 = vmax.f32 %v7918, %v7919
        %v7921 = vrot.slane %v7920, 2
        %v7922 = vmax.f32 %v7920, %v7921
        %v7923 = vrot.slane %v7922, 1
        %v7924 = vmax.f32 %v7922, %v7923
        %v7925 = vmax.f32 %v6521, %v6529
        %v7926 = vmax.f32 %v7925, %v6537
        %v7927 = vmax.f32 %v7926, %v6545
        %v7928 = vmax.f32 %v7927, %v6553
        %v7929 = vmax.f32 %v7928, %v6561
        %v7930 = vmax.f32 %v7929, %v6569
        %v7931 = vmax.f32 %v7930, %v6577
        %v7932 = vmax.f32 %v7931, %v6585
        %v7933 = vmax.f32 %v7932, %v6593
        %v7934 = vmax.f32 %v7933, %v6601
        %v7935 = vmax.f32 %v7934, %v6609
        %v7936 = vmax.f32 %v7935, %v6617
        %v7937 = vmax.f32 %v7936, %v6625
        %v7938 = vmax.f32 %v7937, %v6633
        %v7939 = vmax.f32 %v7938, %v6641
        %v7940 = vrot.slane %v7939, 4
        %v7941 = vmax.f32 %v7939, %v7940
        %v7942 = vrot.slane %v7941, 2
        %v7943 = vmax.f32 %v7941, %v7942
        %v7944 = vrot.slane %v7943, 1
        %v7945 = vmax.f32 %v7943, %v7944
        %v7946 = vmax.f32 %v6642, %v6650
        %v7947 = vmax.f32 %v7946, %v6658
        %v7948 = vmax.f32 %v7947, %v6666
        %v7949 = vmax.f32 %v7948, %v6674
        %v7950 = vmax.f32 %v7949, %v6682
        %v7951 = vmax.f32 %v7950, %v6690
        %v7952 = vmax.f32 %v7951, %v6698
        %v7953 = vmax.f32 %v7952, %v6706
        %v7954 = vmax.f32 %v7953, %v6714
        %v7955 = vmax.f32 %v7954, %v6722
        %v7956 = vmax.f32 %v7955, %v6730
        %v7957 = vmax.f32 %v7956, %v6738
        %v7958 = vmax.f32 %v7957, %v6746
        %v7959 = vmax.f32 %v7958, %v6754
        %v7960 = vmax.f32 %v7959, %v6762
        %v7961 = vrot.slane %v7960, 4
        %v7962 = vmax.f32 %v7960, %v7961
        %v7963 = vrot.slane %v7962, 2
        %v7964 = vmax.f32 %v7962, %v7963
        %v7965 = vrot.slane %v7964, 1
        %v7966 = vmax.f32 %v7964, %v7965
        %v7967 = vmax.f32 %v6643, %v6651
        %v7968 = vmax.f32 %v7967, %v6659
        %v7969 = vmax.f32 %v7968, %v6667
        %v7970 = vmax.f32 %v7969, %v6675
        %v7971 = vmax.f32 %v7970, %v6683
        %v7972 = vmax.f32 %v7971, %v6691
        %v7973 = vmax.f32 %v7972, %v6699
        %v7974 = vmax.f32 %v7973, %v6707
        %v7975 = vmax.f32 %v7974, %v6715
        %v7976 = vmax.f32 %v7975, %v6723
        %v7977 = vmax.f32 %v7976, %v6731
        %v7978 = vmax.f32 %v7977, %v6739
        %v7979 = vmax.f32 %v7978, %v6747
        %v7980 = vmax.f32 %v7979, %v6755
        %v7981 = vmax.f32 %v7980, %v6763
        %v7982 = vrot.slane %v7981, 4
        %v7983 = vmax.f32 %v7981, %v7982
        %v7984 = vrot.slane %v7983, 2
        %v7985 = vmax.f32 %v7983, %v7984
        %v7986 = vrot.slane %v7985, 1
        %v7987 = vmax.f32 %v7985, %v7986
        %v7988 = vmax.f32 %v6644, %v6652
        %v7989 = vmax.f32 %v7988, %v6660
        %v7990 = vmax.f32 %v7989, %v6668
        %v7991 = vmax.f32 %v7990, %v6676
        %v7992 = vmax.f32 %v7991, %v6684
        %v7993 = vmax.f32 %v7992, %v6692
        %v7994 = vmax.f32 %v7993, %v6700
        %v7995 = vmax.f32 %v7994, %v6708
        %v7996 = vmax.f32 %v7995, %v6716
        %v7997 = vmax.f32 %v7996, %v6724
        %v7998 = vmax.f32 %v7997, %v6732
        %v7999 = vmax.f32 %v7998, %v6740
        %v8000 = vmax.f32 %v7999, %v6748
        %v8001 = vmax.f32 %v8000, %v6756
        %v8002 = vmax.f32 %v8001, %v6764
        %v8003 = vrot.slane %v8002, 4
        %v8004 = vmax.f32 %v8002, %v8003
        %v8005 = vrot.slane %v8004, 2
        %v8006 = vmax.f32 %v8004, %v8005
        %v8007 = vrot.slane %v8006, 1
        %v8008 = vmax.f32 %v8006, %v8007
        %v8009 = vmax.f32 %v6645, %v6653
        %v8010 = vmax.f32 %v8009, %v6661
        %v8011 = vmax.f32 %v8010, %v6669
        %v8012 = vmax.f32 %v8011, %v6677
        %v8013 = vmax.f32 %v8012, %v6685
        %v8014 = vmax.f32 %v8013, %v6693
        %v8015 = vmax.f32 %v8014, %v6701
        %v8016 = vmax.f32 %v8015, %v6709
        %v8017 = vmax.f32 %v8016, %v6717
        %v8018 = vmax.f32 %v8017, %v6725
        %v8019 = vmax.f32 %v8018, %v6733
        %v8020 = vmax.f32 %v8019, %v6741
        %v8021 = vmax.f32 %v8020, %v6749
        %v8022 = vmax.f32 %v8021, %v6757
        %v8023 = vmax.f32 %v8022, %v6765
        %v8024 = vrot.slane %v8023, 4
        %v8025 = vmax.f32 %v8023, %v8024
        %v8026 = vrot.slane %v8025, 2
        %v8027 = vmax.f32 %v8025, %v8026
        %v8028 = vrot.slane %v8027, 1
        %v8029 = vmax.f32 %v8027, %v8028
        %v8030 = vmax.f32 %v6646, %v6654
        %v8031 = vmax.f32 %v8030, %v6662
        %v8032 = vmax.f32 %v8031, %v6670
        %v8033 = vmax.f32 %v8032, %v6678
        %v8034 = vmax.f32 %v8033, %v6686
        %v8035 = vmax.f32 %v8034, %v6694
        %v8036 = vmax.f32 %v8035, %v6702
        %v8037 = vmax.f32 %v8036, %v6710
        %v8038 = vmax.f32 %v8037, %v6718
        %v8039 = vmax.f32 %v8038, %v6726
        %v8040 = vmax.f32 %v8039, %v6734
        %v8041 = vmax.f32 %v8040, %v6742
        %v8042 = vmax.f32 %v8041, %v6750
        %v8043 = vmax.f32 %v8042, %v6758
        %v8044 = vmax.f32 %v8043, %v6766
        %v8045 = vrot.slane %v8044, 4
        %v8046 = vmax.f32 %v8044, %v8045
        %v8047 = vrot.slane %v8046, 2
        %v8048 = vmax.f32 %v8046, %v8047
        %v8049 = vrot.slane %v8048, 1
        %v8050 = vmax.f32 %v8048, %v8049
        %v8051 = vmax.f32 %v6647, %v6655
        %v8052 = vmax.f32 %v8051, %v6663
        %v8053 = vmax.f32 %v8052, %v6671
        %v8054 = vmax.f32 %v8053, %v6679
        %v8055 = vmax.f32 %v8054, %v6687
        %v8056 = vmax.f32 %v8055, %v6695
        %v8057 = vmax.f32 %v8056, %v6703
        %v8058 = vmax.f32 %v8057, %v6711
        %v8059 = vmax.f32 %v8058, %v6719
        %v8060 = vmax.f32 %v8059, %v6727
        %v8061 = vmax.f32 %v8060, %v6735
        %v8062 = vmax.f32 %v8061, %v6743
        %v8063 = vmax.f32 %v8062, %v6751
        %v8064 = vmax.f32 %v8063, %v6759
        %v8065 = vmax.f32 %v8064, %v6767
        %v8066 = vrot.slane %v8065, 4
        %v8067 = vmax.f32 %v8065, %v8066
        %v8068 = vrot.slane %v8067, 2
        %v8069 = vmax.f32 %v8067, %v8068
        %v8070 = vrot.slane %v8069, 1
        %v8071 = vmax.f32 %v8069, %v8070
        %v8072 = vmax.f32 %v6648, %v6656
        %v8073 = vmax.f32 %v8072, %v6664
        %v8074 = vmax.f32 %v8073, %v6672
        %v8075 = vmax.f32 %v8074, %v6680
        %v8076 = vmax.f32 %v8075, %v6688
        %v8077 = vmax.f32 %v8076, %v6696
        %v8078 = vmax.f32 %v8077, %v6704
        %v8079 = vmax.f32 %v8078, %v6712
        %v8080 = vmax.f32 %v8079, %v6720
        %v8081 = vmax.f32 %v8080, %v6728
        %v8082 = vmax.f32 %v8081, %v6736
        %v8083 = vmax.f32 %v8082, %v6744
        %v8084 = vmax.f32 %v8083, %v6752
        %v8085 = vmax.f32 %v8084, %v6760
        %v8086 = vmax.f32 %v8085, %v6768
        %v8087 = vrot.slane %v8086, 4
        %v8088 = vmax.f32 %v8086, %v8087
        %v8089 = vrot.slane %v8088, 2
        %v8090 = vmax.f32 %v8088, %v8089
        %v8091 = vrot.slane %v8090, 1
        %v8092 = vmax.f32 %v8090, %v8091
        %v8093 = vmax.f32 %v6649, %v6657
        %v8094 = vmax.f32 %v8093, %v6665
        %v8095 = vmax.f32 %v8094, %v6673
        %v8096 = vmax.f32 %v8095, %v6681
        %v8097 = vmax.f32 %v8096, %v6689
        %v8098 = vmax.f32 %v8097, %v6697
        %v8099 = vmax.f32 %v8098, %v6705
        %v8100 = vmax.f32 %v8099, %v6713
        %v8101 = vmax.f32 %v8100, %v6721
        %v8102 = vmax.f32 %v8101, %v6729
        %v8103 = vmax.f32 %v8102, %v6737
        %v8104 = vmax.f32 %v8103, %v6745
        %v8105 = vmax.f32 %v8104, %v6753
        %v8106 = vmax.f32 %v8105, %v6761
        %v8107 = vmax.f32 %v8106, %v6769
        %v8108 = vrot.slane %v8107, 4
        %v8109 = vmax.f32 %v8107, %v8108
        %v8110 = vrot.slane %v8109, 2
        %v8111 = vmax.f32 %v8109, %v8110
        %v8112 = vrot.slane %v8111, 1
        %v8113 = vmax.f32 %v8111, %v8112
        %v8114 = vld [vmem:[#allocation2] sm:$0xff]
        %v8115 = vld [vmem:[#allocation2 + $0x8] sm:$0xff]
        %v8116 = vld [vmem:[#allocation2 + $0x10] sm:$0xff]
        %v8117 = vld [vmem:[#allocation2 + $0x18] sm:$0xff]
        %v8118 = vld [vmem:[#allocation2 + $0x20] sm:$0xff]
        %v8119 = vld [vmem:[#allocation2 + $0x28] sm:$0xff]
        %v8120 = vld [vmem:[#allocation2 + $0x30] sm:$0xff]
        %v8121 = vld [vmem:[#allocation2 + $0x38] sm:$0xff]
        %vm8186 = vcmask 1041409
        %v8187 = vsel %vm8186, %v6958, %v6790
        %vm8188 = vcmask 1042434
        %v8189 = vsel %vm8188, %v7126, %v8187
        %vm8190 = vcmask 1043459
        %v8191 = vsel %vm8190, %v7294, %v8189
        %vm8192 = vcmask 1044484
        %v8193 = vsel %vm8192, %v7462, %v8191
        %vm8194 = vcmask 1045509
        %v8195 = vsel %vm8194, %v7630, %v8193
        %vm8196 = vcmask 1046534
        %v8197 = vsel %vm8196, %v7798, %v8195
        %vm8198 = vcmask 1047559
        %v8199 = vsel %vm8198, %v7966, %v8197
        %v8200 = vsel %vm8186, %v6979, %v6811
        %v8201 = vsel %vm8188, %v7147, %v8200
        %v8202 = vsel %vm8190, %v7315, %v8201
        %v8203 = vsel %vm8192, %v7483, %v8202
        %v8204 = vsel %vm8194, %v7651, %v8203
        %v8205 = vsel %vm8196, %v7819, %v8204
        %v8206 = vsel %vm8198, %v7987, %v8205
        %v8207 = vsel %vm8186, %v7000, %v6832
        %v8208 = vsel %vm8188, %v7168, %v8207
        %v8209 = vsel %vm8190, %v7336, %v8208
        %v8210 = vsel %vm8192, %v7504, %v8209
        %v8211 = vsel %vm8194, %v7672, %v8210
        %v8212 = vsel %vm8196, %v7840, %v8211
        %v8213 = vsel %vm8198, %v8008, %v8212
        %v8214 = vsel %vm8186, %v7021, %v6853
        %v8215 = vsel %vm8188, %v7189, %v8214
        %v8216 = vsel %vm8190, %v7357, %v8215
        %v8217 = vsel %vm8192, %v7525, %v8216
        %v8218 = vsel %vm8194, %v7693, %v8217
        %v8219 = vsel %vm8196, %v7861, %v8218
        %v8220 = vsel %vm8198, %v8029, %v8219
        %v8221 = vsel %vm8186, %v7042, %v6874
        %v8222 = vsel %vm8188, %v7210, %v8221
        %v8223 = vsel %vm8190, %v7378, %v8222
        %v8224 = vsel %vm8192, %v7546, %v8223
        %v8225 = vsel %vm8194, %v7714, %v8224
        %v8226 = vsel %vm8196, %v7882, %v8225
        %v8227 = vsel %vm8198, %v8050, %v8226
        %v8228 = vsel %vm8186, %v7063, %v6895
        %v8229 = vsel %vm8188, %v7231, %v8228
        %v8230 = vsel %vm8190, %v7399, %v8229
        %v8231 = vsel %vm8192, %v7567, %v8230
        %v8232 = vsel %vm8194, %v7735, %v8231
        %v8233 = vsel %vm8196, %v7903, %v8232
        %v8234 = vsel %vm8198, %v8071, %v8233
        %v8235 = vsel %vm8186, %v7084, %v6916
        %v8236 = vsel %vm8188, %v7252, %v8235
        %v8237 = vsel %vm8190, %v7420, %v8236
        %v8238 = vsel %vm8192, %v7588, %v8237
        %v8239 = vsel %vm8194, %v7756, %v8238
        %v8240 = vsel %vm8196, %v7924, %v8239
        %v8241 = vsel %vm8198, %v8092, %v8240
        %v8242 = vsel %vm8186, %v7105, %v6937
        %v8243 = vsel %vm8188, %v7273, %v8242
        %v8244 = vsel %vm8190, %v7441, %v8243
        %v8245 = vsel %vm8192, %v7609, %v8244
        %v8246 = vsel %vm8194, %v7777, %v8245
        %v8247 = vsel %vm8196, %v7945, %v8246
        %v8248 = vsel %vm8198, %v8113, %v8247
        %v8257 = vmax.f32 %v8114, %v8199
        %v8258 = vmax.f32 %v8115, %v8206
        %v8259 = vmax.f32 %v8116, %v8213
        %v8260 = vmax.f32 %v8117, %v8220
        %v8261 = vmax.f32 %v8118, %v8227
        %v8262 = vmax.f32 %v8119, %v8234
        %v8263 = vmax.f32 %v8120, %v8241
        %v8264 = vmax.f32 %v8121, %v8248
        %8265 = vst [vmem:[#allocation2] sm:$0xff] %v8257
        %8266 = vst [vmem:[#allocation2 + $0x8] sm:$0xff] %v8258
        %8267 = vst [vmem:[#allocation2 + $0x10] sm:$0xff] %v8259
        %8268 = vst [vmem:[#allocation2 + $0x18] sm:$0xff] %v8260
        %8269 = vst [vmem:[#allocation2 + $0x20] sm:$0xff] %v8261
        %8270 = vst [vmem:[#allocation2 + $0x28] sm:$0xff] %v8262
        %8271 = vst [vmem:[#allocation2 + $0x30] sm:$0xff] %v8263
        %8272 = vst [vmem:[#allocation2 + $0x38] sm:$0xff] %v8264
        %p8273 = scmp.eq.s32.totalorder %s30, 1
        // Predicated region
        $region119: #{stnkd_forward.1} parent=109 // pred_check
          %p8274 = pneg %p8273
        $region120: #{stnkd_forward.1} parent=109 // pred_check_branch
          %8276 = sbr.rel (%p8274) target = $region122
        $region121: #{stnkd_forward.1} parent=109 // pred_region
          %v8277 = vld [vmem:[#allocation2] sm:$0xff]
          %v8278 = vld [vmem:[#allocation2 + $0x8] sm:$0xff]
          %v8279 = vld [vmem:[#allocation2 + $0x10] sm:$0xff]
          %v8280 = vld [vmem:[#allocation2 + $0x18] sm:$0xff]
          %v8281 = vld [vmem:[#allocation2 + $0x20] sm:$0xff]
          %v8282 = vld [vmem:[#allocation2 + $0x28] sm:$0xff]
          %v8283 = vld [vmem:[#allocation2 + $0x30] sm:$0xff]
          %v8284 = vld [vmem:[#allocation2 + $0x38] sm:$0xff]
          %v8285 = vpack.c.bf16 %v8277, %v8277
          %v8286 = vpack.c.bf16 %v8278, %v8278
          %v8287 = vpack.c.bf16 %v8279, %v8279
          %v8288 = vpack.c.bf16 %v8280, %v8280
          %v8289 = vpack.c.bf16 %v8281, %v8281
          %v8290 = vpack.c.bf16 %v8282, %v8282
          %v8291 = vpack.c.bf16 %v8283, %v8283
          %v8292 = vpack.c.bf16 %v8284, %v8284
          %v8293 = vld [vmem:[%s7] sm:$0xff]
          %v8294 = vld [vmem:[%s7 + $0x8] sm:$0xff]
          %v8295 = vld [vmem:[%s7 + $0x10] sm:$0xff]
          %v8296 = vld [vmem:[%s7 + $0x18] sm:$0xff]
          %v8297 = vld [vmem:[%s7 + $0x20] sm:$0xff]
          %v8298 = vld [vmem:[%s7 + $0x28] sm:$0xff]
          %v8299 = vld [vmem:[%s7 + $0x30] sm:$0xff]
          %v8300 = vld [vmem:[%s7 + $0x38] sm:$0xff]
          %v8301 = vld [vmem:[%s7 + $0x40] sm:$0xff]
          %v8302 = vld [vmem:[%s7 + $0x48] sm:$0xff]
          %v8303 = vld [vmem:[%s7 + $0x50] sm:$0xff]
          %v8304 = vld [vmem:[%s7 + $0x58] sm:$0xff]
          %v8305 = vld [vmem:[%s7 + $0x60] sm:$0xff]
          %v8306 = vld [vmem:[%s7 + $0x68] sm:$0xff]
          %v8307 = vld [vmem:[%s7 + $0x70] sm:$0xff]
          %v8308 = vld [vmem:[%s7 + $0x78] sm:$0xff]
          %v8309 = vld [vmem:[%s7 + $0x80] sm:$0xff]
          %v8310 = vld [vmem:[%s7 + $0x88] sm:$0xff]
          %v8311 = vld [vmem:[%s7 + $0x90] sm:$0xff]
          %v8312 = vld [vmem:[%s7 + $0x98] sm:$0xff]
          %v8313 = vld [vmem:[%s7 + $0xa0] sm:$0xff]
          %v8314 = vld [vmem:[%s7 + $0xa8] sm:$0xff]
          %v8315 = vld [vmem:[%s7 + $0xb0] sm:$0xff]
          %v8316 = vld [vmem:[%s7 + $0xb8] sm:$0xff]
          %v8317 = vld [vmem:[%s7 + $0xc0] sm:$0xff]
          %v8318 = vld [vmem:[%s7 + $0xc8] sm:$0xff]
          %v8319 = vld [vmem:[%s7 + $0xd0] sm:$0xff]
          %v8320 = vld [vmem:[%s7 + $0xd8] sm:$0xff]
          %v8321 = vld [vmem:[%s7 + $0xe0] sm:$0xff]
          %v8322 = vld [vmem:[%s7 + $0xe8] sm:$0xff]
          %v8323 = vld [vmem:[%s7 + $0xf0] sm:$0xff]
          %v8324 = vld [vmem:[%s7 + $0xf8] sm:$0xff]
          %v8325 = vld [vmem:[%s7 + $0x100] sm:$0xff]
          %v8326 = vld [vmem:[%s7 + $0x108] sm:$0xff]
          %v8327 = vld [vmem:[%s7 + $0x110] sm:$0xff]
          %v8328 = vld [vmem:[%s7 + $0x118] sm:$0xff]
          %v8329 = vld [vmem:[%s7 + $0x120] sm:$0xff]
          %v8330 = vld [vmem:[%s7 + $0x128] sm:$0xff]
          %v8331 = vld [vmem:[%s7 + $0x130] sm:$0xff]
          %v8332 = vld [vmem:[%s7 + $0x138] sm:$0xff]
          %v8333 = vld [vmem:[%s7 + $0x140] sm:$0xff]
          %v8334 = vld [vmem:[%s7 + $0x148] sm:$0xff]
          %v8335 = vld [vmem:[%s7 + $0x150] sm:$0xff]
          %v8336 = vld [vmem:[%s7 + $0x158] sm:$0xff]
          %v8337 = vld [vmem:[%s7 + $0x160] sm:$0xff]
          %v8338 = vld [vmem:[%s7 + $0x168] sm:$0xff]
          %v8339 = vld [vmem:[%s7 + $0x170] sm:$0xff]
          %v8340 = vld [vmem:[%s7 + $0x178] sm:$0xff]
          %v8341 = vld [vmem:[%s7 + $0x180] sm:$0xff]
          %v8342 = vld [vmem:[%s7 + $0x188] sm:$0xff]
          %v8343 = vld [vmem:[%s7 + $0x190] sm:$0xff]
          %v8344 = vld [vmem:[%s7 + $0x198] sm:$0xff]
          %v8345 = vld [vmem:[%s7 + $0x1a0] sm:$0xff]
          %v8346 = vld [vmem:[%s7 + $0x1a8] sm:$0xff]
          %v8347 = vld [vmem:[%s7 + $0x1b0] sm:$0xff]
          %v8348 = vld [vmem:[%s7 + $0x1b8] sm:$0xff]
          %v8349 = vld [vmem:[%s7 + $0x1c0] sm:$0xff]
          %v8350 = vld [vmem:[%s7 + $0x1c8] sm:$0xff]
          %v8351 = vld [vmem:[%s7 + $0x1d0] sm:$0xff]
          %v8352 = vld [vmem:[%s7 + $0x1d8] sm:$0xff]
          %v8353 = vld [vmem:[%s7 + $0x1e0] sm:$0xff]
          %v8354 = vld [vmem:[%s7 + $0x1e8] sm:$0xff]
          %v8355 = vld [vmem:[%s7 + $0x1f0] sm:$0xff]
          %v8356 = vld [vmem:[%s7 + $0x1f8] sm:$0xff]
          %v8357 = vld [vmem:[%s7 + $0x200] sm:$0xff]
          %v8358 = vld [vmem:[%s7 + $0x208] sm:$0xff]
          %v8359 = vld [vmem:[%s7 + $0x210] sm:$0xff]
          %v8360 = vld [vmem:[%s7 + $0x218] sm:$0xff]
          %v8361 = vld [vmem:[%s7 + $0x220] sm:$0xff]
          %v8362 = vld [vmem:[%s7 + $0x228] sm:$0xff]
          %v8363 = vld [vmem:[%s7 + $0x230] sm:$0xff]
          %v8364 = vld [vmem:[%s7 + $0x238] sm:$0xff]
          %v8365 = vld [vmem:[%s7 + $0x240] sm:$0xff]
          %v8366 = vld [vmem:[%s7 + $0x248] sm:$0xff]
          %v8367 = vld [vmem:[%s7 + $0x250] sm:$0xff]
          %v8368 = vld [vmem:[%s7 + $0x258] sm:$0xff]
          %v8369 = vld [vmem:[%s7 + $0x260] sm:$0xff]
          %v8370 = vld [vmem:[%s7 + $0x268] sm:$0xff]
          %v8371 = vld [vmem:[%s7 + $0x270] sm:$0xff]
          %v8372 = vld [vmem:[%s7 + $0x278] sm:$0xff]
          %v8373 = vld [vmem:[%s7 + $0x280] sm:$0xff]
          %v8374 = vld [vmem:[%s7 + $0x288] sm:$0xff]
          %v8375 = vld [vmem:[%s7 + $0x290] sm:$0xff]
          %v8376 = vld [vmem:[%s7 + $0x298] sm:$0xff]
          %v8377 = vld [vmem:[%s7 + $0x2a0] sm:$0xff]
          %v8378 = vld [vmem:[%s7 + $0x2a8] sm:$0xff]
          %v8379 = vld [vmem:[%s7 + $0x2b0] sm:$0xff]
          %v8380 = vld [vmem:[%s7 + $0x2b8] sm:$0xff]
          %v8381 = vld [vmem:[%s7 + $0x2c0] sm:$0xff]
          %v8382 = vld [vmem:[%s7 + $0x2c8] sm:$0xff]
          %v8383 = vld [vmem:[%s7 + $0x2d0] sm:$0xff]
          %v8384 = vld [vmem:[%s7 + $0x2d8] sm:$0xff]
          %v8385 = vld [vmem:[%s7 + $0x2e0] sm:$0xff]
          %v8386 = vld [vmem:[%s7 + $0x2e8] sm:$0xff]
          %v8387 = vld [vmem:[%s7 + $0x2f0] sm:$0xff]
          %v8388 = vld [vmem:[%s7 + $0x2f8] sm:$0xff]
          %v8389 = vld [vmem:[%s7 + $0x300] sm:$0xff]
          %v8390 = vld [vmem:[%s7 + $0x308] sm:$0xff]
          %v8391 = vld [vmem:[%s7 + $0x310] sm:$0xff]
          %v8392 = vld [vmem:[%s7 + $0x318] sm:$0xff]
          %v8393 = vld [vmem:[%s7 + $0x320] sm:$0xff]
          %v8394 = vld [vmem:[%s7 + $0x328] sm:$0xff]
          %v8395 = vld [vmem:[%s7 + $0x330] sm:$0xff]
          %v8396 = vld [vmem:[%s7 + $0x338] sm:$0xff]
          %v8397 = vld [vmem:[%s7 + $0x340] sm:$0xff]
          %v8398 = vld [vmem:[%s7 + $0x348] sm:$0xff]
          %v8399 = vld [vmem:[%s7 + $0x350] sm:$0xff]
          %v8400 = vld [vmem:[%s7 + $0x358] sm:$0xff]
          %v8401 = vld [vmem:[%s7 + $0x360] sm:$0xff]
          %v8402 = vld [vmem:[%s7 + $0x368] sm:$0xff]
          %v8403 = vld [vmem:[%s7 + $0x370] sm:$0xff]
          %v8404 = vld [vmem:[%s7 + $0x378] sm:$0xff]
          %v8405 = vld [vmem:[%s7 + $0x380] sm:$0xff]
          %v8406 = vld [vmem:[%s7 + $0x388] sm:$0xff]
          %v8407 = vld [vmem:[%s7 + $0x390] sm:$0xff]
          %v8408 = vld [vmem:[%s7 + $0x398] sm:$0xff]
          %v8409 = vld [vmem:[%s7 + $0x3a0] sm:$0xff]
          %v8410 = vld [vmem:[%s7 + $0x3a8] sm:$0xff]
          %v8411 = vld [vmem:[%s7 + $0x3b0] sm:$0xff]
          %v8412 = vld [vmem:[%s7 + $0x3b8] sm:$0xff]
          %v8413 = vld [vmem:[%s7 + $0x3c0] sm:$0xff]
          %v8414 = vld [vmem:[%s7 + $0x3c8] sm:$0xff]
          %v8415 = vld [vmem:[%s7 + $0x3d0] sm:$0xff]
          %v8416 = vld [vmem:[%s7 + $0x3d8] sm:$0xff]
          %v8417 = vld [vmem:[%s7 + $0x3e0] sm:$0xff]
          %v8418 = vld [vmem:[%s7 + $0x3e8] sm:$0xff]
          %v8419 = vld [vmem:[%s7 + $0x3f0] sm:$0xff]
          %v8420 = vld [vmem:[%s7 + $0x3f8] sm:$0xff]
          %v8421 = vld [vmem:[%s7 + $0x400] sm:$0xff]
          %v8422 = vld [vmem:[%s7 + $0x408] sm:$0xff]
          %v8423 = vld [vmem:[%s7 + $0x410] sm:$0xff]
          %v8424 = vld [vmem:[%s7 + $0x418] sm:$0xff]
          %v8425 = vld [vmem:[%s7 + $0x420] sm:$0xff]
          %v8426 = vld [vmem:[%s7 + $0x428] sm:$0xff]
          %v8427 = vld [vmem:[%s7 + $0x430] sm:$0xff]
          %v8428 = vld [vmem:[%s7 + $0x438] sm:$0xff]
          %v8429 = vld [vmem:[%s7 + $0x440] sm:$0xff]
          %v8430 = vld [vmem:[%s7 + $0x448] sm:$0xff]
          %v8431 = vld [vmem:[%s7 + $0x450] sm:$0xff]
          %v8432 = vld [vmem:[%s7 + $0x458] sm:$0xff]
          %v8433 = vld [vmem:[%s7 + $0x460] sm:$0xff]
          %v8434 = vld [vmem:[%s7 + $0x468] sm:$0xff]
          %v8435 = vld [vmem:[%s7 + $0x470] sm:$0xff]
          %v8436 = vld [vmem:[%s7 + $0x478] sm:$0xff]
          %v8437 = vld [vmem:[%s7 + $0x480] sm:$0xff]
          %v8438 = vld [vmem:[%s7 + $0x488] sm:$0xff]
          %v8439 = vld [vmem:[%s7 + $0x490] sm:$0xff]
          %v8440 = vld [vmem:[%s7 + $0x498] sm:$0xff]
          %v8441 = vld [vmem:[%s7 + $0x4a0] sm:$0xff]
          %v8442 = vld [vmem:[%s7 + $0x4a8] sm:$0xff]
          %v8443 = vld [vmem:[%s7 + $0x4b0] sm:$0xff]
          %v8444 = vld [vmem:[%s7 + $0x4b8] sm:$0xff]
          %v8445 = vld [vmem:[%s7 + $0x4c0] sm:$0xff]
          %v8446 = vld [vmem:[%s7 + $0x4c8] sm:$0xff]
          %v8447 = vld [vmem:[%s7 + $0x4d0] sm:$0xff]
          %v8448 = vld [vmem:[%s7 + $0x4d8] sm:$0xff]
          %v8449 = vld [vmem:[%s7 + $0x4e0] sm:$0xff]
          %v8450 = vld [vmem:[%s7 + $0x4e8] sm:$0xff]
          %v8451 = vld [vmem:[%s7 + $0x4f0] sm:$0xff]
          %v8452 = vld [vmem:[%s7 + $0x4f8] sm:$0xff]
          %v8453 = vld [vmem:[%s7 + $0x500] sm:$0xff]
          %v8454 = vld [vmem:[%s7 + $0x508] sm:$0xff]
          %v8455 = vld [vmem:[%s7 + $0x510] sm:$0xff]
          %v8456 = vld [vmem:[%s7 + $0x518] sm:$0xff]
          %v8457 = vld [vmem:[%s7 + $0x520] sm:$0xff]
          %v8458 = vld [vmem:[%s7 + $0x528] sm:$0xff]
          %v8459 = vld [vmem:[%s7 + $0x530] sm:$0xff]
          %v8460 = vld [vmem:[%s7 + $0x538] sm:$0xff]
          %v8461 = vld [vmem:[%s7 + $0x540] sm:$0xff]
          %v8462 = vld [vmem:[%s7 + $0x548] sm:$0xff]
          %v8463 = vld [vmem:[%s7 + $0x550] sm:$0xff]
          %v8464 = vld [vmem:[%s7 + $0x558] sm:$0xff]
          %v8465 = vld [vmem:[%s7 + $0x560] sm:$0xff]
          %v8466 = vld [vmem:[%s7 + $0x568] sm:$0xff]
          %v8467 = vld [vmem:[%s7 + $0x570] sm:$0xff]
          %v8468 = vld [vmem:[%s7 + $0x578] sm:$0xff]
          %v8469 = vld [vmem:[%s7 + $0x580] sm:$0xff]
          %v8470 = vld [vmem:[%s7 + $0x588] sm:$0xff]
          %v8471 = vld [vmem:[%s7 + $0x590] sm:$0xff]
          %v8472 = vld [vmem:[%s7 + $0x598] sm:$0xff]
          %v8473 = vld [vmem:[%s7 + $0x5a0] sm:$0xff]
          %v8474 = vld [vmem:[%s7 + $0x5a8] sm:$0xff]
          %v8475 = vld [vmem:[%s7 + $0x5b0] sm:$0xff]
          %v8476 = vld [vmem:[%s7 + $0x5b8] sm:$0xff]
          %v8477 = vld [vmem:[%s7 + $0x5c0] sm:$0xff]
          %v8478 = vld [vmem:[%s7 + $0x5c8] sm:$0xff]
          %v8479 = vld [vmem:[%s7 + $0x5d0] sm:$0xff]
          %v8480 = vld [vmem:[%s7 + $0x5d8] sm:$0xff]
          %v8481 = vld [vmem:[%s7 + $0x5e0] sm:$0xff]
          %v8482 = vld [vmem:[%s7 + $0x5e8] sm:$0xff]
          %v8483 = vld [vmem:[%s7 + $0x5f0] sm:$0xff]
          %v8484 = vld [vmem:[%s7 + $0x5f8] sm:$0xff]
          %v8485 = vld [vmem:[%s7 + $0x600] sm:$0xff]
          %v8486 = vld [vmem:[%s7 + $0x608] sm:$0xff]
          %v8487 = vld [vmem:[%s7 + $0x610] sm:$0xff]
          %v8488 = vld [vmem:[%s7 + $0x618] sm:$0xff]
          %v8489 = vld [vmem:[%s7 + $0x620] sm:$0xff]
          %v8490 = vld [vmem:[%s7 + $0x628] sm:$0xff]
          %v8491 = vld [vmem:[%s7 + $0x630] sm:$0xff]
          %v8492 = vld [vmem:[%s7 + $0x638] sm:$0xff]
          %v8493 = vld [vmem:[%s7 + $0x640] sm:$0xff]
          %v8494 = vld [vmem:[%s7 + $0x648] sm:$0xff]
          %v8495 = vld [vmem:[%s7 + $0x650] sm:$0xff]
          %v8496 = vld [vmem:[%s7 + $0x658] sm:$0xff]
          %v8497 = vld [vmem:[%s7 + $0x660] sm:$0xff]
          %v8498 = vld [vmem:[%s7 + $0x668] sm:$0xff]
          %v8499 = vld [vmem:[%s7 + $0x670] sm:$0xff]
          %v8500 = vld [vmem:[%s7 + $0x678] sm:$0xff]
          %v8501 = vld [vmem:[%s7 + $0x680] sm:$0xff]
          %v8502 = vld [vmem:[%s7 + $0x688] sm:$0xff]
          %v8503 = vld [vmem:[%s7 + $0x690] sm:$0xff]
          %v8504 = vld [vmem:[%s7 + $0x698] sm:$0xff]
          %v8505 = vld [vmem:[%s7 + $0x6a0] sm:$0xff]
          %v8506 = vld [vmem:[%s7 + $0x6a8] sm:$0xff]
          %v8507 = vld [vmem:[%s7 + $0x6b0] sm:$0xff]
          %v8508 = vld [vmem:[%s7 + $0x6b8] sm:$0xff]
          %v8509 = vld [vmem:[%s7 + $0x6c0] sm:$0xff]
          %v8510 = vld [vmem:[%s7 + $0x6c8] sm:$0xff]
          %v8511 = vld [vmem:[%s7 + $0x6d0] sm:$0xff]
          %v8512 = vld [vmem:[%s7 + $0x6d8] sm:$0xff]
          %v8513 = vld [vmem:[%s7 + $0x6e0] sm:$0xff]
          %v8514 = vld [vmem:[%s7 + $0x6e8] sm:$0xff]
          %v8515 = vld [vmem:[%s7 + $0x6f0] sm:$0xff]
          %v8516 = vld [vmem:[%s7 + $0x6f8] sm:$0xff]
          %v8517 = vld [vmem:[%s7 + $0x700] sm:$0xff]
          %v8518 = vld [vmem:[%s7 + $0x708] sm:$0xff]
          %v8519 = vld [vmem:[%s7 + $0x710] sm:$0xff]
          %v8520 = vld [vmem:[%s7 + $0x718] sm:$0xff]
          %v8521 = vld [vmem:[%s7 + $0x720] sm:$0xff]
          %v8522 = vld [vmem:[%s7 + $0x728] sm:$0xff]
          %v8523 = vld [vmem:[%s7 + $0x730] sm:$0xff]
          %v8524 = vld [vmem:[%s7 + $0x738] sm:$0xff]
          %v8525 = vld [vmem:[%s7 + $0x740] sm:$0xff]
          %v8526 = vld [vmem:[%s7 + $0x748] sm:$0xff]
          %v8527 = vld [vmem:[%s7 + $0x750] sm:$0xff]
          %v8528 = vld [vmem:[%s7 + $0x758] sm:$0xff]
          %v8529 = vld [vmem:[%s7 + $0x760] sm:$0xff]
          %v8530 = vld [vmem:[%s7 + $0x768] sm:$0xff]
          %v8531 = vld [vmem:[%s7 + $0x770] sm:$0xff]
          %v8532 = vld [vmem:[%s7 + $0x778] sm:$0xff]
          %v8533 = vld [vmem:[%s7 + $0x780] sm:$0xff]
          %v8534 = vld [vmem:[%s7 + $0x788] sm:$0xff]
          %v8535 = vld [vmem:[%s7 + $0x790] sm:$0xff]
          %v8536 = vld [vmem:[%s7 + $0x798] sm:$0xff]
          %v8537 = vld [vmem:[%s7 + $0x7a0] sm:$0xff]
          %v8538 = vld [vmem:[%s7 + $0x7a8] sm:$0xff]
          %v8539 = vld [vmem:[%s7 + $0x7b0] sm:$0xff]
          %v8540 = vld [vmem:[%s7 + $0x7b8] sm:$0xff]
          %v8541 = vld [vmem:[%s7 + $0x7c0] sm:$0xff]
          %v8542 = vld [vmem:[%s7 + $0x7c8] sm:$0xff]
          %v8543 = vld [vmem:[%s7 + $0x7d0] sm:$0xff]
          %v8544 = vld [vmem:[%s7 + $0x7d8] sm:$0xff]
          %v8545 = vld [vmem:[%s7 + $0x7e0] sm:$0xff]
          %v8546 = vld [vmem:[%s7 + $0x7e8] sm:$0xff]
          %v8547 = vld [vmem:[%s7 + $0x7f0] sm:$0xff]
          %v8548 = vld [vmem:[%s7 + $0x7f8] sm:$0xff]
          %v8549 = vld [vmem:[%s8] sm:$0xf]
          %v8551 = vperm.slane %v8549, 0
          %v8552 = vperm.slane %v8549, 1
          %v8553 = vperm.slane %v8549, 2
          %v8554 = vperm.slane %v8549, 3
          %v8815 = vunpack.c.l.b16 %v8293
          %v8816 = vunpack.c.h.b16 %v8293
          %v8817 = vunpack.c.l.b16 %v8294
          %v8818 = vunpack.c.h.b16 %v8294
          %v8819 = vunpack.c.l.b16 %v8295
          %v8820 = vunpack.c.h.b16 %v8295
          %v8821 = vunpack.c.l.b16 %v8296
          %v8822 = vunpack.c.h.b16 %v8296
          %v8823 = vunpack.c.l.b16 %v8297
          %v8824 = vunpack.c.h.b16 %v8297
          %v8825 = vunpack.c.l.b16 %v8298
          %v8826 = vunpack.c.h.b16 %v8298
          %v8827 = vunpack.c.l.b16 %v8299
          %v8828 = vunpack.c.h.b16 %v8299
          %v8829 = vunpack.c.l.b16 %v8300
          %v8830 = vunpack.c.h.b16 %v8300
          %v8831 = vunpack.c.l.b16 %v8301
          %v8832 = vunpack.c.h.b16 %v8301
          %v8833 = vunpack.c.l.b16 %v8302
          %v8834 = vunpack.c.h.b16 %v8302
          %v8835 = vunpack.c.l.b16 %v8303
          %v8836 = vunpack.c.h.b16 %v8303
          %v8837 = vunpack.c.l.b16 %v8304
          %v8838 = vunpack.c.h.b16 %v8304
          %v8839 = vunpack.c.l.b16 %v8305
          %v8840 = vunpack.c.h.b16 %v8305
          %v8841 = vunpack.c.l.b16 %v8306
          %v8842 = vunpack.c.h.b16 %v8306
          %v8843 = vunpack.c.l.b16 %v8307
          %v8844 = vunpack.c.h.b16 %v8307
          %v8845 = vunpack.c.l.b16 %v8308
          %v8846 = vunpack.c.h.b16 %v8308
          %v8847 = vunpack.c.l.b16 %v8309
          %v8848 = vunpack.c.h.b16 %v8309
          %v8849 = vunpack.c.l.b16 %v8310
          %v8850 = vunpack.c.h.b16 %v8310
          %v8851 = vunpack.c.l.b16 %v8311
          %v8852 = vunpack.c.h.b16 %v8311
          %v8853 = vunpack.c.l.b16 %v8312
          %v8854 = vunpack.c.h.b16 %v8312
          %v8855 = vunpack.c.l.b16 %v8313
          %v8856 = vunpack.c.h.b16 %v8313
          %v8857 = vunpack.c.l.b16 %v8314
          %v8858 = vunpack.c.h.b16 %v8314
          %v8859 = vunpack.c.l.b16 %v8315
          %v8860 = vunpack.c.h.b16 %v8315
          %v8861 = vunpack.c.l.b16 %v8316
          %v8862 = vunpack.c.h.b16 %v8316
          %v8863 = vunpack.c.l.b16 %v8317
          %v8864 = vunpack.c.h.b16 %v8317
          %v8865 = vunpack.c.l.b16 %v8318
          %v8866 = vunpack.c.h.b16 %v8318
          %v8867 = vunpack.c.l.b16 %v8319
          %v8868 = vunpack.c.h.b16 %v8319
          %v8869 = vunpack.c.l.b16 %v8320
          %v8870 = vunpack.c.h.b16 %v8320
          %v8871 = vunpack.c.l.b16 %v8321
          %v8872 = vunpack.c.h.b16 %v8321
          %v8873 = vunpack.c.l.b16 %v8322
          %v8874 = vunpack.c.h.b16 %v8322
          %v8875 = vunpack.c.l.b16 %v8323
          %v8876 = vunpack.c.h.b16 %v8323
          %v8877 = vunpack.c.l.b16 %v8324
          %v8878 = vunpack.c.h.b16 %v8324
          %v8879 = vunpack.c.l.b16 %v8325
          %v8880 = vunpack.c.h.b16 %v8325
          %v8881 = vunpack.c.l.b16 %v8326
          %v8882 = vunpack.c.h.b16 %v8326
          %v8883 = vunpack.c.l.b16 %v8327
          %v8884 = vunpack.c.h.b16 %v8327
          %v8885 = vunpack.c.l.b16 %v8328
          %v8886 = vunpack.c.h.b16 %v8328
          %v8887 = vunpack.c.l.b16 %v8329
          %v8888 = vunpack.c.h.b16 %v8329
          %v8889 = vunpack.c.l.b16 %v8330
          %v8890 = vunpack.c.h.b16 %v8330
          %v8891 = vunpack.c.l.b16 %v8331
          %v8892 = vunpack.c.h.b16 %v8331
          %v8893 = vunpack.c.l.b16 %v8332
          %v8894 = vunpack.c.h.b16 %v8332
          %v8895 = vunpack.c.l.b16 %v8333
          %v8896 = vunpack.c.h.b16 %v8333
          %v8897 = vunpack.c.l.b16 %v8334
          %v8898 = vunpack.c.h.b16 %v8334
          %v8899 = vunpack.c.l.b16 %v8335
          %v8900 = vunpack.c.h.b16 %v8335
          %v8901 = vunpack.c.l.b16 %v8336
          %v8902 = vunpack.c.h.b16 %v8336
          %v8903 = vunpack.c.l.b16 %v8337
          %v8904 = vunpack.c.h.b16 %v8337
          %v8905 = vunpack.c.l.b16 %v8338
          %v8906 = vunpack.c.h.b16 %v8338
          %v8907 = vunpack.c.l.b16 %v8339
          %v8908 = vunpack.c.h.b16 %v8339
          %v8909 = vunpack.c.l.b16 %v8340
          %v8910 = vunpack.c.h.b16 %v8340
          %v8911 = vunpack.c.l.b16 %v8341
          %v8912 = vunpack.c.h.b16 %v8341
          %v8913 = vunpack.c.l.b16 %v8342
          %v8914 = vunpack.c.h.b16 %v8342
          %v8915 = vunpack.c.l.b16 %v8343
          %v8916 = vunpack.c.h.b16 %v8343
          %v8917 = vunpack.c.l.b16 %v8344
          %v8918 = vunpack.c.h.b16 %v8344
          %v8919 = vunpack.c.l.b16 %v8345
          %v8920 = vunpack.c.h.b16 %v8345
          %v8921 = vunpack.c.l.b16 %v8346
          %v8922 = vunpack.c.h.b16 %v8346
          %v8923 = vunpack.c.l.b16 %v8347
          %v8924 = vunpack.c.h.b16 %v8347
          %v8925 = vunpack.c.l.b16 %v8348
          %v8926 = vunpack.c.h.b16 %v8348
          %v8927 = vunpack.c.l.b16 %v8349
          %v8928 = vunpack.c.h.b16 %v8349
          %v8929 = vunpack.c.l.b16 %v8350
          %v8930 = vunpack.c.h.b16 %v8350
          %v8931 = vunpack.c.l.b16 %v8351
          %v8932 = vunpack.c.h.b16 %v8351
          %v8933 = vunpack.c.l.b16 %v8352
          %v8934 = vunpack.c.h.b16 %v8352
          %v8935 = vunpack.c.l.b16 %v8353
          %v8936 = vunpack.c.h.b16 %v8353
          %v8937 = vunpack.c.l.b16 %v8354
          %v8938 = vunpack.c.h.b16 %v8354
          %v8939 = vunpack.c.l.b16 %v8355
          %v8940 = vunpack.c.h.b16 %v8355
          %v8941 = vunpack.c.l.b16 %v8356
          %v8942 = vunpack.c.h.b16 %v8356
          %v8943 = vunpack.c.l.b16 %v8357
          %v8944 = vunpack.c.h.b16 %v8357
          %v8945 = vunpack.c.l.b16 %v8358
          %v8946 = vunpack.c.h.b16 %v8358
          %v8947 = vunpack.c.l.b16 %v8359
          %v8948 = vunpack.c.h.b16 %v8359
          %v8949 = vunpack.c.l.b16 %v8360
          %v8950 = vunpack.c.h.b16 %v8360
          %v8951 = vunpack.c.l.b16 %v8361
          %v8952 = vunpack.c.h.b16 %v8361
          %v8953 = vunpack.c.l.b16 %v8362
          %v8954 = vunpack.c.h.b16 %v8362
          %v8955 = vunpack.c.l.b16 %v8363
          %v8956 = vunpack.c.h.b16 %v8363
          %v8957 = vunpack.c.l.b16 %v8364
          %v8958 = vunpack.c.h.b16 %v8364
          %v8959 = vunpack.c.l.b16 %v8365
          %v8960 = vunpack.c.h.b16 %v8365
          %v8961 = vunpack.c.l.b16 %v8366
          %v8962 = vunpack.c.h.b16 %v8366
          %v8963 = vunpack.c.l.b16 %v8367
          %v8964 = vunpack.c.h.b16 %v8367
          %v8965 = vunpack.c.l.b16 %v8368
          %v8966 = vunpack.c.h.b16 %v8368
          %v8967 = vunpack.c.l.b16 %v8369
          %v8968 = vunpack.c.h.b16 %v8369
          %v8969 = vunpack.c.l.b16 %v8370
          %v8970 = vunpack.c.h.b16 %v8370
          %v8971 = vunpack.c.l.b16 %v8371
          %v8972 = vunpack.c.h.b16 %v8371
          %v8973 = vunpack.c.l.b16 %v8372
          %v8974 = vunpack.c.h.b16 %v8372
          %v8975 = vunpack.c.l.b16 %v8373
          %v8976 = vunpack.c.h.b16 %v8373
          %v8977 = vunpack.c.l.b16 %v8374
          %v8978 = vunpack.c.h.b16 %v8374
          %v8979 = vunpack.c.l.b16 %v8375
          %v8980 = vunpack.c.h.b16 %v8375
          %v8981 = vunpack.c.l.b16 %v8376
          %v8982 = vunpack.c.h.b16 %v8376
          %v8983 = vunpack.c.l.b16 %v8377
          %v8984 = vunpack.c.h.b16 %v8377
          %v8985 = vunpack.c.l.b16 %v8378
          %v8986 = vunpack.c.h.b16 %v8378
          %v8987 = vunpack.c.l.b16 %v8379
          %v8988 = vunpack.c.h.b16 %v8379
          %v8989 = vunpack.c.l.b16 %v8380
          %v8990 = vunpack.c.h.b16 %v8380
          %v8991 = vunpack.c.l.b16 %v8381
          %v8992 = vunpack.c.h.b16 %v8381
          %v8993 = vunpack.c.l.b16 %v8382
          %v8994 = vunpack.c.h.b16 %v8382
          %v8995 = vunpack.c.l.b16 %v8383
          %v8996 = vunpack.c.h.b16 %v8383
          %v8997 = vunpack.c.l.b16 %v8384
          %v8998 = vunpack.c.h.b16 %v8384
          %v8999 = vunpack.c.l.b16 %v8385
          %v9000 = vunpack.c.h.b16 %v8385
          %v9001 = vunpack.c.l.b16 %v8386
          %v9002 = vunpack.c.h.b16 %v8386
          %v9003 = vunpack.c.l.b16 %v8387
          %v9004 = vunpack.c.h.b16 %v8387
          %v9005 = vunpack.c.l.b16 %v8388
          %v9006 = vunpack.c.h.b16 %v8388
          %v9007 = vunpack.c.l.b16 %v8389
          %v9008 = vunpack.c.h.b16 %v8389
          %v9009 = vunpack.c.l.b16 %v8390
          %v9010 = vunpack.c.h.b16 %v8390
          %v9011 = vunpack.c.l.b16 %v8391
          %v9012 = vunpack.c.h.b16 %v8391
          %v9013 = vunpack.c.l.b16 %v8392
          %v9014 = vunpack.c.h.b16 %v8392
          %v9015 = vunpack.c.l.b16 %v8393
          %v9016 = vunpack.c.h.b16 %v8393
          %v9017 = vunpack.c.l.b16 %v8394
          %v9018 = vunpack.c.h.b16 %v8394
          %v9019 = vunpack.c.l.b16 %v8395
          %v9020 = vunpack.c.h.b16 %v8395
          %v9021 = vunpack.c.l.b16 %v8396
          %v9022 = vunpack.c.h.b16 %v8396
          %v9023 = vunpack.c.l.b16 %v8397
          %v9024 = vunpack.c.h.b16 %v8397
          %v9025 = vunpack.c.l.b16 %v8398
          %v9026 = vunpack.c.h.b16 %v8398
          %v9027 = vunpack.c.l.b16 %v8399
          %v9028 = vunpack.c.h.b16 %v8399
          %v9029 = vunpack.c.l.b16 %v8400
          %v9030 = vunpack.c.h.b16 %v8400
          %v9031 = vunpack.c.l.b16 %v8401
          %v9032 = vunpack.c.h.b16 %v8401
          %v9033 = vunpack.c.l.b16 %v8402
          %v9034 = vunpack.c.h.b16 %v8402
          %v9035 = vunpack.c.l.b16 %v8403
          %v9036 = vunpack.c.h.b16 %v8403
          %v9037 = vunpack.c.l.b16 %v8404
          %v9038 = vunpack.c.h.b16 %v8404
          %v9039 = vunpack.c.l.b16 %v8405
          %v9040 = vunpack.c.h.b16 %v8405
          %v9041 = vunpack.c.l.b16 %v8406
          %v9042 = vunpack.c.h.b16 %v8406
          %v9043 = vunpack.c.l.b16 %v8407
          %v9044 = vunpack.c.h.b16 %v8407
          %v9045 = vunpack.c.l.b16 %v8408
          %v9046 = vunpack.c.h.b16 %v8408
          %v9047 = vunpack.c.l.b16 %v8409
          %v9048 = vunpack.c.h.b16 %v8409
          %v9049 = vunpack.c.l.b16 %v8410
          %v9050 = vunpack.c.h.b16 %v8410
          %v9051 = vunpack.c.l.b16 %v8411
          %v9052 = vunpack.c.h.b16 %v8411
          %v9053 = vunpack.c.l.b16 %v8412
          %v9054 = vunpack.c.h.b16 %v8412
          %v9055 = vunpack.c.l.b16 %v8413
          %v9056 = vunpack.c.h.b16 %v8413
          %v9057 = vunpack.c.l.b16 %v8414
          %v9058 = vunpack.c.h.b16 %v8414
          %v9059 = vunpack.c.l.b16 %v8415
          %v9060 = vunpack.c.h.b16 %v8415
          %v9061 = vunpack.c.l.b16 %v8416
          %v9062 = vunpack.c.h.b16 %v8416
          %v9063 = vunpack.c.l.b16 %v8417
          %v9064 = vunpack.c.h.b16 %v8417
          %v9065 = vunpack.c.l.b16 %v8418
          %v9066 = vunpack.c.h.b16 %v8418
          %v9067 = vunpack.c.l.b16 %v8419
          %v9068 = vunpack.c.h.b16 %v8419
          %v9069 = vunpack.c.l.b16 %v8420
          %v9070 = vunpack.c.h.b16 %v8420
          %v9071 = vunpack.c.l.b16 %v8421
          %v9072 = vunpack.c.h.b16 %v8421
          %v9073 = vunpack.c.l.b16 %v8422
          %v9074 = vunpack.c.h.b16 %v8422
          %v9075 = vunpack.c.l.b16 %v8423
          %v9076 = vunpack.c.h.b16 %v8423
          %v9077 = vunpack.c.l.b16 %v8424
          %v9078 = vunpack.c.h.b16 %v8424
          %v9079 = vunpack.c.l.b16 %v8425
          %v9080 = vunpack.c.h.b16 %v8425
          %v9081 = vunpack.c.l.b16 %v8426
          %v9082 = vunpack.c.h.b16 %v8426
          %v9083 = vunpack.c.l.b16 %v8427
          %v9084 = vunpack.c.h.b16 %v8427
          %v9085 = vunpack.c.l.b16 %v8428
          %v9086 = vunpack.c.h.b16 %v8428
          %v9087 = vunpack.c.l.b16 %v8429
          %v9088 = vunpack.c.h.b16 %v8429
          %v9089 = vunpack.c.l.b16 %v8430
          %v9090 = vunpack.c.h.b16 %v8430
          %v9091 = vunpack.c.l.b16 %v8431
          %v9092 = vunpack.c.h.b16 %v8431
          %v9093 = vunpack.c.l.b16 %v8432
          %v9094 = vunpack.c.h.b16 %v8432
          %v9095 = vunpack.c.l.b16 %v8433
          %v9096 = vunpack.c.h.b16 %v8433
          %v9097 = vunpack.c.l.b16 %v8434
          %v9098 = vunpack.c.h.b16 %v8434
          %v9099 = vunpack.c.l.b16 %v8435
          %v9100 = vunpack.c.h.b16 %v8435
          %v9101 = vunpack.c.l.b16 %v8436
          %v9102 = vunpack.c.h.b16 %v8436
          %v9103 = vunpack.c.l.b16 %v8437
          %v9104 = vunpack.c.h.b16 %v8437
          %v9105 = vunpack.c.l.b16 %v8438
          %v9106 = vunpack.c.h.b16 %v8438
          %v9107 = vunpack.c.l.b16 %v8439
          %v9108 = vunpack.c.h.b16 %v8439
          %v9109 = vunpack.c.l.b16 %v8440
          %v9110 = vunpack.c.h.b16 %v8440
          %v9111 = vunpack.c.l.b16 %v8441
          %v9112 = vunpack.c.h.b16 %v8441
          %v9113 = vunpack.c.l.b16 %v8442
          %v9114 = vunpack.c.h.b16 %v8442
          %v9115 = vunpack.c.l.b16 %v8443
          %v9116 = vunpack.c.h.b16 %v8443
          %v9117 = vunpack.c.l.b16 %v8444
          %v9118 = vunpack.c.h.b16 %v8444
          %v9119 = vunpack.c.l.b16 %v8445
          %v9120 = vunpack.c.h.b16 %v8445
          %v9121 = vunpack.c.l.b16 %v8446
          %v9122 = vunpack.c.h.b16 %v8446
          %v9123 = vunpack.c.l.b16 %v8447
          %v9124 = vunpack.c.h.b16 %v8447
          %v9125 = vunpack.c.l.b16 %v8448
          %v9126 = vunpack.c.h.b16 %v8448
          %v9127 = vunpack.c.l.b16 %v8449
          %v9128 = vunpack.c.h.b16 %v8449
          %v9129 = vunpack.c.l.b16 %v8450
          %v9130 = vunpack.c.h.b16 %v8450
          %v9131 = vunpack.c.l.b16 %v8451
          %v9132 = vunpack.c.h.b16 %v8451
          %v9133 = vunpack.c.l.b16 %v8452
          %v9134 = vunpack.c.h.b16 %v8452
          %v9135 = vunpack.c.l.b16 %v8453
          %v9136 = vunpack.c.h.b16 %v8453
          %v9137 = vunpack.c.l.b16 %v8454
          %v9138 = vunpack.c.h.b16 %v8454
          %v9139 = vunpack.c.l.b16 %v8455
          %v9140 = vunpack.c.h.b16 %v8455
          %v9141 = vunpack.c.l.b16 %v8456
          %v9142 = vunpack.c.h.b16 %v8456
          %v9143 = vunpack.c.l.b16 %v8457
          %v9144 = vunpack.c.h.b16 %v8457
          %v9145 = vunpack.c.l.b16 %v8458
          %v9146 = vunpack.c.h.b16 %v8458
          %v9147 = vunpack.c.l.b16 %v8459
          %v9148 = vunpack.c.h.b16 %v8459
          %v9149 = vunpack.c.l.b16 %v8460
          %v9150 = vunpack.c.h.b16 %v8460
          %v9151 = vunpack.c.l.b16 %v8461
          %v9152 = vunpack.c.h.b16 %v8461
          %v9153 = vunpack.c.l.b16 %v8462
          %v9154 = vunpack.c.h.b16 %v8462
          %v9155 = vunpack.c.l.b16 %v8463
          %v9156 = vunpack.c.h.b16 %v8463
          %v9157 = vunpack.c.l.b16 %v8464
          %v9158 = vunpack.c.h.b16 %v8464
          %v9159 = vunpack.c.l.b16 %v8465
          %v9160 = vunpack.c.h.b16 %v8465
          %v9161 = vunpack.c.l.b16 %v8466
          %v9162 = vunpack.c.h.b16 %v8466
          %v9163 = vunpack.c.l.b16 %v8467
          %v9164 = vunpack.c.h.b16 %v8467
          %v9165 = vunpack.c.l.b16 %v8468
          %v9166 = vunpack.c.h.b16 %v8468
          %v9167 = vunpack.c.l.b16 %v8469
          %v9168 = vunpack.c.h.b16 %v8469
          %v9169 = vunpack.c.l.b16 %v8470
          %v9170 = vunpack.c.h.b16 %v8470
          %v9171 = vunpack.c.l.b16 %v8471
          %v9172 = vunpack.c.h.b16 %v8471
          %v9173 = vunpack.c.l.b16 %v8472
          %v9174 = vunpack.c.h.b16 %v8472
          %v9175 = vunpack.c.l.b16 %v8473
          %v9176 = vunpack.c.h.b16 %v8473
          %v9177 = vunpack.c.l.b16 %v8474
          %v9178 = vunpack.c.h.b16 %v8474
          %v9179 = vunpack.c.l.b16 %v8475
          %v9180 = vunpack.c.h.b16 %v8475
          %v9181 = vunpack.c.l.b16 %v8476
          %v9182 = vunpack.c.h.b16 %v8476
          %v9183 = vunpack.c.l.b16 %v8477
          %v9184 = vunpack.c.h.b16 %v8477
          %v9185 = vunpack.c.l.b16 %v8478
          %v9186 = vunpack.c.h.b16 %v8478
          %v9187 = vunpack.c.l.b16 %v8479
          %v9188 = vunpack.c.h.b16 %v8479
          %v9189 = vunpack.c.l.b16 %v8480
          %v9190 = vunpack.c.h.b16 %v8480
          %v9191 = vunpack.c.l.b16 %v8481
          %v9192 = vunpack.c.h.b16 %v8481
          %v9193 = vunpack.c.l.b16 %v8482
          %v9194 = vunpack.c.h.b16 %v8482
          %v9195 = vunpack.c.l.b16 %v8483
          %v9196 = vunpack.c.h.b16 %v8483
          %v9197 = vunpack.c.l.b16 %v8484
          %v9198 = vunpack.c.h.b16 %v8484
          %v9199 = vunpack.c.l.b16 %v8485
          %v9200 = vunpack.c.h.b16 %v8485
          %v9201 = vunpack.c.l.b16 %v8486
          %v9202 = vunpack.c.h.b16 %v8486
          %v9203 = vunpack.c.l.b16 %v8487
          %v9204 = vunpack.c.h.b16 %v8487
          %v9205 = vunpack.c.l.b16 %v8488
          %v9206 = vunpack.c.h.b16 %v8488
          %v9207 = vunpack.c.l.b16 %v8489
          %v9208 = vunpack.c.h.b16 %v8489
          %v9209 = vunpack.c.l.b16 %v8490
          %v9210 = vunpack.c.h.b16 %v8490
          %v9211 = vunpack.c.l.b16 %v8491
          %v9212 = vunpack.c.h.b16 %v8491
          %v9213 = vunpack.c.l.b16 %v8492
          %v9214 = vunpack.c.h.b16 %v8492
          %v9215 = vunpack.c.l.b16 %v8493
          %v9216 = vunpack.c.h.b16 %v8493
          %v9217 = vunpack.c.l.b16 %v8494
          %v9218 = vunpack.c.h.b16 %v8494
          %v9219 = vunpack.c.l.b16 %v8495
          %v9220 = vunpack.c.h.b16 %v8495
          %v9221 = vunpack.c.l.b16 %v8496
          %v9222 = vunpack.c.h.b16 %v8496
          %v9223 = vunpack.c.l.b16 %v8497
          %v9224 = vunpack.c.h.b16 %v8497
          %v9225 = vunpack.c.l.b16 %v8498
          %v9226 = vunpack.c.h.b16 %v8498
          %v9227 = vunpack.c.l.b16 %v8499
          %v9228 = vunpack.c.h.b16 %v8499
          %v9229 = vunpack.c.l.b16 %v8500
          %v9230 = vunpack.c.h.b16 %v8500
          %v9231 = vunpack.c.l.b16 %v8501
          %v9232 = vunpack.c.h.b16 %v8501
          %v9233 = vunpack.c.l.b16 %v8502
          %v9234 = vunpack.c.h.b16 %v8502
          %v9235 = vunpack.c.l.b16 %v8503
          %v9236 = vunpack.c.h.b16 %v8503
          %v9237 = vunpack.c.l.b16 %v8504
          %v9238 = vunpack.c.h.b16 %v8504
          %v9239 = vunpack.c.l.b16 %v8505
          %v9240 = vunpack.c.h.b16 %v8505
          %v9241 = vunpack.c.l.b16 %v8506
          %v9242 = vunpack.c.h.b16 %v8506
          %v9243 = vunpack.c.l.b16 %v8507
          %v9244 = vunpack.c.h.b16 %v8507
          %v9245 = vunpack.c.l.b16 %v8508
          %v9246 = vunpack.c.h.b16 %v8508
          %v9247 = vunpack.c.l.b16 %v8509
          %v9248 = vunpack.c.h.b16 %v8509
          %v9249 = vunpack.c.l.b16 %v8510
          %v9250 = vunpack.c.h.b16 %v8510
          %v9251 = vunpack.c.l.b16 %v8511
          %v9252 = vunpack.c.h.b16 %v8511
          %v9253 = vunpack.c.l.b16 %v8512
          %v9254 = vunpack.c.h.b16 %v8512
          %v9255 = vunpack.c.l.b16 %v8513
          %v9256 = vunpack.c.h.b16 %v8513
          %v9257 = vunpack.c.l.b16 %v8514
          %v9258 = vunpack.c.h.b16 %v8514
          %v9259 = vunpack.c.l.b16 %v8515
          %v9260 = vunpack.c.h.b16 %v8515
          %v9261 = vunpack.c.l.b16 %v8516
          %v9262 = vunpack.c.h.b16 %v8516
          %v9263 = vunpack.c.l.b16 %v8517
          %v9264 = vunpack.c.h.b16 %v8517
          %v9265 = vunpack.c.l.b16 %v8518
          %v9266 = vunpack.c.h.b16 %v8518
          %v9267 = vunpack.c.l.b16 %v8519
          %v9268 = vunpack.c.h.b16 %v8519
          %v9269 = vunpack.c.l.b16 %v8520
          %v9270 = vunpack.c.h.b16 %v8520
          %v9271 = vunpack.c.l.b16 %v8521
          %v9272 = vunpack.c.h.b16 %v8521
          %v9273 = vunpack.c.l.b16 %v8522
          %v9274 = vunpack.c.h.b16 %v8522
          %v9275 = vunpack.c.l.b16 %v8523
          %v9276 = vunpack.c.h.b16 %v8523
          %v9277 = vunpack.c.l.b16 %v8524
          %v9278 = vunpack.c.h.b16 %v8524
          %v9279 = vunpack.c.l.b16 %v8525
          %v9280 = vunpack.c.h.b16 %v8525
          %v9281 = vunpack.c.l.b16 %v8526
          %v9282 = vunpack.c.h.b16 %v8526
          %v9283 = vunpack.c.l.b16 %v8527
          %v9284 = vunpack.c.h.b16 %v8527
          %v9285 = vunpack.c.l.b16 %v8528
          %v9286 = vunpack.c.h.b16 %v8528
          %v9287 = vunpack.c.l.b16 %v8529
          %v9288 = vunpack.c.h.b16 %v8529
          %v9289 = vunpack.c.l.b16 %v8530
          %v9290 = vunpack.c.h.b16 %v8530
          %v9291 = vunpack.c.l.b16 %v8531
          %v9292 = vunpack.c.h.b16 %v8531
          %v9293 = vunpack.c.l.b16 %v8532
          %v9294 = vunpack.c.h.b16 %v8532
          %v9295 = vunpack.c.l.b16 %v8533
          %v9296 = vunpack.c.h.b16 %v8533
          %v9297 = vunpack.c.l.b16 %v8534
          %v9298 = vunpack.c.h.b16 %v8534
          %v9299 = vunpack.c.l.b16 %v8535
          %v9300 = vunpack.c.h.b16 %v8535
          %v9301 = vunpack.c.l.b16 %v8536
          %v9302 = vunpack.c.h.b16 %v8536
          %v9303 = vunpack.c.l.b16 %v8537
          %v9304 = vunpack.c.h.b16 %v8537
          %v9305 = vunpack.c.l.b16 %v8538
          %v9306 = vunpack.c.h.b16 %v8538
          %v9307 = vunpack.c.l.b16 %v8539
          %v9308 = vunpack.c.h.b16 %v8539
          %v9309 = vunpack.c.l.b16 %v8540
          %v9310 = vunpack.c.h.b16 %v8540
          %v9311 = vunpack.c.l.b16 %v8541
          %v9312 = vunpack.c.h.b16 %v8541
          %v9313 = vunpack.c.l.b16 %v8542
          %v9314 = vunpack.c.h.b16 %v8542
          %v9315 = vunpack.c.l.b16 %v8543
          %v9316 = vunpack.c.h.b16 %v8543
          %v9317 = vunpack.c.l.b16 %v8544
          %v9318 = vunpack.c.h.b16 %v8544
          %v9319 = vunpack.c.l.b16 %v8545
          %v9320 = vunpack.c.h.b16 %v8545
          %v9321 = vunpack.c.l.b16 %v8546
          %v9322 = vunpack.c.h.b16 %v8546
          %v9323 = vunpack.c.l.b16 %v8547
          %v9324 = vunpack.c.h.b16 %v8547
          %v9325 = vunpack.c.l.b16 %v8548
          %v9326 = vunpack.c.h.b16 %v8548
          %v9327 = vpack.c.b16 %v8819, %v8815
          %v9328 = vpack.c.b16 %v8820, %v8816
          %v9329 = vpack.c.b16 %v8821, %v8817
          %v9330 = vpack.c.b16 %v8822, %v8818
          %v9331 = vpack.c.b16 %v8827, %v8823
          %v9332 = vpack.c.b16 %v8828, %v8824
          %v9333 = vpack.c.b16 %v8829, %v8825
          %v9334 = vpack.c.b16 %v8830, %v8826
          %v9335 = vpack.c.b16 %v8835, %v8831
          %v9336 = vpack.c.b16 %v8836, %v8832
          %v9337 = vpack.c.b16 %v8837, %v8833
          %v9338 = vpack.c.b16 %v8838, %v8834
          %v9339 = vpack.c.b16 %v8843, %v8839
          %v9340 = vpack.c.b16 %v8844, %v8840
          %v9341 = vpack.c.b16 %v8845, %v8841
          %v9342 = vpack.c.b16 %v8846, %v8842
          %v9343 = vpack.c.b16 %v8851, %v8847
          %v9344 = vpack.c.b16 %v8852, %v8848
          %v9345 = vpack.c.b16 %v8853, %v8849
          %v9346 = vpack.c.b16 %v8854, %v8850
          %v9347 = vpack.c.b16 %v8859, %v8855
          %v9348 = vpack.c.b16 %v8860, %v8856
          %v9349 = vpack.c.b16 %v8861, %v8857
          %v9350 = vpack.c.b16 %v8862, %v8858
          %v9351 = vpack.c.b16 %v8867, %v8863
          %v9352 = vpack.c.b16 %v8868, %v8864
          %v9353 = vpack.c.b16 %v8869, %v8865
          %v9354 = vpack.c.b16 %v8870, %v8866
          %v9355 = vpack.c.b16 %v8875, %v8871
          %v9356 = vpack.c.b16 %v8876, %v8872
          %v9357 = vpack.c.b16 %v8877, %v8873
          %v9358 = vpack.c.b16 %v8878, %v8874
          %v9359 = vpack.c.b16 %v8883, %v8879
          %v9360 = vpack.c.b16 %v8884, %v8880
          %v9361 = vpack.c.b16 %v8885, %v8881
          %v9362 = vpack.c.b16 %v8886, %v8882
          %v9363 = vpack.c.b16 %v8891, %v8887
          %v9364 = vpack.c.b16 %v8892, %v8888
          %v9365 = vpack.c.b16 %v8893, %v8889
          %v9366 = vpack.c.b16 %v8894, %v8890
          %v9367 = vpack.c.b16 %v8899, %v8895
          %v9368 = vpack.c.b16 %v8900, %v8896
          %v9369 = vpack.c.b16 %v8901, %v8897
          %v9370 = vpack.c.b16 %v8902, %v8898
          %v9371 = vpack.c.b16 %v8907, %v8903
          %v9372 = vpack.c.b16 %v8908, %v8904
          %v9373 = vpack.c.b16 %v8909, %v8905
          %v9374 = vpack.c.b16 %v8910, %v8906
          %v9375 = vpack.c.b16 %v8915, %v8911
          %v9376 = vpack.c.b16 %v8916, %v8912
          %v9377 = vpack.c.b16 %v8917, %v8913
          %v9378 = vpack.c.b16 %v8918, %v8914
          %v9379 = vpack.c.b16 %v8923, %v8919
          %v9380 = vpack.c.b16 %v8924, %v8920
          %v9381 = vpack.c.b16 %v8925, %v8921
          %v9382 = vpack.c.b16 %v8926, %v8922
          %v9383 = vpack.c.b16 %v8931, %v8927
          %v9384 = vpack.c.b16 %v8932, %v8928
          %v9385 = vpack.c.b16 %v8933, %v8929
          %v9386 = vpack.c.b16 %v8934, %v8930
          %v9387 = vpack.c.b16 %v8939, %v8935
          %v9388 = vpack.c.b16 %v8940, %v8936
          %v9389 = vpack.c.b16 %v8941, %v8937
          %v9390 = vpack.c.b16 %v8942, %v8938
          %v9391 = vpack.c.b16 %v8947, %v8943
          %v9392 = vpack.c.b16 %v8948, %v8944
          %v9393 = vpack.c.b16 %v8949, %v8945
          %v9394 = vpack.c.b16 %v8950, %v8946
          %v9395 = vpack.c.b16 %v8955, %v8951
          %v9396 = vpack.c.b16 %v8956, %v8952
          %v9397 = vpack.c.b16 %v8957, %v8953
          %v9398 = vpack.c.b16 %v8958, %v8954
          %v9399 = vpack.c.b16 %v8963, %v8959
          %v9400 = vpack.c.b16 %v8964, %v8960
          %v9401 = vpack.c.b16 %v8965, %v8961
          %v9402 = vpack.c.b16 %v8966, %v8962
          %v9403 = vpack.c.b16 %v8971, %v8967
          %v9404 = vpack.c.b16 %v8972, %v8968
          %v9405 = vpack.c.b16 %v8973, %v8969
          %v9406 = vpack.c.b16 %v8974, %v8970
          %v9407 = vpack.c.b16 %v8979, %v8975
          %v9408 = vpack.c.b16 %v8980, %v8976
          %v9409 = vpack.c.b16 %v8981, %v8977
          %v9410 = vpack.c.b16 %v8982, %v8978
          %v9411 = vpack.c.b16 %v8987, %v8983
          %v9412 = vpack.c.b16 %v8988, %v8984
          %v9413 = vpack.c.b16 %v8989, %v8985
          %v9414 = vpack.c.b16 %v8990, %v8986
          %v9415 = vpack.c.b16 %v8995, %v8991
          %v9416 = vpack.c.b16 %v8996, %v8992
          %v9417 = vpack.c.b16 %v8997, %v8993
          %v9418 = vpack.c.b16 %v8998, %v8994
          %v9419 = vpack.c.b16 %v9003, %v8999
          %v9420 = vpack.c.b16 %v9004, %v9000
          %v9421 = vpack.c.b16 %v9005, %v9001
          %v9422 = vpack.c.b16 %v9006, %v9002
          %v9423 = vpack.c.b16 %v9011, %v9007
          %v9424 = vpack.c.b16 %v9012, %v9008
          %v9425 = vpack.c.b16 %v9013, %v9009
          %v9426 = vpack.c.b16 %v9014, %v9010
          %v9427 = vpack.c.b16 %v9019, %v9015
          %v9428 = vpack.c.b16 %v9020, %v9016
          %v9429 = vpack.c.b16 %v9021, %v9017
          %v9430 = vpack.c.b16 %v9022, %v9018
          %v9431 = vpack.c.b16 %v9027, %v9023
          %v9432 = vpack.c.b16 %v9028, %v9024
          %v9433 = vpack.c.b16 %v9029, %v9025
          %v9434 = vpack.c.b16 %v9030, %v9026
          %v9435 = vpack.c.b16 %v9035, %v9031
          %v9436 = vpack.c.b16 %v9036, %v9032
          %v9437 = vpack.c.b16 %v9037, %v9033
          %v9438 = vpack.c.b16 %v9038, %v9034
          %v9439 = vpack.c.b16 %v9043, %v9039
          %v9440 = vpack.c.b16 %v9044, %v9040
          %v9441 = vpack.c.b16 %v9045, %v9041
          %v9442 = vpack.c.b16 %v9046, %v9042
          %v9443 = vpack.c.b16 %v9051, %v9047
          %v9444 = vpack.c.b16 %v9052, %v9048
          %v9445 = vpack.c.b16 %v9053, %v9049
          %v9446 = vpack.c.b16 %v9054, %v9050
          %v9447 = vpack.c.b16 %v9059, %v9055
          %v9448 = vpack.c.b16 %v9060, %v9056
          %v9449 = vpack.c.b16 %v9061, %v9057
          %v9450 = vpack.c.b16 %v9062, %v9058
          %v9451 = vpack.c.b16 %v9067, %v9063
          %v9452 = vpack.c.b16 %v9068, %v9064
          %v9453 = vpack.c.b16 %v9069, %v9065
          %v9454 = vpack.c.b16 %v9070, %v9066
          %v9455 = vpack.c.b16 %v9075, %v9071
          %v9456 = vpack.c.b16 %v9076, %v9072
          %v9457 = vpack.c.b16 %v9077, %v9073
          %v9458 = vpack.c.b16 %v9078, %v9074
          %v9459 = vpack.c.b16 %v9083, %v9079
          %v9460 = vpack.c.b16 %v9084, %v9080
          %v9461 = vpack.c.b16 %v9085, %v9081
          %v9462 = vpack.c.b16 %v9086, %v9082
          %v9463 = vpack.c.b16 %v9091, %v9087
          %v9464 = vpack.c.b16 %v9092, %v9088
          %v9465 = vpack.c.b16 %v9093, %v9089
          %v9466 = vpack.c.b16 %v9094, %v9090
          %v9467 = vpack.c.b16 %v9099, %v9095
          %v9468 = vpack.c.b16 %v9100, %v9096
          %v9469 = vpack.c.b16 %v9101, %v9097
          %v9470 = vpack.c.b16 %v9102, %v9098
          %v9471 = vpack.c.b16 %v9107, %v9103
          %v9472 = vpack.c.b16 %v9108, %v9104
          %v9473 = vpack.c.b16 %v9109, %v9105
          %v9474 = vpack.c.b16 %v9110, %v9106
          %v9475 = vpack.c.b16 %v9115, %v9111
          %v9476 = vpack.c.b16 %v9116, %v9112
          %v9477 = vpack.c.b16 %v9117, %v9113
          %v9478 = vpack.c.b16 %v9118, %v9114
          %v9479 = vpack.c.b16 %v9123, %v9119
          %v9480 = vpack.c.b16 %v9124, %v9120
          %v9481 = vpack.c.b16 %v9125, %v9121
          %v9482 = vpack.c.b16 %v9126, %v9122
          %v9483 = vpack.c.b16 %v9131, %v9127
          %v9484 = vpack.c.b16 %v9132, %v9128
          %v9485 = vpack.c.b16 %v9133, %v9129
          %v9486 = vpack.c.b16 %v9134, %v9130
          %v9487 = vpack.c.b16 %v9139, %v9135
          %v9488 = vpack.c.b16 %v9140, %v9136
          %v9489 = vpack.c.b16 %v9141, %v9137
          %v9490 = vpack.c.b16 %v9142, %v9138
          %v9491 = vpack.c.b16 %v9147, %v9143
          %v9492 = vpack.c.b16 %v9148, %v9144
          %v9493 = vpack.c.b16 %v9149, %v9145
          %v9494 = vpack.c.b16 %v9150, %v9146
          %v9495 = vpack.c.b16 %v9155, %v9151
          %v9496 = vpack.c.b16 %v9156, %v9152
          %v9497 = vpack.c.b16 %v9157, %v9153
          %v9498 = vpack.c.b16 %v9158, %v9154
          %v9499 = vpack.c.b16 %v9163, %v9159
          %v9500 = vpack.c.b16 %v9164, %v9160
          %v9501 = vpack.c.b16 %v9165, %v9161
          %v9502 = vpack.c.b16 %v9166, %v9162
          %v9503 = vpack.c.b16 %v9171, %v9167
          %v9504 = vpack.c.b16 %v9172, %v9168
          %v9505 = vpack.c.b16 %v9173, %v9169
          %v9506 = vpack.c.b16 %v9174, %v9170
          %v9507 = vpack.c.b16 %v9179, %v9175
          %v9508 = vpack.c.b16 %v9180, %v9176
          %v9509 = vpack.c.b16 %v9181, %v9177
          %v9510 = vpack.c.b16 %v9182, %v9178
          %v9511 = vpack.c.b16 %v9187, %v9183
          %v9512 = vpack.c.b16 %v9188, %v9184
          %v9513 = vpack.c.b16 %v9189, %v9185
          %v9514 = vpack.c.b16 %v9190, %v9186
          %v9515 = vpack.c.b16 %v9195, %v9191
          %v9516 = vpack.c.b16 %v9196, %v9192
          %v9517 = vpack.c.b16 %v9197, %v9193
          %v9518 = vpack.c.b16 %v9198, %v9194
          %v9519 = vpack.c.b16 %v9203, %v9199
          %v9520 = vpack.c.b16 %v9204, %v9200
          %v9521 = vpack.c.b16 %v9205, %v9201
          %v9522 = vpack.c.b16 %v9206, %v9202
          %v9523 = vpack.c.b16 %v9211, %v9207
          %v9524 = vpack.c.b16 %v9212, %v9208
          %v9525 = vpack.c.b16 %v9213, %v9209
          %v9526 = vpack.c.b16 %v9214, %v9210
          %v9527 = vpack.c.b16 %v9219, %v9215
          %v9528 = vpack.c.b16 %v9220, %v9216
          %v9529 = vpack.c.b16 %v9221, %v9217
          %v9530 = vpack.c.b16 %v9222, %v9218
          %v9531 = vpack.c.b16 %v9227, %v9223
          %v9532 = vpack.c.b16 %v9228, %v9224
          %v9533 = vpack.c.b16 %v9229, %v9225
          %v9534 = vpack.c.b16 %v9230, %v9226
          %v9535 = vpack.c.b16 %v9235, %v9231
          %v9536 = vpack.c.b16 %v9236, %v9232
          %v9537 = vpack.c.b16 %v9237, %v9233
          %v9538 = vpack.c.b16 %v9238, %v9234
          %v9539 = vpack.c.b16 %v9243, %v9239
          %v9540 = vpack.c.b16 %v9244, %v9240
          %v9541 = vpack.c.b16 %v9245, %v9241
          %v9542 = vpack.c.b16 %v9246, %v9242
          %v9543 = vpack.c.b16 %v9251, %v9247
          %v9544 = vpack.c.b16 %v9252, %v9248
          %v9545 = vpack.c.b16 %v9253, %v9249
          %v9546 = vpack.c.b16 %v9254, %v9250
          %v9547 = vpack.c.b16 %v9259, %v9255
          %v9548 = vpack.c.b16 %v9260, %v9256
          %v9549 = vpack.c.b16 %v9261, %v9257
          %v9550 = vpack.c.b16 %v9262, %v9258
          %v9551 = vpack.c.b16 %v9267, %v9263
          %v9552 = vpack.c.b16 %v9268, %v9264
          %v9553 = vpack.c.b16 %v9269, %v9265
          %v9554 = vpack.c.b16 %v9270, %v9266
          %v9555 = vpack.c.b16 %v9275, %v9271
          %v9556 = vpack.c.b16 %v9276, %v9272
          %v9557 = vpack.c.b16 %v9277, %v9273
          %v9558 = vpack.c.b16 %v9278, %v9274
          %v9559 = vpack.c.b16 %v9283, %v9279
          %v9560 = vpack.c.b16 %v9284, %v9280
          %v9561 = vpack.c.b16 %v9285, %v9281
          %v9562 = vpack.c.b16 %v9286, %v9282
          %v9563 = vpack.c.b16 %v9291, %v9287
          %v9564 = vpack.c.b16 %v9292, %v9288
          %v9565 = vpack.c.b16 %v9293, %v9289
          %v9566 = vpack.c.b16 %v9294, %v9290
          %v9567 = vpack.c.b16 %v9299, %v9295
          %v9568 = vpack.c.b16 %v9300, %v9296
          %v9569 = vpack.c.b16 %v9301, %v9297
          %v9570 = vpack.c.b16 %v9302, %v9298
          %v9571 = vpack.c.b16 %v9307, %v9303
          %v9572 = vpack.c.b16 %v9308, %v9304
          %v9573 = vpack.c.b16 %v9309, %v9305
          %v9574 = vpack.c.b16 %v9310, %v9306
          %v9575 = vpack.c.b16 %v9315, %v9311
          %v9576 = vpack.c.b16 %v9316, %v9312
          %v9577 = vpack.c.b16 %v9317, %v9313
          %v9578 = vpack.c.b16 %v9318, %v9314
          %v9579 = vpack.c.b16 %v9323, %v9319
          %v9580 = vpack.c.b16 %v9324, %v9320
          %v9581 = vpack.c.b16 %v9325, %v9321
          %v9582 = vpack.c.b16 %v9326, %v9322
          %9839 = vmatpush.bf16.msra.mxu0 %v9355
          %9840 = vmatpush.bf16.msra.mxu0 %v9351
          %9841 = vmatpush.bf16.msra.mxu0 %v9347
          %9842 = vmatpush.bf16.msra.mxu0 %v9343
          %9843 = vmatpush.bf16.msra.mxu0 %v9339
          %9844 = vmatpush.bf16.msra.mxu0 %v9335
          %9845 = vmatpush.bf16.msra.mxu0 %v9331
          %9846 = vmatpush.bf16.msra.mxu0 %v9327
          %9847 = vmatmul.bf16.gmra.mxu0 %v8285
          %v9848 = vpop.f32.mrf.mxu0
          %v9849 = vadd.f32 %v8551, %v9848
          %v9850 = vpop.f32.mrf.mxu0
          %9851 = vdwg.mxu0
          %9852 = vmatpush.bf16.msra.mxu0 %v9387
          %9853 = vmatpush.bf16.msra.mxu0 %v9383
          %9854 = vmatpush.bf16.msra.mxu0 %v9379
          %9855 = vmatpush.bf16.msra.mxu0 %v9375
          %9856 = vmatpush.bf16.msra.mxu0 %v9371
          %9857 = vmatpush.bf16.msra.mxu0 %v9367
          %9858 = vmatpush.bf16.msra.mxu0 %v9363
          %9859 = vmatpush.bf16.msra.mxu0 %v9359
          %9860 = vmatmul.bf16.gmra.mxu0 %v8286
          %v9861 = vpop.f32.mrf.mxu0
          %v9862 = vadd.f32 %v9849, %v9861
          %v9863 = vpop.f32.mrf.mxu0
          %9864 = vdwg.mxu0
          %9865 = vmatpush.bf16.msra.mxu0 %v9419
          %9866 = vmatpush.bf16.msra.mxu0 %v9415
          %9867 = vmatpush.bf16.msra.mxu0 %v9411
          %9868 = vmatpush.bf16.msra.mxu0 %v9407
          %9869 = vmatpush.bf16.msra.mxu0 %v9403
          %9870 = vmatpush.bf16.msra.mxu0 %v9399
          %9871 = vmatpush.bf16.msra.mxu0 %v9395
          %9872 = vmatpush.bf16.msra.mxu0 %v9391
          %9873 = vmatmul.bf16.gmra.mxu0 %v8287
          %v9874 = vpop.f32.mrf.mxu0
          %v9875 = vadd.f32 %v9862, %v9874
          %v9876 = vpop.f32.mrf.mxu0
          %9877 = vdwg.mxu0
          %9878 = vmatpush.bf16.msra.mxu0 %v9451
          %9879 = vmatpush.bf16.msra.mxu0 %v9447
          %9880 = vmatpush.bf16.msra.mxu0 %v9443
          %9881 = vmatpush.bf16.msra.mxu0 %v9439
          %9882 = vmatpush.bf16.msra.mxu0 %v9435
          %9883 = vmatpush.bf16.msra.mxu0 %v9431
          %9884 = vmatpush.bf16.msra.mxu0 %v9427
          %9885 = vmatpush.bf16.msra.mxu0 %v9423
          %9886 = vmatmul.bf16.gmra.mxu0 %v8288
          %v9887 = vpop.f32.mrf.mxu0
          %v9888 = vadd.f32 %v9875, %v9887
          %v9889 = vpop.f32.mrf.mxu0
          %9890 = vdwg.mxu0
          %9891 = vmatpush.bf16.msra.mxu0 %v9483
          %9892 = vmatpush.bf16.msra.mxu0 %v9479
          %9893 = vmatpush.bf16.msra.mxu0 %v9475
          %9894 = vmatpush.bf16.msra.mxu0 %v9471
          %9895 = vmatpush.bf16.msra.mxu0 %v9467
          %9896 = vmatpush.bf16.msra.mxu0 %v9463
          %9897 = vmatpush.bf16.msra.mxu0 %v9459
          %9898 = vmatpush.bf16.msra.mxu0 %v9455
          %9899 = vmatmul.bf16.gmra.mxu0 %v8289
          %v9900 = vpop.f32.mrf.mxu0
          %v9901 = vadd.f32 %v9888, %v9900
          %v9902 = vpop.f32.mrf.mxu0
          %9903 = vdwg.mxu0
          %9904 = vmatpush.bf16.msra.mxu0 %v9515
          %9905 = vmatpush.bf16.msra.mxu0 %v9511
          %9906 = vmatpush.bf16.msra.mxu0 %v9507
          %9907 = vmatpush.bf16.msra.mxu0 %v9503
          %9908 = vmatpush.bf16.msra.mxu0 %v9499
          %9909 = vmatpush.bf16.msra.mxu0 %v9495
          %9910 = vmatpush.bf16.msra.mxu0 %v9491
          %9911 = vmatpush.bf16.msra.mxu0 %v9487
          %9912 = vmatmul.bf16.gmra.mxu0 %v8290
          %v9913 = vpop.f32.mrf.mxu0
          %v9914 = vadd.f32 %v9901, %v9913
          %v9915 = vpop.f32.mrf.mxu0
          %9916 = vdwg.mxu0
          %9917 = vmatpush.bf16.msra.mxu0 %v9547
          %9918 = vmatpush.bf16.msra.mxu0 %v9543
          %9919 = vmatpush.bf16.msra.mxu0 %v9539
          %9920 = vmatpush.bf16.msra.mxu0 %v9535
          %9921 = vmatpush.bf16.msra.mxu0 %v9531
          %9922 = vmatpush.bf16.msra.mxu0 %v9527
          %9923 = vmatpush.bf16.msra.mxu0 %v9523
          %9924 = vmatpush.bf16.msra.mxu0 %v9519
          %9925 = vmatmul.bf16.gmra.mxu0 %v8291
          %v9926 = vpop.f32.mrf.mxu0
          %v9927 = vadd.f32 %v9914, %v9926
          %v9928 = vpop.f32.mrf.mxu0
          %9929 = vdwg.mxu0
          %9930 = vmatpush.bf16.msra.mxu0 %v9579
          %9931 = vmatpush.bf16.msra.mxu0 %v9575
          %9932 = vmatpush.bf16.msra.mxu0 %v9571
          %9933 = vmatpush.bf16.msra.mxu0 %v9567
          %9934 = vmatpush.bf16.msra.mxu0 %v9563
          %9935 = vmatpush.bf16.msra.mxu0 %v9559
          %9936 = vmatpush.bf16.msra.mxu0 %v9555
          %9937 = vmatpush.bf16.msra.mxu0 %v9551
          %9938 = vmatmul.bf16.gmra.mxu0 %v8292
          %v9939 = vpop.f32.mrf.mxu0
          %v9940 = vadd.f32 %v9927, %v9939
          %v9941 = vpop.f32.mrf.mxu0
          %9942 = vdwg.mxu0
          %9943 = vmatpush.bf16.msra.mxu0 %v9356
          %9944 = vmatpush.bf16.msra.mxu0 %v9352
          %9945 = vmatpush.bf16.msra.mxu0 %v9348
          %9946 = vmatpush.bf16.msra.mxu0 %v9344
          %9947 = vmatpush.bf16.msra.mxu0 %v9340
          %9948 = vmatpush.bf16.msra.mxu0 %v9336
          %9949 = vmatpush.bf16.msra.mxu0 %v9332
          %9950 = vmatpush.bf16.msra.mxu0 %v9328
          %9951 = vmatmul.bf16.gmra.mxu0 %v8285
          %v9952 = vpop.f32.mrf.mxu0
          %v9953 = vadd.f32 %v8552, %v9952
          %v9954 = vpop.f32.mrf.mxu0
          %9955 = vdwg.mxu0
          %9956 = vmatpush.bf16.msra.mxu0 %v9388
          %9957 = vmatpush.bf16.msra.mxu0 %v9384
          %9958 = vmatpush.bf16.msra.mxu0 %v9380
          %9959 = vmatpush.bf16.msra.mxu0 %v9376
          %9960 = vmatpush.bf16.msra.mxu0 %v9372
          %9961 = vmatpush.bf16.msra.mxu0 %v9368
          %9962 = vmatpush.bf16.msra.mxu0 %v9364
          %9963 = vmatpush.bf16.msra.mxu0 %v9360
          %9964 = vmatmul.bf16.gmra.mxu0 %v8286
          %v9965 = vpop.f32.mrf.mxu0
          %v9966 = vadd.f32 %v9953, %v9965
          %v9967 = vpop.f32.mrf.mxu0
          %9968 = vdwg.mxu0
          %9969 = vmatpush.bf16.msra.mxu0 %v9420
          %9970 = vmatpush.bf16.msra.mxu0 %v9416
          %9971 = vmatpush.bf16.msra.mxu0 %v9412
          %9972 = vmatpush.bf16.msra.mxu0 %v9408
          %9973 = vmatpush.bf16.msra.mxu0 %v9404
          %9974 = vmatpush.bf16.msra.mxu0 %v9400
          %9975 = vmatpush.bf16.msra.mxu0 %v9396
          %9976 = vmatpush.bf16.msra.mxu0 %v9392
          %9977 = vmatmul.bf16.gmra.mxu0 %v8287
          %v9978 = vpop.f32.mrf.mxu0
          %v9979 = vadd.f32 %v9966, %v9978
          %v9980 = vpop.f32.mrf.mxu0
          %9981 = vdwg.mxu0
          %9982 = vmatpush.bf16.msra.mxu0 %v9452
          %9983 = vmatpush.bf16.msra.mxu0 %v9448
          %9984 = vmatpush.bf16.msra.mxu0 %v9444
          %9985 = vmatpush.bf16.msra.mxu0 %v9440
          %9986 = vmatpush.bf16.msra.mxu0 %v9436
          %9987 = vmatpush.bf16.msra.mxu0 %v9432
          %9988 = vmatpush.bf16.msra.mxu0 %v9428
          %9989 = vmatpush.bf16.msra.mxu0 %v9424
          %9990 = vmatmul.bf16.gmra.mxu0 %v8288
          %v9991 = vpop.f32.mrf.mxu0
          %v9992 = vadd.f32 %v9979, %v9991
          %v9993 = vpop.f32.mrf.mxu0
          %9994 = vdwg.mxu0
          %9995 = vmatpush.bf16.msra.mxu0 %v9484
          %9996 = vmatpush.bf16.msra.mxu0 %v9480
          %9997 = vmatpush.bf16.msra.mxu0 %v9476
          %9998 = vmatpush.bf16.msra.mxu0 %v9472
          %9999 = vmatpush.bf16.msra.mxu0 %v9468
          %10000 = vmatpush.bf16.msra.mxu0 %v9464
          %10001 = vmatpush.bf16.msra.mxu0 %v9460
          %10002 = vmatpush.bf16.msra.mxu0 %v9456
          %10003 = vmatmul.bf16.gmra.mxu0 %v8289
          %v10004 = vpop.f32.mrf.mxu0
          %v10005 = vadd.f32 %v9992, %v10004
          %v10006 = vpop.f32.mrf.mxu0
          %10007 = vdwg.mxu0
          %10008 = vmatpush.bf16.msra.mxu0 %v9516
          %10009 = vmatpush.bf16.msra.mxu0 %v9512
          %10010 = vmatpush.bf16.msra.mxu0 %v9508
          %10011 = vmatpush.bf16.msra.mxu0 %v9504
          %10012 = vmatpush.bf16.msra.mxu0 %v9500
          %10013 = vmatpush.bf16.msra.mxu0 %v9496
          %10014 = vmatpush.bf16.msra.mxu0 %v9492
          %10015 = vmatpush.bf16.msra.mxu0 %v9488
          %10016 = vmatmul.bf16.gmra.mxu0 %v8290
          %v10017 = vpop.f32.mrf.mxu0
          %v10018 = vadd.f32 %v10005, %v10017
          %v10019 = vpop.f32.mrf.mxu0
          %10020 = vdwg.mxu0
          %10021 = vmatpush.bf16.msra.mxu0 %v9548
          %10022 = vmatpush.bf16.msra.mxu0 %v9544
          %10023 = vmatpush.bf16.msra.mxu0 %v9540
          %10024 = vmatpush.bf16.msra.mxu0 %v9536
          %10025 = vmatpush.bf16.msra.mxu0 %v9532
          %10026 = vmatpush.bf16.msra.mxu0 %v9528
          %10027 = vmatpush.bf16.msra.mxu0 %v9524
          %10028 = vmatpush.bf16.msra.mxu0 %v9520
          %10029 = vmatmul.bf16.gmra.mxu0 %v8291
          %v10030 = vpop.f32.mrf.mxu0
          %v10031 = vadd.f32 %v10018, %v10030
          %v10032 = vpop.f32.mrf.mxu0
          %10033 = vdwg.mxu0
          %10034 = vmatpush.bf16.msra.mxu0 %v9580
          %10035 = vmatpush.bf16.msra.mxu0 %v9576
          %10036 = vmatpush.bf16.msra.mxu0 %v9572
          %10037 = vmatpush.bf16.msra.mxu0 %v9568
          %10038 = vmatpush.bf16.msra.mxu0 %v9564
          %10039 = vmatpush.bf16.msra.mxu0 %v9560
          %10040 = vmatpush.bf16.msra.mxu0 %v9556
          %10041 = vmatpush.bf16.msra.mxu0 %v9552
          %10042 = vmatmul.bf16.gmra.mxu0 %v8292
          %v10043 = vpop.f32.mrf.mxu0
          %v10044 = vadd.f32 %v10031, %v10043
          %v10045 = vpop.f32.mrf.mxu0
          %10046 = vdwg.mxu0
          %10047 = vmatpush.bf16.msra.mxu0 %v9357
          %10048 = vmatpush.bf16.msra.mxu0 %v9353
          %10049 = vmatpush.bf16.msra.mxu0 %v9349
          %10050 = vmatpush.bf16.msra.mxu0 %v9345
          %10051 = vmatpush.bf16.msra.mxu0 %v9341
          %10052 = vmatpush.bf16.msra.mxu0 %v9337
          %10053 = vmatpush.bf16.msra.mxu0 %v9333
          %10054 = vmatpush.bf16.msra.mxu0 %v9329
          %10055 = vmatmul.bf16.gmra.mxu0 %v8285
          %v10056 = vpop.f32.mrf.mxu0
          %v10057 = vadd.f32 %v8553, %v10056
          %v10058 = vpop.f32.mrf.mxu0
          %10059 = vdwg.mxu0
          %10060 = vmatpush.bf16.msra.mxu0 %v9389
          %10061 = vmatpush.bf16.msra.mxu0 %v9385
          %10062 = vmatpush.bf16.msra.mxu0 %v9381
          %10063 = vmatpush.bf16.msra.mxu0 %v9377
          %10064 = vmatpush.bf16.msra.mxu0 %v9373
          %10065 = vmatpush.bf16.msra.mxu0 %v9369
          %10066 = vmatpush.bf16.msra.mxu0 %v9365
          %10067 = vmatpush.bf16.msra.mxu0 %v9361
          %10068 = vmatmul.bf16.gmra.mxu0 %v8286
          %v10069 = vpop.f32.mrf.mxu0
          %v10070 = vadd.f32 %v10057, %v10069
          %v10071 = vpop.f32.mrf.mxu0
          %10072 = vdwg.mxu0
          %10073 = vmatpush.bf16.msra.mxu0 %v9421
          %10074 = vmatpush.bf16.msra.mxu0 %v9417
          %10075 = vmatpush.bf16.msra.mxu0 %v9413
          %10076 = vmatpush.bf16.msra.mxu0 %v9409
          %10077 = vmatpush.bf16.msra.mxu0 %v9405
          %10078 = vmatpush.bf16.msra.mxu0 %v9401
          %10079 = vmatpush.bf16.msra.mxu0 %v9397
          %10080 = vmatpush.bf16.msra.mxu0 %v9393
          %10081 = vmatmul.bf16.gmra.mxu0 %v8287
          %v10082 = vpop.f32.mrf.mxu0
          %v10083 = vadd.f32 %v10070, %v10082
          %v10084 = vpop.f32.mrf.mxu0
          %10085 = vdwg.mxu0
          %10086 = vmatpush.bf16.msra.mxu0 %v9453
          %10087 = vmatpush.bf16.msra.mxu0 %v9449
          %10088 = vmatpush.bf16.msra.mxu0 %v9445
          %10089 = vmatpush.bf16.msra.mxu0 %v9441
          %10090 = vmatpush.bf16.msra.mxu0 %v9437
          %10091 = vmatpush.bf16.msra.mxu0 %v9433
          %10092 = vmatpush.bf16.msra.mxu0 %v9429
          %10093 = vmatpush.bf16.msra.mxu0 %v9425
          %10094 = vmatmul.bf16.gmra.mxu0 %v8288
          %v10095 = vpop.f32.mrf.mxu0
          %v10096 = vadd.f32 %v10083, %v10095
          %v10097 = vpop.f32.mrf.mxu0
          %10098 = vdwg.mxu0
          %10099 = vmatpush.bf16.msra.mxu0 %v9485
          %10100 = vmatpush.bf16.msra.mxu0 %v9481
          %10101 = vmatpush.bf16.msra.mxu0 %v9477
          %10102 = vmatpush.bf16.msra.mxu0 %v9473
          %10103 = vmatpush.bf16.msra.mxu0 %v9469
          %10104 = vmatpush.bf16.msra.mxu0 %v9465
          %10105 = vmatpush.bf16.msra.mxu0 %v9461
          %10106 = vmatpush.bf16.msra.mxu0 %v9457
          %10107 = vmatmul.bf16.gmra.mxu0 %v8289
          %v10108 = vpop.f32.mrf.mxu0
          %v10109 = vadd.f32 %v10096, %v10108
          %v10110 = vpop.f32.mrf.mxu0
          %10111 = vdwg.mxu0
          %10112 = vmatpush.bf16.msra.mxu0 %v9517
          %10113 = vmatpush.bf16.msra.mxu0 %v9513
          %10114 = vmatpush.bf16.msra.mxu0 %v9509
          %10115 = vmatpush.bf16.msra.mxu0 %v9505
          %10116 = vmatpush.bf16.msra.mxu0 %v9501
          %10117 = vmatpush.bf16.msra.mxu0 %v9497
          %10118 = vmatpush.bf16.msra.mxu0 %v9493
          %10119 = vmatpush.bf16.msra.mxu0 %v9489
          %10120 = vmatmul.bf16.gmra.mxu0 %v8290
          %v10121 = vpop.f32.mrf.mxu0
          %v10122 = vadd.f32 %v10109, %v10121
          %v10123 = vpop.f32.mrf.mxu0
          %10124 = vdwg.mxu0
          %10125 = vmatpush.bf16.msra.mxu0 %v9549
          %10126 = vmatpush.bf16.msra.mxu0 %v9545
          %10127 = vmatpush.bf16.msra.mxu0 %v9541
          %10128 = vmatpush.bf16.msra.mxu0 %v9537
          %10129 = vmatpush.bf16.msra.mxu0 %v9533
          %10130 = vmatpush.bf16.msra.mxu0 %v9529
          %10131 = vmatpush.bf16.msra.mxu0 %v9525
          %10132 = vmatpush.bf16.msra.mxu0 %v9521
          %10133 = vmatmul.bf16.gmra.mxu0 %v8291
          %v10134 = vpop.f32.mrf.mxu0
          %v10135 = vadd.f32 %v10122, %v10134
          %v10136 = vpop.f32.mrf.mxu0
          %10137 = vdwg.mxu0
          %10138 = vmatpush.bf16.msra.mxu0 %v9581
          %10139 = vmatpush.bf16.msra.mxu0 %v9577
          %10140 = vmatpush.bf16.msra.mxu0 %v9573
          %10141 = vmatpush.bf16.msra.mxu0 %v9569
          %10142 = vmatpush.bf16.msra.mxu0 %v9565
          %10143 = vmatpush.bf16.msra.mxu0 %v9561
          %10144 = vmatpush.bf16.msra.mxu0 %v9557
          %10145 = vmatpush.bf16.msra.mxu0 %v9553
          %10146 = vmatmul.bf16.gmra.mxu0 %v8292
          %v10147 = vpop.f32.mrf.mxu0
          %v10148 = vadd.f32 %v10135, %v10147
          %v10149 = vpop.f32.mrf.mxu0
          %10150 = vdwg.mxu0
          %10151 = vmatpush.bf16.msra.mxu0 %v9358
          %10152 = vmatpush.bf16.msra.mxu0 %v9354
          %10153 = vmatpush.bf16.msra.mxu0 %v9350
          %10154 = vmatpush.bf16.msra.mxu0 %v9346
          %10155 = vmatpush.bf16.msra.mxu0 %v9342
          %10156 = vmatpush.bf16.msra.mxu0 %v9338
          %10157 = vmatpush.bf16.msra.mxu0 %v9334
          %10158 = vmatpush.bf16.msra.mxu0 %v9330
          %10159 = vmatmul.bf16.gmra.mxu0 %v8285
          %v10160 = vpop.f32.mrf.mxu0
          %v10161 = vadd.f32 %v8554, %v10160
          %v10162 = vpop.f32.mrf.mxu0
          %10163 = vdwg.mxu0
          %10164 = vmatpush.bf16.msra.mxu0 %v9390
          %10165 = vmatpush.bf16.msra.mxu0 %v9386
          %10166 = vmatpush.bf16.msra.mxu0 %v9382
          %10167 = vmatpush.bf16.msra.mxu0 %v9378
          %10168 = vmatpush.bf16.msra.mxu0 %v9374
          %10169 = vmatpush.bf16.msra.mxu0 %v9370
          %10170 = vmatpush.bf16.msra.mxu0 %v9366
          %10171 = vmatpush.bf16.msra.mxu0 %v9362
          %10172 = vmatmul.bf16.gmra.mxu0 %v8286
          %v10173 = vpop.f32.mrf.mxu0
          %v10174 = vadd.f32 %v10161, %v10173
          %v10175 = vpop.f32.mrf.mxu0
          %10176 = vdwg.mxu0
          %10177 = vmatpush.bf16.msra.mxu0 %v9422
          %10178 = vmatpush.bf16.msra.mxu0 %v9418
          %10179 = vmatpush.bf16.msra.mxu0 %v9414
          %10180 = vmatpush.bf16.msra.mxu0 %v9410
          %10181 = vmatpush.bf16.msra.mxu0 %v9406
          %10182 = vmatpush.bf16.msra.mxu0 %v9402
          %10183 = vmatpush.bf16.msra.mxu0 %v9398
          %10184 = vmatpush.bf16.msra.mxu0 %v9394
          %10185 = vmatmul.bf16.gmra.mxu0 %v8287
          %v10186 = vpop.f32.mrf.mxu0
          %v10187 = vadd.f32 %v10174, %v10186
          %v10188 = vpop.f32.mrf.mxu0
          %10189 = vdwg.mxu0
          %10190 = vmatpush.bf16.msra.mxu0 %v9454
          %10191 = vmatpush.bf16.msra.mxu0 %v9450
          %10192 = vmatpush.bf16.msra.mxu0 %v9446
          %10193 = vmatpush.bf16.msra.mxu0 %v9442
          %10194 = vmatpush.bf16.msra.mxu0 %v9438
          %10195 = vmatpush.bf16.msra.mxu0 %v9434
          %10196 = vmatpush.bf16.msra.mxu0 %v9430
          %10197 = vmatpush.bf16.msra.mxu0 %v9426
          %10198 = vmatmul.bf16.gmra.mxu0 %v8288
          %v10199 = vpop.f32.mrf.mxu0
          %v10200 = vadd.f32 %v10187, %v10199
          %v10201 = vpop.f32.mrf.mxu0
          %10202 = vdwg.mxu0
          %10203 = vmatpush.bf16.msra.mxu0 %v9486
          %10204 = vmatpush.bf16.msra.mxu0 %v9482
          %10205 = vmatpush.bf16.msra.mxu0 %v9478
          %10206 = vmatpush.bf16.msra.mxu0 %v9474
          %10207 = vmatpush.bf16.msra.mxu0 %v9470
          %10208 = vmatpush.bf16.msra.mxu0 %v9466
          %10209 = vmatpush.bf16.msra.mxu0 %v9462
          %10210 = vmatpush.bf16.msra.mxu0 %v9458
          %10211 = vmatmul.bf16.gmra.mxu0 %v8289
          %v10212 = vpop.f32.mrf.mxu0
          %v10213 = vadd.f32 %v10200, %v10212
          %v10214 = vpop.f32.mrf.mxu0
          %10215 = vdwg.mxu0
          %10216 = vmatpush.bf16.msra.mxu0 %v9518
          %10217 = vmatpush.bf16.msra.mxu0 %v9514
          %10218 = vmatpush.bf16.msra.mxu0 %v9510
          %10219 = vmatpush.bf16.msra.mxu0 %v9506
          %10220 = vmatpush.bf16.msra.mxu0 %v9502
          %10221 = vmatpush.bf16.msra.mxu0 %v9498
          %10222 = vmatpush.bf16.msra.mxu0 %v9494
          %10223 = vmatpush.bf16.msra.mxu0 %v9490
          %10224 = vmatmul.bf16.gmra.mxu0 %v8290
          %v10225 = vpop.f32.mrf.mxu0
          %v10226 = vadd.f32 %v10213, %v10225
          %v10227 = vpop.f32.mrf.mxu0
          %10228 = vdwg.mxu0
          %10229 = vmatpush.bf16.msra.mxu0 %v9550
          %10230 = vmatpush.bf16.msra.mxu0 %v9546
          %10231 = vmatpush.bf16.msra.mxu0 %v9542
          %10232 = vmatpush.bf16.msra.mxu0 %v9538
          %10233 = vmatpush.bf16.msra.mxu0 %v9534
          %10234 = vmatpush.bf16.msra.mxu0 %v9530
          %10235 = vmatpush.bf16.msra.mxu0 %v9526
          %10236 = vmatpush.bf16.msra.mxu0 %v9522
          %10237 = vmatmul.bf16.gmra.mxu0 %v8291
          %v10238 = vpop.f32.mrf.mxu0
          %v10239 = vadd.f32 %v10226, %v10238
          %v10240 = vpop.f32.mrf.mxu0
          %10241 = vdwg.mxu0
          %10242 = vmatpush.bf16.msra.mxu0 %v9582
          %10243 = vmatpush.bf16.msra.mxu0 %v9578
          %10244 = vmatpush.bf16.msra.mxu0 %v9574
          %10245 = vmatpush.bf16.msra.mxu0 %v9570
          %10246 = vmatpush.bf16.msra.mxu0 %v9566
          %10247 = vmatpush.bf16.msra.mxu0 %v9562
          %10248 = vmatpush.bf16.msra.mxu0 %v9558
          %10249 = vmatpush.bf16.msra.mxu0 %v9554
          %10250 = vmatmul.bf16.gmra.mxu0 %v8292
          %v10251 = vpop.f32.mrf.mxu0
          %v10252 = vadd.f32 %v10239, %v10251
          %v10253 = vpop.f32.mrf.mxu0
          %10254 = vdwg.mxu0
          %v10255 = vmax.f32 %v9940, 0.0
          %v10256 = vmax.f32 %v10044, 0.0
          %v10257 = vmax.f32 %v10148, 0.0
          %v10258 = vmax.f32 %v10252, 0.0
          %v10259 = vpack.c.bf16 %v10255, %v10255
          %v10260 = vpack.c.bf16 %v10256, %v10256
          %v10261 = vpack.c.bf16 %v10257, %v10257
          %v10262 = vpack.c.bf16 %v10258, %v10258
          %v10263 = vld [vmem:[%s9] sm:$0xff]
          %v10264 = vld [vmem:[%s9 + $0x8] sm:$0xff]
          %v10265 = vld [vmem:[%s9 + $0x10] sm:$0xff]
          %v10266 = vld [vmem:[%s9 + $0x18] sm:$0xff]
          %v10267 = vld [vmem:[%s9 + $0x20] sm:$0xff]
          %v10268 = vld [vmem:[%s9 + $0x28] sm:$0xff]
          %v10269 = vld [vmem:[%s9 + $0x30] sm:$0xff]
          %v10270 = vld [vmem:[%s9 + $0x38] sm:$0xff]
          %v10271 = vld [vmem:[%s9 + $0x40] sm:$0xff]
          %v10272 = vld [vmem:[%s9 + $0x48] sm:$0xff]
          %v10273 = vld [vmem:[%s9 + $0x50] sm:$0xff]
          %v10274 = vld [vmem:[%s9 + $0x58] sm:$0xff]
          %v10275 = vld [vmem:[%s9 + $0x60] sm:$0xff]
          %v10276 = vld [vmem:[%s9 + $0x68] sm:$0xff]
          %v10277 = vld [vmem:[%s9 + $0x70] sm:$0xff]
          %v10278 = vld [vmem:[%s9 + $0x78] sm:$0xff]
          %v10279 = vld [vmem:[%s9 + $0x80] sm:$0xff]
          %v10280 = vld [vmem:[%s9 + $0x88] sm:$0xff]
          %v10281 = vld [vmem:[%s9 + $0x90] sm:$0xff]
          %v10282 = vld [vmem:[%s9 + $0x98] sm:$0xff]
          %v10283 = vld [vmem:[%s9 + $0xa0] sm:$0xff]
          %v10284 = vld [vmem:[%s9 + $0xa8] sm:$0xff]
          %v10285 = vld [vmem:[%s9 + $0xb0] sm:$0xff]
          %v10286 = vld [vmem:[%s9 + $0xb8] sm:$0xff]
          %v10287 = vld [vmem:[%s9 + $0xc0] sm:$0xff]
          %v10288 = vld [vmem:[%s9 + $0xc8] sm:$0xff]
          %v10289 = vld [vmem:[%s9 + $0xd0] sm:$0xff]
          %v10290 = vld [vmem:[%s9 + $0xd8] sm:$0xff]
          %v10291 = vld [vmem:[%s9 + $0xe0] sm:$0xff]
          %v10292 = vld [vmem:[%s9 + $0xe8] sm:$0xff]
          %v10293 = vld [vmem:[%s9 + $0xf0] sm:$0xff]
          %v10294 = vld [vmem:[%s9 + $0xf8] sm:$0xff]
          %v10295 = vld [vmem:[%s9 + $0x100] sm:$0xff]
          %v10296 = vld [vmem:[%s9 + $0x108] sm:$0xff]
          %v10297 = vld [vmem:[%s9 + $0x110] sm:$0xff]
          %v10298 = vld [vmem:[%s9 + $0x118] sm:$0xff]
          %v10299 = vld [vmem:[%s9 + $0x120] sm:$0xff]
          %v10300 = vld [vmem:[%s9 + $0x128] sm:$0xff]
          %v10301 = vld [vmem:[%s9 + $0x130] sm:$0xff]
          %v10302 = vld [vmem:[%s9 + $0x138] sm:$0xff]
          %v10303 = vld [vmem:[%s9 + $0x140] sm:$0xff]
          %v10304 = vld [vmem:[%s9 + $0x148] sm:$0xff]
          %v10305 = vld [vmem:[%s9 + $0x150] sm:$0xff]
          %v10306 = vld [vmem:[%s9 + $0x158] sm:$0xff]
          %v10307 = vld [vmem:[%s9 + $0x160] sm:$0xff]
          %v10308 = vld [vmem:[%s9 + $0x168] sm:$0xff]
          %v10309 = vld [vmem:[%s9 + $0x170] sm:$0xff]
          %v10310 = vld [vmem:[%s9 + $0x178] sm:$0xff]
          %v10311 = vld [vmem:[%s9 + $0x180] sm:$0xff]
          %v10312 = vld [vmem:[%s9 + $0x188] sm:$0xff]
          %v10313 = vld [vmem:[%s9 + $0x190] sm:$0xff]
          %v10314 = vld [vmem:[%s9 + $0x198] sm:$0xff]
          %v10315 = vld [vmem:[%s9 + $0x1a0] sm:$0xff]
          %v10316 = vld [vmem:[%s9 + $0x1a8] sm:$0xff]
          %v10317 = vld [vmem:[%s9 + $0x1b0] sm:$0xff]
          %v10318 = vld [vmem:[%s9 + $0x1b8] sm:$0xff]
          %v10319 = vld [vmem:[%s9 + $0x1c0] sm:$0xff]
          %v10320 = vld [vmem:[%s9 + $0x1c8] sm:$0xff]
          %v10321 = vld [vmem:[%s9 + $0x1d0] sm:$0xff]
          %v10322 = vld [vmem:[%s9 + $0x1d8] sm:$0xff]
          %v10323 = vld [vmem:[%s9 + $0x1e0] sm:$0xff]
          %v10324 = vld [vmem:[%s9 + $0x1e8] sm:$0xff]
          %v10325 = vld [vmem:[%s9 + $0x1f0] sm:$0xff]
          %v10326 = vld [vmem:[%s9 + $0x1f8] sm:$0xff]
          %v10327 = vld [vmem:[%s10] sm:$0x3]
          %v10329 = vperm.slane %v10327, 0
          %v10330 = vperm.slane %v10327, 1
          %v10397 = vunpack.c.l.b16 %v10263
          %v10398 = vunpack.c.h.b16 %v10263
          %v10399 = vunpack.c.l.b16 %v10264
          %v10400 = vunpack.c.h.b16 %v10264
          %v10401 = vunpack.c.l.b16 %v10265
          %v10402 = vunpack.c.h.b16 %v10265
          %v10403 = vunpack.c.l.b16 %v10266
          %v10404 = vunpack.c.h.b16 %v10266
          %v10405 = vunpack.c.l.b16 %v10267
          %v10406 = vunpack.c.h.b16 %v10267
          %v10407 = vunpack.c.l.b16 %v10268
          %v10408 = vunpack.c.h.b16 %v10268
          %v10409 = vunpack.c.l.b16 %v10269
          %v10410 = vunpack.c.h.b16 %v10269
          %v10411 = vunpack.c.l.b16 %v10270
          %v10412 = vunpack.c.h.b16 %v10270
          %v10413 = vunpack.c.l.b16 %v10271
          %v10414 = vunpack.c.h.b16 %v10271
          %v10415 = vunpack.c.l.b16 %v10272
          %v10416 = vunpack.c.h.b16 %v10272
          %v10417 = vunpack.c.l.b16 %v10273
          %v10418 = vunpack.c.h.b16 %v10273
          %v10419 = vunpack.c.l.b16 %v10274
          %v10420 = vunpack.c.h.b16 %v10274
          %v10421 = vunpack.c.l.b16 %v10275
          %v10422 = vunpack.c.h.b16 %v10275
          %v10423 = vunpack.c.l.b16 %v10276
          %v10424 = vunpack.c.h.b16 %v10276
          %v10425 = vunpack.c.l.b16 %v10277
          %v10426 = vunpack.c.h.b16 %v10277
          %v10427 = vunpack.c.l.b16 %v10278
          %v10428 = vunpack.c.h.b16 %v10278
          %v10429 = vunpack.c.l.b16 %v10279
          %v10430 = vunpack.c.h.b16 %v10279
          %v10431 = vunpack.c.l.b16 %v10280
          %v10432 = vunpack.c.h.b16 %v10280
          %v10433 = vunpack.c.l.b16 %v10281
          %v10434 = vunpack.c.h.b16 %v10281
          %v10435 = vunpack.c.l.b16 %v10282
          %v10436 = vunpack.c.h.b16 %v10282
          %v10437 = vunpack.c.l.b16 %v10283
          %v10438 = vunpack.c.h.b16 %v10283
          %v10439 = vunpack.c.l.b16 %v10284
          %v10440 = vunpack.c.h.b16 %v10284
          %v10441 = vunpack.c.l.b16 %v10285
          %v10442 = vunpack.c.h.b16 %v10285
          %v10443 = vunpack.c.l.b16 %v10286
          %v10444 = vunpack.c.h.b16 %v10286
          %v10445 = vunpack.c.l.b16 %v10287
          %v10446 = vunpack.c.h.b16 %v10287
          %v10447 = vunpack.c.l.b16 %v10288
          %v10448 = vunpack.c.h.b16 %v10288
          %v10449 = vunpack.c.l.b16 %v10289
          %v10450 = vunpack.c.h.b16 %v10289
          %v10451 = vunpack.c.l.b16 %v10290
          %v10452 = vunpack.c.h.b16 %v10290
          %v10453 = vunpack.c.l.b16 %v10291
          %v10454 = vunpack.c.h.b16 %v10291
          %v10455 = vunpack.c.l.b16 %v10292
          %v10456 = vunpack.c.h.b16 %v10292
          %v10457 = vunpack.c.l.b16 %v10293
          %v10458 = vunpack.c.h.b16 %v10293
          %v10459 = vunpack.c.l.b16 %v10294
          %v10460 = vunpack.c.h.b16 %v10294
          %v10461 = vunpack.c.l.b16 %v10295
          %v10462 = vunpack.c.h.b16 %v10295
          %v10463 = vunpack.c.l.b16 %v10296
          %v10464 = vunpack.c.h.b16 %v10296
          %v10465 = vunpack.c.l.b16 %v10297
          %v10466 = vunpack.c.h.b16 %v10297
          %v10467 = vunpack.c.l.b16 %v10298
          %v10468 = vunpack.c.h.b16 %v10298
          %v10469 = vunpack.c.l.b16 %v10299
          %v10470 = vunpack.c.h.b16 %v10299
          %v10471 = vunpack.c.l.b16 %v10300
          %v10472 = vunpack.c.h.b16 %v10300
          %v10473 = vunpack.c.l.b16 %v10301
          %v10474 = vunpack.c.h.b16 %v10301
          %v10475 = vunpack.c.l.b16 %v10302
          %v10476 = vunpack.c.h.b16 %v10302
          %v10477 = vunpack.c.l.b16 %v10303
          %v10478 = vunpack.c.h.b16 %v10303
          %v10479 = vunpack.c.l.b16 %v10304
          %v10480 = vunpack.c.h.b16 %v10304
          %v10481 = vunpack.c.l.b16 %v10305
          %v10482 = vunpack.c.h.b16 %v10305
          %v10483 = vunpack.c.l.b16 %v10306
          %v10484 = vunpack.c.h.b16 %v10306
          %v10485 = vunpack.c.l.b16 %v10307
          %v10486 = vunpack.c.h.b16 %v10307
          %v10487 = vunpack.c.l.b16 %v10308
          %v10488 = vunpack.c.h.b16 %v10308
          %v10489 = vunpack.c.l.b16 %v10309
          %v10490 = vunpack.c.h.b16 %v10309
          %v10491 = vunpack.c.l.b16 %v10310
          %v10492 = vunpack.c.h.b16 %v10310
          %v10493 = vunpack.c.l.b16 %v10311
          %v10494 = vunpack.c.h.b16 %v10311
          %v10495 = vunpack.c.l.b16 %v10312
          %v10496 = vunpack.c.h.b16 %v10312
          %v10497 = vunpack.c.l.b16 %v10313
          %v10498 = vunpack.c.h.b16 %v10313
          %v10499 = vunpack.c.l.b16 %v10314
          %v10500 = vunpack.c.h.b16 %v10314
          %v10501 = vunpack.c.l.b16 %v10315
          %v10502 = vunpack.c.h.b16 %v10315
          %v10503 = vunpack.c.l.b16 %v10316
          %v10504 = vunpack.c.h.b16 %v10316
          %v10505 = vunpack.c.l.b16 %v10317
          %v10506 = vunpack.c.h.b16 %v10317
          %v10507 = vunpack.c.l.b16 %v10318
          %v10508 = vunpack.c.h.b16 %v10318
          %v10509 = vunpack.c.l.b16 %v10319
          %v10510 = vunpack.c.h.b16 %v10319
          %v10511 = vunpack.c.l.b16 %v10320
          %v10512 = vunpack.c.h.b16 %v10320
          %v10513 = vunpack.c.l.b16 %v10321
          %v10514 = vunpack.c.h.b16 %v10321
          %v10515 = vunpack.c.l.b16 %v10322
          %v10516 = vunpack.c.h.b16 %v10322
          %v10517 = vunpack.c.l.b16 %v10323
          %v10518 = vunpack.c.h.b16 %v10323
          %v10519 = vunpack.c.l.b16 %v10324
          %v10520 = vunpack.c.h.b16 %v10324
          %v10521 = vunpack.c.l.b16 %v10325
          %v10522 = vunpack.c.h.b16 %v10325
          %v10523 = vunpack.c.l.b16 %v10326
          %v10524 = vunpack.c.h.b16 %v10326
          %v10525 = vpack.c.b16 %v10399, %v10397
          %v10526 = vpack.c.b16 %v10400, %v10398
          %v10527 = vpack.c.b16 %v10403, %v10401
          %v10528 = vpack.c.b16 %v10404, %v10402
          %v10529 = vpack.c.b16 %v10407, %v10405
          %v10530 = vpack.c.b16 %v10408, %v10406
          %v10531 = vpack.c.b16 %v10411, %v10409
          %v10532 = vpack.c.b16 %v10412, %v10410
          %v10533 = vpack.c.b16 %v10415, %v10413
          %v10534 = vpack.c.b16 %v10416, %v10414
          %v10535 = vpack.c.b16 %v10419, %v10417
          %v10536 = vpack.c.b16 %v10420, %v10418
          %v10537 = vpack.c.b16 %v10423, %v10421
          %v10538 = vpack.c.b16 %v10424, %v10422
          %v10539 = vpack.c.b16 %v10427, %v10425
          %v10540 = vpack.c.b16 %v10428, %v10426
          %v10541 = vpack.c.b16 %v10431, %v10429
          %v10542 = vpack.c.b16 %v10432, %v10430
          %v10543 = vpack.c.b16 %v10435, %v10433
          %v10544 = vpack.c.b16 %v10436, %v10434
          %v10545 = vpack.c.b16 %v10439, %v10437
          %v10546 = vpack.c.b16 %v10440, %v10438
          %v10547 = vpack.c.b16 %v10443, %v10441
          %v10548 = vpack.c.b16 %v10444, %v10442
          %v10549 = vpack.c.b16 %v10447, %v10445
          %v10550 = vpack.c.b16 %v10448, %v10446
          %v10551 = vpack.c.b16 %v10451, %v10449
          %v10552 = vpack.c.b16 %v10452, %v10450
          %v10553 = vpack.c.b16 %v10455, %v10453
          %v10554 = vpack.c.b16 %v10456, %v10454
          %v10555 = vpack.c.b16 %v10459, %v10457
          %v10556 = vpack.c.b16 %v10460, %v10458
          %v10557 = vpack.c.b16 %v10463, %v10461
          %v10558 = vpack.c.b16 %v10464, %v10462
          %v10559 = vpack.c.b16 %v10467, %v10465
          %v10560 = vpack.c.b16 %v10468, %v10466
          %v10561 = vpack.c.b16 %v10471, %v10469
          %v10562 = vpack.c.b16 %v10472, %v10470
          %v10563 = vpack.c.b16 %v10475, %v10473
          %v10564 = vpack.c.b16 %v10476, %v10474
          %v10565 = vpack.c.b16 %v10479, %v10477
          %v10566 = vpack.c.b16 %v10480, %v10478
          %v10567 = vpack.c.b16 %v10483, %v10481
          %v10568 = vpack.c.b16 %v10484, %v10482
          %v10569 = vpack.c.b16 %v10487, %v10485
          %v10570 = vpack.c.b16 %v10488, %v10486
          %v10571 = vpack.c.b16 %v10491, %v10489
          %v10572 = vpack.c.b16 %v10492, %v10490
          %v10573 = vpack.c.b16 %v10495, %v10493
          %v10574 = vpack.c.b16 %v10496, %v10494
          %v10575 = vpack.c.b16 %v10499, %v10497
          %v10576 = vpack.c.b16 %v10500, %v10498
          %v10577 = vpack.c.b16 %v10503, %v10501
          %v10578 = vpack.c.b16 %v10504, %v10502
          %v10579 = vpack.c.b16 %v10507, %v10505
          %v10580 = vpack.c.b16 %v10508, %v10506
          %v10581 = vpack.c.b16 %v10511, %v10509
          %v10582 = vpack.c.b16 %v10512, %v10510
          %v10583 = vpack.c.b16 %v10515, %v10513
          %v10584 = vpack.c.b16 %v10516, %v10514
          %v10585 = vpack.c.b16 %v10519, %v10517
          %v10586 = vpack.c.b16 %v10520, %v10518
          %v10587 = vpack.c.b16 %v10523, %v10521
          %v10588 = vpack.c.b16 %v10524, %v10522
          %10653 = vmatpush.bf16.msra.mxu0 %v10539
          %10654 = vmatpush.bf16.msra.mxu0 %v10537
          %10655 = vmatpush.bf16.msra.mxu0 %v10535
          %10656 = vmatpush.bf16.msra.mxu0 %v10533
          %10657 = vmatpush.bf16.msra.mxu0 %v10531
          %10658 = vmatpush.bf16.msra.mxu0 %v10529
          %10659 = vmatpush.bf16.msra.mxu0 %v10527
          %10660 = vmatpush.bf16.msra.mxu0 %v10525
          %10661 = vmatmul.bf16.gmra.mxu0 %v10259
          %v10662 = vpop.f32.mrf.mxu0
          %v10663 = vadd.f32 %v10329, %v10662
          %v10664 = vpop.f32.mrf.mxu0
          %10665 = vdwg.mxu0
          %10666 = vmatpush.bf16.msra.mxu0 %v10555
          %10667 = vmatpush.bf16.msra.mxu0 %v10553
          %10668 = vmatpush.bf16.msra.mxu0 %v10551
          %10669 = vmatpush.bf16.msra.mxu0 %v10549
          %10670 = vmatpush.bf16.msra.mxu0 %v10547
          %10671 = vmatpush.bf16.msra.mxu0 %v10545
          %10672 = vmatpush.bf16.msra.mxu0 %v10543
          %10673 = vmatpush.bf16.msra.mxu0 %v10541
          %10674 = vmatmul.bf16.gmra.mxu0 %v10260
          %v10675 = vpop.f32.mrf.mxu0
          %v10676 = vadd.f32 %v10663, %v10675
          %v10677 = vpop.f32.mrf.mxu0
          %10678 = vdwg.mxu0
          %10679 = vmatpush.bf16.msra.mxu0 %v10571
          %10680 = vmatpush.bf16.msra.mxu0 %v10569
          %10681 = vmatpush.bf16.msra.mxu0 %v10567
          %10682 = vmatpush.bf16.msra.mxu0 %v10565
          %10683 = vmatpush.bf16.msra.mxu0 %v10563
          %10684 = vmatpush.bf16.msra.mxu0 %v10561
          %10685 = vmatpush.bf16.msra.mxu0 %v10559
          %10686 = vmatpush.bf16.msra.mxu0 %v10557
          %10687 = vmatmul.bf16.gmra.mxu0 %v10261
          %v10688 = vpop.f32.mrf.mxu0
          %v10689 = vadd.f32 %v10676, %v10688
          %v10690 = vpop.f32.mrf.mxu0
          %10691 = vdwg.mxu0
          %10692 = vmatpush.bf16.msra.mxu0 %v10587
          %10693 = vmatpush.bf16.msra.mxu0 %v10585
          %10694 = vmatpush.bf16.msra.mxu0 %v10583
          %10695 = vmatpush.bf16.msra.mxu0 %v10581
          %10696 = vmatpush.bf16.msra.mxu0 %v10579
          %10697 = vmatpush.bf16.msra.mxu0 %v10577
          %10698 = vmatpush.bf16.msra.mxu0 %v10575
          %10699 = vmatpush.bf16.msra.mxu0 %v10573
          %10700 = vmatmul.bf16.gmra.mxu0 %v10262
          %v10701 = vpop.f32.mrf.mxu0
          %v10702 = vadd.f32 %v10689, %v10701
          %v10703 = vpop.f32.mrf.mxu0
          %10704 = vdwg.mxu0
          %10705 = vmatpush.bf16.msra.mxu0 %v10540
          %10706 = vmatpush.bf16.msra.mxu0 %v10538
          %10707 = vmatpush.bf16.msra.mxu0 %v10536
          %10708 = vmatpush.bf16.msra.mxu0 %v10534
          %10709 = vmatpush.bf16.msra.mxu0 %v10532
          %10710 = vmatpush.bf16.msra.mxu0 %v10530
          %10711 = vmatpush.bf16.msra.mxu0 %v10528
          %10712 = vmatpush.bf16.msra.mxu0 %v10526
          %10713 = vmatmul.bf16.gmra.mxu0 %v10259
          %v10714 = vpop.f32.mrf.mxu0
          %v10715 = vadd.f32 %v10330, %v10714
          %v10716 = vpop.f32.mrf.mxu0
          %10717 = vdwg.mxu0
          %10718 = vmatpush.bf16.msra.mxu0 %v10556
          %10719 = vmatpush.bf16.msra.mxu0 %v10554
          %10720 = vmatpush.bf16.msra.mxu0 %v10552
          %10721 = vmatpush.bf16.msra.mxu0 %v10550
          %10722 = vmatpush.bf16.msra.mxu0 %v10548
          %10723 = vmatpush.bf16.msra.mxu0 %v10546
          %10724 = vmatpush.bf16.msra.mxu0 %v10544
          %10725 = vmatpush.bf16.msra.mxu0 %v10542
          %10726 = vmatmul.bf16.gmra.mxu0 %v10260
          %v10727 = vpop.f32.mrf.mxu0
          %v10728 = vadd.f32 %v10715, %v10727
          %v10729 = vpop.f32.mrf.mxu0
          %10730 = vdwg.mxu0
          %10731 = vmatpush.bf16.msra.mxu0 %v10572
          %10732 = vmatpush.bf16.msra.mxu0 %v10570
          %10733 = vmatpush.bf16.msra.mxu0 %v10568
          %10734 = vmatpush.bf16.msra.mxu0 %v10566
          %10735 = vmatpush.bf16.msra.mxu0 %v10564
          %10736 = vmatpush.bf16.msra.mxu0 %v10562
          %10737 = vmatpush.bf16.msra.mxu0 %v10560
          %10738 = vmatpush.bf16.msra.mxu0 %v10558
          %10739 = vmatmul.bf16.gmra.mxu0 %v10261
          %v10740 = vpop.f32.mrf.mxu0
          %v10741 = vadd.f32 %v10728, %v10740
          %v10742 = vpop.f32.mrf.mxu0
          %10743 = vdwg.mxu0
          %10744 = vmatpush.bf16.msra.mxu0 %v10588
          %10745 = vmatpush.bf16.msra.mxu0 %v10586
          %10746 = vmatpush.bf16.msra.mxu0 %v10584
          %10747 = vmatpush.bf16.msra.mxu0 %v10582
          %10748 = vmatpush.bf16.msra.mxu0 %v10580
          %10749 = vmatpush.bf16.msra.mxu0 %v10578
          %10750 = vmatpush.bf16.msra.mxu0 %v10576
          %10751 = vmatpush.bf16.msra.mxu0 %v10574
          %10752 = vmatmul.bf16.gmra.mxu0 %v10262
          %v10753 = vpop.f32.mrf.mxu0
          %v10754 = vadd.f32 %v10741, %v10753
          %v10755 = vpop.f32.mrf.mxu0
          %10756 = vdwg.mxu0
          %v10757 = vmax.f32 %v10702, 0.0
          %v10758 = vmax.f32 %v10754, 0.0
          %v10759 = vpack.c.bf16 %v10757, %v10757
          %v10760 = vpack.c.bf16 %v10758, %v10758
          %v10761 = vld [vmem:[%s11] sm:$0xff]
          %v10762 = vld [vmem:[%s11 + $0x8] sm:$0xff]
          %v10763 = vld [vmem:[%s11 + $0x10] sm:$0xff]
          %v10764 = vld [vmem:[%s11 + $0x18] sm:$0xff]
          %v10765 = vld [vmem:[%s11 + $0x20] sm:$0xff]
          %v10766 = vld [vmem:[%s11 + $0x28] sm:$0xff]
          %v10767 = vld [vmem:[%s11 + $0x30] sm:$0xff]
          %v10768 = vld [vmem:[%s11 + $0x38] sm:$0xff]
          %v10769 = vld [vmem:[%s11 + $0x40] sm:$0xff]
          %v10770 = vld [vmem:[%s11 + $0x48] sm:$0xff]
          %v10771 = vld [vmem:[%s11 + $0x50] sm:$0xff]
          %v10772 = vld [vmem:[%s11 + $0x58] sm:$0xff]
          %v10773 = vld [vmem:[%s11 + $0x60] sm:$0xff]
          %v10774 = vld [vmem:[%s11 + $0x68] sm:$0xff]
          %v10775 = vld [vmem:[%s11 + $0x70] sm:$0xff]
          %v10776 = vld [vmem:[%s11 + $0x78] sm:$0xff]
          %v10777 = vld [vmem:[%s11 + $0x80] sm:$0xff]
          %v10778 = vld [vmem:[%s11 + $0x88] sm:$0xff]
          %v10779 = vld [vmem:[%s11 + $0x90] sm:$0xff]
          %v10780 = vld [vmem:[%s11 + $0x98] sm:$0xff]
          %v10781 = vld [vmem:[%s11 + $0xa0] sm:$0xff]
          %v10782 = vld [vmem:[%s11 + $0xa8] sm:$0xff]
          %v10783 = vld [vmem:[%s11 + $0xb0] sm:$0xff]
          %v10784 = vld [vmem:[%s11 + $0xb8] sm:$0xff]
          %v10785 = vld [vmem:[%s11 + $0xc0] sm:$0xff]
          %v10786 = vld [vmem:[%s11 + $0xc8] sm:$0xff]
          %v10787 = vld [vmem:[%s11 + $0xd0] sm:$0xff]
          %v10788 = vld [vmem:[%s11 + $0xd8] sm:$0xff]
          %v10789 = vld [vmem:[%s11 + $0xe0] sm:$0xff]
          %v10790 = vld [vmem:[%s11 + $0xe8] sm:$0xff]
          %v10791 = vld [vmem:[%s11 + $0xf0] sm:$0xff]
          %v10792 = vld [vmem:[%s11 + $0xf8] sm:$0xff]
          %v10793 = vld [vmem:[%s12] sm:$0x3]
          %v10795 = vperm.slane %v10793, 0
          %v10796 = vperm.slane %v10793, 1
          %v10831 = vunpack.c.l.b16 %v10761
          %v10832 = vunpack.c.h.b16 %v10761
          %v10833 = vunpack.c.l.b16 %v10762
          %v10834 = vunpack.c.h.b16 %v10762
          %v10835 = vunpack.c.l.b16 %v10763
          %v10836 = vunpack.c.h.b16 %v10763
          %v10837 = vunpack.c.l.b16 %v10764
          %v10838 = vunpack.c.h.b16 %v10764
          %v10839 = vunpack.c.l.b16 %v10765
          %v10840 = vunpack.c.h.b16 %v10765
          %v10841 = vunpack.c.l.b16 %v10766
          %v10842 = vunpack.c.h.b16 %v10766
          %v10843 = vunpack.c.l.b16 %v10767
          %v10844 = vunpack.c.h.b16 %v10767
          %v10845 = vunpack.c.l.b16 %v10768
          %v10846 = vunpack.c.h.b16 %v10768
          %v10847 = vunpack.c.l.b16 %v10769
          %v10848 = vunpack.c.h.b16 %v10769
          %v10849 = vunpack.c.l.b16 %v10770
          %v10850 = vunpack.c.h.b16 %v10770
          %v10851 = vunpack.c.l.b16 %v10771
          %v10852 = vunpack.c.h.b16 %v10771
          %v10853 = vunpack.c.l.b16 %v10772
          %v10854 = vunpack.c.h.b16 %v10772
          %v10855 = vunpack.c.l.b16 %v10773
          %v10856 = vunpack.c.h.b16 %v10773
          %v10857 = vunpack.c.l.b16 %v10774
          %v10858 = vunpack.c.h.b16 %v10774
          %v10859 = vunpack.c.l.b16 %v10775
          %v10860 = vunpack.c.h.b16 %v10775
          %v10861 = vunpack.c.l.b16 %v10776
          %v10862 = vunpack.c.h.b16 %v10776
          %v10863 = vunpack.c.l.b16 %v10777
          %v10864 = vunpack.c.h.b16 %v10777
          %v10865 = vunpack.c.l.b16 %v10778
          %v10866 = vunpack.c.h.b16 %v10778
          %v10867 = vunpack.c.l.b16 %v10779
          %v10868 = vunpack.c.h.b16 %v10779
          %v10869 = vunpack.c.l.b16 %v10780
          %v10870 = vunpack.c.h.b16 %v10780
          %v10871 = vunpack.c.l.b16 %v10781
          %v10872 = vunpack.c.h.b16 %v10781
          %v10873 = vunpack.c.l.b16 %v10782
          %v10874 = vunpack.c.h.b16 %v10782
          %v10875 = vunpack.c.l.b16 %v10783
          %v10876 = vunpack.c.h.b16 %v10783
          %v10877 = vunpack.c.l.b16 %v10784
          %v10878 = vunpack.c.h.b16 %v10784
          %v10879 = vunpack.c.l.b16 %v10785
          %v10880 = vunpack.c.h.b16 %v10785
          %v10881 = vunpack.c.l.b16 %v10786
          %v10882 = vunpack.c.h.b16 %v10786
          %v10883 = vunpack.c.l.b16 %v10787
          %v10884 = vunpack.c.h.b16 %v10787
          %v10885 = vunpack.c.l.b16 %v10788
          %v10886 = vunpack.c.h.b16 %v10788
          %v10887 = vunpack.c.l.b16 %v10789
          %v10888 = vunpack.c.h.b16 %v10789
          %v10889 = vunpack.c.l.b16 %v10790
          %v10890 = vunpack.c.h.b16 %v10790
          %v10891 = vunpack.c.l.b16 %v10791
          %v10892 = vunpack.c.h.b16 %v10791
          %v10893 = vunpack.c.l.b16 %v10792
          %v10894 = vunpack.c.h.b16 %v10792
          %v10895 = vpack.c.b16 %v10833, %v10831
          %v10896 = vpack.c.b16 %v10834, %v10832
          %v10897 = vpack.c.b16 %v10837, %v10835
          %v10898 = vpack.c.b16 %v10838, %v10836
          %v10899 = vpack.c.b16 %v10841, %v10839
          %v10900 = vpack.c.b16 %v10842, %v10840
          %v10901 = vpack.c.b16 %v10845, %v10843
          %v10902 = vpack.c.b16 %v10846, %v10844
          %v10903 = vpack.c.b16 %v10849, %v10847
          %v10904 = vpack.c.b16 %v10850, %v10848
          %v10905 = vpack.c.b16 %v10853, %v10851
          %v10906 = vpack.c.b16 %v10854, %v10852
          %v10907 = vpack.c.b16 %v10857, %v10855
          %v10908 = vpack.c.b16 %v10858, %v10856
          %v10909 = vpack.c.b16 %v10861, %v10859
          %v10910 = vpack.c.b16 %v10862, %v10860
          %v10911 = vpack.c.b16 %v10865, %v10863
          %v10912 = vpack.c.b16 %v10866, %v10864
          %v10913 = vpack.c.b16 %v10869, %v10867
          %v10914 = vpack.c.b16 %v10870, %v10868
          %v10915 = vpack.c.b16 %v10873, %v10871
          %v10916 = vpack.c.b16 %v10874, %v10872
          %v10917 = vpack.c.b16 %v10877, %v10875
          %v10918 = vpack.c.b16 %v10878, %v10876
          %v10919 = vpack.c.b16 %v10881, %v10879
          %v10920 = vpack.c.b16 %v10882, %v10880
          %v10921 = vpack.c.b16 %v10885, %v10883
          %v10922 = vpack.c.b16 %v10886, %v10884
          %v10923 = vpack.c.b16 %v10889, %v10887
          %v10924 = vpack.c.b16 %v10890, %v10888
          %v10925 = vpack.c.b16 %v10893, %v10891
          %v10926 = vpack.c.b16 %v10894, %v10892
          %10959 = vmatpush.bf16.msra.mxu0 %v10909
          %10960 = vmatpush.bf16.msra.mxu0 %v10907
          %10961 = vmatpush.bf16.msra.mxu0 %v10905
          %10962 = vmatpush.bf16.msra.mxu0 %v10903
          %10963 = vmatpush.bf16.msra.mxu0 %v10901
          %10964 = vmatpush.bf16.msra.mxu0 %v10899
          %10965 = vmatpush.bf16.msra.mxu0 %v10897
          %10966 = vmatpush.bf16.msra.mxu0 %v10895
          %10967 = vmatmul.bf16.gmra.mxu0 %v10759
          %v10968 = vpop.f32.mrf.mxu0
          %v10969 = vadd.f32 %v10795, %v10968
          %v10970 = vpop.f32.mrf.mxu0
          %10971 = vdwg.mxu0
          %10972 = vmatpush.bf16.msra.mxu0 %v10925
          %10973 = vmatpush.bf16.msra.mxu0 %v10923
          %10974 = vmatpush.bf16.msra.mxu0 %v10921
          %10975 = vmatpush.bf16.msra.mxu0 %v10919
          %10976 = vmatpush.bf16.msra.mxu0 %v10917
          %10977 = vmatpush.bf16.msra.mxu0 %v10915
          %10978 = vmatpush.bf16.msra.mxu0 %v10913
          %10979 = vmatpush.bf16.msra.mxu0 %v10911
          %10980 = vmatmul.bf16.gmra.mxu0 %v10760
          %v10981 = vpop.f32.mrf.mxu0
          %v10982 = vadd.f32 %v10969, %v10981
          %v10983 = vpop.f32.mrf.mxu0
          %10984 = vdwg.mxu0
          %10985 = vmatpush.bf16.msra.mxu0 %v10910
          %10986 = vmatpush.bf16.msra.mxu0 %v10908
          %10987 = vmatpush.bf16.msra.mxu0 %v10906
          %10988 = vmatpush.bf16.msra.mxu0 %v10904
          %10989 = vmatpush.bf16.msra.mxu0 %v10902
          %10990 = vmatpush.bf16.msra.mxu0 %v10900
          %10991 = vmatpush.bf16.msra.mxu0 %v10898
          %10992 = vmatpush.bf16.msra.mxu0 %v10896
          %10993 = vmatmul.bf16.gmra.mxu0 %v10759
          %v10994 = vpop.f32.mrf.mxu0
          %v10995 = vadd.f32 %v10796, %v10994
          %v10996 = vpop.f32.mrf.mxu0
          %10997 = vdwg.mxu0
          %10998 = vmatpush.bf16.msra.mxu0 %v10926
          %10999 = vmatpush.bf16.msra.mxu0 %v10924
          %11000 = vmatpush.bf16.msra.mxu0 %v10922
          %11001 = vmatpush.bf16.msra.mxu0 %v10920
          %11002 = vmatpush.bf16.msra.mxu0 %v10918
          %11003 = vmatpush.bf16.msra.mxu0 %v10916
          %11004 = vmatpush.bf16.msra.mxu0 %v10914
          %11005 = vmatpush.bf16.msra.mxu0 %v10912
          %11006 = vmatmul.bf16.gmra.mxu0 %v10760
          %v11007 = vpop.f32.mrf.mxu0
          %v11008 = vadd.f32 %v10995, %v11007
          %v11009 = vpop.f32.mrf.mxu0
          %11010 = vdwg.mxu0
          %v11011 = vld [vmem:[%s13] sm:$0x3]
          %v11013 = vperm.slane %v11011, 0
          %v11014 = vperm.slane %v11011, 1
          %v11017 = vadd.f32 %v10982, %v11013
          %v11018 = vadd.f32 %v11008, %v11014
          %11019 = vst [vmem:[%s1030] sm:$0xff] %v11017
          %11020 = vst [vmem:[%s1030 + $0x8] sm:$0xff] %v11018
        $region122: #{stnkd_forward.1} parent=109 // pred_fallthru
          _
        %p11021 = scmp.lt.s32.totalorder %s29, 1
        %s11022 = scalar_select %p11021, %s29, 1
        %s11023 = smul.addr %s11022, 2
        %s11024 = smul.addr %s11023, 8
        %s11025 = scalar_lea.vmem %s14, %s11024
        // Predicated region
        $region123: #{stnkd_forward.1} parent=109 // pred_check
          %p11026 = pneg %p356
        $region124: #{stnkd_forward.1} parent=109 // pred_check_branch
          %11028 = sbr.rel (%p11026) target = $region126
        $region125: #{stnkd_forward.1} parent=109 // pred_region
          _
        $region126: #{stnkd_forward.1} parent=109 // pred_fallthru
          _
      $region110: #{stnkd_forward.1} parent=5 // pred_fallthru
        _
      %p11029 = scmp.le.s32.totalorder 2, %s20
      // Predicated region
      $region127: #{stnkd_forward.1} parent=5 // pred_check
        %p11030 = pneg %p11029
      $region128: #{stnkd_forward.1} parent=5 // pred_check_branch
        %11032 = sbr.rel (%p11030) target = $region130
      $region129: #{stnkd_forward.1} parent=5 // pred_region
        %s11033 = ssub.s32 %s20, 2
        // Predicated region
        $region131: #{stnkd_forward.1} parent=129 // pred_check
          %p11034 = pneg %p362
        $region132: #{stnkd_forward.1} parent=129 // pred_check_branch
          %11036 = sbr.rel (%p11034) target = $region134
        $region133: #{stnkd_forward.1} parent=129 // pred_region
          %p11037 = scmp.lt.s32.totalorder %s31, 1
          %s11038 = scalar_select %p11037, %s31, 1
          %s11039 = smul.addr %s11038, 2
          %s11040 = smul.addr %s11039, 8
          %s11041 = scalar_lea.vmem %s14, %s11040
        $region134: #{stnkd_forward.1} parent=129 // pred_fallthru
          _
      $region130: #{stnkd_forward.1} parent=5 // pred_fallthru
        _
    $region6: #{stnkd_forward.1} parent=1 // loop_footer
      %s24 = sadd.s32 1, %s20
    $region7: #{stnkd_forward.1} parent=1 // loop_footer_branch
      %19 = sbr.rel target = $region3
    $region8: #{stnkd_forward.1} parent=1 // loop_exit
      _

</llo_original>
